<compile_context>
chip_gen: v7x
topology: tpu7x:2x2x1
jax: 0.10.0
libtpu: 0.0.40
codegen_flags: <defaults>
</compile_context>

<pallas_src>
import functools
import math

import jax
import jax.numpy as jnp
from jax.experimental import pallas as pl
from jax.experimental.pallas import tpu as pltpu


_FCN_CHANNELS = [(3, 32), (32, 32), (32, 32), (32, 32), (32, 3)]
_CIN_PAD = 8      # input channels padded 3 -> 8 (cheap HBM read, lane-friendly)
_CMID = 32        # every layer's in/out width padded to 32 (zero weights/bias)
_VMEM_CAP = 36 * 1024 * 1024   # conservative cap: v7x has 64 MiB physical / TC


# ---------------------------------------------------------------------------
# Fused Pallas kernel: one grid step == one full image through all 5 layers
# ---------------------------------------------------------------------------
def _fcn_fused_kernel(x_ref, w_ref, b_ref, o_ref, act_a, act_b,
                      *, h, w, cin, cmid, n_layers):
    """x_ref : (1, h, w, cin)           bf16 input image (channels zero-padded)
       w_ref : (n_layers, 9*cmid, cmid) bf16 weights, taps flattened into K
       b_ref : (n_layers, 1, cmid)      f32 biases
       o_ref : (1, h, w, cmid)          f32 output (channels >= 3 are zero)
       act_a, act_b : (h+2, w+2, cmid)  bf16 ping-pong padded activation scratch
    """
    # Zero both padded scratch buffers every step: this provides the conv's
    # zero padding "for free" and clears any stale state (scratch persists
    # across grid steps and is per-TensorCore under megacore splitting).
    # Cost: ~40 KB of VMEM stores per step -- negligible.
    act_a[...] = jnp.zeros_like(act_a)
    act_b[...] = jnp.zeros_like(act_b)

    # Input image -> interior of buffer A (extra channels stay zero).
    act_a[1:h + 1, 1:w + 1, :cin] = x_ref[0]

    bufs = (act_a, act_b)
    for l in range(n_layers):                    # static unrolled layer loop
        src = bufs[l % 2]
        dst = bufs[(l + 1) % 2]

        xt = src[...]                                            # (h+2, w+2, cmid)
        # In-VMEM im2col: 9 shifted views, taps flattened into the K dim so the
        # tap-sum happens on the MXU (one matmul per layer, K = 9*cmid).
        taps = [xt[dy:dy + h, dx:dx + w, :]
                for dy in range(3) for dx in range(3)]
        patches = jnp.concatenate(taps, axis=-1).reshape(h * w, 9 * cmid)

        # bf16 operands, f32 accumulation; fused bias + ReLU.
        acc = jnp.dot(patches, w_ref[l], preferred_element_type=jnp.float32)
        acc = jnp.maximum(acc + b_ref[l], 0.0)
        y = acc.reshape(h, w, cmid)

        if l == n_layers - 1:
            o_ref[0] = y.astype(o_ref.dtype)                     # final f32 write
        else:
            dst[1:h + 1, 1:w + 1, :] = y.astype(dst.dtype)       # stay in VMEM


# ---------------------------------------------------------------------------
# VMEM accounting (generation-aware: capped for v7x's 64 MiB per TC)
# ---------------------------------------------------------------------------
def _fused_vmem_bytes(h, w, cin, cmid, n_layers):
    bf, f32 = 2, 4
    x_blk = h * w * cin * bf
    o_blk = h * w * cmid * f32
    wts = n_layers * 9 * cmid * cmid * bf
    bias = n_layers * cmid * f32
    scratch = 2 * (h + 2) * (w + 2) * cmid * bf
    # live temporaries inside one layer: padded-activation load, 9-tap patch
    # matrix (+ one copy's worth of concat/relayout slack), f32 accumulator.
    interm = ((h + 2) * (w + 2) * cmid * bf
              + 2 * h * w * 9 * cmid * bf
              + 2 * h * w * cmid * f32)
    # pipelined in/out blocks are double-buffered; count weights/bias 2x too.
    return 2 * (x_blk + o_blk + wts + bias) + scratch + interm


# ---------------------------------------------------------------------------
# pallas_call wrapper
# ---------------------------------------------------------------------------
def fcn_fused_call(x, w_stack, b_stack):
    """x: (N, H, W, _CIN_PAD) bf16; w_stack: (L, 9*CMID, CMID) bf16;
       b_stack: (L, 1, CMID) f32.  Returns (N, H, W, CMID) f32."""
    n, h, w, cin = x.shape
    n_layers, k9, cmid = w_stack.shape
    assert k9 == 9 * cmid

    need = _fused_vmem_bytes(h, w, cin, cmid, n_layers)
    assert need <= _VMEM_CAP, (
        f"whole-image fused kernel needs ~{need} B VMEM (> {_VMEM_CAP}); "
        "use a row-tiled variant for images this large")
    vmem_limit = int(min(_VMEM_CAP, max(8 * 1024 * 1024, 2 * need)))

    kern = functools.partial(_fcn_fused_kernel, h=h, w=w, cin=cin,
                             cmid=cmid, n_layers=n_layers)

    return pl.pallas_call(
        kern,
        out_shape=jax.ShapeDtypeStruct((n, h, w, cmid), jnp.float32),
        grid=(n,),
        in_specs=[
            # one whole image per step
            pl.BlockSpec((1, h, w, cin), lambda bi: (bi, 0, 0, 0)),
            # weights / biases: constant block index -> fetched once, stay in VMEM
            pl.BlockSpec((n_layers, 9 * cmid, cmid), lambda bi: (0, 0, 0)),
            pl.BlockSpec((n_layers, 1, cmid), lambda bi: (0, 0, 0)),
        ],
        out_specs=pl.BlockSpec((1, h, w, cmid), lambda bi: (bi, 0, 0, 0)),
        scratch_shapes=[
            pltpu.VMEM((h + 2, w + 2, cmid), jnp.bfloat16),
            pltpu.VMEM((h + 2, w + 2, cmid), jnp.bfloat16),
        ],
        compiler_params=pltpu.CompilerParams(
            # independent images; an even batch keeps both v7x TCs busy
            dimension_semantics=("parallel",),
            vmem_limit_bytes=vmem_limit,
        ),
    )(x, w_stack, b_stack)


# ---------------------------------------------------------------------------
# FCN parameters (synthetic, PyTorch-style init) and forward pass
# ---------------------------------------------------------------------------
def init_fcn_params(key):
    """Per-layer f32 (3,3,Cin,Cout) HWIO weights and (Cout,) biases."""
    ws, bs = [], []
    for k, (cin, cout) in zip(jax.random.split(key, len(_FCN_CHANNELS)),
                              _FCN_CHANNELS):
        kw_, kb_ = jax.random.split(k)
        bound = 1.0 / math.sqrt(9 * cin)
        ws.append(jax.random.uniform(kw_, (3, 3, cin, cout), jnp.float32,
                                     -bound, bound))
        bs.append(jax.random.uniform(kb_, (cout,), jnp.float32, -bound, bound))
    return ws, bs


def pack_fcn_params(ws, bs, cmid=_CMID):
    """Pad every layer to cmid in/out channels (zero weights & bias -> exactly
    the same math), flatten taps into the contraction dim and stack."""
    w_stack, b_stack = [], []
    for wt, bi in zip(ws, bs):
        _, _, cin, cout = wt.shape
        wp = jnp.pad(wt, ((0, 0), (0, 0), (0, cmid - cin), (0, cmid - cout)))
        w_stack.append(wp.reshape(9 * cmid, cmid))
        b_stack.append(jnp.pad(bi, (0, cmid - cout)).reshape(1, cmid))
    return (jnp.stack(w_stack).astype(jnp.bfloat16),
            jnp.stack(b_stack).astype(jnp.float32))


def fcn_forward(params, x_nchw):
    """FCN forward pass.  x_nchw: (N, 3, H, W) f32 -> (N, 3, H, W) f32."""
    w_stack, b_stack = params
    n, c, h, w = x_nchw.shape
    x = jnp.transpose(x_nchw, (0, 2, 3, 1))                        # NCHW -> NHWC
    x = jnp.pad(x, ((0, 0),) * 3 + ((0, _CIN_PAD - c),)).astype(jnp.bfloat16)
    out = fcn_fused_call(x, w_stack, b_stack)                      # (n,h,w,32) f32
    return jnp.transpose(out[..., :c], (0, 3, 1, 2))               # back to NCHW


def fcn_reference(ws, bs, x_nchw):
    """Pure-JAX reference matching the kernel's numerics (bf16 weights, bf16
    per-layer activation rounding, f32 accumulation, f32 final layer)."""
    a = jnp.transpose(x_nchw, (0, 2, 3, 1)).astype(jnp.bfloat16).astype(jnp.float32)
    for l, (wt, bi) in enumerate(zip(ws, bs)):
        wr = wt.astype(jnp.bfloat16).astype(jnp.float32)
        y = jax.lax.conv_general_dilated(
            a, wr, (1, 1), "SAME",
            dimension_numbers=("NHWC", "HWIO", "NHWC"),
            precision=jax.lax.Precision.HIGHEST)
        a = jnp.maximum(y + bi, 0.0)
        if l < len(ws) - 1:
            a = a.astype(jnp.bfloat16).astype(jnp.float32)
    return jnp.transpose(a, (0, 3, 1, 2))


# ---------------------------------------------------------------------------
if __name__ == "__main__":
    key = jax.random.PRNGKey(0)
    kx, kp = jax.random.split(key)
    x_nchw = jax.random.normal(kx, (2, 3, 16, 16), jnp.float32)    # NCHW input
    ws, bs = init_fcn_params(kp)
    params = pack_fcn_params(ws, bs)

    run = jax.jit(functools.partial(fcn_forward, params))
    out = run(x_nchw)
    jax.block_until_ready(out)
    assert out.shape == (2, 3, 16, 16) and out.dtype == jnp.float32

    ref = jax.jit(functools.partial(fcn_reference, ws, bs))(x_nchw)
    max_err = float(jnp.max(jnp.abs(out - ref)))
    assert max_err < 5e-2, f"mismatch vs reference: max|diff|={max_err}"

    print("KERNEL_OK")
</pallas_src>

<mosaic_0001>
module attributes {stable_mosaic.version = 11 : i64} {
  func.func @_fcn_fused_kernel(%arg0: i32, %arg1: memref<1x16x16x8xbf16, #tpu.memory_space<vmem>>, %arg2: memref<5x288x32xbf16, #tpu.memory_space<vmem>>, %arg3: memref<5x1x32xf32, #tpu.memory_space<vmem>>, %arg4: memref<1x16x16x32xf32, #tpu.memory_space<vmem>>, %arg5: memref<18x18x32xbf16, #tpu.memory_space<vmem>>, %arg6: memref<18x18x32xbf16, #tpu.memory_space<vmem>>) attributes {dimension_semantics = [#tpu.dimension_semantics<parallel>], iteration_bounds = array<i64: 2>, scalar_prefetch = 0 : i64, scratch_operands = 2 : i64, tpu.core_type = #tpu.core_type<tc>, window_params = [{transform_indices = @transform_0, window_bounds = array<i64: 1, 16, 16, 8>}, {pipeline_mode = #tpu.pipeline_mode<synchronous>, transform_indices = @transform_1, window_bounds = array<i64: 5, 288, 32>}, {pipeline_mode = #tpu.pipeline_mode<synchronous>, transform_indices = @transform_2, window_bounds = array<i64: 5, 1, 32>}, {transform_indices = @transform_3, window_bounds = array<i64: 1, 16, 16, 32>}]} {
    %cst = arith.constant 0.000000e+00 : bf16
    %0 = vector.broadcast %cst : bf16 to vector<18x18x32xbf16>
    %c0 = arith.constant 0 : index
    %c0_0 = arith.constant 0 : index
    %c0_1 = arith.constant 0 : index
    %1 = vector.load %arg5[%c0, %c0_0, %c0_1] : memref<18x18x32xbf16, #tpu.memory_space<vmem>>, vector<18x18x32xbf16>
    tpu.vector_store %arg5[%c0, %c0_0, %c0_1], %0 {strides = array<i32>} : memref<18x18x32xbf16, #tpu.memory_space<vmem>>, vector<18x18x32xbf16>,
    %cst_2 = arith.constant 0.000000e+00 : bf16
    %2 = vector.broadcast %cst_2 : bf16 to vector<18x18x32xbf16>
    %c0_3 = arith.constant 0 : index
    %c0_4 = arith.constant 0 : index
    %c0_5 = arith.constant 0 : index
    %3 = vector.load %arg6[%c0_3, %c0_4, %c0_5] : memref<18x18x32xbf16, #tpu.memory_space<vmem>>, vector<18x18x32xbf16>
    tpu.vector_store %arg6[%c0_3, %c0_4, %c0_5], %2 {strides = array<i32>} : memref<18x18x32xbf16, #tpu.memory_space<vmem>>, vector<18x18x32xbf16>,
    %c0_6 = arith.constant 0 : index
    %c0_7 = arith.constant 0 : index
    %c0_8 = arith.constant 0 : index
    %c0_9 = arith.constant 0 : index
    %4 = vector.load %arg1[%c0_6, %c0_7, %c0_8, %c0_9] : memref<1x16x16x8xbf16, #tpu.memory_space<vmem>>, vector<1x16x16x8xbf16>
    %5 = vector.shape_cast %4 : vector<1x16x16x8xbf16> to vector<16x16x8xbf16>
    %c1 = arith.constant 1 : index
    %c1_10 = arith.constant 1 : index
    %c0_11 = arith.constant 0 : index
    %6 = vector.load %arg5[%c1, %c1_10, %c0_11] : memref<18x18x32xbf16, #tpu.memory_space<vmem>>, vector<16x16x8xbf16>
    tpu.vector_store %arg5[%c1, %c1_10, %c0_11], %5 {strides = array<i32>} : memref<18x18x32xbf16, #tpu.memory_space<vmem>>, vector<16x16x8xbf16>,
    %c0_12 = arith.constant 0 : index
    %c0_13 = arith.constant 0 : index
    %c0_14 = arith.constant 0 : index
    %7 = vector.load %arg5[%c0_12, %c0_13, %c0_14] : memref<18x18x32xbf16, #tpu.memory_space<vmem>>, vector<18x18x32xbf16>
    %8 = vector.extract_strided_slice %7 {offsets = [0, 0, 0], sizes = [16, 16, 32], strides = [1, 1, 1]} : vector<18x18x32xbf16> to vector<16x16x32xbf16>
    %9 = vector.extract_strided_slice %7 {offsets = [0, 1, 0], sizes = [16, 16, 32], strides = [1, 1, 1]} : vector<18x18x32xbf16> to vector<16x16x32xbf16>
    %10 = vector.extract_strided_slice %7 {offsets = [0, 2, 0], sizes = [16, 16, 32], strides = [1, 1, 1]} : vector<18x18x32xbf16> to vector<16x16x32xbf16>
    %11 = vector.extract_strided_slice %7 {offsets = [1, 0, 0], sizes = [16, 16, 32], strides = [1, 1, 1]} : vector<18x18x32xbf16> to vector<16x16x32xbf16>
    %12 = vector.extract_strided_slice %7 {offsets = [1, 1, 0], sizes = [16, 16, 32], strides = [1, 1, 1]} : vector<18x18x32xbf16> to vector<16x16x32xbf16>
    %13 = vector.extract_strided_slice %7 {offsets = [1, 2, 0], sizes = [16, 16, 32], strides = [1, 1, 1]} : vector<18x18x32xbf16> to vector<16x16x32xbf16>
    %14 = vector.extract_strided_slice %7 {offsets = [2, 0, 0], sizes = [16, 16, 32], strides = [1, 1, 1]} : vector<18x18x32xbf16> to vector<16x16x32xbf16>
    %15 = vector.extract_strided_slice %7 {offsets = [2, 1, 0], sizes = [16, 16, 32], strides = [1, 1, 1]} : vector<18x18x32xbf16> to vector<16x16x32xbf16>
    %16 = vector.extract_strided_slice %7 {offsets = [2, 2, 0], sizes = [16, 16, 32], strides = [1, 1, 1]} : vector<18x18x32xbf16> to vector<16x16x32xbf16>
    %17 = tpu.concatenate %8, %9, %10, %11, %12, %13, %14, %15, %16 in 2 : vector<16x16x32xbf16>, vector<16x16x32xbf16>, vector<16x16x32xbf16>, vector<16x16x32xbf16>, vector<16x16x32xbf16>, vector<16x16x32xbf16>, vector<16x16x32xbf16>, vector<16x16x32xbf16>, vector<16x16x32xbf16> -> vector<16x16x288xbf16>
    %18 = vector.shape_cast %17 : vector<16x16x288xbf16> to vector<256x288xbf16>
    %c0_15 = arith.constant 0 : index
    %c0_16 = arith.constant 0 : index
    %c0_17 = arith.constant 0 : index
    %19 = vector.load %arg2[%c0_15, %c0_16, %c0_17] : memref<5x288x32xbf16, #tpu.memory_space<vmem>>, vector<1x288x32xbf16>
    %20 = vector.shape_cast %19 : vector<1x288x32xbf16> to vector<288x32xbf16>
    %cst_18 = arith.constant dense<0.000000e+00> : vector<256x32xf32>
    %21 = tpu.matmul %18, %20, %cst_18 {dimension_numbers = #tpu.dot_dimension_numbers<[1], [0], [0], [1], [0, 0, 1, 1], [], []>} : vector<256x288xbf16>, vector<288x32xbf16>, vector<256x32xf32> -> vector<256x32xf32>
    %c0_19 = arith.constant 0 : index
    %c0_20 = arith.constant 0 : index
    %c0_21 = arith.constant 0 : index
    %22 = vector.load %arg3[%c0_19, %c0_20, %c0_21] : memref<5x1x32xf32, #tpu.memory_space<vmem>>, vector<1x1x32xf32>
    %23 = vector.shape_cast %22 : vector<1x1x32xf32> to vector<1x32xf32>
    %24 = vector.broadcast %23 : vector<1x32xf32> to vector<256x32xf32>
    %25 = arith.addf %21, %24 : vector<256x32xf32>
    %cst_22 = arith.constant 0.000000e+00 : f32
    %26 = vector.broadcast %cst_22 : f32 to vector<256x32xf32>
    %27 = arith.maximumf %25, %26 : vector<256x32xf32>
    %28 = vector.shape_cast %27 : vector<256x32xf32> to vector<16x16x32xf32>
    %29 = arith.truncf %28 : vector<16x16x32xf32> to vector<16x16x32xbf16>
    %c1_23 = arith.constant 1 : index
    %c1_24 = arith.constant 1 : index
    %c0_25 = arith.constant 0 : index
    %30 = vector.load %arg6[%c1_23, %c1_24, %c0_25] : memref<18x18x32xbf16, #tpu.memory_space<vmem>>, vector<16x16x32xbf16>
    tpu.vector_store %arg6[%c1_23, %c1_24, %c0_25], %29 {strides = array<i32>} : memref<18x18x32xbf16, #tpu.memory_space<vmem>>, vector<16x16x32xbf16>,
    %c0_26 = arith.constant 0 : index
    %c0_27 = arith.constant 0 : index
    %c0_28 = arith.constant 0 : index
    %31 = vector.load %arg6[%c0_26, %c0_27, %c0_28] : memref<18x18x32xbf16, #tpu.memory_space<vmem>>, vector<18x18x32xbf16>
    %32 = vector.extract_strided_slice %31 {offsets = [0, 0, 0], sizes = [16, 16, 32], strides = [1, 1, 1]} : vector<18x18x32xbf16> to vector<16x16x32xbf16>
    %33 = vector.extract_strided_slice %31 {offsets = [0, 1, 0], sizes = [16, 16, 32], strides = [1, 1, 1]} : vector<18x18x32xbf16> to vector<16x16x32xbf16>
    %34 = vector.extract_strided_slice %31 {offsets = [0, 2, 0], sizes = [16, 16, 32], strides = [1, 1, 1]} : vector<18x18x32xbf16> to vector<16x16x32xbf16>
    %35 = vector.extract_strided_slice %31 {offsets = [1, 0, 0], sizes = [16, 16, 32], strides = [1, 1, 1]} : vector<18x18x32xbf16> to vector<16x16x32xbf16>
    %36 = vector.extract_strided_slice %31 {offsets = [1, 1, 0], sizes = [16, 16, 32], strides = [1, 1, 1]} : vector<18x18x32xbf16> to vector<16x16x32xbf16>
    %37 = vector.extract_strided_slice %31 {offsets = [1, 2, 0], sizes = [16, 16, 32], strides = [1, 1, 1]} : vector<18x18x32xbf16> to vector<16x16x32xbf16>
    %38 = vector.extract_strided_slice %31 {offsets = [2, 0, 0], sizes = [16, 16, 32], strides = [1, 1, 1]} : vector<18x18x32xbf16> to vector<16x16x32xbf16>
    %39 = vector.extract_strided_slice %31 {offsets = [2, 1, 0], sizes = [16, 16, 32], strides = [1, 1, 1]} : vector<18x18x32xbf16> to vector<16x16x32xbf16>
    %40 = vector.extract_strided_slice %31 {offsets = [2, 2, 0], sizes = [16, 16, 32], strides = [1, 1, 1]} : vector<18x18x32xbf16> to vector<16x16x32xbf16>
    %41 = tpu.concatenate %32, %33, %34, %35, %36, %37, %38, %39, %40 in 2 : vector<16x16x32xbf16>, vector<16x16x32xbf16>, vector<16x16x32xbf16>, vector<16x16x32xbf16>, vector<16x16x32xbf16>, vector<16x16x32xbf16>, vector<16x16x32xbf16>, vector<16x16x32xbf16>, vector<16x16x32xbf16> -> vector<16x16x288xbf16>
    %42 = vector.shape_cast %41 : vector<16x16x288xbf16> to vector<256x288xbf16>
    %c1_29 = arith.constant 1 : index
    %c0_30 = arith.constant 0 : index
    %c0_31 = arith.constant 0 : index
    %43 = vector.load %arg2[%c1_29, %c0_30, %c0_31] : memref<5x288x32xbf16, #tpu.memory_space<vmem>>, vector<1x288x32xbf16>
    %44 = vector.shape_cast %43 : vector<1x288x32xbf16> to vector<288x32xbf16>
    %cst_32 = arith.constant dense<0.000000e+00> : vector<256x32xf32>
    %45 = tpu.matmul %42, %44, %cst_32 {dimension_numbers = #tpu.dot_dimension_numbers<[1], [0], [0], [1], [0, 0, 1, 1], [], []>} : vector<256x288xbf16>, vector<288x32xbf16>, vector<256x32xf32> -> vector<256x32xf32>
    %c1_33 = arith.constant 1 : index
    %c0_34 = arith.constant 0 : index
    %c0_35 = arith.constant 0 : index
    %46 = vector.load %arg3[%c1_33, %c0_34, %c0_35] : memref<5x1x32xf32, #tpu.memory_space<vmem>>, vector<1x1x32xf32>
    %47 = vector.shape_cast %46 : vector<1x1x32xf32> to vector<1x32xf32>
    %48 = vector.broadcast %47 : vector<1x32xf32> to vector<256x32xf32>
    %49 = arith.addf %45, %48 : vector<256x32xf32>
    %cst_36 = arith.constant 0.000000e+00 : f32
    %50 = vector.broadcast %cst_36 : f32 to vector<256x32xf32>
    %51 = arith.maximumf %49, %50 : vector<256x32xf32>
    %52 = vector.shape_cast %51 : vector<256x32xf32> to vector<16x16x32xf32>
    %53 = arith.truncf %52 : vector<16x16x32xf32> to vector<16x16x32xbf16>
    %c1_37 = arith.constant 1 : index
    %c1_38 = arith.constant 1 : index
    %c0_39 = arith.constant 0 : index
    %54 = vector.load %arg5[%c1_37, %c1_38, %c0_39] : memref<18x18x32xbf16, #tpu.memory_space<vmem>>, vector<16x16x32xbf16>
    tpu.vector_store %arg5[%c1_37, %c1_38, %c0_39], %53 {strides = array<i32>} : memref<18x18x32xbf16, #tpu.memory_space<vmem>>, vector<16x16x32xbf16>,
    %c0_40 = arith.constant 0 : index
    %c0_41 = arith.constant 0 : index
    %c0_42 = arith.constant 0 : index
    %55 = vector.load %arg5[%c0_40, %c0_41, %c0_42] : memref<18x18x32xbf16, #tpu.memory_space<vmem>>, vector<18x18x32xbf16>
    %56 = vector.extract_strided_slice %55 {offsets = [0, 0, 0], sizes = [16, 16, 32], strides = [1, 1, 1]} : vector<18x18x32xbf16> to vector<16x16x32xbf16>
    %57 = vector.extract_strided_slice %55 {offsets = [0, 1, 0], sizes = [16, 16, 32], strides = [1, 1, 1]} : vector<18x18x32xbf16> to vector<16x16x32xbf16>
    %58 = vector.extract_strided_slice %55 {offsets = [0, 2, 0], sizes = [16, 16, 32], strides = [1, 1, 1]} : vector<18x18x32xbf16> to vector<16x16x32xbf16>
    %59 = vector.extract_strided_slice %55 {offsets = [1, 0, 0], sizes = [16, 16, 32], strides = [1, 1, 1]} : vector<18x18x32xbf16> to vector<16x16x32xbf16>
    %60 = vector.extract_strided_slice %55 {offsets = [1, 1, 0], sizes = [16, 16, 32], strides = [1, 1, 1]} : vector<18x18x32xbf16> to vector<16x16x32xbf16>
    %61 = vector.extract_strided_slice %55 {offsets = [1, 2, 0], sizes = [16, 16, 32], strides = [1, 1, 1]} : vector<18x18x32xbf16> to vector<16x16x32xbf16>
    %62 = vector.extract_strided_slice %55 {offsets = [2, 0, 0], sizes = [16, 16, 32], strides = [1, 1, 1]} : vector<18x18x32xbf16> to vector<16x16x32xbf16>
    %63 = vector.extract_strided_slice %55 {offsets = [2, 1, 0], sizes = [16, 16, 32], strides = [1, 1, 1]} : vector<18x18x32xbf16> to vector<16x16x32xbf16>
    %64 = vector.extract_strided_slice %55 {offsets = [2, 2, 0], sizes = [16, 16, 32], strides = [1, 1, 1]} : vector<18x18x32xbf16> to vector<16x16x32xbf16>
    %65 = tpu.concatenate %56, %57, %58, %59, %60, %61, %62, %63, %64 in 2 : vector<16x16x32xbf16>, vector<16x16x32xbf16>, vector<16x16x32xbf16>, vector<16x16x32xbf16>, vector<16x16x32xbf16>, vector<16x16x32xbf16>, vector<16x16x32xbf16>, vector<16x16x32xbf16>, vector<16x16x32xbf16> -> vector<16x16x288xbf16>
    %66 = vector.shape_cast %65 : vector<16x16x288xbf16> to vector<256x288xbf16>
    %c2 = arith.constant 2 : index
    %c0_43 = arith.constant 0 : index
    %c0_44 = arith.constant 0 : index
    %67 = vector.load %arg2[%c2, %c0_43, %c0_44] : memref<5x288x32xbf16, #tpu.memory_space<vmem>>, vector<1x288x32xbf16>
    %68 = vector.shape_cast %67 : vector<1x288x32xbf16> to vector<288x32xbf16>
    %cst_45 = arith.constant dense<0.000000e+00> : vector<256x32xf32>
    %69 = tpu.matmul %66, %68, %cst_45 {dimension_numbers = #tpu.dot_dimension_numbers<[1], [0], [0], [1], [0, 0, 1, 1], [], []>} : vector<256x288xbf16>, vector<288x32xbf16>, vector<256x32xf32> -> vector<256x32xf32>
    %c2_46 = arith.constant 2 : index
    %c0_47 = arith.constant 0 : index
    %c0_48 = arith.constant 0 : index
    %70 = vector.load %arg3[%c2_46, %c0_47, %c0_48] : memref<5x1x32xf32, #tpu.memory_space<vmem>>, vector<1x1x32xf32>
    %71 = vector.shape_cast %70 : vector<1x1x32xf32> to vector<1x32xf32>
    %72 = vector.broadcast %71 : vector<1x32xf32> to vector<256x32xf32>
    %73 = arith.addf %69, %72 : vector<256x32xf32>
    %cst_49 = arith.constant 0.000000e+00 : f32
    %74 = vector.broadcast %cst_49 : f32 to vector<256x32xf32>
    %75 = arith.maximumf %73, %74 : vector<256x32xf32>
    %76 = vector.shape_cast %75 : vector<256x32xf32> to vector<16x16x32xf32>
    %77 = arith.truncf %76 : vector<16x16x32xf32> to vector<16x16x32xbf16>
    %c1_50 = arith.constant 1 : index
    %c1_51 = arith.constant 1 : index
    %c0_52 = arith.constant 0 : index
    %78 = vector.load %arg6[%c1_50, %c1_51, %c0_52] : memref<18x18x32xbf16, #tpu.memory_space<vmem>>, vector<16x16x32xbf16>
    tpu.vector_store %arg6[%c1_50, %c1_51, %c0_52], %77 {strides = array<i32>} : memref<18x18x32xbf16, #tpu.memory_space<vmem>>, vector<16x16x32xbf16>,
    %c0_53 = arith.constant 0 : index
    %c0_54 = arith.constant 0 : index
    %c0_55 = arith.constant 0 : index
    %79 = vector.load %arg6[%c0_53, %c0_54, %c0_55] : memref<18x18x32xbf16, #tpu.memory_space<vmem>>, vector<18x18x32xbf16>
    %80 = vector.extract_strided_slice %79 {offsets = [0, 0, 0], sizes = [16, 16, 32], strides = [1, 1, 1]} : vector<18x18x32xbf16> to vector<16x16x32xbf16>
    %81 = vector.extract_strided_slice %79 {offsets = [0, 1, 0], sizes = [16, 16, 32], strides = [1, 1, 1]} : vector<18x18x32xbf16> to vector<16x16x32xbf16>
    %82 = vector.extract_strided_slice %79 {offsets = [0, 2, 0], sizes = [16, 16, 32], strides = [1, 1, 1]} : vector<18x18x32xbf16> to vector<16x16x32xbf16>
    %83 = vector.extract_strided_slice %79 {offsets = [1, 0, 0], sizes = [16, 16, 32], strides = [1, 1, 1]} : vector<18x18x32xbf16> to vector<16x16x32xbf16>
    %84 = vector.extract_strided_slice %79 {offsets = [1, 1, 0], sizes = [16, 16, 32], strides = [1, 1, 1]} : vector<18x18x32xbf16> to vector<16x16x32xbf16>
    %85 = vector.extract_strided_slice %79 {offsets = [1, 2, 0], sizes = [16, 16, 32], strides = [1, 1, 1]} : vector<18x18x32xbf16> to vector<16x16x32xbf16>
    %86 = vector.extract_strided_slice %79 {offsets = [2, 0, 0], sizes = [16, 16, 32], strides = [1, 1, 1]} : vector<18x18x32xbf16> to vector<16x16x32xbf16>
    %87 = vector.extract_strided_slice %79 {offsets = [2, 1, 0], sizes = [16, 16, 32], strides = [1, 1, 1]} : vector<18x18x32xbf16> to vector<16x16x32xbf16>
    %88 = vector.extract_strided_slice %79 {offsets = [2, 2, 0], sizes = [16, 16, 32], strides = [1, 1, 1]} : vector<18x18x32xbf16> to vector<16x16x32xbf16>
    %89 = tpu.concatenate %80, %81, %82, %83, %84, %85, %86, %87, %88 in 2 : vector<16x16x32xbf16>, vector<16x16x32xbf16>, vector<16x16x32xbf16>, vector<16x16x32xbf16>, vector<16x16x32xbf16>, vector<16x16x32xbf16>, vector<16x16x32xbf16>, vector<16x16x32xbf16>, vector<16x16x32xbf16> -> vector<16x16x288xbf16>
    %90 = vector.shape_cast %89 : vector<16x16x288xbf16> to vector<256x288xbf16>
    %c3 = arith.constant 3 : index
    %c0_56 = arith.constant 0 : index
    %c0_57 = arith.constant 0 : index
    %91 = vector.load %arg2[%c3, %c0_56, %c0_57] : memref<5x288x32xbf16, #tpu.memory_space<vmem>>, vector<1x288x32xbf16>
    %92 = vector.shape_cast %91 : vector<1x288x32xbf16> to vector<288x32xbf16>
    %cst_58 = arith.constant dense<0.000000e+00> : vector<256x32xf32>
    %93 = tpu.matmul %90, %92, %cst_58 {dimension_numbers = #tpu.dot_dimension_numbers<[1], [0], [0], [1], [0, 0, 1, 1], [], []>} : vector<256x288xbf16>, vector<288x32xbf16>, vector<256x32xf32> -> vector<256x32xf32>
    %c3_59 = arith.constant 3 : index
    %c0_60 = arith.constant 0 : index
    %c0_61 = arith.constant 0 : index
    %94 = vector.load %arg3[%c3_59, %c0_60, %c0_61] : memref<5x1x32xf32, #tpu.memory_space<vmem>>, vector<1x1x32xf32>
    %95 = vector.shape_cast %94 : vector<1x1x32xf32> to vector<1x32xf32>
    %96 = vector.broadcast %95 : vector<1x32xf32> to vector<256x32xf32>
    %97 = arith.addf %93, %96 : vector<256x32xf32>
    %cst_62 = arith.constant 0.000000e+00 : f32
    %98 = vector.broadcast %cst_62 : f32 to vector<256x32xf32>
    %99 = arith.maximumf %97, %98 : vector<256x32xf32>
    %100 = vector.shape_cast %99 : vector<256x32xf32> to vector<16x16x32xf32>
    %101 = arith.truncf %100 : vector<16x16x32xf32> to vector<16x16x32xbf16>
    %c1_63 = arith.constant 1 : index
    %c1_64 = arith.constant 1 : index
    %c0_65 = arith.constant 0 : index
    %102 = vector.load %arg5[%c1_63, %c1_64, %c0_65] : memref<18x18x32xbf16, #tpu.memory_space<vmem>>, vector<16x16x32xbf16>
    tpu.vector_store %arg5[%c1_63, %c1_64, %c0_65], %101 {strides = array<i32>} : memref<18x18x32xbf16, #tpu.memory_space<vmem>>, vector<16x16x32xbf16>,
    %c0_66 = arith.constant 0 : index
    %c0_67 = arith.constant 0 : index
    %c0_68 = arith.constant 0 : index
    %103 = vector.load %arg5[%c0_66, %c0_67, %c0_68] : memref<18x18x32xbf16, #tpu.memory_space<vmem>>, vector<18x18x32xbf16>
    %104 = vector.extract_strided_slice %103 {offsets = [0, 0, 0], sizes = [16, 16, 32], strides = [1, 1, 1]} : vector<18x18x32xbf16> to vector<16x16x32xbf16>
    %105 = vector.extract_strided_slice %103 {offsets = [0, 1, 0], sizes = [16, 16, 32], strides = [1, 1, 1]} : vector<18x18x32xbf16> to vector<16x16x32xbf16>
    %106 = vector.extract_strided_slice %103 {offsets = [0, 2, 0], sizes = [16, 16, 32], strides = [1, 1, 1]} : vector<18x18x32xbf16> to vector<16x16x32xbf16>
    %107 = vector.extract_strided_slice %103 {offsets = [1, 0, 0], sizes = [16, 16, 32], strides = [1, 1, 1]} : vector<18x18x32xbf16> to vector<16x16x32xbf16>
    %108 = vector.extract_strided_slice %103 {offsets = [1, 1, 0], sizes = [16, 16, 32], strides = [1, 1, 1]} : vector<18x18x32xbf16> to vector<16x16x32xbf16>
    %109 = vector.extract_strided_slice %103 {offsets = [1, 2, 0], sizes = [16, 16, 32], strides = [1, 1, 1]} : vector<18x18x32xbf16> to vector<16x16x32xbf16>
    %110 = vector.extract_strided_slice %103 {offsets = [2, 0, 0], sizes = [16, 16, 32], strides = [1, 1, 1]} : vector<18x18x32xbf16> to vector<16x16x32xbf16>
    %111 = vector.extract_strided_slice %103 {offsets = [2, 1, 0], sizes = [16, 16, 32], strides = [1, 1, 1]} : vector<18x18x32xbf16> to vector<16x16x32xbf16>
    %112 = vector.extract_strided_slice %103 {offsets = [2, 2, 0], sizes = [16, 16, 32], strides = [1, 1, 1]} : vector<18x18x32xbf16> to vector<16x16x32xbf16>
    %113 = tpu.concatenate %104, %105, %106, %107, %108, %109, %110, %111, %112 in 2 : vector<16x16x32xbf16>, vector<16x16x32xbf16>, vector<16x16x32xbf16>, vector<16x16x32xbf16>, vector<16x16x32xbf16>, vector<16x16x32xbf16>, vector<16x16x32xbf16>, vector<16x16x32xbf16>, vector<16x16x32xbf16> -> vector<16x16x288xbf16>
    %114 = vector.shape_cast %113 : vector<16x16x288xbf16> to vector<256x288xbf16>
    %c4 = arith.constant 4 : index
    %c0_69 = arith.constant 0 : index
    %c0_70 = arith.constant 0 : index
    %115 = vector.load %arg2[%c4, %c0_69, %c0_70] : memref<5x288x32xbf16, #tpu.memory_space<vmem>>, vector<1x288x32xbf16>
    %116 = vector.shape_cast %115 : vector<1x288x32xbf16> to vector<288x32xbf16>
    %cst_71 = arith.constant dense<0.000000e+00> : vector<256x32xf32>
    %117 = tpu.matmul %114, %116, %cst_71 {dimension_numbers = #tpu.dot_dimension_numbers<[1], [0], [0], [1], [0, 0, 1, 1], [], []>} : vector<256x288xbf16>, vector<288x32xbf16>, vector<256x32xf32> -> vector<256x32xf32>
    %c4_72 = arith.constant 4 : index
    %c0_73 = arith.constant 0 : index
    %c0_74 = arith.constant 0 : index
    %118 = vector.load %arg3[%c4_72, %c0_73, %c0_74] : memref<5x1x32xf32, #tpu.memory_space<vmem>>, vector<1x1x32xf32>
    %119 = vector.shape_cast %118 : vector<1x1x32xf32> to vector<1x32xf32>
    %120 = vector.broadcast %119 : vector<1x32xf32> to vector<256x32xf32>
    %121 = arith.addf %117, %120 : vector<256x32xf32>
    %cst_75 = arith.constant 0.000000e+00 : f32
    %122 = vector.broadcast %cst_75 : f32 to vector<256x32xf32>
    %123 = arith.maximumf %121, %122 : vector<256x32xf32>
    %124 = vector.shape_cast %123 : vector<256x32xf32> to vector<16x16x32xf32>
    %c0_76 = arith.constant 0 : index
    %c0_77 = arith.constant 0 : index
    %c0_78 = arith.constant 0 : index
    %c0_79 = arith.constant 0 : index
    %125 = vector.load %arg4[%c0_76, %c0_77, %c0_78, %c0_79] : memref<1x16x16x32xf32, #tpu.memory_space<vmem>>, vector<1x16x16x32xf32>
    %126 = vector.shape_cast %125 : vector<1x16x16x32xf32> to vector<16x16x32xf32>
    %127 = vector.shape_cast %124 : vector<16x16x32xf32> to vector<1x16x16x32xf32>
    tpu.vector_store %arg4[%c0_76, %c0_77, %c0_78, %c0_79], %127 {strides = array<i32>} : memref<1x16x16x32xf32, #tpu.memory_space<vmem>>, vector<1x16x16x32xf32>,
    return
  }
  func.func @transform_0(%arg0: i32) -> (i32, i32, i32, i32) {
    %c0_i32 = arith.constant 0 : i32
    %c0_i32_0 = arith.constant 0 : i32
    %c0_i32_1 = arith.constant 0 : i32
    %c0_i32_2 = arith.constant 0 : i32
    return %arg0, %c0_i32, %c0_i32_0, %c0_i32_1 : i32, i32, i32, i32
  }
  func.func @transform_1(%arg0: i32) -> (i32, i32, i32) {
    %c0_i32 = arith.constant 0 : i32
    %c0_i32_0 = arith.constant 0 : i32
    %c0_i32_1 = arith.constant 0 : i32
    %c0_i32_2 = arith.constant 0 : i32
    return %c0_i32, %c0_i32_0, %c0_i32_1 : i32, i32, i32
  }
  func.func @transform_2(%arg0: i32) -> (i32, i32, i32) {
    %c0_i32 = arith.constant 0 : i32
    %c0_i32_0 = arith.constant 0 : i32
    %c0_i32_1 = arith.constant 0 : i32
    %c0_i32_2 = arith.constant 0 : i32
    return %c0_i32, %c0_i32_0, %c0_i32_1 : i32, i32, i32
  }
  func.func @transform_3(%arg0: i32) -> (i32, i32, i32, i32) {
    %c0_i32 = arith.constant 0 : i32
    %c0_i32_0 = arith.constant 0 : i32
    %c0_i32_1 = arith.constant 0 : i32
    %c0_i32_2 = arith.constant 0 : i32
    return %arg0, %c0_i32, %c0_i32_0, %c0_i32_1 : i32, i32, i32, i32
  }
}

</mosaic_0001>

<llo_original>
// kernel: fcn_forward.1
$region0: #{fcn_forward.1}
  #allocation0 [shape = 'u32[]', space=smem, size = 0x4, offset = 0x4, fixed_abs, tag = 'smem constant byte address 0x4 - core index']
  #allocation1 [shape = 'u32[144,128]{1,0:T(1,128)}', space=vmem, size = 0x12000, scoped, tag = 'internal scratch']
  #allocation2 [shape = 'bf16[18,18,32]{2,1,0:T(8,128)(2,1)}', space=vmem, size = 0x1b000, scoped, tag = 'scratch operand']
  #allocation3 [shape = 'bf16[18,18,32]{2,1,0:T(8,128)(2,1)}', space=vmem, size = 0x1b000, scoped, tag = 'scratch operand']
  %s0 = inlined_call_operand.vmem [shape: bf16[2,16,16,8], index: 0, kind: input, shape index: {}]
  %s1 = inlined_call_operand.vmem [shape: bf16[5,288,32], index: 1, kind: input, shape index: {}]
  %s2 = inlined_call_operand.vmem [shape: f32[5,1,32], index: 2, kind: input, shape index: {}]
  %s3 = inlined_call_operand.vmem [shape: f32[2,16,16,32], index: 3, kind: output, shape index: {}]
  %s4 = sld [smem:[#allocation0]]
  $region45: #{fcn_forward.1} parent=0
    _
  %s6 = ssub.s32 1, %s4
  %s7 = scalar_select 0, %s6, %s4
  loop: start=0, step=1, limit=4
  $region2: #{fcn_forward.1} parent=0 // loop_pre_header
    _
  $region3: #{fcn_forward.1} parent=0 // loop_header
    %s9 = sphi 0, %s13
    %p10 = scmp.ge.s32.totalorder %s9, 4
    %s19 = sphi 0, %s21
    %s22 = sphi 0, %s19
    %s23 = sphi 0, %s22
    %s39 = sphi 0, %s23
    %s43 = sphi 0, %s43
    %s45 = sphi 0, %s43
    %s46 = sphi 0, %s45
    %s60 = sphi 0, %s46
    %s64 = sphi 0, %s64
    %s66 = sphi 0, %s64
    %s67 = sphi 0, %s66
    %s81 = sphi 0, %s67
    %s87 = sphi 0, %s89
    %s90 = sphi 0, %s87
    %s91 = sphi 0, %s90
    %s107 = sphi 0, %s91
  $region4: #{fcn_forward.1} parent=0 // loop_header_branch
    %12 = sbr.rel (%p10) target = $region8
  $region5: #{fcn_forward.1} parent=0 // loop_body
    %s14 = ssub.s32 %s9, 1
    %s15 = ssub.s32 %s9, 2
    %s16 = sadd.s32 %s9, 1
    %s17 = ssub.s32 %s9, %s16
    %p18 = scmp.eq.s32.totalorder %s17, 0
    %s20 = sadd.s32 %s19, 1
    %s21 = scalar_select %p18, %s19, %s20
    %p24 = pneg %p18
    %p25 = scmp.eq.s32.totalorder %s9, 1
    %p26 = por %p24, %p25
    %p27 = scmp.ne.s32.totalorder %s19, %s22
    %p28 = scmp.eq.s32.totalorder %s9, 0
    %p29 = por %p27, %p28
    %p30 = scmp.ne.s32.totalorder %s19, %s22
    %p31 = scmp.eq.s32.totalorder %s14, 1
    %p32 = por %p30, %p31
    %p33 = scmp.ne.s32.totalorder %s22, %s23
    %p34 = scmp.eq.s32.totalorder %s14, 0
    %p35 = por %p33, %p34
    %p36 = scmp.ne.s32.totalorder %s22, %s23
    %p37 = scmp.eq.s32.totalorder %s15, 1
    %p38 = por %p36, %p37
    %p40 = scmp.ne.s32.totalorder %s23, %s39
    %p41 = scmp.eq.s32.totalorder %s15, 0
    %p42 = por %p40, %p41
    %s44 = sadd.s32 %s43, 1
    %p47 = scmp.eq.s32.totalorder %s9, 1
    %p48 = scmp.ne.s32.totalorder %s43, %s45
    %p49 = scmp.eq.s32.totalorder %s9, 0
    %p50 = por %p48, %p49
    %p51 = scmp.ne.s32.totalorder %s43, %s45
    %p52 = scmp.eq.s32.totalorder %s14, 1
    %p53 = por %p51, %p52
    %p54 = scmp.ne.s32.totalorder %s45, %s46
    %p55 = scmp.eq.s32.totalorder %s14, 0
    %p56 = por %p54, %p55
    %p57 = scmp.ne.s32.totalorder %s45, %s46
    %p58 = scmp.eq.s32.totalorder %s15, 1
    %p59 = por %p57, %p58
    %p61 = scmp.ne.s32.totalorder %s46, %s60
    %p62 = scmp.eq.s32.totalorder %s15, 0
    %p63 = por %p61, %p62
    %s65 = sadd.s32 %s64, 1
    %p68 = scmp.eq.s32.totalorder %s9, 1
    %p69 = scmp.ne.s32.totalorder %s64, %s66
    %p70 = scmp.eq.s32.totalorder %s9, 0
    %p71 = por %p69, %p70
    %p72 = scmp.ne.s32.totalorder %s64, %s66
    %p73 = scmp.eq.s32.totalorder %s14, 1
    %p74 = por %p72, %p73
    %p75 = scmp.ne.s32.totalorder %s66, %s67
    %p76 = scmp.eq.s32.totalorder %s14, 0
    %p77 = por %p75, %p76
    %p78 = scmp.ne.s32.totalorder %s66, %s67
    %p79 = scmp.eq.s32.totalorder %s15, 1
    %p80 = por %p78, %p79
    %p82 = scmp.ne.s32.totalorder %s67, %s81
    %p83 = scmp.eq.s32.totalorder %s15, 0
    %p84 = por %p82, %p83
    %s85 = ssub.s32 %s9, %s16
    %p86 = scmp.eq.s32.totalorder %s85, 0
    %s88 = sadd.s32 %s87, 1
    %s89 = scalar_select %p86, %s87, %s88
    %p92 = pneg %p86
    %p93 = scmp.eq.s32.totalorder %s9, 1
    %p94 = por %p92, %p93
    %p95 = scmp.ne.s32.totalorder %s87, %s90
    %p96 = scmp.eq.s32.totalorder %s9, 0
    %p97 = por %p95, %p96
    %p98 = scmp.ne.s32.totalorder %s87, %s90
    %p99 = scmp.eq.s32.totalorder %s14, 1
    %p100 = por %p98, %p99
    %p101 = scmp.ne.s32.totalorder %s90, %s91
    %p102 = scmp.eq.s32.totalorder %s14, 0
    %p103 = por %p101, %p102
    %p104 = scmp.ne.s32.totalorder %s90, %s91
    %p105 = scmp.eq.s32.totalorder %s15, 1
    %p106 = por %p104, %p105
    %p108 = scmp.ne.s32.totalorder %s91, %s107
    %p109 = scmp.eq.s32.totalorder %s15, 0
    %p110 = por %p108, %p109
    %p111 = scmp.le.s32.totalorder 1, %s9
    %p112 = scmp.lt.s32.totalorder %s9, 3
    %p113 = pnand %p111, %p112
    %p114 = pneg %p113
    // Predicated region
    $region9: #{fcn_forward.1} parent=5 // pred_check
      _
    $region10: #{fcn_forward.1} parent=5 // pred_check_branch
      %116 = sbr.rel (%p113) target = $region12
    $region11: #{fcn_forward.1} parent=5 // pred_region
      %s117 = ssub.s32 %s9, 1
      // Predicated region
      $region13: #{fcn_forward.1} parent=11 // pred_check
        %p118 = pneg %p56
      $region14: #{fcn_forward.1} parent=11 // pred_check_branch
        %120 = sbr.rel (%p118) target = $region16
      $region15: #{fcn_forward.1} parent=11 // pred_region
        _
      $region16: #{fcn_forward.1} parent=11 // pred_fallthru
        _
      // Predicated region
      $region17: #{fcn_forward.1} parent=11 // pred_check
        %p121 = pneg %p77
      $region18: #{fcn_forward.1} parent=11 // pred_check_branch
        %123 = sbr.rel (%p121) target = $region20
      $region19: #{fcn_forward.1} parent=11 // pred_region
        _
      $region20: #{fcn_forward.1} parent=11 // pred_fallthru
        _
    $region12: #{fcn_forward.1} parent=5 // pred_fallthru
      _
    %p124 = scmp.lt.s32.totalorder %s9, 2
    // Predicated region
    $region21: #{fcn_forward.1} parent=5 // pred_check
      %p125 = pneg %p124
    $region22: #{fcn_forward.1} parent=5 // pred_check_branch
      %127 = sbr.rel (%p125) target = $region24
    $region23: #{fcn_forward.1} parent=5 // pred_region
      // Predicated region
      $region25: #{fcn_forward.1} parent=23 // pred_check
        %p128 = pneg %p29
      $region26: #{fcn_forward.1} parent=23 // pred_check_branch
        %130 = sbr.rel (%p128) target = $region28
      $region27: #{fcn_forward.1} parent=23 // pred_region
        %p131 = scmp.lt.s32.totalorder %s9, 1
        %s132 = scalar_select %p131, %s9, 1
        %s133 = smul.addr %s132, 32
        %s134 = smul.addr %s133, 4
        %s135 = scalar_lea.vmem %s0, %s134
      $region28: #{fcn_forward.1} parent=23 // pred_fallthru
        _
    $region24: #{fcn_forward.1} parent=5 // pred_fallthru
      _
    %p136 = scmp.le.s32.totalorder 1, %s9
    %p137 = scmp.lt.s32.totalorder %s9, 3
    %p138 = pnand %p136, %p137
    %p139 = pneg %p138
    // Predicated region
    $region29: #{fcn_forward.1} parent=5 // pred_check
      _
    $region30: #{fcn_forward.1} parent=5 // pred_check_branch
      %141 = sbr.rel (%p138) target = $region32
    $region31: #{fcn_forward.1} parent=5 // pred_region
      %s142 = ssub.s32 %s9, 1
      %p143 = scmp.lt.s32.totalorder %s14, 1
      %s144 = scalar_select %p143, %s14, 1
      %s145 = smul.addr %s144, 32
      %s146 = smul.addr %s145, 4
      %s147 = scalar_lea.vmem %s0, %s146
      %p148 = pneg %p35
      %p149 = pneg %p32
      %p150 = pneg %p56
      %p151 = pneg %p53
      %p152 = pneg %p77
      %p153 = pneg %p74
      %p154 = pneg %p103
      %p155 = pneg %p100
      %p156 = scmp.lt.s32.totalorder %s14, 1
      %s157 = scalar_select %p156, %s14, 1
      %s158 = smul.addr %s157, 32
      %s159 = smul.addr %s158, 8
      %s160 = scalar_lea.vmem %s3, %s159
      %p161 = scmp.lt.s32.totalorder %s14, 1
      %s162 = scalar_select %p161, %s14, 1
      %s163 = smul.addr %s162, 32
      %s164 = smul.addr %s163, 4
      %s165 = scalar_lea.vmem %s0, %s164
      %p166 = scmp.lt.s32.totalorder %s14, 1
      %s167 = scalar_select %p166, %s14, 1
      %s168 = smul.addr %s167, 32
      %s169 = smul.addr %s168, 8
      %s170 = scalar_lea.vmem %s3, %s169
      %vm172 = vcmask 257024
      %173 = vst.msk [vmem:[#allocation2] sm:$0xf] %vm172, 0
      %174 = vst.msk [vmem:[#allocation2 + $0x4] sm:$0xf] %vm172, 0
      %vm175 = vcmask 253952
      %176 = vst.msk [vmem:[#allocation2 + $0x8] sm:$0x1] %vm175, 0
      %177 = vst.msk [vmem:[#allocation2 + $0xc] sm:$0xf] %vm172, 0
      %178 = vst.msk [vmem:[#allocation2 + $0x10] sm:$0xf] %vm172, 0
      %179 = vst.msk [vmem:[#allocation2 + $0x14] sm:$0x1] %vm175, 0
      %180 = vst.msk [vmem:[#allocation2 + $0x18] sm:$0xf] %vm172, 0
      %181 = vst.msk [vmem:[#allocation2 + $0x1c] sm:$0xf] %vm172, 0
      %182 = vst.msk [vmem:[#allocation2 + $0x20] sm:$0x1] %vm175, 0
      %183 = vst.msk [vmem:[#allocation2 + $0x24] sm:$0xf] %vm172, 0
      %184 = vst.msk [vmem:[#allocation2 + $0x28] sm:$0xf] %vm172, 0
      %185 = vst.msk [vmem:[#allocation2 + $0x2c] sm:$0x1] %vm175, 0
      %186 = vst.msk [vmem:[#allocation2 + $0x30] sm:$0xf] %vm172, 0
      %187 = vst.msk [vmem:[#allocation2 + $0x34] sm:$0xf] %vm172, 0
      %188 = vst.msk [vmem:[#allocation2 + $0x38] sm:$0x1] %vm175, 0
      %189 = vst.msk [vmem:[#allocation2 + $0x3c] sm:$0xf] %vm172, 0
      %190 = vst.msk [vmem:[#allocation2 + $0x40] sm:$0xf] %vm172, 0
      %191 = vst.msk [vmem:[#allocation2 + $0x44] sm:$0x1] %vm175, 0
      %192 = vst.msk [vmem:[#allocation2 + $0x48] sm:$0xf] %vm172, 0
      %193 = vst.msk [vmem:[#allocation2 + $0x4c] sm:$0xf] %vm172, 0
      %194 = vst.msk [vmem:[#allocation2 + $0x50] sm:$0x1] %vm175, 0
      %195 = vst.msk [vmem:[#allocation2 + $0x54] sm:$0xf] %vm172, 0
      %196 = vst.msk [vmem:[#allocation2 + $0x58] sm:$0xf] %vm172, 0
      %197 = vst.msk [vmem:[#allocation2 + $0x5c] sm:$0x1] %vm175, 0
      %198 = vst.msk [vmem:[#allocation2 + $0x60] sm:$0xf] %vm172, 0
      %199 = vst.msk [vmem:[#allocation2 + $0x64] sm:$0xf] %vm172, 0
      %200 = vst.msk [vmem:[#allocation2 + $0x68] sm:$0x1] %vm175, 0
      %201 = vst.msk [vmem:[#allocation2 + $0x6c] sm:$0xf] %vm172, 0
      %202 = vst.msk [vmem:[#allocation2 + $0x70] sm:$0xf] %vm172, 0
      %203 = vst.msk [vmem:[#allocation2 + $0x74] sm:$0x1] %vm175, 0
      %204 = vst.msk [vmem:[#allocation2 + $0x78] sm:$0xf] %vm172, 0
      %205 = vst.msk [vmem:[#allocation2 + $0x7c] sm:$0xf] %vm172, 0
      %206 = vst.msk [vmem:[#allocation2 + $0x80] sm:$0x1] %vm175, 0
      %207 = vst.msk [vmem:[#allocation2 + $0x84] sm:$0xf] %vm172, 0
      %208 = vst.msk [vmem:[#allocation2 + $0x88] sm:$0xf] %vm172, 0
      %209 = vst.msk [vmem:[#allocation2 + $0x8c] sm:$0x1] %vm175, 0
      %210 = vst.msk [vmem:[#allocation2 + $0x90] sm:$0xf] %vm172, 0
      %211 = vst.msk [vmem:[#allocation2 + $0x94] sm:$0xf] %vm172, 0
      %212 = vst.msk [vmem:[#allocation2 + $0x98] sm:$0x1] %vm175, 0
      %213 = vst.msk [vmem:[#allocation2 + $0x9c] sm:$0xf] %vm172, 0
      %214 = vst.msk [vmem:[#allocation2 + $0xa0] sm:$0xf] %vm172, 0
      %215 = vst.msk [vmem:[#allocation2 + $0xa4] sm:$0x1] %vm175, 0
      %216 = vst.msk [vmem:[#allocation2 + $0xa8] sm:$0xf] %vm172, 0
      %217 = vst.msk [vmem:[#allocation2 + $0xac] sm:$0xf] %vm172, 0
      %218 = vst.msk [vmem:[#allocation2 + $0xb0] sm:$0x1] %vm175, 0
      %219 = vst.msk [vmem:[#allocation2 + $0xb4] sm:$0xf] %vm172, 0
      %220 = vst.msk [vmem:[#allocation2 + $0xb8] sm:$0xf] %vm172, 0
      %221 = vst.msk [vmem:[#allocation2 + $0xbc] sm:$0x1] %vm175, 0
      %222 = vst.msk [vmem:[#allocation2 + $0xc0] sm:$0xf] %vm172, 0
      %223 = vst.msk [vmem:[#allocation2 + $0xc4] sm:$0xf] %vm172, 0
      %224 = vst.msk [vmem:[#allocation2 + $0xc8] sm:$0x1] %vm175, 0
      %225 = vst.msk [vmem:[#allocation2 + $0xcc] sm:$0xf] %vm172, 0
      %226 = vst.msk [vmem:[#allocation2 + $0xd0] sm:$0xf] %vm172, 0
      %227 = vst.msk [vmem:[#allocation2 + $0xd4] sm:$0x1] %vm175, 0
      %228 = vst.msk [vmem:[#allocation3] sm:$0xf] %vm172, 0
      %229 = vst.msk [vmem:[#allocation3 + $0x4] sm:$0xf] %vm172, 0
      %230 = vst.msk [vmem:[#allocation3 + $0x8] sm:$0x1] %vm175, 0
      %231 = vst.msk [vmem:[#allocation3 + $0xc] sm:$0xf] %vm172, 0
      %232 = vst.msk [vmem:[#allocation3 + $0x10] sm:$0xf] %vm172, 0
      %233 = vst.msk [vmem:[#allocation3 + $0x14] sm:$0x1] %vm175, 0
      %234 = vst.msk [vmem:[#allocation3 + $0x18] sm:$0xf] %vm172, 0
      %235 = vst.msk [vmem:[#allocation3 + $0x1c] sm:$0xf] %vm172, 0
      %236 = vst.msk [vmem:[#allocation3 + $0x20] sm:$0x1] %vm175, 0
      %237 = vst.msk [vmem:[#allocation3 + $0x24] sm:$0xf] %vm172, 0
      %238 = vst.msk [vmem:[#allocation3 + $0x28] sm:$0xf] %vm172, 0
      %239 = vst.msk [vmem:[#allocation3 + $0x2c] sm:$0x1] %vm175, 0
      %240 = vst.msk [vmem:[#allocation3 + $0x30] sm:$0xf] %vm172, 0
      %241 = vst.msk [vmem:[#allocation3 + $0x34] sm:$0xf] %vm172, 0
      %242 = vst.msk [vmem:[#allocation3 + $0x38] sm:$0x1] %vm175, 0
      %243 = vst.msk [vmem:[#allocation3 + $0x3c] sm:$0xf] %vm172, 0
      %244 = vst.msk [vmem:[#allocation3 + $0x40] sm:$0xf] %vm172, 0
      %245 = vst.msk [vmem:[#allocation3 + $0x44] sm:$0x1] %vm175, 0
      %246 = vst.msk [vmem:[#allocation3 + $0x48] sm:$0xf] %vm172, 0
      %247 = vst.msk [vmem:[#allocation3 + $0x4c] sm:$0xf] %vm172, 0
      %248 = vst.msk [vmem:[#allocation3 + $0x50] sm:$0x1] %vm175, 0
      %249 = vst.msk [vmem:[#allocation3 + $0x54] sm:$0xf] %vm172, 0
      %250 = vst.msk [vmem:[#allocation3 + $0x58] sm:$0xf] %vm172, 0
      %251 = vst.msk [vmem:[#allocation3 + $0x5c] sm:$0x1] %vm175, 0
      %252 = vst.msk [vmem:[#allocation3 + $0x60] sm:$0xf] %vm172, 0
      %253 = vst.msk [vmem:[#allocation3 + $0x64] sm:$0xf] %vm172, 0
      %254 = vst.msk [vmem:[#allocation3 + $0x68] sm:$0x1] %vm175, 0
      %255 = vst.msk [vmem:[#allocation3 + $0x6c] sm:$0xf] %vm172, 0
      %256 = vst.msk [vmem:[#allocation3 + $0x70] sm:$0xf] %vm172, 0
      %257 = vst.msk [vmem:[#allocation3 + $0x74] sm:$0x1] %vm175, 0
      %258 = vst.msk [vmem:[#allocation3 + $0x78] sm:$0xf] %vm172, 0
      %259 = vst.msk [vmem:[#allocation3 + $0x7c] sm:$0xf] %vm172, 0
      %260 = vst.msk [vmem:[#allocation3 + $0x80] sm:$0x1] %vm175, 0
      %261 = vst.msk [vmem:[#allocation3 + $0x84] sm:$0xf] %vm172, 0
      %262 = vst.msk [vmem:[#allocation3 + $0x88] sm:$0xf] %vm172, 0
      %263 = vst.msk [vmem:[#allocation3 + $0x8c] sm:$0x1] %vm175, 0
      %264 = vst.msk [vmem:[#allocation3 + $0x90] sm:$0xf] %vm172, 0
      %265 = vst.msk [vmem:[#allocation3 + $0x94] sm:$0xf] %vm172, 0
      %266 = vst.msk [vmem:[#allocation3 + $0x98] sm:$0x1] %vm175, 0
      %267 = vst.msk [vmem:[#allocation3 + $0x9c] sm:$0xf] %vm172, 0
      %268 = vst.msk [vmem:[#allocation3 + $0xa0] sm:$0xf] %vm172, 0
      %269 = vst.msk [vmem:[#allocation3 + $0xa4] sm:$0x1] %vm175, 0
      %270 = vst.msk [vmem:[#allocation3 + $0xa8] sm:$0xf] %vm172, 0
      %271 = vst.msk [vmem:[#allocation3 + $0xac] sm:$0xf] %vm172, 0
      %272 = vst.msk [vmem:[#allocation3 + $0xb0] sm:$0x1] %vm175, 0
      %273 = vst.msk [vmem:[#allocation3 + $0xb4] sm:$0xf] %vm172, 0
      %274 = vst.msk [vmem:[#allocation3 + $0xb8] sm:$0xf] %vm172, 0
      %275 = vst.msk [vmem:[#allocation3 + $0xbc] sm:$0x1] %vm175, 0
      %276 = vst.msk [vmem:[#allocation3 + $0xc0] sm:$0xf] %vm172, 0
      %277 = vst.msk [vmem:[#allocation3 + $0xc4] sm:$0xf] %vm172, 0
      %278 = vst.msk [vmem:[#allocation3 + $0xc8] sm:$0x1] %vm175, 0
      %279 = vst.msk [vmem:[#allocation3 + $0xcc] sm:$0xf] %vm172, 0
      %280 = vst.msk [vmem:[#allocation3 + $0xd0] sm:$0xf] %vm172, 0
      %281 = vst.msk [vmem:[#allocation3 + $0xd4] sm:$0x1] %vm175, 0
      %v282 = vld [vmem:[%s165] sm:$0xf]
      %v283 = vld [vmem:[%s165 + $0x4] sm:$0xf]
      %v284 = vld [vmem:[%s165 + $0x8] sm:$0xf]
      %v285 = vld [vmem:[%s165 + $0xc] sm:$0xf]
      %v286 = vld [vmem:[%s165 + $0x10] sm:$0xf]
      %v287 = vld [vmem:[%s165 + $0x14] sm:$0xf]
      %v288 = vld [vmem:[%s165 + $0x18] sm:$0xf]
      %v289 = vld [vmem:[%s165 + $0x1c] sm:$0xf]
      %v290 = vld [vmem:[%s165 + $0x20] sm:$0xf]
      %v291 = vld [vmem:[%s165 + $0x24] sm:$0xf]
      %v292 = vld [vmem:[%s165 + $0x28] sm:$0xf]
      %v293 = vld [vmem:[%s165 + $0x2c] sm:$0xf]
      %v294 = vld [vmem:[%s165 + $0x30] sm:$0xf]
      %v295 = vld [vmem:[%s165 + $0x34] sm:$0xf]
      %v296 = vld [vmem:[%s165 + $0x38] sm:$0xf]
      %v297 = vld [vmem:[%s165 + $0x3c] sm:$0xf]
      %v298 = vld [vmem:[%s165 + $0x40] sm:$0xf]
      %v299 = vld [vmem:[%s165 + $0x44] sm:$0xf]
      %v300 = vld [vmem:[%s165 + $0x48] sm:$0xf]
      %v301 = vld [vmem:[%s165 + $0x4c] sm:$0xf]
      %v302 = vld [vmem:[%s165 + $0x50] sm:$0xf]
      %v303 = vld [vmem:[%s165 + $0x54] sm:$0xf]
      %v304 = vld [vmem:[%s165 + $0x58] sm:$0xf]
      %v305 = vld [vmem:[%s165 + $0x5c] sm:$0xf]
      %v306 = vld [vmem:[%s165 + $0x60] sm:$0xf]
      %v307 = vld [vmem:[%s165 + $0x64] sm:$0xf]
      %v308 = vld [vmem:[%s165 + $0x68] sm:$0xf]
      %v309 = vld [vmem:[%s165 + $0x6c] sm:$0xf]
      %v310 = vld [vmem:[%s165 + $0x70] sm:$0xf]
      %v311 = vld [vmem:[%s165 + $0x74] sm:$0xf]
      %v312 = vld [vmem:[%s165 + $0x78] sm:$0xf]
      %v313 = vld [vmem:[%s165 + $0x7c] sm:$0xf]
      %vm314 = vsmask.f32 256
      %vm315 = vsmask.f32 4368
      %vm316 = vmor %vm314, %vm315
      %v318 = vshrl.u32 %v282, 16
      %v320 = vrot.slane %v318, 7
      %v321 = vshll.u32 %v282, 16
      %v323 = vor.u32 %v320, %v321
      %v324 = vrot.slane %v320, 4
      %v326 = vshrl.u32 %v283, 16
      %v328 = vrot.slane %v326, 7
      %v329 = vshll.u32 %v283, 16
      %v331 = vor.u32 %v328, %v329
      %v332 = vsel %vm316, %v324, %v331
      %v333 = vrot.slane %v328, 4
      %v335 = vshrl.u32 %v284, 16
      %v337 = vrot.slane %v335, 7
      %v338 = vshll.u32 %v284, 16
      %v340 = vor.u32 %v337, %v338
      %v341 = vrot.slane %v337, 4
      %v343 = vshrl.u32 %v285, 16
      %v345 = vrot.slane %v343, 7
      %v346 = vshll.u32 %v285, 16
      %v348 = vor.u32 %v345, %v346
      %v349 = vsel %vm316, %v341, %v348
      %v350 = vrot.slane %v345, 4
      %v352 = vshrl.u32 %v286, 16
      %v354 = vrot.slane %v352, 7
      %v355 = vshll.u32 %v286, 16
      %v357 = vor.u32 %v354, %v355
      %v358 = vrot.slane %v354, 4
      %v360 = vshrl.u32 %v287, 16
      %v362 = vrot.slane %v360, 7
      %v363 = vshll.u32 %v287, 16
      %v365 = vor.u32 %v362, %v363
      %v366 = vsel %vm316, %v358, %v365
      %v367 = vrot.slane %v362, 4
      %v369 = vshrl.u32 %v288, 16
      %v371 = vrot.slane %v369, 7
      %v372 = vshll.u32 %v288, 16
      %v374 = vor.u32 %v371, %v372
      %v375 = vrot.slane %v371, 4
      %v377 = vshrl.u32 %v289, 16
      %v379 = vrot.slane %v377, 7
      %v380 = vshll.u32 %v289, 16
      %v382 = vor.u32 %v379, %v380
      %v383 = vsel %vm316, %v375, %v382
      %v384 = vrot.slane %v379, 4
      %v386 = vshrl.u32 %v290, 16
      %v388 = vrot.slane %v386, 7
      %v389 = vshll.u32 %v290, 16
      %v391 = vor.u32 %v388, %v389
      %v392 = vrot.slane %v388, 4
      %v394 = vshrl.u32 %v291, 16
      %v396 = vrot.slane %v394, 7
      %v397 = vshll.u32 %v291, 16
      %v399 = vor.u32 %v396, %v397
      %v400 = vsel %vm316, %v392, %v399
      %v401 = vrot.slane %v396, 4
      %v403 = vshrl.u32 %v292, 16
      %v405 = vrot.slane %v403, 7
      %v406 = vshll.u32 %v292, 16
      %v408 = vor.u32 %v405, %v406
      %v409 = vrot.slane %v405, 4
      %v411 = vshrl.u32 %v293, 16
      %v413 = vrot.slane %v411, 7
      %v414 = vshll.u32 %v293, 16
      %v416 = vor.u32 %v413, %v414
      %v417 = vsel %vm316, %v409, %v416
      %v418 = vrot.slane %v413, 4
      %v420 = vshrl.u32 %v294, 16
      %v422 = vrot.slane %v420, 7
      %v423 = vshll.u32 %v294, 16
      %v425 = vor.u32 %v422, %v423
      %v426 = vrot.slane %v422, 4
      %v428 = vshrl.u32 %v295, 16
      %v430 = vrot.slane %v428, 7
      %v431 = vshll.u32 %v295, 16
      %v433 = vor.u32 %v430, %v431
      %v434 = vsel %vm316, %v426, %v433
      %v435 = vrot.slane %v430, 4
      %v437 = vshrl.u32 %v296, 16
      %v439 = vrot.slane %v437, 7
      %v440 = vshll.u32 %v296, 16
      %v442 = vor.u32 %v439, %v440
      %v443 = vrot.slane %v439, 4
      %v445 = vshrl.u32 %v297, 16
      %v447 = vrot.slane %v445, 7
      %v448 = vshll.u32 %v297, 16
      %v450 = vor.u32 %v447, %v448
      %v451 = vsel %vm316, %v443, %v450
      %v452 = vrot.slane %v447, 4
      %v454 = vshrl.u32 %v298, 16
      %v456 = vrot.slane %v454, 7
      %v457 = vshll.u32 %v298, 16
      %v459 = vor.u32 %v456, %v457
      %v460 = vrot.slane %v456, 4
      %v462 = vshrl.u32 %v299, 16
      %v464 = vrot.slane %v462, 7
      %v465 = vshll.u32 %v299, 16
      %v467 = vor.u32 %v464, %v465
      %v468 = vsel %vm316, %v460, %v467
      %v469 = vrot.slane %v464, 4
      %v471 = vshrl.u32 %v300, 16
      %v473 = vrot.slane %v471, 7
      %v474 = vshll.u32 %v300, 16
      %v476 = vor.u32 %v473, %v474
      %v477 = vrot.slane %v473, 4
      %v479 = vshrl.u32 %v301, 16
      %v481 = vrot.slane %v479, 7
      %v482 = vshll.u32 %v301, 16
      %v484 = vor.u32 %v481, %v482
      %v485 = vsel %vm316, %v477, %v484
      %v486 = vrot.slane %v481, 4
      %v488 = vshrl.u32 %v302, 16
      %v490 = vrot.slane %v488, 7
      %v491 = vshll.u32 %v302, 16
      %v493 = vor.u32 %v490, %v491
      %v494 = vrot.slane %v490, 4
      %v496 = vshrl.u32 %v303, 16
      %v498 = vrot.slane %v496, 7
      %v499 = vshll.u32 %v303, 16
      %v501 = vor.u32 %v498, %v499
      %v502 = vsel %vm316, %v494, %v501
      %v503 = vrot.slane %v498, 4
      %v505 = vshrl.u32 %v304, 16
      %v507 = vrot.slane %v505, 7
      %v508 = vshll.u32 %v304, 16
      %v510 = vor.u32 %v507, %v508
      %v511 = vrot.slane %v507, 4
      %v513 = vshrl.u32 %v305, 16
      %v515 = vrot.slane %v513, 7
      %v516 = vshll.u32 %v305, 16
      %v518 = vor.u32 %v515, %v516
      %v519 = vsel %vm316, %v511, %v518
      %v520 = vrot.slane %v515, 4
      %v522 = vshrl.u32 %v306, 16
      %v524 = vrot.slane %v522, 7
      %v525 = vshll.u32 %v306, 16
      %v527 = vor.u32 %v524, %v525
      %v528 = vrot.slane %v524, 4
      %v530 = vshrl.u32 %v307, 16
      %v532 = vrot.slane %v530, 7
      %v533 = vshll.u32 %v307, 16
      %v535 = vor.u32 %v532, %v533
      %v536 = vsel %vm316, %v528, %v535
      %v537 = vrot.slane %v532, 4
      %v539 = vshrl.u32 %v308, 16
      %v541 = vrot.slane %v539, 7
      %v542 = vshll.u32 %v308, 16
      %v544 = vor.u32 %v541, %v542
      %v545 = vrot.slane %v541, 4
      %v547 = vshrl.u32 %v309, 16
      %v549 = vrot.slane %v547, 7
      %v550 = vshll.u32 %v309, 16
      %v552 = vor.u32 %v549, %v550
      %v553 = vsel %vm316, %v545, %v552
      %v554 = vrot.slane %v549, 4
      %v556 = vshrl.u32 %v310, 16
      %v558 = vrot.slane %v556, 7
      %v559 = vshll.u32 %v310, 16
      %v561 = vor.u32 %v558, %v559
      %v562 = vrot.slane %v558, 4
      %v564 = vshrl.u32 %v311, 16
      %v566 = vrot.slane %v564, 7
      %v567 = vshll.u32 %v311, 16
      %v569 = vor.u32 %v566, %v567
      %v570 = vsel %vm316, %v562, %v569
      %v571 = vrot.slane %v566, 4
      %v573 = vshrl.u32 %v312, 16
      %v575 = vrot.slane %v573, 7
      %v576 = vshll.u32 %v312, 16
      %v578 = vor.u32 %v575, %v576
      %v579 = vrot.slane %v575, 4
      %v581 = vshrl.u32 %v313, 16
      %v583 = vrot.slane %v581, 7
      %v584 = vshll.u32 %v313, 16
      %v586 = vor.u32 %v583, %v584
      %v587 = vsel %vm316, %v579, %v586
      %v588 = vrot.slane %v583, 4
      %s637 = scalar_lea.vmem [#allocation2], 12
      %vm638 = vcmask 60416
      %vm639 = vsmask.f32 7938
      %vm640 = vmand %vm638, %vm639
      %v641 = vld [vmem:[%s637] sm:$0xf]
      %v642 = vsel %vm640, %v323, %v641
      %643 = vst [vmem:[%s637] sm:$0xf] %v642
      %vm644 = vcmask 60416
      %645 = vst.msk [vmem:[%s637 + $0x4] sm:$0xf] %vm644, %v332
      %vm646 = vcmask 57344
      %vm647 = vmand %vm646, %vm314
      %v648 = vld [vmem:[%s637 + $0x8] sm:$0x1]
      %v649 = vsel %vm647, %v333, %v648
      %650 = vst [vmem:[%s637 + $0x8] sm:$0x1] %v649
      %v651 = vld [vmem:[%s637 + $0xc] sm:$0xf]
      %v652 = vsel %vm640, %v340, %v651
      %653 = vst [vmem:[%s637 + $0xc] sm:$0xf] %v652
      %654 = vst.msk [vmem:[%s637 + $0x10] sm:$0xf] %vm644, %v349
      %v655 = vld [vmem:[%s637 + $0x14] sm:$0x1]
      %v656 = vsel %vm647, %v350, %v655
      %657 = vst [vmem:[%s637 + $0x14] sm:$0x1] %v656
      %v658 = vld [vmem:[%s637 + $0x18] sm:$0xf]
      %v659 = vsel %vm640, %v357, %v658
      %660 = vst [vmem:[%s637 + $0x18] sm:$0xf] %v659
      %661 = vst.msk [vmem:[%s637 + $0x1c] sm:$0xf] %vm644, %v366
      %v662 = vld [vmem:[%s637 + $0x20] sm:$0x1]
      %v663 = vsel %vm647, %v367, %v662
      %664 = vst [vmem:[%s637 + $0x20] sm:$0x1] %v663
      %v665 = vld [vmem:[%s637 + $0x24] sm:$0xf]
      %v666 = vsel %vm640, %v374, %v665
      %667 = vst [vmem:[%s637 + $0x24] sm:$0xf] %v666
      %668 = vst.msk [vmem:[%s637 + $0x28] sm:$0xf] %vm644, %v383
      %v669 = vld [vmem:[%s637 + $0x2c] sm:$0x1]
      %v670 = vsel %vm647, %v384, %v669
      %671 = vst [vmem:[%s637 + $0x2c] sm:$0x1] %v670
      %v672 = vld [vmem:[%s637 + $0x30] sm:$0xf]
      %v673 = vsel %vm640, %v391, %v672
      %674 = vst [vmem:[%s637 + $0x30] sm:$0xf] %v673
      %675 = vst.msk [vmem:[%s637 + $0x34] sm:$0xf] %vm644, %v400
      %v676 = vld [vmem:[%s637 + $0x38] sm:$0x1]
      %v677 = vsel %vm647, %v401, %v676
      %678 = vst [vmem:[%s637 + $0x38] sm:$0x1] %v677
      %v679 = vld [vmem:[%s637 + $0x3c] sm:$0xf]
      %v680 = vsel %vm640, %v408, %v679
      %681 = vst [vmem:[%s637 + $0x3c] sm:$0xf] %v680
      %682 = vst.msk [vmem:[%s637 + $0x40] sm:$0xf] %vm644, %v417
      %v683 = vld [vmem:[%s637 + $0x44] sm:$0x1]
      %v684 = vsel %vm647, %v418, %v683
      %685 = vst [vmem:[%s637 + $0x44] sm:$0x1] %v684
      %v686 = vld [vmem:[%s637 + $0x48] sm:$0xf]
      %v687 = vsel %vm640, %v425, %v686
      %688 = vst [vmem:[%s637 + $0x48] sm:$0xf] %v687
      %689 = vst.msk [vmem:[%s637 + $0x4c] sm:$0xf] %vm644, %v434
      %v690 = vld [vmem:[%s637 + $0x50] sm:$0x1]
      %v691 = vsel %vm647, %v435, %v690
      %692 = vst [vmem:[%s637 + $0x50] sm:$0x1] %v691
      %v693 = vld [vmem:[%s637 + $0x54] sm:$0xf]
      %v694 = vsel %vm640, %v442, %v693
      %695 = vst [vmem:[%s637 + $0x54] sm:$0xf] %v694
      %696 = vst.msk [vmem:[%s637 + $0x58] sm:$0xf] %vm644, %v451
      %v697 = vld [vmem:[%s637 + $0x5c] sm:$0x1]
      %v698 = vsel %vm647, %v452, %v697
      %699 = vst [vmem:[%s637 + $0x5c] sm:$0x1] %v698
      %v700 = vld [vmem:[%s637 + $0x60] sm:$0xf]
      %v701 = vsel %vm640, %v459, %v700
      %702 = vst [vmem:[%s637 + $0x60] sm:$0xf] %v701
      %703 = vst.msk [vmem:[%s637 + $0x64] sm:$0xf] %vm644, %v468
      %v704 = vld [vmem:[%s637 + $0x68] sm:$0x1]
      %v705 = vsel %vm647, %v469, %v704
      %706 = vst [vmem:[%s637 + $0x68] sm:$0x1] %v705
      %v707 = vld [vmem:[%s637 + $0x6c] sm:$0xf]
      %v708 = vsel %vm640, %v476, %v707
      %709 = vst [vmem:[%s637 + $0x6c] sm:$0xf] %v708
      %710 = vst.msk [vmem:[%s637 + $0x70] sm:$0xf] %vm644, %v485
      %v711 = vld [vmem:[%s637 + $0x74] sm:$0x1]
      %v712 = vsel %vm647, %v486, %v711
      %713 = vst [vmem:[%s637 + $0x74] sm:$0x1] %v712
      %v714 = vld [vmem:[%s637 + $0x78] sm:$0xf]
      %v715 = vsel %vm640, %v493, %v714
      %716 = vst [vmem:[%s637 + $0x78] sm:$0xf] %v715
      %717 = vst.msk [vmem:[%s637 + $0x7c] sm:$0xf] %vm644, %v502
      %v718 = vld [vmem:[%s637 + $0x80] sm:$0x1]
      %v719 = vsel %vm647, %v503, %v718
      %720 = vst [vmem:[%s637 + $0x80] sm:$0x1] %v719
      %v721 = vld [vmem:[%s637 + $0x84] sm:$0xf]
      %v722 = vsel %vm640, %v510, %v721
      %723 = vst [vmem:[%s637 + $0x84] sm:$0xf] %v722
      %724 = vst.msk [vmem:[%s637 + $0x88] sm:$0xf] %vm644, %v519
      %v725 = vld [vmem:[%s637 + $0x8c] sm:$0x1]
      %v726 = vsel %vm647, %v520, %v725
      %727 = vst [vmem:[%s637 + $0x8c] sm:$0x1] %v726
      %v728 = vld [vmem:[%s637 + $0x90] sm:$0xf]
      %v729 = vsel %vm640, %v527, %v728
      %730 = vst [vmem:[%s637 + $0x90] sm:$0xf] %v729
      %731 = vst.msk [vmem:[%s637 + $0x94] sm:$0xf] %vm644, %v536
      %v732 = vld [vmem:[%s637 + $0x98] sm:$0x1]
      %v733 = vsel %vm647, %v537, %v732
      %734 = vst [vmem:[%s637 + $0x98] sm:$0x1] %v733
      %v735 = vld [vmem:[%s637 + $0x9c] sm:$0xf]
      %v736 = vsel %vm640, %v544, %v735
      %737 = vst [vmem:[%s637 + $0x9c] sm:$0xf] %v736
      %738 = vst.msk [vmem:[%s637 + $0xa0] sm:$0xf] %vm644, %v553
      %v739 = vld [vmem:[%s637 + $0xa4] sm:$0x1]
      %v740 = vsel %vm647, %v554, %v739
      %741 = vst [vmem:[%s637 + $0xa4] sm:$0x1] %v740
      %v742 = vld [vmem:[%s637 + $0xa8] sm:$0xf]
      %v743 = vsel %vm640, %v561, %v742
      %744 = vst [vmem:[%s637 + $0xa8] sm:$0xf] %v743
      %745 = vst.msk [vmem:[%s637 + $0xac] sm:$0xf] %vm644, %v570
      %v746 = vld [vmem:[%s637 + $0xb0] sm:$0x1]
      %v747 = vsel %vm647, %v571, %v746
      %748 = vst [vmem:[%s637 + $0xb0] sm:$0x1] %v747
      %v749 = vld [vmem:[%s637 + $0xb4] sm:$0xf]
      %v750 = vsel %vm640, %v578, %v749
      %751 = vst [vmem:[%s637 + $0xb4] sm:$0xf] %v750
      %752 = vst.msk [vmem:[%s637 + $0xb8] sm:$0xf] %vm644, %v587
      %v753 = vld [vmem:[%s637 + $0xbc] sm:$0x1]
      %v754 = vsel %vm647, %v588, %v753
      %755 = vst [vmem:[%s637 + $0xbc] sm:$0x1] %v754
      %v756 = vld [vmem:[#allocation2] sm:$0xf]
      %v757 = vld [vmem:[#allocation2 + $0x4] sm:$0xf]
      %v758 = vld [vmem:[#allocation2 + $0x8] sm:$0x1]
      %v759 = vld [vmem:[#allocation2 + $0xc] sm:$0xf]
      %v760 = vld [vmem:[#allocation2 + $0x10] sm:$0xf]
      %v761 = vld [vmem:[#allocation2 + $0x14] sm:$0x1]
      %v762 = vld [vmem:[#allocation2 + $0x18] sm:$0xf]
      %v763 = vld [vmem:[#allocation2 + $0x1c] sm:$0xf]
      %v764 = vld [vmem:[#allocation2 + $0x20] sm:$0x1]
      %v765 = vld [vmem:[#allocation2 + $0x24] sm:$0xf]
      %v766 = vld [vmem:[#allocation2 + $0x28] sm:$0xf]
      %v767 = vld [vmem:[#allocation2 + $0x2c] sm:$0x1]
      %v768 = vld [vmem:[#allocation2 + $0x30] sm:$0xf]
      %v769 = vld [vmem:[#allocation2 + $0x34] sm:$0xf]
      %v770 = vld [vmem:[#allocation2 + $0x38] sm:$0x1]
      %v771 = vld [vmem:[#allocation2 + $0x3c] sm:$0xf]
      %v772 = vld [vmem:[#allocation2 + $0x40] sm:$0xf]
      %v773 = vld [vmem:[#allocation2 + $0x44] sm:$0x1]
      %v774 = vld [vmem:[#allocation2 + $0x48] sm:$0xf]
      %v775 = vld [vmem:[#allocation2 + $0x4c] sm:$0xf]
      %v776 = vld [vmem:[#allocation2 + $0x50] sm:$0x1]
      %v777 = vld [vmem:[#allocation2 + $0x54] sm:$0xf]
      %v778 = vld [vmem:[#allocation2 + $0x58] sm:$0xf]
      %v779 = vld [vmem:[#allocation2 + $0x5c] sm:$0x1]
      %v780 = vld [vmem:[#allocation2 + $0x60] sm:$0xf]
      %v781 = vld [vmem:[#allocation2 + $0x64] sm:$0xf]
      %v782 = vld [vmem:[#allocation2 + $0x68] sm:$0x1]
      %v783 = vld [vmem:[#allocation2 + $0x6c] sm:$0xf]
      %v784 = vld [vmem:[#allocation2 + $0x70] sm:$0xf]
      %v785 = vld [vmem:[#allocation2 + $0x74] sm:$0x1]
      %v786 = vld [vmem:[#allocation2 + $0x78] sm:$0xf]
      %v787 = vld [vmem:[#allocation2 + $0x7c] sm:$0xf]
      %v788 = vld [vmem:[#allocation2 + $0x80] sm:$0x1]
      %v789 = vld [vmem:[#allocation2 + $0x84] sm:$0xf]
      %v790 = vld [vmem:[#allocation2 + $0x88] sm:$0xf]
      %v791 = vld [vmem:[#allocation2 + $0x8c] sm:$0x1]
      %v792 = vld [vmem:[#allocation2 + $0x90] sm:$0xf]
      %v793 = vld [vmem:[#allocation2 + $0x94] sm:$0xf]
      %v794 = vld [vmem:[#allocation2 + $0x98] sm:$0x1]
      %v795 = vld [vmem:[#allocation2 + $0x9c] sm:$0xf]
      %v796 = vld [vmem:[#allocation2 + $0xa0] sm:$0xf]
      %v797 = vld [vmem:[#allocation2 + $0xa4] sm:$0x1]
      %v798 = vld [vmem:[#allocation2 + $0xa8] sm:$0xf]
      %v799 = vld [vmem:[#allocation2 + $0xac] sm:$0xf]
      %v800 = vld [vmem:[#allocation2 + $0xb0] sm:$0x1]
      %v801 = vld [vmem:[#allocation2 + $0xb4] sm:$0xf]
      %v802 = vld [vmem:[#allocation2 + $0xb8] sm:$0xf]
      %v803 = vld [vmem:[#allocation2 + $0xbc] sm:$0x1]
      %v804 = vld [vmem:[#allocation2 + $0xc0] sm:$0xf]
      %v805 = vld [vmem:[#allocation2 + $0xc4] sm:$0xf]
      %v806 = vld [vmem:[#allocation2 + $0xc8] sm:$0x1]
      %v807 = vld [vmem:[#allocation2 + $0xcc] sm:$0xf]
      %v808 = vld [vmem:[#allocation2 + $0xd0] sm:$0xf]
      %v809 = vld [vmem:[#allocation2 + $0xd4] sm:$0x1]
      %v842 = vunpack.c.l.b16 %v756
      %v843 = vunpack.c.l.b16 %v757
      %v844 = vunpack.c.l.b16 %v759
      %v845 = vunpack.c.l.b16 %v760
      %v846 = vunpack.c.l.b16 %v762
      %v847 = vunpack.c.l.b16 %v763
      %v848 = vunpack.c.l.b16 %v765
      %v849 = vunpack.c.l.b16 %v766
      %v850 = vunpack.c.l.b16 %v768
      %v851 = vunpack.c.l.b16 %v769
      %v852 = vunpack.c.l.b16 %v771
      %v853 = vunpack.c.l.b16 %v772
      %v854 = vunpack.c.l.b16 %v774
      %v855 = vunpack.c.l.b16 %v775
      %v856 = vunpack.c.l.b16 %v777
      %v857 = vunpack.c.l.b16 %v778
      %v858 = vunpack.c.l.b16 %v780
      %v859 = vunpack.c.l.b16 %v781
      %v860 = vunpack.c.l.b16 %v783
      %v861 = vunpack.c.l.b16 %v784
      %v862 = vunpack.c.l.b16 %v786
      %v863 = vunpack.c.l.b16 %v787
      %v864 = vunpack.c.l.b16 %v789
      %v865 = vunpack.c.l.b16 %v790
      %v866 = vunpack.c.l.b16 %v792
      %v867 = vunpack.c.l.b16 %v793
      %v868 = vunpack.c.l.b16 %v795
      %v869 = vunpack.c.l.b16 %v796
      %v870 = vunpack.c.l.b16 %v798
      %v871 = vunpack.c.l.b16 %v799
      %v872 = vunpack.c.l.b16 %v801
      %v873 = vunpack.c.l.b16 %v802
      %v874 = vpack.c.b16 %v843, %v842
      %v875 = vpack.c.b16 %v845, %v844
      %v876 = vpack.c.b16 %v847, %v846
      %v877 = vpack.c.b16 %v849, %v848
      %v878 = vpack.c.b16 %v851, %v850
      %v879 = vpack.c.b16 %v853, %v852
      %v880 = vpack.c.b16 %v855, %v854
      %v881 = vpack.c.b16 %v857, %v856
      %v882 = vpack.c.b16 %v859, %v858
      %v883 = vpack.c.b16 %v861, %v860
      %v884 = vpack.c.b16 %v863, %v862
      %v885 = vpack.c.b16 %v865, %v864
      %v886 = vpack.c.b16 %v867, %v866
      %v887 = vpack.c.b16 %v869, %v868
      %v888 = vpack.c.b16 %v871, %v870
      %v889 = vpack.c.b16 %v873, %v872
      %v906 = vunpack.c.l.b16 %v758
      %v907 = vunpack.c.l.b16 %v761
      %v908 = vunpack.c.l.b16 %v764
      %v909 = vunpack.c.l.b16 %v767
      %v910 = vunpack.c.l.b16 %v770
      %v911 = vunpack.c.l.b16 %v773
      %v912 = vunpack.c.l.b16 %v776
      %v913 = vunpack.c.l.b16 %v779
      %v914 = vunpack.c.l.b16 %v782
      %v915 = vunpack.c.l.b16 %v785
      %v916 = vunpack.c.l.b16 %v788
      %v917 = vunpack.c.l.b16 %v791
      %v918 = vunpack.c.l.b16 %v794
      %v919 = vunpack.c.l.b16 %v797
      %v920 = vunpack.c.l.b16 %v800
      %v921 = vunpack.c.l.b16 %v803
      %v922 = vpack.c.b16 %v906, %v906
      %v923 = vpack.c.b16 %v907, %v907
      %v924 = vpack.c.b16 %v908, %v908
      %v925 = vpack.c.b16 %v909, %v909
      %v926 = vpack.c.b16 %v910, %v910
      %v927 = vpack.c.b16 %v911, %v911
      %v928 = vpack.c.b16 %v912, %v912
      %v929 = vpack.c.b16 %v913, %v913
      %v930 = vpack.c.b16 %v914, %v914
      %v931 = vpack.c.b16 %v915, %v915
      %v932 = vpack.c.b16 %v916, %v916
      %v933 = vpack.c.b16 %v917, %v917
      %v934 = vpack.c.b16 %v918, %v918
      %v935 = vpack.c.b16 %v919, %v919
      %v936 = vpack.c.b16 %v920, %v920
      %v937 = vpack.c.b16 %v921, %v921
      %vm938 = vsmask.f32 7424
      %v940 = vshrl.u32 %v874, 16
      %v942 = vshll.u32 %v874, 16
      %v944 = vrot.slane %v942, 1
      %v945 = vor.u32 %v940, %v944
      %v947 = vshll.u32 %v922, 16
      %v949 = vrot.slane %v947, 1
      %v950 = vsel %vm938, %v945, %v949
      %v952 = vshrl.u32 %v875, 16
      %v954 = vshll.u32 %v875, 16
      %v956 = vrot.slane %v954, 1
      %v957 = vor.u32 %v952, %v956
      %v959 = vshll.u32 %v923, 16
      %v961 = vrot.slane %v959, 1
      %v962 = vsel %vm938, %v957, %v961
      %v964 = vshrl.u32 %v876, 16
      %v966 = vshll.u32 %v876, 16
      %v968 = vrot.slane %v966, 1
      %v969 = vor.u32 %v964, %v968
      %v971 = vshll.u32 %v924, 16
      %v973 = vrot.slane %v971, 1
      %v974 = vsel %vm938, %v969, %v973
      %v976 = vshrl.u32 %v877, 16
      %v978 = vshll.u32 %v877, 16
      %v980 = vrot.slane %v978, 1
      %v981 = vor.u32 %v976, %v980
      %v983 = vshll.u32 %v925, 16
      %v985 = vrot.slane %v983, 1
      %v986 = vsel %vm938, %v981, %v985
      %v988 = vshrl.u32 %v878, 16
      %v990 = vshll.u32 %v878, 16
      %v992 = vrot.slane %v990, 1
      %v993 = vor.u32 %v988, %v992
      %v995 = vshll.u32 %v926, 16
      %v997 = vrot.slane %v995, 1
      %v998 = vsel %vm938, %v993, %v997
      %v1000 = vshrl.u32 %v879, 16
      %v1002 = vshll.u32 %v879, 16
      %v1004 = vrot.slane %v1002, 1
      %v1005 = vor.u32 %v1000, %v1004
      %v1007 = vshll.u32 %v927, 16
      %v1009 = vrot.slane %v1007, 1
      %v1010 = vsel %vm938, %v1005, %v1009
      %v1012 = vshrl.u32 %v880, 16
      %v1014 = vshll.u32 %v880, 16
      %v1016 = vrot.slane %v1014, 1
      %v1017 = vor.u32 %v1012, %v1016
      %v1019 = vshll.u32 %v928, 16
      %v1021 = vrot.slane %v1019, 1
      %v1022 = vsel %vm938, %v1017, %v1021
      %v1024 = vshrl.u32 %v881, 16
      %v1026 = vshll.u32 %v881, 16
      %v1028 = vrot.slane %v1026, 1
      %v1029 = vor.u32 %v1024, %v1028
      %v1031 = vshll.u32 %v929, 16
      %v1033 = vrot.slane %v1031, 1
      %v1034 = vsel %vm938, %v1029, %v1033
      %v1036 = vshrl.u32 %v882, 16
      %v1038 = vshll.u32 %v882, 16
      %v1040 = vrot.slane %v1038, 1
      %v1041 = vor.u32 %v1036, %v1040
      %v1043 = vshll.u32 %v930, 16
      %v1045 = vrot.slane %v1043, 1
      %v1046 = vsel %vm938, %v1041, %v1045
      %v1048 = vshrl.u32 %v883, 16
      %v1050 = vshll.u32 %v883, 16
      %v1052 = vrot.slane %v1050, 1
      %v1053 = vor.u32 %v1048, %v1052
      %v1055 = vshll.u32 %v931, 16
      %v1057 = vrot.slane %v1055, 1
      %v1058 = vsel %vm938, %v1053, %v1057
      %v1060 = vshrl.u32 %v884, 16
      %v1062 = vshll.u32 %v884, 16
      %v1064 = vrot.slane %v1062, 1
      %v1065 = vor.u32 %v1060, %v1064
      %v1067 = vshll.u32 %v932, 16
      %v1069 = vrot.slane %v1067, 1
      %v1070 = vsel %vm938, %v1065, %v1069
      %v1072 = vshrl.u32 %v885, 16
      %v1074 = vshll.u32 %v885, 16
      %v1076 = vrot.slane %v1074, 1
      %v1077 = vor.u32 %v1072, %v1076
      %v1079 = vshll.u32 %v933, 16
      %v1081 = vrot.slane %v1079, 1
      %v1082 = vsel %vm938, %v1077, %v1081
      %v1084 = vshrl.u32 %v886, 16
      %v1086 = vshll.u32 %v886, 16
      %v1088 = vrot.slane %v1086, 1
      %v1089 = vor.u32 %v1084, %v1088
      %v1091 = vshll.u32 %v934, 16
      %v1093 = vrot.slane %v1091, 1
      %v1094 = vsel %vm938, %v1089, %v1093
      %v1096 = vshrl.u32 %v887, 16
      %v1098 = vshll.u32 %v887, 16
      %v1100 = vrot.slane %v1098, 1
      %v1101 = vor.u32 %v1096, %v1100
      %v1103 = vshll.u32 %v935, 16
      %v1105 = vrot.slane %v1103, 1
      %v1106 = vsel %vm938, %v1101, %v1105
      %v1108 = vshrl.u32 %v888, 16
      %v1110 = vshll.u32 %v888, 16
      %v1112 = vrot.slane %v1110, 1
      %v1113 = vor.u32 %v1108, %v1112
      %v1115 = vshll.u32 %v936, 16
      %v1117 = vrot.slane %v1115, 1
      %v1118 = vsel %vm938, %v1113, %v1117
      %v1120 = vshrl.u32 %v889, 16
      %v1122 = vshll.u32 %v889, 16
      %v1124 = vrot.slane %v1122, 1
      %v1125 = vor.u32 %v1120, %v1124
      %v1127 = vshll.u32 %v937, 16
      %v1129 = vrot.slane %v1127, 1
      %v1130 = vsel %vm938, %v1125, %v1129
      %1131 = vrot.lane.b32.xlu0 %v950, 32
      %v1132 = vpop.permute.xlu0 %1131
      %1133 = vrot.lane.b32.xlu0 %v962, 32
      %v1134 = vpop.permute.xlu0 %1133
      %1135 = vrot.lane.b32.xlu0 %v974, 32
      %v1136 = vpop.permute.xlu0 %1135
      %1137 = vrot.lane.b32.xlu0 %v986, 32
      %v1138 = vpop.permute.xlu0 %1137
      %1139 = vrot.lane.b32.xlu0 %v998, 32
      %v1140 = vpop.permute.xlu0 %1139
      %1141 = vrot.lane.b32.xlu0 %v1010, 32
      %v1142 = vpop.permute.xlu0 %1141
      %1143 = vrot.lane.b32.xlu0 %v1022, 32
      %v1144 = vpop.permute.xlu0 %1143
      %1145 = vrot.lane.b32.xlu0 %v1034, 32
      %v1146 = vpop.permute.xlu0 %1145
      %1147 = vrot.lane.b32.xlu0 %v1046, 32
      %v1148 = vpop.permute.xlu0 %1147
      %1149 = vrot.lane.b32.xlu0 %v1058, 32
      %v1150 = vpop.permute.xlu0 %1149
      %1151 = vrot.lane.b32.xlu0 %v1070, 32
      %v1152 = vpop.permute.xlu0 %1151
      %1153 = vrot.lane.b32.xlu0 %v1082, 32
      %v1154 = vpop.permute.xlu0 %1153
      %1155 = vrot.lane.b32.xlu0 %v1094, 32
      %v1156 = vpop.permute.xlu0 %1155
      %1157 = vrot.lane.b32.xlu0 %v1106, 32
      %v1158 = vpop.permute.xlu0 %1157
      %1159 = vrot.lane.b32.xlu0 %v1118, 32
      %v1160 = vpop.permute.xlu0 %1159
      %1161 = vrot.lane.b32.xlu0 %v1130, 32
      %v1162 = vpop.permute.xlu0 %1161
      %vm1163 = vcmask 1046528
      %v1164 = vrot.slane %v874, 1
      %v1165 = vrot.slane %v922, 1
      %v1166 = vsel %vm1163, %v1164, %v1165
      %v1167 = vrot.slane %v875, 1
      %v1168 = vrot.slane %v923, 1
      %v1169 = vsel %vm1163, %v1167, %v1168
      %v1170 = vrot.slane %v876, 1
      %v1171 = vrot.slane %v924, 1
      %v1172 = vsel %vm1163, %v1170, %v1171
      %v1173 = vrot.slane %v877, 1
      %v1174 = vrot.slane %v925, 1
      %v1175 = vsel %vm1163, %v1173, %v1174
      %v1176 = vrot.slane %v878, 1
      %v1177 = vrot.slane %v926, 1
      %v1178 = vsel %vm1163, %v1176, %v1177
      %v1179 = vrot.slane %v879, 1
      %v1180 = vrot.slane %v927, 1
      %v1181 = vsel %vm1163, %v1179, %v1180
      %v1182 = vrot.slane %v880, 1
      %v1183 = vrot.slane %v928, 1
      %v1184 = vsel %vm1163, %v1182, %v1183
      %v1185 = vrot.slane %v881, 1
      %v1186 = vrot.slane %v929, 1
      %v1187 = vsel %vm1163, %v1185, %v1186
      %v1188 = vrot.slane %v882, 1
      %v1189 = vrot.slane %v930, 1
      %v1190 = vsel %vm1163, %v1188, %v1189
      %v1191 = vrot.slane %v883, 1
      %v1192 = vrot.slane %v931, 1
      %v1193 = vsel %vm1163, %v1191, %v1192
      %v1194 = vrot.slane %v884, 1
      %v1195 = vrot.slane %v932, 1
      %v1196 = vsel %vm1163, %v1194, %v1195
      %v1197 = vrot.slane %v885, 1
      %v1198 = vrot.slane %v933, 1
      %v1199 = vsel %vm1163, %v1197, %v1198
      %v1200 = vrot.slane %v886, 1
      %v1201 = vrot.slane %v934, 1
      %v1202 = vsel %vm1163, %v1200, %v1201
      %v1203 = vrot.slane %v887, 1
      %v1204 = vrot.slane %v935, 1
      %v1205 = vsel %vm1163, %v1203, %v1204
      %v1206 = vrot.slane %v888, 1
      %v1207 = vrot.slane %v936, 1
      %v1208 = vsel %vm1163, %v1206, %v1207
      %v1209 = vrot.slane %v889, 1
      %v1210 = vrot.slane %v937, 1
      %v1211 = vsel %vm1163, %v1209, %v1210
      %1212 = vrot.lane.b32.xlu0 %v1166, 64
      %v1213 = vpop.permute.xlu0 %1212
      %1214 = vrot.lane.b32.xlu0 %v1169, 64
      %v1215 = vpop.permute.xlu0 %1214
      %1216 = vrot.lane.b32.xlu0 %v1172, 64
      %v1217 = vpop.permute.xlu0 %1216
      %1218 = vrot.lane.b32.xlu0 %v1175, 64
      %v1219 = vpop.permute.xlu0 %1218
      %1220 = vrot.lane.b32.xlu0 %v1178, 64
      %v1221 = vpop.permute.xlu0 %1220
      %1222 = vrot.lane.b32.xlu0 %v1181, 64
      %v1223 = vpop.permute.xlu0 %1222
      %1224 = vrot.lane.b32.xlu0 %v1184, 64
      %v1225 = vpop.permute.xlu0 %1224
      %1226 = vrot.lane.b32.xlu0 %v1187, 64
      %v1227 = vpop.permute.xlu0 %1226
      %1228 = vrot.lane.b32.xlu0 %v1190, 64
      %v1229 = vpop.permute.xlu0 %1228
      %1230 = vrot.lane.b32.xlu0 %v1193, 64
      %v1231 = vpop.permute.xlu0 %1230
      %1232 = vrot.lane.b32.xlu0 %v1196, 64
      %v1233 = vpop.permute.xlu0 %1232
      %1234 = vrot.lane.b32.xlu0 %v1199, 64
      %v1235 = vpop.permute.xlu0 %1234
      %1236 = vrot.lane.b32.xlu0 %v1202, 64
      %v1237 = vpop.permute.xlu0 %1236
      %1238 = vrot.lane.b32.xlu0 %v1205, 64
      %v1239 = vpop.permute.xlu0 %1238
      %1240 = vrot.lane.b32.xlu0 %v1208, 64
      %v1241 = vpop.permute.xlu0 %1240
      %1242 = vrot.lane.b32.xlu0 %v1211, 64
      %v1243 = vpop.permute.xlu0 %1242
      %v1246 = vunpack.c.l.b16 %v804
      %v1247 = vunpack.c.l.b16 %v805
      %v1248 = vpack.c.b16 %v1247, %v1246
      %1249 = vrot.lane.b32.xlu0 %v875, 96
      %v1250 = vpop.permute.xlu0 %1249
      %1251 = vrot.lane.b32.xlu0 %v876, 96
      %v1252 = vpop.permute.xlu0 %1251
      %1253 = vrot.lane.b32.xlu0 %v877, 96
      %v1254 = vpop.permute.xlu0 %1253
      %1255 = vrot.lane.b32.xlu0 %v878, 96
      %v1256 = vpop.permute.xlu0 %1255
      %1257 = vrot.lane.b32.xlu0 %v879, 96
      %v1258 = vpop.permute.xlu0 %1257
      %1259 = vrot.lane.b32.xlu0 %v880, 96
      %v1260 = vpop.permute.xlu0 %1259
      %1261 = vrot.lane.b32.xlu0 %v881, 96
      %v1262 = vpop.permute.xlu0 %1261
      %1263 = vrot.lane.b32.xlu0 %v882, 96
      %v1264 = vpop.permute.xlu0 %1263
      %1265 = vrot.lane.b32.xlu0 %v883, 96
      %v1266 = vpop.permute.xlu0 %1265
      %1267 = vrot.lane.b32.xlu0 %v884, 96
      %v1268 = vpop.permute.xlu0 %1267
      %1269 = vrot.lane.b32.xlu0 %v885, 96
      %v1270 = vpop.permute.xlu0 %1269
      %1271 = vrot.lane.b32.xlu0 %v886, 96
      %v1272 = vpop.permute.xlu0 %1271
      %1273 = vrot.lane.b32.xlu0 %v887, 96
      %v1274 = vpop.permute.xlu0 %1273
      %1275 = vrot.lane.b32.xlu0 %v888, 96
      %v1276 = vpop.permute.xlu0 %1275
      %1277 = vrot.lane.b32.xlu0 %v889, 96
      %v1278 = vpop.permute.xlu0 %1277
      %1279 = vrot.lane.b32.xlu0 %v1248, 96
      %v1280 = vpop.permute.xlu0 %1279
      %v1282 = vunpack.c.l.b16 %v806
      %v1283 = vpack.c.b16 %v1282, %v1282
      %v1285 = vshrl.u32 %v1248, 16
      %v1287 = vshll.u32 %v1248, 16
      %v1289 = vrot.slane %v1287, 1
      %v1290 = vor.u32 %v1285, %v1289
      %v1292 = vshll.u32 %v1283, 16
      %v1294 = vrot.slane %v1292, 1
      %v1295 = vsel %vm938, %v1290, %v1294
      %v1296 = vrot.slane %v1248, 1
      %v1297 = vrot.slane %v1283, 1
      %v1298 = vsel %vm1163, %v1296, %v1297
      %1299 = vrot.lane.b32.xlu0 %v1169, 32
      %v1300 = vpop.permute.xlu0 %1299
      %1301 = vrot.lane.b32.xlu0 %v1172, 32
      %v1302 = vpop.permute.xlu0 %1301
      %1303 = vrot.lane.b32.xlu0 %v1175, 32
      %v1304 = vpop.permute.xlu0 %1303
      %1305 = vrot.lane.b32.xlu0 %v1178, 32
      %v1306 = vpop.permute.xlu0 %1305
      %1307 = vrot.lane.b32.xlu0 %v1181, 32
      %v1308 = vpop.permute.xlu0 %1307
      %1309 = vrot.lane.b32.xlu0 %v1184, 32
      %v1310 = vpop.permute.xlu0 %1309
      %1311 = vrot.lane.b32.xlu0 %v1187, 32
      %v1312 = vpop.permute.xlu0 %1311
      %1313 = vrot.lane.b32.xlu0 %v1190, 32
      %v1314 = vpop.permute.xlu0 %1313
      %1315 = vrot.lane.b32.xlu0 %v1193, 32
      %v1316 = vpop.permute.xlu0 %1315
      %1317 = vrot.lane.b32.xlu0 %v1196, 32
      %v1318 = vpop.permute.xlu0 %1317
      %1319 = vrot.lane.b32.xlu0 %v1199, 32
      %v1320 = vpop.permute.xlu0 %1319
      %1321 = vrot.lane.b32.xlu0 %v1202, 32
      %v1322 = vpop.permute.xlu0 %1321
      %1323 = vrot.lane.b32.xlu0 %v1205, 32
      %v1324 = vpop.permute.xlu0 %1323
      %1325 = vrot.lane.b32.xlu0 %v1208, 32
      %v1326 = vpop.permute.xlu0 %1325
      %1327 = vrot.lane.b32.xlu0 %v1211, 32
      %v1328 = vpop.permute.xlu0 %1327
      %1329 = vrot.lane.b32.xlu0 %v1298, 32
      %v1330 = vpop.permute.xlu0 %1329
      %v1333 = vunpack.c.l.b16 %v807
      %v1334 = vunpack.c.l.b16 %v808
      %v1335 = vpack.c.b16 %v1334, %v1333
      %1336 = vrot.lane.b32.xlu0 %v876, 64
      %v1337 = vpop.permute.xlu0 %1336
      %1338 = vrot.lane.b32.xlu0 %v877, 64
      %v1339 = vpop.permute.xlu0 %1338
      %1340 = vrot.lane.b32.xlu0 %v878, 64
      %v1341 = vpop.permute.xlu0 %1340
      %1342 = vrot.lane.b32.xlu0 %v879, 64
      %v1343 = vpop.permute.xlu0 %1342
      %1344 = vrot.lane.b32.xlu0 %v880, 64
      %v1345 = vpop.permute.xlu0 %1344
      %1346 = vrot.lane.b32.xlu0 %v881, 64
      %v1347 = vpop.permute.xlu0 %1346
      %1348 = vrot.lane.b32.xlu0 %v882, 64
      %v1349 = vpop.permute.xlu0 %1348
      %1350 = vrot.lane.b32.xlu0 %v883, 64
      %v1351 = vpop.permute.xlu0 %1350
      %1352 = vrot.lane.b32.xlu0 %v884, 64
      %v1353 = vpop.permute.xlu0 %1352
      %1354 = vrot.lane.b32.xlu0 %v885, 64
      %v1355 = vpop.permute.xlu0 %1354
      %1356 = vrot.lane.b32.xlu0 %v886, 64
      %v1357 = vpop.permute.xlu0 %1356
      %1358 = vrot.lane.b32.xlu0 %v887, 64
      %v1359 = vpop.permute.xlu0 %1358
      %1360 = vrot.lane.b32.xlu0 %v888, 64
      %v1361 = vpop.permute.xlu0 %1360
      %1362 = vrot.lane.b32.xlu0 %v889, 64
      %v1363 = vpop.permute.xlu0 %1362
      %1364 = vrot.lane.b32.xlu0 %v1248, 64
      %v1365 = vpop.permute.xlu0 %1364
      %1366 = vrot.lane.b32.xlu0 %v1335, 64
      %v1367 = vpop.permute.xlu0 %1366
      %v1369 = vunpack.c.l.b16 %v809
      %v1370 = vpack.c.b16 %v1369, %v1369
      %v1372 = vshrl.u32 %v1335, 16
      %v1374 = vshll.u32 %v1335, 16
      %v1376 = vrot.slane %v1374, 1
      %v1377 = vor.u32 %v1372, %v1376
      %v1379 = vshll.u32 %v1370, 16
      %v1381 = vrot.slane %v1379, 1
      %v1382 = vsel %vm938, %v1377, %v1381
      %1383 = vrot.lane.b32.xlu0 %v974, 96
      %v1384 = vpop.permute.xlu0 %1383
      %1385 = vrot.lane.b32.xlu0 %v986, 96
      %v1386 = vpop.permute.xlu0 %1385
      %1387 = vrot.lane.b32.xlu0 %v998, 96
      %v1388 = vpop.permute.xlu0 %1387
      %1389 = vrot.lane.b32.xlu0 %v1010, 96
      %v1390 = vpop.permute.xlu0 %1389
      %1391 = vrot.lane.b32.xlu0 %v1022, 96
      %v1392 = vpop.permute.xlu0 %1391
      %1393 = vrot.lane.b32.xlu0 %v1034, 96
      %v1394 = vpop.permute.xlu0 %1393
      %1395 = vrot.lane.b32.xlu0 %v1046, 96
      %v1396 = vpop.permute.xlu0 %1395
      %1397 = vrot.lane.b32.xlu0 %v1058, 96
      %v1398 = vpop.permute.xlu0 %1397
      %1399 = vrot.lane.b32.xlu0 %v1070, 96
      %v1400 = vpop.permute.xlu0 %1399
      %1401 = vrot.lane.b32.xlu0 %v1082, 96
      %v1402 = vpop.permute.xlu0 %1401
      %1403 = vrot.lane.b32.xlu0 %v1094, 96
      %v1404 = vpop.permute.xlu0 %1403
      %1405 = vrot.lane.b32.xlu0 %v1106, 96
      %v1406 = vpop.permute.xlu0 %1405
      %1407 = vrot.lane.b32.xlu0 %v1118, 96
      %v1408 = vpop.permute.xlu0 %1407
      %1409 = vrot.lane.b32.xlu0 %v1130, 96
      %v1410 = vpop.permute.xlu0 %1409
      %1411 = vrot.lane.b32.xlu0 %v1295, 96
      %v1412 = vpop.permute.xlu0 %1411
      %1413 = vrot.lane.b32.xlu0 %v1382, 96
      %v1414 = vpop.permute.xlu0 %1413
      %v1415 = vrot.slane %v1335, 1
      %v1416 = vrot.slane %v1370, 1
      %v1417 = vsel %vm1163, %v1415, %v1416
      %vm1418 = vcmask 261120
      %v1420 = vsel %vm1418, %v874, %v1132
      %v1422 = vsel %vm1418, %v875, %v1134
      %v1424 = vsel %vm1418, %v876, %v1136
      %v1426 = vsel %vm1418, %v877, %v1138
      %v1428 = vsel %vm1418, %v878, %v1140
      %v1430 = vsel %vm1418, %v879, %v1142
      %v1432 = vsel %vm1418, %v880, %v1144
      %v1434 = vsel %vm1418, %v881, %v1146
      %v1436 = vsel %vm1418, %v882, %v1148
      %v1438 = vsel %vm1418, %v883, %v1150
      %v1440 = vsel %vm1418, %v884, %v1152
      %v1442 = vsel %vm1418, %v885, %v1154
      %v1444 = vsel %vm1418, %v886, %v1156
      %v1446 = vsel %vm1418, %v887, %v1158
      %v1448 = vsel %vm1418, %v888, %v1160
      %v1450 = vsel %vm1418, %v889, %v1162
      %vm1451 = vcmask 523264
      %v1453 = vsel %vm1451, %v1420, %v1213
      %v1455 = vsel %vm1451, %v1422, %v1215
      %v1457 = vsel %vm1451, %v1424, %v1217
      %v1459 = vsel %vm1451, %v1426, %v1219
      %v1461 = vsel %vm1451, %v1428, %v1221
      %v1463 = vsel %vm1451, %v1430, %v1223
      %v1465 = vsel %vm1451, %v1432, %v1225
      %v1467 = vsel %vm1451, %v1434, %v1227
      %v1469 = vsel %vm1451, %v1436, %v1229
      %v1471 = vsel %vm1451, %v1438, %v1231
      %v1473 = vsel %vm1451, %v1440, %v1233
      %v1475 = vsel %vm1451, %v1442, %v1235
      %v1477 = vsel %vm1451, %v1444, %v1237
      %v1479 = vsel %vm1451, %v1446, %v1239
      %v1481 = vsel %vm1451, %v1448, %v1241
      %v1483 = vsel %vm1451, %v1450, %v1243
      %vm1484 = vcmask 785408
      %v1486 = vsel %vm1484, %v1453, %v1250
      %v1489 = vsel %vm1484, %v1455, %v1252
      %v1492 = vsel %vm1484, %v1457, %v1254
      %v1495 = vsel %vm1484, %v1459, %v1256
      %v1498 = vsel %vm1484, %v1461, %v1258
      %v1501 = vsel %vm1484, %v1463, %v1260
      %v1504 = vsel %vm1484, %v1465, %v1262
      %v1507 = vsel %vm1484, %v1467, %v1264
      %v1510 = vsel %vm1484, %v1469, %v1266
      %v1513 = vsel %vm1484, %v1471, %v1268
      %v1516 = vsel %vm1484, %v1473, %v1270
      %v1519 = vsel %vm1484, %v1475, %v1272
      %v1522 = vsel %vm1484, %v1477, %v1274
      %v1525 = vsel %vm1484, %v1479, %v1276
      %v1528 = vsel %vm1484, %v1481, %v1278
      %v1531 = vsel %vm1484, %v1483, %v1280
      %v1535 = vsel %vm1418, %v962, %v1300
      %v1538 = vsel %vm1418, %v974, %v1302
      %v1541 = vsel %vm1418, %v986, %v1304
      %v1544 = vsel %vm1418, %v998, %v1306
      %v1547 = vsel %vm1418, %v1010, %v1308
      %v1550 = vsel %vm1418, %v1022, %v1310
      %v1553 = vsel %vm1418, %v1034, %v1312
      %v1556 = vsel %vm1418, %v1046, %v1314
      %v1559 = vsel %vm1418, %v1058, %v1316
      %v1562 = vsel %vm1418, %v1070, %v1318
      %v1565 = vsel %vm1418, %v1082, %v1320
      %v1568 = vsel %vm1418, %v1094, %v1322
      %v1571 = vsel %vm1418, %v1106, %v1324
      %v1574 = vsel %vm1418, %v1118, %v1326
      %v1577 = vsel %vm1418, %v1130, %v1328
      %v1580 = vsel %vm1418, %v1295, %v1330
      %v1582 = vsel %vm1451, %v1535, %v1337
      %v1584 = vsel %vm1451, %v1538, %v1339
      %v1586 = vsel %vm1451, %v1541, %v1341
      %v1588 = vsel %vm1451, %v1544, %v1343
      %v1590 = vsel %vm1451, %v1547, %v1345
      %v1592 = vsel %vm1451, %v1550, %v1347
      %v1594 = vsel %vm1451, %v1553, %v1349
      %v1596 = vsel %vm1451, %v1556, %v1351
      %v1598 = vsel %vm1451, %v1559, %v1353
      %v1600 = vsel %vm1451, %v1562, %v1355
      %v1602 = vsel %vm1451, %v1565, %v1357
      %v1604 = vsel %vm1451, %v1568, %v1359
      %v1606 = vsel %vm1451, %v1571, %v1361
      %v1608 = vsel %vm1451, %v1574, %v1363
      %v1610 = vsel %vm1451, %v1577, %v1365
      %v1612 = vsel %vm1451, %v1580, %v1367
      %v1614 = vsel %vm1484, %v1582, %v1384
      %v1617 = vsel %vm1484, %v1584, %v1386
      %v1620 = vsel %vm1484, %v1586, %v1388
      %v1623 = vsel %vm1484, %v1588, %v1390
      %v1626 = vsel %vm1484, %v1590, %v1392
      %v1629 = vsel %vm1484, %v1592, %v1394
      %v1632 = vsel %vm1484, %v1594, %v1396
      %v1635 = vsel %vm1484, %v1596, %v1398
      %v1638 = vsel %vm1484, %v1598, %v1400
      %v1641 = vsel %vm1484, %v1600, %v1402
      %v1644 = vsel %vm1484, %v1602, %v1404
      %v1647 = vsel %vm1484, %v1604, %v1406
      %v1650 = vsel %vm1484, %v1606, %v1408
      %v1653 = vsel %vm1484, %v1608, %v1410
      %v1656 = vsel %vm1484, %v1610, %v1412
      %v1659 = vsel %vm1484, %v1612, %v1414
      %v1661 = vld [vmem:[%s1] sm:$0xf]
      %v1662 = vld [vmem:[%s1 + $0x4] sm:$0xf]
      %v1663 = vld [vmem:[%s1 + $0x8] sm:$0xf]
      %v1664 = vld [vmem:[%s1 + $0xc] sm:$0xf]
      %v1665 = vld [vmem:[%s1 + $0x10] sm:$0xf]
      %v1666 = vld [vmem:[%s1 + $0x14] sm:$0xf]
      %v1667 = vld [vmem:[%s1 + $0x18] sm:$0xf]
      %v1668 = vld [vmem:[%s1 + $0x1c] sm:$0xf]
      %v1669 = vld [vmem:[%s1 + $0x20] sm:$0xf]
      %v1670 = vld [vmem:[%s1 + $0x24] sm:$0xf]
      %v1671 = vld [vmem:[%s1 + $0x28] sm:$0xf]
      %v1672 = vld [vmem:[%s1 + $0x2c] sm:$0xf]
      %v1673 = vld [vmem:[%s1 + $0x30] sm:$0xf]
      %v1674 = vld [vmem:[%s1 + $0x34] sm:$0xf]
      %v1675 = vld [vmem:[%s1 + $0x38] sm:$0xf]
      %v1676 = vld [vmem:[%s1 + $0x3c] sm:$0xf]
      %v1677 = vld [vmem:[%s1 + $0x40] sm:$0xf]
      %v1678 = vld [vmem:[%s1 + $0x44] sm:$0xf]
      %v1679 = vld [vmem:[%s1 + $0x48] sm:$0xf]
      %v1680 = vld [vmem:[%s1 + $0x4c] sm:$0xf]
      %v1681 = vld [vmem:[%s1 + $0x50] sm:$0xf]
      %v1682 = vld [vmem:[%s1 + $0x54] sm:$0xf]
      %v1683 = vld [vmem:[%s1 + $0x58] sm:$0xf]
      %v1684 = vld [vmem:[%s1 + $0x5c] sm:$0xf]
      %v1685 = vld [vmem:[%s1 + $0x60] sm:$0xf]
      %v1686 = vld [vmem:[%s1 + $0x64] sm:$0xf]
      %v1687 = vld [vmem:[%s1 + $0x68] sm:$0xf]
      %v1688 = vld [vmem:[%s1 + $0x6c] sm:$0xf]
      %v1689 = vld [vmem:[%s1 + $0x70] sm:$0xf]
      %v1690 = vld [vmem:[%s1 + $0x74] sm:$0xf]
      %v1691 = vld [vmem:[%s1 + $0x78] sm:$0xf]
      %v1692 = vld [vmem:[%s1 + $0x7c] sm:$0xf]
      %v1693 = vld [vmem:[%s1 + $0x80] sm:$0xf]
      %v1694 = vld [vmem:[%s1 + $0x84] sm:$0xf]
      %v1695 = vld [vmem:[%s1 + $0x88] sm:$0xf]
      %v1696 = vld [vmem:[%s1 + $0x8c] sm:$0xf]
      %v1697 = vld [vmem:[%s2] sm:$0x1]
      %v1699 = vlaneseq
      %v1700 = vshrl.u32 %v1699, 7
      %v1701 = vsub.s32 0, %v1700
      %v1702 = vrot.slane %v1697, %v1701
      %v1740 = vunpack.c.l.b16 %v1661
      %v1741 = vunpack.c.l.b16 %v1662
      %v1742 = vunpack.c.l.b16 %v1663
      %v1743 = vunpack.c.l.b16 %v1664
      %v1744 = vunpack.c.l.b16 %v1665
      %v1745 = vunpack.c.l.b16 %v1666
      %v1746 = vunpack.c.l.b16 %v1667
      %v1747 = vunpack.c.l.b16 %v1668
      %v1748 = vunpack.c.l.b16 %v1669
      %v1749 = vunpack.c.l.b16 %v1670
      %v1750 = vunpack.c.l.b16 %v1671
      %v1751 = vunpack.c.l.b16 %v1672
      %v1752 = vunpack.c.l.b16 %v1673
      %v1753 = vunpack.c.l.b16 %v1674
      %v1754 = vunpack.c.l.b16 %v1675
      %v1755 = vunpack.c.l.b16 %v1676
      %v1756 = vunpack.c.l.b16 %v1677
      %v1757 = vunpack.c.l.b16 %v1678
      %v1758 = vunpack.c.l.b16 %v1679
      %v1759 = vunpack.c.l.b16 %v1680
      %v1760 = vunpack.c.l.b16 %v1681
      %v1761 = vunpack.c.l.b16 %v1682
      %v1762 = vunpack.c.l.b16 %v1683
      %v1763 = vunpack.c.l.b16 %v1684
      %v1764 = vunpack.c.l.b16 %v1685
      %v1765 = vunpack.c.l.b16 %v1686
      %v1766 = vunpack.c.l.b16 %v1687
      %v1767 = vunpack.c.l.b16 %v1688
      %v1768 = vunpack.c.l.b16 %v1689
      %v1769 = vunpack.c.l.b16 %v1690
      %v1770 = vunpack.c.l.b16 %v1691
      %v1771 = vunpack.c.l.b16 %v1692
      %v1772 = vunpack.c.l.b16 %v1693
      %v1773 = vunpack.c.l.b16 %v1694
      %v1774 = vunpack.c.l.b16 %v1695
      %v1775 = vunpack.c.l.b16 %v1696
      %v1776 = vpack.c.b16 %v1741, %v1740
      %v1777 = vpack.c.b16 %v1743, %v1742
      %v1778 = vpack.c.b16 %v1745, %v1744
      %v1779 = vpack.c.b16 %v1747, %v1746
      %v1780 = vpack.c.b16 %v1749, %v1748
      %v1781 = vpack.c.b16 %v1751, %v1750
      %v1782 = vpack.c.b16 %v1753, %v1752
      %v1783 = vpack.c.b16 %v1755, %v1754
      %v1784 = vpack.c.b16 %v1757, %v1756
      %v1785 = vpack.c.b16 %v1759, %v1758
      %v1786 = vpack.c.b16 %v1761, %v1760
      %v1787 = vpack.c.b16 %v1763, %v1762
      %v1788 = vpack.c.b16 %v1765, %v1764
      %v1789 = vpack.c.b16 %v1767, %v1766
      %v1790 = vpack.c.b16 %v1769, %v1768
      %v1791 = vpack.c.b16 %v1771, %v1770
      %v1792 = vpack.c.b16 %v1773, %v1772
      %v1793 = vpack.c.b16 %v1775, %v1774
      %v1813 = vsel %vm1418, %v1172, 0
      %v1816 = vsel %vm1418, %v1175, 0
      %v1819 = vsel %vm1418, %v1178, 0
      %v1822 = vsel %vm1418, %v1181, 0
      %v1825 = vsel %vm1418, %v1184, 0
      %v1828 = vsel %vm1418, %v1187, 0
      %v1831 = vsel %vm1418, %v1190, 0
      %v1834 = vsel %vm1418, %v1193, 0
      %v1837 = vsel %vm1418, %v1196, 0
      %v1840 = vsel %vm1418, %v1199, 0
      %v1843 = vsel %vm1418, %v1202, 0
      %v1846 = vsel %vm1418, %v1205, 0
      %v1849 = vsel %vm1418, %v1208, 0
      %v1852 = vsel %vm1418, %v1211, 0
      %v1855 = vsel %vm1418, %v1298, 0
      %v1858 = vsel %vm1418, %v1417, 0
      %1860 = vmatprep.subr.bf16.mxu0 0
      %1861 = vmatpush1.bf16.msra.mxu0 %v1776
      %1862 = vmatprep.subr.bf16.mxu0 0
      %1863 = vmatpush1.bf16.msra.mxu0 %v1777
      %1864 = vmatprep.subr.bf16.mxu0 0
      %1865 = vmatpush1.bf16.msra.mxu0 %v1778
      %1866 = vmatprep.subr.bf16.mxu0 0
      %1867 = vmatpush1.bf16.msra.mxu0 %v1779
      %1868 = vmatprep.subr.bf16.mxu0 0
      %1869 = vmatpush1.bf16.msra.mxu0 %v1780
      %1870 = vmatprep.subr.bf16.mxu0 0
      %1871 = vmatpush1.bf16.msra.mxu0 %v1781
      %1872 = vmatprep.subr.bf16.mxu0 0
      %1873 = vmatpush1.bf16.msra.mxu0 %v1782
      %1874 = vmatprep.subr.bf16.mxu0 0
      %1875 = vmatpush1.bf16.msra.mxu0 %v1783
      %1876 = vmatprep.subr.bf16.mxu0 0
      %1877 = vmatpush1.bf16.msra.mxu0 %v1784
      %1878 = vmatprep.subr.bf16.mxu0 0
      %1879 = vmatpush1.bf16.msra.mxu0 %v1785
      %1880 = vmatprep.subr.bf16.mxu0 0
      %1881 = vmatpush1.bf16.msra.mxu0 %v1786
      %1882 = vmatprep.subr.bf16.mxu0 0
      %1883 = vmatpush1.bf16.msra.mxu0 %v1787
      %1884 = vmatprep.subr.bf16.mxu0 0
      %1885 = vmatpush1.bf16.msra.mxu0 %v1788
      %1886 = vmatprep.subr.bf16.mxu0 0
      %1887 = vmatpush1.bf16.msra.mxu0 %v1789
      %1888 = vmatprep.subr.bf16.mxu0 0
      %1889 = vmatpush1.bf16.msra.mxu0 %v1790
      %1890 = vmatprep.subr.bf16.mxu0 0
      %1891 = vmatpush1.bf16.msra.mxu0 %v1791
      %1892 = vmatprep.mubr.bf16.mxu0 %v1614
      %1893 = vmatmul.mubr.bf16.gmra.mrb[0].mxu0 %v1486
      %v1894 = vpop.f32.mrb[0].mxu0
      %v1895 = vadd.f32 %v1702, %v1894
      %v1896 = vpop.f32.mrb[0].mxu0
      %v1897 = vpop.f32.mrb[0].mxu0
      %v1898 = vadd.f32 %v1702, %v1897
      %v1899 = vpop.f32.mrb[0].mxu0
      %1900 = vmatprep.mubr.bf16.mxu0 %v1617
      %1901 = vmatmul.mubr.bf16.gmra.mrb[0].mxu0 %v1489
      %v1902 = vpop.f32.mrb[0].mxu0
      %v1903 = vadd.f32 %v1702, %v1902
      %v1904 = vpop.f32.mrb[0].mxu0
      %v1905 = vpop.f32.mrb[0].mxu0
      %v1906 = vadd.f32 %v1702, %v1905
      %v1907 = vpop.f32.mrb[0].mxu0
      %1908 = vmatprep.mubr.bf16.mxu0 %v1620
      %1909 = vmatmul.mubr.bf16.gmra.mrb[0].mxu0 %v1492
      %v1910 = vpop.f32.mrb[0].mxu0
      %v1911 = vadd.f32 %v1702, %v1910
      %v1912 = vpop.f32.mrb[0].mxu0
      %v1913 = vpop.f32.mrb[0].mxu0
      %v1914 = vadd.f32 %v1702, %v1913
      %v1915 = vpop.f32.mrb[0].mxu0
      %1916 = vmatprep.mubr.bf16.mxu0 %v1623
      %1917 = vmatmul.mubr.bf16.gmra.mrb[0].mxu0 %v1495
      %v1918 = vpop.f32.mrb[0].mxu0
      %v1919 = vadd.f32 %v1702, %v1918
      %v1920 = vpop.f32.mrb[0].mxu0
      %v1921 = vpop.f32.mrb[0].mxu0
      %v1922 = vadd.f32 %v1702, %v1921
      %v1923 = vpop.f32.mrb[0].mxu0
      %1924 = vmatprep.mubr.bf16.mxu0 %v1626
      %1925 = vmatmul.mubr.bf16.gmra.mrb[0].mxu0 %v1498
      %v1926 = vpop.f32.mrb[0].mxu0
      %v1927 = vadd.f32 %v1702, %v1926
      %v1928 = vpop.f32.mrb[0].mxu0
      %v1929 = vpop.f32.mrb[0].mxu0
      %v1930 = vadd.f32 %v1702, %v1929
      %v1931 = vpop.f32.mrb[0].mxu0
      %1932 = vmatprep.mubr.bf16.mxu0 %v1629
      %1933 = vmatmul.mubr.bf16.gmra.mrb[0].mxu0 %v1501
      %v1934 = vpop.f32.mrb[0].mxu0
      %v1935 = vadd.f32 %v1702, %v1934
      %v1936 = vpop.f32.mrb[0].mxu0
      %v1937 = vpop.f32.mrb[0].mxu0
      %v1938 = vadd.f32 %v1702, %v1937
      %v1939 = vpop.f32.mrb[0].mxu0
      %1940 = vmatprep.mubr.bf16.mxu0 %v1632
      %1941 = vmatmul.mubr.bf16.gmra.mrb[0].mxu0 %v1504
      %v1942 = vpop.f32.mrb[0].mxu0
      %v1943 = vadd.f32 %v1702, %v1942
      %v1944 = vpop.f32.mrb[0].mxu0
      %v1945 = vpop.f32.mrb[0].mxu0
      %v1946 = vadd.f32 %v1702, %v1945
      %v1947 = vpop.f32.mrb[0].mxu0
      %1948 = vmatprep.mubr.bf16.mxu0 %v1635
      %1949 = vmatmul.mubr.bf16.gmra.mrb[0].mxu0 %v1507
      %v1950 = vpop.f32.mrb[0].mxu0
      %v1951 = vadd.f32 %v1702, %v1950
      %v1952 = vpop.f32.mrb[0].mxu0
      %v1953 = vpop.f32.mrb[0].mxu0
      %v1954 = vadd.f32 %v1702, %v1953
      %v1955 = vpop.f32.mrb[0].mxu0
      %1956 = vmatprep.mubr.bf16.mxu0 %v1638
      %1957 = vmatmul.mubr.bf16.gmra.mrb[0].mxu0 %v1510
      %v1958 = vpop.f32.mrb[0].mxu0
      %v1959 = vadd.f32 %v1702, %v1958
      %v1960 = vpop.f32.mrb[0].mxu0
      %v1961 = vpop.f32.mrb[0].mxu0
      %v1962 = vadd.f32 %v1702, %v1961
      %v1963 = vpop.f32.mrb[0].mxu0
      %1964 = vmatprep.mubr.bf16.mxu0 %v1641
      %1965 = vmatmul.mubr.bf16.gmra.mrb[0].mxu0 %v1513
      %v1966 = vpop.f32.mrb[0].mxu0
      %v1967 = vadd.f32 %v1702, %v1966
      %v1968 = vpop.f32.mrb[0].mxu0
      %v1969 = vpop.f32.mrb[0].mxu0
      %v1970 = vadd.f32 %v1702, %v1969
      %v1971 = vpop.f32.mrb[0].mxu0
      %1972 = vmatprep.mubr.bf16.mxu0 %v1644
      %1973 = vmatmul.mubr.bf16.gmra.mrb[0].mxu0 %v1516
      %v1974 = vpop.f32.mrb[0].mxu0
      %v1975 = vadd.f32 %v1702, %v1974
      %v1976 = vpop.f32.mrb[0].mxu0
      %v1977 = vpop.f32.mrb[0].mxu0
      %v1978 = vadd.f32 %v1702, %v1977
      %v1979 = vpop.f32.mrb[0].mxu0
      %1980 = vmatprep.mubr.bf16.mxu0 %v1647
      %1981 = vmatmul.mubr.bf16.gmra.mrb[0].mxu0 %v1519
      %v1982 = vpop.f32.mrb[0].mxu0
      %v1983 = vadd.f32 %v1702, %v1982
      %v1984 = vpop.f32.mrb[0].mxu0
      %v1985 = vpop.f32.mrb[0].mxu0
      %v1986 = vadd.f32 %v1702, %v1985
      %v1987 = vpop.f32.mrb[0].mxu0
      %1988 = vmatprep.mubr.bf16.mxu0 %v1650
      %1989 = vmatmul.mubr.bf16.gmra.mrb[0].mxu0 %v1522
      %v1990 = vpop.f32.mrb[0].mxu0
      %v1991 = vadd.f32 %v1702, %v1990
      %v1992 = vpop.f32.mrb[0].mxu0
      %v1993 = vpop.f32.mrb[0].mxu0
      %v1994 = vadd.f32 %v1702, %v1993
      %v1995 = vpop.f32.mrb[0].mxu0
      %1996 = vmatprep.mubr.bf16.mxu0 %v1653
      %1997 = vmatmul.mubr.bf16.gmra.mrb[0].mxu0 %v1525
      %v1998 = vpop.f32.mrb[0].mxu0
      %v1999 = vadd.f32 %v1702, %v1998
      %v2000 = vpop.f32.mrb[0].mxu0
      %v2001 = vpop.f32.mrb[0].mxu0
      %v2002 = vadd.f32 %v1702, %v2001
      %v2003 = vpop.f32.mrb[0].mxu0
      %2004 = vmatprep.mubr.bf16.mxu0 %v1656
      %2005 = vmatmul.mubr.bf16.gmra.mrb[0].mxu0 %v1528
      %v2006 = vpop.f32.mrb[0].mxu0
      %v2007 = vadd.f32 %v1702, %v2006
      %v2008 = vpop.f32.mrb[0].mxu0
      %v2009 = vpop.f32.mrb[0].mxu0
      %v2010 = vadd.f32 %v1702, %v2009
      %v2011 = vpop.f32.mrb[0].mxu0
      %2012 = vmatprep.mubr.bf16.mxu0 %v1659
      %2013 = vmatmul.mubr.bf16.gmra.mrb[0].mxu0 %v1531
      %v2014 = vpop.f32.mrb[0].mxu0
      %v2015 = vadd.f32 %v1702, %v2014
      %v2016 = vpop.f32.mrb[0].mxu0
      %v2017 = vpop.f32.mrb[0].mxu0
      %v2018 = vadd.f32 %v1702, %v2017
      %v2019 = vpop.f32.mrb[0].mxu0
      %2020 = vdwg.mxu0
      %2021 = vmatprep.subr.bf16.mxu0 0
      %2022 = vmatpush1.bf16.msra.mxu0 %v1792
      %2023 = vmatprep.subr.bf16.mxu0 0
      %2024 = vmatpush1.bf16.msra.mxu0 %v1793
      %2025 = vmatprep.subr.bf16.mxu0 0
      %2026 = vmatpush1.bf16.msra.mxu0 0
      %2027 = vmatprep.subr.bf16.mxu0 0
      %2028 = vmatpush1.bf16.msra.mxu0 0
      %2029 = vmatprep.subr.bf16.mxu0 0
      %2030 = vmatpush1.bf16.msra.mxu0 0
      %2031 = vmatprep.subr.bf16.mxu0 0
      %2032 = vmatpush1.bf16.msra.mxu0 0
      %2033 = vmatprep.subr.bf16.mxu0 0
      %2034 = vmatpush1.bf16.msra.mxu0 0
      %2035 = vmatprep.subr.bf16.mxu0 0
      %2036 = vmatpush1.bf16.msra.mxu0 0
      %2037 = vmatprep.subr.bf16.mxu0 0
      %2038 = vmatpush1.bf16.msra.mxu0 0
      %2039 = vmatprep.subr.bf16.mxu0 0
      %2040 = vmatpush1.bf16.msra.mxu0 0
      %2041 = vmatprep.subr.bf16.mxu0 0
      %2042 = vmatpush1.bf16.msra.mxu0 0
      %2043 = vmatprep.subr.bf16.mxu0 0
      %2044 = vmatpush1.bf16.msra.mxu0 0
      %2045 = vmatprep.subr.bf16.mxu0 0
      %2046 = vmatpush1.bf16.msra.mxu0 0
      %2047 = vmatprep.subr.bf16.mxu0 0
      %2048 = vmatpush1.bf16.msra.mxu0 0
      %2049 = vmatprep.subr.bf16.mxu0 0
      %2050 = vmatpush1.bf16.msra.mxu0 0
      %2051 = vmatprep.subr.bf16.mxu0 0
      %2052 = vmatpush1.bf16.msra.mxu0 0
      %2053 = vmatprep.mubr.bf16.mxu0 0
      %2054 = vmatmul.mubr.bf16.gmra.mrb[0].mxu0 %v1813
      %v2055 = vpop.f32.mrb[0].mxu0
      %v2056 = vadd.f32 %v1895, %v2055
      %v2057 = vpop.f32.mrb[0].mxu0
      %v2058 = vpop.f32.mrb[0].mxu0
      %v2059 = vadd.f32 %v1898, %v2058
      %v2060 = vpop.f32.mrb[0].mxu0
      %2061 = vmatprep.mubr.bf16.mxu0 0
      %2062 = vmatmul.mubr.bf16.gmra.mrb[0].mxu0 %v1816
      %v2063 = vpop.f32.mrb[0].mxu0
      %v2064 = vadd.f32 %v1903, %v2063
      %v2065 = vpop.f32.mrb[0].mxu0
      %v2066 = vpop.f32.mrb[0].mxu0
      %v2067 = vadd.f32 %v1906, %v2066
      %v2068 = vpop.f32.mrb[0].mxu0
      %2069 = vmatprep.mubr.bf16.mxu0 0
      %2070 = vmatmul.mubr.bf16.gmra.mrb[0].mxu0 %v1819
      %v2071 = vpop.f32.mrb[0].mxu0
      %v2072 = vadd.f32 %v1911, %v2071
      %v2073 = vpop.f32.mrb[0].mxu0
      %v2074 = vpop.f32.mrb[0].mxu0
      %v2075 = vadd.f32 %v1914, %v2074
      %v2076 = vpop.f32.mrb[0].mxu0
      %2077 = vmatprep.mubr.bf16.mxu0 0
      %2078 = vmatmul.mubr.bf16.gmra.mrb[0].mxu0 %v1822
      %v2079 = vpop.f32.mrb[0].mxu0
      %v2080 = vadd.f32 %v1919, %v2079
      %v2081 = vpop.f32.mrb[0].mxu0
      %v2082 = vpop.f32.mrb[0].mxu0
      %v2083 = vadd.f32 %v1922, %v2082
      %v2084 = vpop.f32.mrb[0].mxu0
      %2085 = vmatprep.mubr.bf16.mxu0 0
      %2086 = vmatmul.mubr.bf16.gmra.mrb[0].mxu0 %v1825
      %v2087 = vpop.f32.mrb[0].mxu0
      %v2088 = vadd.f32 %v1927, %v2087
      %v2089 = vpop.f32.mrb[0].mxu0
      %v2090 = vpop.f32.mrb[0].mxu0
      %v2091 = vadd.f32 %v1930, %v2090
      %v2092 = vpop.f32.mrb[0].mxu0
      %2093 = vmatprep.mubr.bf16.mxu0 0
      %2094 = vmatmul.mubr.bf16.gmra.mrb[0].mxu0 %v1828
      %v2095 = vpop.f32.mrb[0].mxu0
      %v2096 = vadd.f32 %v1935, %v2095
      %v2097 = vpop.f32.mrb[0].mxu0
      %v2098 = vpop.f32.mrb[0].mxu0
      %v2099 = vadd.f32 %v1938, %v2098
      %v2100 = vpop.f32.mrb[0].mxu0
      %2101 = vmatprep.mubr.bf16.mxu0 0
      %2102 = vmatmul.mubr.bf16.gmra.mrb[0].mxu0 %v1831
      %v2103 = vpop.f32.mrb[0].mxu0
      %v2104 = vadd.f32 %v1943, %v2103
      %v2105 = vpop.f32.mrb[0].mxu0
      %v2106 = vpop.f32.mrb[0].mxu0
      %v2107 = vadd.f32 %v1946, %v2106
      %v2108 = vpop.f32.mrb[0].mxu0
      %2109 = vmatprep.mubr.bf16.mxu0 0
      %2110 = vmatmul.mubr.bf16.gmra.mrb[0].mxu0 %v1834
      %v2111 = vpop.f32.mrb[0].mxu0
      %v2112 = vadd.f32 %v1951, %v2111
      %v2113 = vpop.f32.mrb[0].mxu0
      %v2114 = vpop.f32.mrb[0].mxu0
      %v2115 = vadd.f32 %v1954, %v2114
      %v2116 = vpop.f32.mrb[0].mxu0
      %2117 = vmatprep.mubr.bf16.mxu0 0
      %2118 = vmatmul.mubr.bf16.gmra.mrb[0].mxu0 %v1837
      %v2119 = vpop.f32.mrb[0].mxu0
      %v2120 = vadd.f32 %v1959, %v2119
      %v2121 = vpop.f32.mrb[0].mxu0
      %v2122 = vpop.f32.mrb[0].mxu0
      %v2123 = vadd.f32 %v1962, %v2122
      %v2124 = vpop.f32.mrb[0].mxu0
      %2125 = vmatprep.mubr.bf16.mxu0 0
      %2126 = vmatmul.mubr.bf16.gmra.mrb[0].mxu0 %v1840
      %v2127 = vpop.f32.mrb[0].mxu0
      %v2128 = vadd.f32 %v1967, %v2127
      %v2129 = vpop.f32.mrb[0].mxu0
      %v2130 = vpop.f32.mrb[0].mxu0
      %v2131 = vadd.f32 %v1970, %v2130
      %v2132 = vpop.f32.mrb[0].mxu0
      %2133 = vmatprep.mubr.bf16.mxu0 0
      %2134 = vmatmul.mubr.bf16.gmra.mrb[0].mxu0 %v1843
      %v2135 = vpop.f32.mrb[0].mxu0
      %v2136 = vadd.f32 %v1975, %v2135
      %v2137 = vpop.f32.mrb[0].mxu0
      %v2138 = vpop.f32.mrb[0].mxu0
      %v2139 = vadd.f32 %v1978, %v2138
      %v2140 = vpop.f32.mrb[0].mxu0
      %2141 = vmatprep.mubr.bf16.mxu0 0
      %2142 = vmatmul.mubr.bf16.gmra.mrb[0].mxu0 %v1846
      %v2143 = vpop.f32.mrb[0].mxu0
      %v2144 = vadd.f32 %v1983, %v2143
      %v2145 = vpop.f32.mrb[0].mxu0
      %v2146 = vpop.f32.mrb[0].mxu0
      %v2147 = vadd.f32 %v1986, %v2146
      %v2148 = vpop.f32.mrb[0].mxu0
      %2149 = vmatprep.mubr.bf16.mxu0 0
      %2150 = vmatmul.mubr.bf16.gmra.mrb[0].mxu0 %v1849
      %v2151 = vpop.f32.mrb[0].mxu0
      %v2152 = vadd.f32 %v1991, %v2151
      %v2153 = vpop.f32.mrb[0].mxu0
      %v2154 = vpop.f32.mrb[0].mxu0
      %v2155 = vadd.f32 %v1994, %v2154
      %v2156 = vpop.f32.mrb[0].mxu0
      %2157 = vmatprep.mubr.bf16.mxu0 0
      %2158 = vmatmul.mubr.bf16.gmra.mrb[0].mxu0 %v1852
      %v2159 = vpop.f32.mrb[0].mxu0
      %v2160 = vadd.f32 %v1999, %v2159
      %v2161 = vpop.f32.mrb[0].mxu0
      %v2162 = vpop.f32.mrb[0].mxu0
      %v2163 = vadd.f32 %v2002, %v2162
      %v2164 = vpop.f32.mrb[0].mxu0
      %2165 = vmatprep.mubr.bf16.mxu0 0
      %2166 = vmatmul.mubr.bf16.gmra.mrb[0].mxu0 %v1855
      %v2167 = vpop.f32.mrb[0].mxu0
      %v2168 = vadd.f32 %v2007, %v2167
      %v2169 = vpop.f32.mrb[0].mxu0
      %v2170 = vpop.f32.mrb[0].mxu0
      %v2171 = vadd.f32 %v2010, %v2170
      %v2172 = vpop.f32.mrb[0].mxu0
      %2173 = vmatprep.mubr.bf16.mxu0 0
      %2174 = vmatmul.mubr.bf16.gmra.mrb[0].mxu0 %v1858
      %v2175 = vpop.f32.mrb[0].mxu0
      %v2176 = vadd.f32 %v2015, %v2175
      %v2177 = vpop.f32.mrb[0].mxu0
      %v2178 = vpop.f32.mrb[0].mxu0
      %v2179 = vadd.f32 %v2018, %v2178
      %v2180 = vpop.f32.mrb[0].mxu0
      %2181 = vdwg.mxu0
      %v2182 = vmax.f32 %v2056, 0.0
      %v2183 = vmax.f32 %v2059, 0.0
      %v2184 = vmax.f32 %v2064, 0.0
      %v2185 = vmax.f32 %v2067, 0.0
      %v2186 = vmax.f32 %v2072, 0.0
      %v2187 = vmax.f32 %v2075, 0.0
      %v2188 = vmax.f32 %v2080, 0.0
      %v2189 = vmax.f32 %v2083, 0.0
      %v2190 = vmax.f32 %v2088, 0.0
      %v2191 = vmax.f32 %v2091, 0.0
      %v2192 = vmax.f32 %v2096, 0.0
      %v2193 = vmax.f32 %v2099, 0.0
      %v2194 = vmax.f32 %v2104, 0.0
      %v2195 = vmax.f32 %v2107, 0.0
      %v2196 = vmax.f32 %v2112, 0.0
      %v2197 = vmax.f32 %v2115, 0.0
      %v2198 = vmax.f32 %v2120, 0.0
      %v2199 = vmax.f32 %v2123, 0.0
      %v2200 = vmax.f32 %v2128, 0.0
      %v2201 = vmax.f32 %v2131, 0.0
      %v2202 = vmax.f32 %v2136, 0.0
      %v2203 = vmax.f32 %v2139, 0.0
      %v2204 = vmax.f32 %v2144, 0.0
      %v2205 = vmax.f32 %v2147, 0.0
      %v2206 = vmax.f32 %v2152, 0.0
      %v2207 = vmax.f32 %v2155, 0.0
      %v2208 = vmax.f32 %v2160, 0.0
      %v2209 = vmax.f32 %v2163, 0.0
      %v2210 = vmax.f32 %v2168, 0.0
      %v2211 = vmax.f32 %v2171, 0.0
      %v2212 = vmax.f32 %v2176, 0.0
      %v2213 = vmax.f32 %v2179, 0.0
      %v2214 = vpack.c.bf16 %v2183, %v2182
      %v2215 = vpack.c.bf16 %v2185, %v2184
      %v2216 = vpack.c.bf16 %v2187, %v2186
      %v2217 = vpack.c.bf16 %v2189, %v2188
      %v2218 = vpack.c.bf16 %v2191, %v2190
      %v2219 = vpack.c.bf16 %v2193, %v2192
      %v2220 = vpack.c.bf16 %v2195, %v2194
      %v2221 = vpack.c.bf16 %v2197, %v2196
      %v2222 = vpack.c.bf16 %v2199, %v2198
      %v2223 = vpack.c.bf16 %v2201, %v2200
      %v2224 = vpack.c.bf16 %v2203, %v2202
      %v2225 = vpack.c.bf16 %v2205, %v2204
      %v2226 = vpack.c.bf16 %v2207, %v2206
      %v2227 = vpack.c.bf16 %v2209, %v2208
      %v2228 = vpack.c.bf16 %v2211, %v2210
      %v2229 = vpack.c.bf16 %v2213, %v2212
      %v2246 = vunpack.c.l.b16 %v2214
      %v2247 = vunpack.c.h.b16 %v2214
      %v2248 = vunpack.c.l.b16 %v2215
      %v2249 = vunpack.c.h.b16 %v2215
      %v2250 = vunpack.c.l.b16 %v2216
      %v2251 = vunpack.c.h.b16 %v2216
      %v2252 = vunpack.c.l.b16 %v2217
      %v2253 = vunpack.c.h.b16 %v2217
      %v2254 = vunpack.c.l.b16 %v2218
      %v2255 = vunpack.c.h.b16 %v2218
      %v2256 = vunpack.c.l.b16 %v2219
      %v2257 = vunpack.c.h.b16 %v2219
      %v2258 = vunpack.c.l.b16 %v2220
      %v2259 = vunpack.c.h.b16 %v2220
      %v2260 = vunpack.c.l.b16 %v2221
      %v2261 = vunpack.c.h.b16 %v2221
      %v2262 = vunpack.c.l.b16 %v2222
      %v2263 = vunpack.c.h.b16 %v2222
      %v2264 = vunpack.c.l.b16 %v2223
      %v2265 = vunpack.c.h.b16 %v2223
      %v2266 = vunpack.c.l.b16 %v2224
      %v2267 = vunpack.c.h.b16 %v2224
      %v2268 = vunpack.c.l.b16 %v2225
      %v2269 = vunpack.c.h.b16 %v2225
      %v2270 = vunpack.c.l.b16 %v2226
      %v2271 = vunpack.c.h.b16 %v2226
      %v2272 = vunpack.c.l.b16 %v2227
      %v2273 = vunpack.c.h.b16 %v2227
      %v2274 = vunpack.c.l.b16 %v2228
      %v2275 = vunpack.c.h.b16 %v2228
      %v2276 = vunpack.c.l.b16 %v2229
      %v2277 = vunpack.c.h.b16 %v2229
      %v2278 = vpack.c.b16 %v2246, %v2246
      %v2279 = vpack.c.b16 %v2247, %v2247
      %v2280 = vpack.c.b16 %v2248, %v2248
      %v2281 = vpack.c.b16 %v2249, %v2249
      %v2282 = vpack.c.b16 %v2250, %v2250
      %v2283 = vpack.c.b16 %v2251, %v2251
      %v2284 = vpack.c.b16 %v2252, %v2252
      %v2285 = vpack.c.b16 %v2253, %v2253
      %v2286 = vpack.c.b16 %v2254, %v2254
      %v2287 = vpack.c.b16 %v2255, %v2255
      %v2288 = vpack.c.b16 %v2256, %v2256
      %v2289 = vpack.c.b16 %v2257, %v2257
      %v2290 = vpack.c.b16 %v2258, %v2258
      %v2291 = vpack.c.b16 %v2259, %v2259
      %v2292 = vpack.c.b16 %v2260, %v2260
      %v2293 = vpack.c.b16 %v2261, %v2261
      %v2294 = vpack.c.b16 %v2262, %v2262
      %v2295 = vpack.c.b16 %v2263, %v2263
      %v2296 = vpack.c.b16 %v2264, %v2264
      %v2297 = vpack.c.b16 %v2265, %v2265
      %v2298 = vpack.c.b16 %v2266, %v2266
      %v2299 = vpack.c.b16 %v2267, %v2267
      %v2300 = vpack.c.b16 %v2268, %v2268
      %v2301 = vpack.c.b16 %v2269, %v2269
      %v2302 = vpack.c.b16 %v2270, %v2270
      %v2303 = vpack.c.b16 %v2271, %v2271
      %v2304 = vpack.c.b16 %v2272, %v2272
      %v2305 = vpack.c.b16 %v2273, %v2273
      %v2306 = vpack.c.b16 %v2274, %v2274
      %v2307 = vpack.c.b16 %v2275, %v2275
      %v2308 = vpack.c.b16 %v2276, %v2276
      %v2309 = vpack.c.b16 %v2277, %v2277
      %v2311 = vshrl.u32 %v2278, 16
      %v2313 = vrot.slane %v2311, 7
      %v2314 = vshll.u32 %v2278, 16
      %v2316 = vor.u32 %v2313, %v2314
      %v2317 = vrot.slane %v2313, 4
      %v2319 = vshrl.u32 %v2279, 16
      %v2321 = vrot.slane %v2319, 7
      %v2322 = vshll.u32 %v2279, 16
      %v2324 = vor.u32 %v2321, %v2322
      %v2325 = vsel %vm316, %v2317, %v2324
      %v2326 = vrot.slane %v2321, 4
      %v2328 = vshrl.u32 %v2280, 16
      %v2330 = vrot.slane %v2328, 7
      %v2331 = vshll.u32 %v2280, 16
      %v2333 = vor.u32 %v2330, %v2331
      %v2334 = vrot.slane %v2330, 4
      %v2336 = vshrl.u32 %v2281, 16
      %v2338 = vrot.slane %v2336, 7
      %v2339 = vshll.u32 %v2281, 16
      %v2341 = vor.u32 %v2338, %v2339
      %v2342 = vsel %vm316, %v2334, %v2341
      %v2343 = vrot.slane %v2338, 4
      %v2345 = vshrl.u32 %v2282, 16
      %v2347 = vrot.slane %v2345, 7
      %v2348 = vshll.u32 %v2282, 16
      %v2350 = vor.u32 %v2347, %v2348
      %v2351 = vrot.slane %v2347, 4
      %v2353 = vshrl.u32 %v2283, 16
      %v2355 = vrot.slane %v2353, 7
      %v2356 = vshll.u32 %v2283, 16
      %v2358 = vor.u32 %v2355, %v2356
      %v2359 = vsel %vm316, %v2351, %v2358
      %v2360 = vrot.slane %v2355, 4
      %v2362 = vshrl.u32 %v2284, 16
      %v2364 = vrot.slane %v2362, 7
      %v2365 = vshll.u32 %v2284, 16
      %v2367 = vor.u32 %v2364, %v2365
      %v2368 = vrot.slane %v2364, 4
      %v2370 = vshrl.u32 %v2285, 16
      %v2372 = vrot.slane %v2370, 7
      %v2373 = vshll.u32 %v2285, 16
      %v2375 = vor.u32 %v2372, %v2373
      %v2376 = vsel %vm316, %v2368, %v2375
      %v2377 = vrot.slane %v2372, 4
      %v2379 = vshrl.u32 %v2286, 16
      %v2381 = vrot.slane %v2379, 7
      %v2382 = vshll.u32 %v2286, 16
      %v2384 = vor.u32 %v2381, %v2382
      %v2385 = vrot.slane %v2381, 4
      %v2387 = vshrl.u32 %v2287, 16
      %v2389 = vrot.slane %v2387, 7
      %v2390 = vshll.u32 %v2287, 16
      %v2392 = vor.u32 %v2389, %v2390
      %v2393 = vsel %vm316, %v2385, %v2392
      %v2394 = vrot.slane %v2389, 4
      %v2396 = vshrl.u32 %v2288, 16
      %v2398 = vrot.slane %v2396, 7
      %v2399 = vshll.u32 %v2288, 16
      %v2401 = vor.u32 %v2398, %v2399
      %v2402 = vrot.slane %v2398, 4
      %v2404 = vshrl.u32 %v2289, 16
      %v2406 = vrot.slane %v2404, 7
      %v2407 = vshll.u32 %v2289, 16
      %v2409 = vor.u32 %v2406, %v2407
      %v2410 = vsel %vm316, %v2402, %v2409
      %v2411 = vrot.slane %v2406, 4
      %v2413 = vshrl.u32 %v2290, 16
      %v2415 = vrot.slane %v2413, 7
      %v2416 = vshll.u32 %v2290, 16
      %v2418 = vor.u32 %v2415, %v2416
      %v2419 = vrot.slane %v2415, 4
      %v2421 = vshrl.u32 %v2291, 16
      %v2423 = vrot.slane %v2421, 7
      %v2424 = vshll.u32 %v2291, 16
      %v2426 = vor.u32 %v2423, %v2424
      %v2427 = vsel %vm316, %v2419, %v2426
      %v2428 = vrot.slane %v2423, 4
      %v2430 = vshrl.u32 %v2292, 16
      %v2432 = vrot.slane %v2430, 7
      %v2433 = vshll.u32 %v2292, 16
      %v2435 = vor.u32 %v2432, %v2433
      %v2436 = vrot.slane %v2432, 4
      %v2438 = vshrl.u32 %v2293, 16
      %v2440 = vrot.slane %v2438, 7
      %v2441 = vshll.u32 %v2293, 16
      %v2443 = vor.u32 %v2440, %v2441
      %v2444 = vsel %vm316, %v2436, %v2443
      %v2445 = vrot.slane %v2440, 4
      %v2447 = vshrl.u32 %v2294, 16
      %v2449 = vrot.slane %v2447, 7
      %v2450 = vshll.u32 %v2294, 16
      %v2452 = vor.u32 %v2449, %v2450
      %v2453 = vrot.slane %v2449, 4
      %v2455 = vshrl.u32 %v2295, 16
      %v2457 = vrot.slane %v2455, 7
      %v2458 = vshll.u32 %v2295, 16
      %v2460 = vor.u32 %v2457, %v2458
      %v2461 = vsel %vm316, %v2453, %v2460
      %v2462 = vrot.slane %v2457, 4
      %v2464 = vshrl.u32 %v2296, 16
      %v2466 = vrot.slane %v2464, 7
      %v2467 = vshll.u32 %v2296, 16
      %v2469 = vor.u32 %v2466, %v2467
      %v2470 = vrot.slane %v2466, 4
      %v2472 = vshrl.u32 %v2297, 16
      %v2474 = vrot.slane %v2472, 7
      %v2475 = vshll.u32 %v2297, 16
      %v2477 = vor.u32 %v2474, %v2475
      %v2478 = vsel %vm316, %v2470, %v2477
      %v2479 = vrot.slane %v2474, 4
      %v2481 = vshrl.u32 %v2298, 16
      %v2483 = vrot.slane %v2481, 7
      %v2484 = vshll.u32 %v2298, 16
      %v2486 = vor.u32 %v2483, %v2484
      %v2487 = vrot.slane %v2483, 4
      %v2489 = vshrl.u32 %v2299, 16
      %v2491 = vrot.slane %v2489, 7
      %v2492 = vshll.u32 %v2299, 16
      %v2494 = vor.u32 %v2491, %v2492
      %v2495 = vsel %vm316, %v2487, %v2494
      %v2496 = vrot.slane %v2491, 4
      %v2498 = vshrl.u32 %v2300, 16
      %v2500 = vrot.slane %v2498, 7
      %v2501 = vshll.u32 %v2300, 16
      %v2503 = vor.u32 %v2500, %v2501
      %v2504 = vrot.slane %v2500, 4
      %v2506 = vshrl.u32 %v2301, 16
      %v2508 = vrot.slane %v2506, 7
      %v2509 = vshll.u32 %v2301, 16
      %v2511 = vor.u32 %v2508, %v2509
      %v2512 = vsel %vm316, %v2504, %v2511
      %v2513 = vrot.slane %v2508, 4
      %v2515 = vshrl.u32 %v2302, 16
      %v2517 = vrot.slane %v2515, 7
      %v2518 = vshll.u32 %v2302, 16
      %v2520 = vor.u32 %v2517, %v2518
      %v2521 = vrot.slane %v2517, 4
      %v2523 = vshrl.u32 %v2303, 16
      %v2525 = vrot.slane %v2523, 7
      %v2526 = vshll.u32 %v2303, 16
      %v2528 = vor.u32 %v2525, %v2526
      %v2529 = vsel %vm316, %v2521, %v2528
      %v2530 = vrot.slane %v2525, 4
      %v2532 = vshrl.u32 %v2304, 16
      %v2534 = vrot.slane %v2532, 7
      %v2535 = vshll.u32 %v2304, 16
      %v2537 = vor.u32 %v2534, %v2535
      %v2538 = vrot.slane %v2534, 4
      %v2540 = vshrl.u32 %v2305, 16
      %v2542 = vrot.slane %v2540, 7
      %v2543 = vshll.u32 %v2305, 16
      %v2545 = vor.u32 %v2542, %v2543
      %v2546 = vsel %vm316, %v2538, %v2545
      %v2547 = vrot.slane %v2542, 4
      %v2549 = vshrl.u32 %v2306, 16
      %v2551 = vrot.slane %v2549, 7
      %v2552 = vshll.u32 %v2306, 16
      %v2554 = vor.u32 %v2551, %v2552
      %v2555 = vrot.slane %v2551, 4
      %v2557 = vshrl.u32 %v2307, 16
      %v2559 = vrot.slane %v2557, 7
      %v2560 = vshll.u32 %v2307, 16
      %v2562 = vor.u32 %v2559, %v2560
      %v2563 = vsel %vm316, %v2555, %v2562
      %v2564 = vrot.slane %v2559, 4
      %v2566 = vshrl.u32 %v2308, 16
      %v2568 = vrot.slane %v2566, 7
      %v2569 = vshll.u32 %v2308, 16
      %v2571 = vor.u32 %v2568, %v2569
      %v2572 = vrot.slane %v2568, 4
      %v2574 = vshrl.u32 %v2309, 16
      %v2576 = vrot.slane %v2574, 7
      %v2577 = vshll.u32 %v2309, 16
      %v2579 = vor.u32 %v2576, %v2577
      %v2580 = vsel %vm316, %v2572, %v2579
      %v2581 = vrot.slane %v2576, 4
      %s2630 = scalar_lea.vmem [#allocation3], 12
      %vm2631 = vcmask 257024
      %vm2632 = vmand %vm2631, %vm639
      %v2633 = vld [vmem:[%s2630] sm:$0xf]
      %v2634 = vsel %vm2632, %v2316, %v2633
      %2635 = vst [vmem:[%s2630] sm:$0xf] %v2634
      %2636 = vst.msk [vmem:[%s2630 + $0x4] sm:$0xf] %vm172, %v2325
      %vm2637 = vcmask 253952
      %vm2638 = vmand %vm2637, %vm314
      %v2639 = vld [vmem:[%s2630 + $0x8] sm:$0x1]
      %v2640 = vsel %vm2638, %v2326, %v2639
      %2641 = vst [vmem:[%s2630 + $0x8] sm:$0x1] %v2640
      %v2642 = vld [vmem:[%s2630 + $0xc] sm:$0xf]
      %v2643 = vsel %vm2632, %v2333, %v2642
      %2644 = vst [vmem:[%s2630 + $0xc] sm:$0xf] %v2643
      %2645 = vst.msk [vmem:[%s2630 + $0x10] sm:$0xf] %vm172, %v2342
      %v2646 = vld [vmem:[%s2630 + $0x14] sm:$0x1]
      %v2647 = vsel %vm2638, %v2343, %v2646
      %2648 = vst [vmem:[%s2630 + $0x14] sm:$0x1] %v2647
      %v2649 = vld [vmem:[%s2630 + $0x18] sm:$0xf]
      %v2650 = vsel %vm2632, %v2350, %v2649
      %2651 = vst [vmem:[%s2630 + $0x18] sm:$0xf] %v2650
      %2652 = vst.msk [vmem:[%s2630 + $0x1c] sm:$0xf] %vm172, %v2359
      %v2653 = vld [vmem:[%s2630 + $0x20] sm:$0x1]
      %v2654 = vsel %vm2638, %v2360, %v2653
      %2655 = vst [vmem:[%s2630 + $0x20] sm:$0x1] %v2654
      %v2656 = vld [vmem:[%s2630 + $0x24] sm:$0xf]
      %v2657 = vsel %vm2632, %v2367, %v2656
      %2658 = vst [vmem:[%s2630 + $0x24] sm:$0xf] %v2657
      %2659 = vst.msk [vmem:[%s2630 + $0x28] sm:$0xf] %vm172, %v2376
      %v2660 = vld [vmem:[%s2630 + $0x2c] sm:$0x1]
      %v2661 = vsel %vm2638, %v2377, %v2660
      %2662 = vst [vmem:[%s2630 + $0x2c] sm:$0x1] %v2661
      %v2663 = vld [vmem:[%s2630 + $0x30] sm:$0xf]
      %v2664 = vsel %vm2632, %v2384, %v2663
      %2665 = vst [vmem:[%s2630 + $0x30] sm:$0xf] %v2664
      %2666 = vst.msk [vmem:[%s2630 + $0x34] sm:$0xf] %vm172, %v2393
      %v2667 = vld [vmem:[%s2630 + $0x38] sm:$0x1]
      %v2668 = vsel %vm2638, %v2394, %v2667
      %2669 = vst [vmem:[%s2630 + $0x38] sm:$0x1] %v2668
      %v2670 = vld [vmem:[%s2630 + $0x3c] sm:$0xf]
      %v2671 = vsel %vm2632, %v2401, %v2670
      %2672 = vst [vmem:[%s2630 + $0x3c] sm:$0xf] %v2671
      %2673 = vst.msk [vmem:[%s2630 + $0x40] sm:$0xf] %vm172, %v2410
      %v2674 = vld [vmem:[%s2630 + $0x44] sm:$0x1]
      %v2675 = vsel %vm2638, %v2411, %v2674
      %2676 = vst [vmem:[%s2630 + $0x44] sm:$0x1] %v2675
      %v2677 = vld [vmem:[%s2630 + $0x48] sm:$0xf]
      %v2678 = vsel %vm2632, %v2418, %v2677
      %2679 = vst [vmem:[%s2630 + $0x48] sm:$0xf] %v2678
      %2680 = vst.msk [vmem:[%s2630 + $0x4c] sm:$0xf] %vm172, %v2427
      %v2681 = vld [vmem:[%s2630 + $0x50] sm:$0x1]
      %v2682 = vsel %vm2638, %v2428, %v2681
      %2683 = vst [vmem:[%s2630 + $0x50] sm:$0x1] %v2682
      %v2684 = vld [vmem:[%s2630 + $0x54] sm:$0xf]
      %v2685 = vsel %vm2632, %v2435, %v2684
      %2686 = vst [vmem:[%s2630 + $0x54] sm:$0xf] %v2685
      %2687 = vst.msk [vmem:[%s2630 + $0x58] sm:$0xf] %vm172, %v2444
      %v2688 = vld [vmem:[%s2630 + $0x5c] sm:$0x1]
      %v2689 = vsel %vm2638, %v2445, %v2688
      %2690 = vst [vmem:[%s2630 + $0x5c] sm:$0x1] %v2689
      %v2691 = vld [vmem:[%s2630 + $0x60] sm:$0xf]
      %v2692 = vsel %vm2632, %v2452, %v2691
      %2693 = vst [vmem:[%s2630 + $0x60] sm:$0xf] %v2692
      %2694 = vst.msk [vmem:[%s2630 + $0x64] sm:$0xf] %vm172, %v2461
      %v2695 = vld [vmem:[%s2630 + $0x68] sm:$0x1]
      %v2696 = vsel %vm2638, %v2462, %v2695
      %2697 = vst [vmem:[%s2630 + $0x68] sm:$0x1] %v2696
      %v2698 = vld [vmem:[%s2630 + $0x6c] sm:$0xf]
      %v2699 = vsel %vm2632, %v2469, %v2698
      %2700 = vst [vmem:[%s2630 + $0x6c] sm:$0xf] %v2699
      %2701 = vst.msk [vmem:[%s2630 + $0x70] sm:$0xf] %vm172, %v2478
      %v2702 = vld [vmem:[%s2630 + $0x74] sm:$0x1]
      %v2703 = vsel %vm2638, %v2479, %v2702
      %2704 = vst [vmem:[%s2630 + $0x74] sm:$0x1] %v2703
      %v2705 = vld [vmem:[%s2630 + $0x78] sm:$0xf]
      %v2706 = vsel %vm2632, %v2486, %v2705
      %2707 = vst [vmem:[%s2630 + $0x78] sm:$0xf] %v2706
      %2708 = vst.msk [vmem:[%s2630 + $0x7c] sm:$0xf] %vm172, %v2495
      %v2709 = vld [vmem:[%s2630 + $0x80] sm:$0x1]
      %v2710 = vsel %vm2638, %v2496, %v2709
      %2711 = vst [vmem:[%s2630 + $0x80] sm:$0x1] %v2710
      %v2712 = vld [vmem:[%s2630 + $0x84] sm:$0xf]
      %v2713 = vsel %vm2632, %v2503, %v2712
      %2714 = vst [vmem:[%s2630 + $0x84] sm:$0xf] %v2713
      %2715 = vst.msk [vmem:[%s2630 + $0x88] sm:$0xf] %vm172, %v2512
      %v2716 = vld [vmem:[%s2630 + $0x8c] sm:$0x1]
      %v2717 = vsel %vm2638, %v2513, %v2716
      %2718 = vst [vmem:[%s2630 + $0x8c] sm:$0x1] %v2717
      %v2719 = vld [vmem:[%s2630 + $0x90] sm:$0xf]
      %v2720 = vsel %vm2632, %v2520, %v2719
      %2721 = vst [vmem:[%s2630 + $0x90] sm:$0xf] %v2720
      %2722 = vst.msk [vmem:[%s2630 + $0x94] sm:$0xf] %vm172, %v2529
      %v2723 = vld [vmem:[%s2630 + $0x98] sm:$0x1]
      %v2724 = vsel %vm2638, %v2530, %v2723
      %2725 = vst [vmem:[%s2630 + $0x98] sm:$0x1] %v2724
      %v2726 = vld [vmem:[%s2630 + $0x9c] sm:$0xf]
      %v2727 = vsel %vm2632, %v2537, %v2726
      %2728 = vst [vmem:[%s2630 + $0x9c] sm:$0xf] %v2727
      %2729 = vst.msk [vmem:[%s2630 + $0xa0] sm:$0xf] %vm172, %v2546
      %v2730 = vld [vmem:[%s2630 + $0xa4] sm:$0x1]
      %v2731 = vsel %vm2638, %v2547, %v2730
      %2732 = vst [vmem:[%s2630 + $0xa4] sm:$0x1] %v2731
      %v2733 = vld [vmem:[%s2630 + $0xa8] sm:$0xf]
      %v2734 = vsel %vm2632, %v2554, %v2733
      %2735 = vst [vmem:[%s2630 + $0xa8] sm:$0xf] %v2734
      %2736 = vst.msk [vmem:[%s2630 + $0xac] sm:$0xf] %vm172, %v2563
      %v2737 = vld [vmem:[%s2630 + $0xb0] sm:$0x1]
      %v2738 = vsel %vm2638, %v2564, %v2737
      %2739 = vst [vmem:[%s2630 + $0xb0] sm:$0x1] %v2738
      %v2740 = vld [vmem:[%s2630 + $0xb4] sm:$0xf]
      %v2741 = vsel %vm2632, %v2571, %v2740
      %2742 = vst [vmem:[%s2630 + $0xb4] sm:$0xf] %v2741
      %2743 = vst.msk [vmem:[%s2630 + $0xb8] sm:$0xf] %vm172, %v2580
      %v2744 = vld [vmem:[%s2630 + $0xbc] sm:$0x1]
      %v2745 = vsel %vm2638, %v2581, %v2744
      %2746 = vst [vmem:[%s2630 + $0xbc] sm:$0x1] %v2745
      %v2747 = vld [vmem:[#allocation3] sm:$0xf]
      %v2748 = vld [vmem:[#allocation3 + $0x4] sm:$0xf]
      %v2749 = vld [vmem:[#allocation3 + $0x8] sm:$0x1]
      %v2750 = vld [vmem:[#allocation3 + $0xc] sm:$0xf]
      %v2751 = vld [vmem:[#allocation3 + $0x10] sm:$0xf]
      %v2752 = vld [vmem:[#allocation3 + $0x14] sm:$0x1]
      %v2753 = vld [vmem:[#allocation3 + $0x18] sm:$0xf]
      %v2754 = vld [vmem:[#allocation3 + $0x1c] sm:$0xf]
      %v2755 = vld [vmem:[#allocation3 + $0x20] sm:$0x1]
      %v2756 = vld [vmem:[#allocation3 + $0x24] sm:$0xf]
      %v2757 = vld [vmem:[#allocation3 + $0x28] sm:$0xf]
      %v2758 = vld [vmem:[#allocation3 + $0x2c] sm:$0x1]
      %v2759 = vld [vmem:[#allocation3 + $0x30] sm:$0xf]
      %v2760 = vld [vmem:[#allocation3 + $0x34] sm:$0xf]
      %v2761 = vld [vmem:[#allocation3 + $0x38] sm:$0x1]
      %v2762 = vld [vmem:[#allocation3 + $0x3c] sm:$0xf]
      %v2763 = vld [vmem:[#allocation3 + $0x40] sm:$0xf]
      %v2764 = vld [vmem:[#allocation3 + $0x44] sm:$0x1]
      %v2765 = vld [vmem:[#allocation3 + $0x48] sm:$0xf]
      %v2766 = vld [vmem:[#allocation3 + $0x4c] sm:$0xf]
      %v2767 = vld [vmem:[#allocation3 + $0x50] sm:$0x1]
      %v2768 = vld [vmem:[#allocation3 + $0x54] sm:$0xf]
      %v2769 = vld [vmem:[#allocation3 + $0x58] sm:$0xf]
      %v2770 = vld [vmem:[#allocation3 + $0x5c] sm:$0x1]
      %v2771 = vld [vmem:[#allocation3 + $0x60] sm:$0xf]
      %v2772 = vld [vmem:[#allocation3 + $0x64] sm:$0xf]
      %v2773 = vld [vmem:[#allocation3 + $0x68] sm:$0x1]
      %v2774 = vld [vmem:[#allocation3 + $0x6c] sm:$0xf]
      %v2775 = vld [vmem:[#allocation3 + $0x70] sm:$0xf]
      %v2776 = vld [vmem:[#allocation3 + $0x74] sm:$0x1]
      %v2777 = vld [vmem:[#allocation3 + $0x78] sm:$0xf]
      %v2778 = vld [vmem:[#allocation3 + $0x7c] sm:$0xf]
      %v2779 = vld [vmem:[#allocation3 + $0x80] sm:$0x1]
      %v2780 = vld [vmem:[#allocation3 + $0x84] sm:$0xf]
      %v2781 = vld [vmem:[#allocation3 + $0x88] sm:$0xf]
      %v2782 = vld [vmem:[#allocation3 + $0x8c] sm:$0x1]
      %v2783 = vld [vmem:[#allocation3 + $0x90] sm:$0xf]
      %v2784 = vld [vmem:[#allocation3 + $0x94] sm:$0xf]
      %v2785 = vld [vmem:[#allocation3 + $0x98] sm:$0x1]
      %v2786 = vld [vmem:[#allocation3 + $0x9c] sm:$0xf]
      %v2787 = vld [vmem:[#allocation3 + $0xa0] sm:$0xf]
      %v2788 = vld [vmem:[#allocation3 + $0xa4] sm:$0x1]
      %v2789 = vld [vmem:[#allocation3 + $0xa8] sm:$0xf]
      %v2790 = vld [vmem:[#allocation3 + $0xac] sm:$0xf]
      %v2791 = vld [vmem:[#allocation3 + $0xb0] sm:$0x1]
      %v2792 = vld [vmem:[#allocation3 + $0xb4] sm:$0xf]
      %v2793 = vld [vmem:[#allocation3 + $0xb8] sm:$0xf]
      %v2794 = vld [vmem:[#allocation3 + $0xbc] sm:$0x1]
      %v2795 = vld [vmem:[#allocation3 + $0xc0] sm:$0xf]
      %v2796 = vld [vmem:[#allocation3 + $0xc4] sm:$0xf]
      %v2797 = vld [vmem:[#allocation3 + $0xc8] sm:$0x1]
      %v2798 = vld [vmem:[#allocation3 + $0xcc] sm:$0xf]
      %v2799 = vld [vmem:[#allocation3 + $0xd0] sm:$0xf]
      %v2800 = vld [vmem:[#allocation3 + $0xd4] sm:$0x1]
      %v2833 = vunpack.c.l.b16 %v2747
      %v2834 = vunpack.c.l.b16 %v2748
      %v2835 = vunpack.c.l.b16 %v2750
      %v2836 = vunpack.c.l.b16 %v2751
      %v2837 = vunpack.c.l.b16 %v2753
      %v2838 = vunpack.c.l.b16 %v2754
      %v2839 = vunpack.c.l.b16 %v2756
      %v2840 = vunpack.c.l.b16 %v2757
      %v2841 = vunpack.c.l.b16 %v2759
      %v2842 = vunpack.c.l.b16 %v2760
      %v2843 = vunpack.c.l.b16 %v2762
      %v2844 = vunpack.c.l.b16 %v2763
      %v2845 = vunpack.c.l.b16 %v2765
      %v2846 = vunpack.c.l.b16 %v2766
      %v2847 = vunpack.c.l.b16 %v2768
      %v2848 = vunpack.c.l.b16 %v2769
      %v2849 = vunpack.c.l.b16 %v2771
      %v2850 = vunpack.c.l.b16 %v2772
      %v2851 = vunpack.c.l.b16 %v2774
      %v2852 = vunpack.c.l.b16 %v2775
      %v2853 = vunpack.c.l.b16 %v2777
      %v2854 = vunpack.c.l.b16 %v2778
      %v2855 = vunpack.c.l.b16 %v2780
      %v2856 = vunpack.c.l.b16 %v2781
      %v2857 = vunpack.c.l.b16 %v2783
      %v2858 = vunpack.c.l.b16 %v2784
      %v2859 = vunpack.c.l.b16 %v2786
      %v2860 = vunpack.c.l.b16 %v2787
      %v2861 = vunpack.c.l.b16 %v2789
      %v2862 = vunpack.c.l.b16 %v2790
      %v2863 = vunpack.c.l.b16 %v2792
      %v2864 = vunpack.c.l.b16 %v2793
      %v2865 = vpack.c.b16 %v2834, %v2833
      %v2866 = vpack.c.b16 %v2836, %v2835
      %v2867 = vpack.c.b16 %v2838, %v2837
      %v2868 = vpack.c.b16 %v2840, %v2839
      %v2869 = vpack.c.b16 %v2842, %v2841
      %v2870 = vpack.c.b16 %v2844, %v2843
      %v2871 = vpack.c.b16 %v2846, %v2845
      %v2872 = vpack.c.b16 %v2848, %v2847
      %v2873 = vpack.c.b16 %v2850, %v2849
      %v2874 = vpack.c.b16 %v2852, %v2851
      %v2875 = vpack.c.b16 %v2854, %v2853
      %v2876 = vpack.c.b16 %v2856, %v2855
      %v2877 = vpack.c.b16 %v2858, %v2857
      %v2878 = vpack.c.b16 %v2860, %v2859
      %v2879 = vpack.c.b16 %v2862, %v2861
      %v2880 = vpack.c.b16 %v2864, %v2863
      %v2897 = vunpack.c.l.b16 %v2749
      %v2898 = vunpack.c.l.b16 %v2752
      %v2899 = vunpack.c.l.b16 %v2755
      %v2900 = vunpack.c.l.b16 %v2758
      %v2901 = vunpack.c.l.b16 %v2761
      %v2902 = vunpack.c.l.b16 %v2764
      %v2903 = vunpack.c.l.b16 %v2767
      %v2904 = vunpack.c.l.b16 %v2770
      %v2905 = vunpack.c.l.b16 %v2773
      %v2906 = vunpack.c.l.b16 %v2776
      %v2907 = vunpack.c.l.b16 %v2779
      %v2908 = vunpack.c.l.b16 %v2782
      %v2909 = vunpack.c.l.b16 %v2785
      %v2910 = vunpack.c.l.b16 %v2788
      %v2911 = vunpack.c.l.b16 %v2791
      %v2912 = vunpack.c.l.b16 %v2794
      %v2913 = vpack.c.b16 %v2897, %v2897
      %v2914 = vpack.c.b16 %v2898, %v2898
      %v2915 = vpack.c.b16 %v2899, %v2899
      %v2916 = vpack.c.b16 %v2900, %v2900
      %v2917 = vpack.c.b16 %v2901, %v2901
      %v2918 = vpack.c.b16 %v2902, %v2902
      %v2919 = vpack.c.b16 %v2903, %v2903
      %v2920 = vpack.c.b16 %v2904, %v2904
      %v2921 = vpack.c.b16 %v2905, %v2905
      %v2922 = vpack.c.b16 %v2906, %v2906
      %v2923 = vpack.c.b16 %v2907, %v2907
      %v2924 = vpack.c.b16 %v2908, %v2908
      %v2925 = vpack.c.b16 %v2909, %v2909
      %v2926 = vpack.c.b16 %v2910, %v2910
      %v2927 = vpack.c.b16 %v2911, %v2911
      %v2928 = vpack.c.b16 %v2912, %v2912
      %v2930 = vshrl.u32 %v2865, 16
      %v2932 = vshll.u32 %v2865, 16
      %v2934 = vrot.slane %v2932, 1
      %v2935 = vor.u32 %v2930, %v2934
      %v2937 = vshll.u32 %v2913, 16
      %v2939 = vrot.slane %v2937, 1
      %v2940 = vsel %vm938, %v2935, %v2939
      %v2942 = vshrl.u32 %v2866, 16
      %v2944 = vshll.u32 %v2866, 16
      %v2946 = vrot.slane %v2944, 1
      %v2947 = vor.u32 %v2942, %v2946
      %v2949 = vshll.u32 %v2914, 16
      %v2951 = vrot.slane %v2949, 1
      %v2952 = vsel %vm938, %v2947, %v2951
      %v2954 = vshrl.u32 %v2867, 16
      %v2956 = vshll.u32 %v2867, 16
      %v2958 = vrot.slane %v2956, 1
      %v2959 = vor.u32 %v2954, %v2958
      %v2961 = vshll.u32 %v2915, 16
      %v2963 = vrot.slane %v2961, 1
      %v2964 = vsel %vm938, %v2959, %v2963
      %v2966 = vshrl.u32 %v2868, 16
      %v2968 = vshll.u32 %v2868, 16
      %v2970 = vrot.slane %v2968, 1
      %v2971 = vor.u32 %v2966, %v2970
      %v2973 = vshll.u32 %v2916, 16
      %v2975 = vrot.slane %v2973, 1
      %v2976 = vsel %vm938, %v2971, %v2975
      %v2978 = vshrl.u32 %v2869, 16
      %v2980 = vshll.u32 %v2869, 16
      %v2982 = vrot.slane %v2980, 1
      %v2983 = vor.u32 %v2978, %v2982
      %v2985 = vshll.u32 %v2917, 16
      %v2987 = vrot.slane %v2985, 1
      %v2988 = vsel %vm938, %v2983, %v2987
      %v2990 = vshrl.u32 %v2870, 16
      %v2992 = vshll.u32 %v2870, 16
      %v2994 = vrot.slane %v2992, 1
      %v2995 = vor.u32 %v2990, %v2994
      %v2997 = vshll.u32 %v2918, 16
      %v2999 = vrot.slane %v2997, 1
      %v3000 = vsel %vm938, %v2995, %v2999
      %v3002 = vshrl.u32 %v2871, 16
      %v3004 = vshll.u32 %v2871, 16
      %v3006 = vrot.slane %v3004, 1
      %v3007 = vor.u32 %v3002, %v3006
      %v3009 = vshll.u32 %v2919, 16
      %v3011 = vrot.slane %v3009, 1
      %v3012 = vsel %vm938, %v3007, %v3011
      %v3014 = vshrl.u32 %v2872, 16
      %v3016 = vshll.u32 %v2872, 16
      %v3018 = vrot.slane %v3016, 1
      %v3019 = vor.u32 %v3014, %v3018
      %v3021 = vshll.u32 %v2920, 16
      %v3023 = vrot.slane %v3021, 1
      %v3024 = vsel %vm938, %v3019, %v3023
      %v3026 = vshrl.u32 %v2873, 16
      %v3028 = vshll.u32 %v2873, 16
      %v3030 = vrot.slane %v3028, 1
      %v3031 = vor.u32 %v3026, %v3030
      %v3033 = vshll.u32 %v2921, 16
      %v3035 = vrot.slane %v3033, 1
      %v3036 = vsel %vm938, %v3031, %v3035
      %v3038 = vshrl.u32 %v2874, 16
      %v3040 = vshll.u32 %v2874, 16
      %v3042 = vrot.slane %v3040, 1
      %v3043 = vor.u32 %v3038, %v3042
      %v3045 = vshll.u32 %v2922, 16
      %v3047 = vrot.slane %v3045, 1
      %v3048 = vsel %vm938, %v3043, %v3047
      %v3050 = vshrl.u32 %v2875, 16
      %v3052 = vshll.u32 %v2875, 16
      %v3054 = vrot.slane %v3052, 1
      %v3055 = vor.u32 %v3050, %v3054
      %v3057 = vshll.u32 %v2923, 16
      %v3059 = vrot.slane %v3057, 1
      %v3060 = vsel %vm938, %v3055, %v3059
      %v3062 = vshrl.u32 %v2876, 16
      %v3064 = vshll.u32 %v2876, 16
      %v3066 = vrot.slane %v3064, 1
      %v3067 = vor.u32 %v3062, %v3066
      %v3069 = vshll.u32 %v2924, 16
      %v3071 = vrot.slane %v3069, 1
      %v3072 = vsel %vm938, %v3067, %v3071
      %v3074 = vshrl.u32 %v2877, 16
      %v3076 = vshll.u32 %v2877, 16
      %v3078 = vrot.slane %v3076, 1
      %v3079 = vor.u32 %v3074, %v3078
      %v3081 = vshll.u32 %v2925, 16
      %v3083 = vrot.slane %v3081, 1
      %v3084 = vsel %vm938, %v3079, %v3083
      %v3086 = vshrl.u32 %v2878, 16
      %v3088 = vshll.u32 %v2878, 16
      %v3090 = vrot.slane %v3088, 1
      %v3091 = vor.u32 %v3086, %v3090
      %v3093 = vshll.u32 %v2926, 16
      %v3095 = vrot.slane %v3093, 1
      %v3096 = vsel %vm938, %v3091, %v3095
      %v3098 = vshrl.u32 %v2879, 16
      %v3100 = vshll.u32 %v2879, 16
      %v3102 = vrot.slane %v3100, 1
      %v3103 = vor.u32 %v3098, %v3102
      %v3105 = vshll.u32 %v2927, 16
      %v3107 = vrot.slane %v3105, 1
      %v3108 = vsel %vm938, %v3103, %v3107
      %v3110 = vshrl.u32 %v2880, 16
      %v3112 = vshll.u32 %v2880, 16
      %v3114 = vrot.slane %v3112, 1
      %v3115 = vor.u32 %v3110, %v3114
      %v3117 = vshll.u32 %v2928, 16
      %v3119 = vrot.slane %v3117, 1
      %v3120 = vsel %vm938, %v3115, %v3119
      %3121 = vrot.lane.b32.xlu0 %v2940, 32
      %v3122 = vpop.permute.xlu0 %3121
      %3123 = vrot.lane.b32.xlu0 %v2952, 32
      %v3124 = vpop.permute.xlu0 %3123
      %3125 = vrot.lane.b32.xlu0 %v2964, 32
      %v3126 = vpop.permute.xlu0 %3125
      %3127 = vrot.lane.b32.xlu0 %v2976, 32
      %v3128 = vpop.permute.xlu0 %3127
      %3129 = vrot.lane.b32.xlu0 %v2988, 32
      %v3130 = vpop.permute.xlu0 %3129
      %3131 = vrot.lane.b32.xlu0 %v3000, 32
      %v3132 = vpop.permute.xlu0 %3131
      %3133 = vrot.lane.b32.xlu0 %v3012, 32
      %v3134 = vpop.permute.xlu0 %3133
      %3135 = vrot.lane.b32.xlu0 %v3024, 32
      %v3136 = vpop.permute.xlu0 %3135
      %3137 = vrot.lane.b32.xlu0 %v3036, 32
      %v3138 = vpop.permute.xlu0 %3137
      %3139 = vrot.lane.b32.xlu0 %v3048, 32
      %v3140 = vpop.permute.xlu0 %3139
      %3141 = vrot.lane.b32.xlu0 %v3060, 32
      %v3142 = vpop.permute.xlu0 %3141
      %3143 = vrot.lane.b32.xlu0 %v3072, 32
      %v3144 = vpop.permute.xlu0 %3143
      %3145 = vrot.lane.b32.xlu0 %v3084, 32
      %v3146 = vpop.permute.xlu0 %3145
      %3147 = vrot.lane.b32.xlu0 %v3096, 32
      %v3148 = vpop.permute.xlu0 %3147
      %3149 = vrot.lane.b32.xlu0 %v3108, 32
      %v3150 = vpop.permute.xlu0 %3149
      %3151 = vrot.lane.b32.xlu0 %v3120, 32
      %v3152 = vpop.permute.xlu0 %3151
      %v3153 = vrot.slane %v2865, 1
      %v3154 = vrot.slane %v2913, 1
      %v3155 = vsel %vm1163, %v3153, %v3154
      %v3156 = vrot.slane %v2866, 1
      %v3157 = vrot.slane %v2914, 1
      %v3158 = vsel %vm1163, %v3156, %v3157
      %v3159 = vrot.slane %v2867, 1
      %v3160 = vrot.slane %v2915, 1
      %v3161 = vsel %vm1163, %v3159, %v3160
      %v3162 = vrot.slane %v2868, 1
      %v3163 = vrot.slane %v2916, 1
      %v3164 = vsel %vm1163, %v3162, %v3163
      %v3165 = vrot.slane %v2869, 1
      %v3166 = vrot.slane %v2917, 1
      %v3167 = vsel %vm1163, %v3165, %v3166
      %v3168 = vrot.slane %v2870, 1
      %v3169 = vrot.slane %v2918, 1
      %v3170 = vsel %vm1163, %v3168, %v3169
      %v3171 = vrot.slane %v2871, 1
      %v3172 = vrot.slane %v2919, 1
      %v3173 = vsel %vm1163, %v3171, %v3172
      %v3174 = vrot.slane %v2872, 1
      %v3175 = vrot.slane %v2920, 1
      %v3176 = vsel %vm1163, %v3174, %v3175
      %v3177 = vrot.slane %v2873, 1
      %v3178 = vrot.slane %v2921, 1
      %v3179 = vsel %vm1163, %v3177, %v3178
      %v3180 = vrot.slane %v2874, 1
      %v3181 = vrot.slane %v2922, 1
      %v3182 = vsel %vm1163, %v3180, %v3181
      %v3183 = vrot.slane %v2875, 1
      %v3184 = vrot.slane %v2923, 1
      %v3185 = vsel %vm1163, %v3183, %v3184
      %v3186 = vrot.slane %v2876, 1
      %v3187 = vrot.slane %v2924, 1
      %v3188 = vsel %vm1163, %v3186, %v3187
      %v3189 = vrot.slane %v2877, 1
      %v3190 = vrot.slane %v2925, 1
      %v3191 = vsel %vm1163, %v3189, %v3190
      %v3192 = vrot.slane %v2878, 1
      %v3193 = vrot.slane %v2926, 1
      %v3194 = vsel %vm1163, %v3192, %v3193
      %v3195 = vrot.slane %v2879, 1
      %v3196 = vrot.slane %v2927, 1
      %v3197 = vsel %vm1163, %v3195, %v3196
      %v3198 = vrot.slane %v2880, 1
      %v3199 = vrot.slane %v2928, 1
      %v3200 = vsel %vm1163, %v3198, %v3199
      %3201 = vrot.lane.b32.xlu0 %v3155, 64
      %v3202 = vpop.permute.xlu0 %3201
      %3203 = vrot.lane.b32.xlu0 %v3158, 64
      %v3204 = vpop.permute.xlu0 %3203
      %3205 = vrot.lane.b32.xlu0 %v3161, 64
      %v3206 = vpop.permute.xlu0 %3205
      %3207 = vrot.lane.b32.xlu0 %v3164, 64
      %v3208 = vpop.permute.xlu0 %3207
      %3209 = vrot.lane.b32.xlu0 %v3167, 64
      %v3210 = vpop.permute.xlu0 %3209
      %3211 = vrot.lane.b32.xlu0 %v3170, 64
      %v3212 = vpop.permute.xlu0 %3211
      %3213 = vrot.lane.b32.xlu0 %v3173, 64
      %v3214 = vpop.permute.xlu0 %3213
      %3215 = vrot.lane.b32.xlu0 %v3176, 64
      %v3216 = vpop.permute.xlu0 %3215
      %3217 = vrot.lane.b32.xlu0 %v3179, 64
      %v3218 = vpop.permute.xlu0 %3217
      %3219 = vrot.lane.b32.xlu0 %v3182, 64
      %v3220 = vpop.permute.xlu0 %3219
      %3221 = vrot.lane.b32.xlu0 %v3185, 64
      %v3222 = vpop.permute.xlu0 %3221
      %3223 = vrot.lane.b32.xlu0 %v3188, 64
      %v3224 = vpop.permute.xlu0 %3223
      %3225 = vrot.lane.b32.xlu0 %v3191, 64
      %v3226 = vpop.permute.xlu0 %3225
      %3227 = vrot.lane.b32.xlu0 %v3194, 64
      %v3228 = vpop.permute.xlu0 %3227
      %3229 = vrot.lane.b32.xlu0 %v3197, 64
      %v3230 = vpop.permute.xlu0 %3229
      %3231 = vrot.lane.b32.xlu0 %v3200, 64
      %v3232 = vpop.permute.xlu0 %3231
      %v3235 = vunpack.c.l.b16 %v2795
      %v3236 = vunpack.c.l.b16 %v2796
      %v3237 = vpack.c.b16 %v3236, %v3235
      %3238 = vrot.lane.b32.xlu0 %v2866, 96
      %v3239 = vpop.permute.xlu0 %3238
      %3240 = vrot.lane.b32.xlu0 %v2867, 96
      %v3241 = vpop.permute.xlu0 %3240
      %3242 = vrot.lane.b32.xlu0 %v2868, 96
      %v3243 = vpop.permute.xlu0 %3242
      %3244 = vrot.lane.b32.xlu0 %v2869, 96
      %v3245 = vpop.permute.xlu0 %3244
      %3246 = vrot.lane.b32.xlu0 %v2870, 96
      %v3247 = vpop.permute.xlu0 %3246
      %3248 = vrot.lane.b32.xlu0 %v2871, 96
      %v3249 = vpop.permute.xlu0 %3248
      %3250 = vrot.lane.b32.xlu0 %v2872, 96
      %v3251 = vpop.permute.xlu0 %3250
      %3252 = vrot.lane.b32.xlu0 %v2873, 96
      %v3253 = vpop.permute.xlu0 %3252
      %3254 = vrot.lane.b32.xlu0 %v2874, 96
      %v3255 = vpop.permute.xlu0 %3254
      %3256 = vrot.lane.b32.xlu0 %v2875, 96
      %v3257 = vpop.permute.xlu0 %3256
      %3258 = vrot.lane.b32.xlu0 %v2876, 96
      %v3259 = vpop.permute.xlu0 %3258
      %3260 = vrot.lane.b32.xlu0 %v2877, 96
      %v3261 = vpop.permute.xlu0 %3260
      %3262 = vrot.lane.b32.xlu0 %v2878, 96
      %v3263 = vpop.permute.xlu0 %3262
      %3264 = vrot.lane.b32.xlu0 %v2879, 96
      %v3265 = vpop.permute.xlu0 %3264
      %3266 = vrot.lane.b32.xlu0 %v2880, 96
      %v3267 = vpop.permute.xlu0 %3266
      %3268 = vrot.lane.b32.xlu0 %v3237, 96
      %v3269 = vpop.permute.xlu0 %3268
      %v3271 = vunpack.c.l.b16 %v2797
      %v3272 = vpack.c.b16 %v3271, %v3271
      %v3274 = vshrl.u32 %v3237, 16
      %v3276 = vshll.u32 %v3237, 16
      %v3278 = vrot.slane %v3276, 1
      %v3279 = vor.u32 %v3274, %v3278
      %v3281 = vshll.u32 %v3272, 16
      %v3283 = vrot.slane %v3281, 1
      %v3284 = vsel %vm938, %v3279, %v3283
      %v3285 = vrot.slane %v3237, 1
      %v3286 = vrot.slane %v3272, 1
      %v3287 = vsel %vm1163, %v3285, %v3286
      %3288 = vrot.lane.b32.xlu0 %v3158, 32
      %v3289 = vpop.permute.xlu0 %3288
      %3290 = vrot.lane.b32.xlu0 %v3161, 32
      %v3291 = vpop.permute.xlu0 %3290
      %3292 = vrot.lane.b32.xlu0 %v3164, 32
      %v3293 = vpop.permute.xlu0 %3292
      %3294 = vrot.lane.b32.xlu0 %v3167, 32
      %v3295 = vpop.permute.xlu0 %3294
      %3296 = vrot.lane.b32.xlu0 %v3170, 32
      %v3297 = vpop.permute.xlu0 %3296
      %3298 = vrot.lane.b32.xlu0 %v3173, 32
      %v3299 = vpop.permute.xlu0 %3298
      %3300 = vrot.lane.b32.xlu0 %v3176, 32
      %v3301 = vpop.permute.xlu0 %3300
      %3302 = vrot.lane.b32.xlu0 %v3179, 32
      %v3303 = vpop.permute.xlu0 %3302
      %3304 = vrot.lane.b32.xlu0 %v3182, 32
      %v3305 = vpop.permute.xlu0 %3304
      %3306 = vrot.lane.b32.xlu0 %v3185, 32
      %v3307 = vpop.permute.xlu0 %3306
      %3308 = vrot.lane.b32.xlu0 %v3188, 32
      %v3309 = vpop.permute.xlu0 %3308
      %3310 = vrot.lane.b32.xlu0 %v3191, 32
      %v3311 = vpop.permute.xlu0 %3310
      %3312 = vrot.lane.b32.xlu0 %v3194, 32
      %v3313 = vpop.permute.xlu0 %3312
      %3314 = vrot.lane.b32.xlu0 %v3197, 32
      %v3315 = vpop.permute.xlu0 %3314
      %3316 = vrot.lane.b32.xlu0 %v3200, 32
      %v3317 = vpop.permute.xlu0 %3316
      %3318 = vrot.lane.b32.xlu0 %v3287, 32
      %v3319 = vpop.permute.xlu0 %3318
      %v3322 = vunpack.c.l.b16 %v2798
      %v3323 = vunpack.c.l.b16 %v2799
      %v3324 = vpack.c.b16 %v3323, %v3322
      %3325 = vrot.lane.b32.xlu0 %v2867, 64
      %v3326 = vpop.permute.xlu0 %3325
      %3327 = vrot.lane.b32.xlu0 %v2868, 64
      %v3328 = vpop.permute.xlu0 %3327
      %3329 = vrot.lane.b32.xlu0 %v2869, 64
      %v3330 = vpop.permute.xlu0 %3329
      %3331 = vrot.lane.b32.xlu0 %v2870, 64
      %v3332 = vpop.permute.xlu0 %3331
      %3333 = vrot.lane.b32.xlu0 %v2871, 64
      %v3334 = vpop.permute.xlu0 %3333
      %3335 = vrot.lane.b32.xlu0 %v2872, 64
      %v3336 = vpop.permute.xlu0 %3335
      %3337 = vrot.lane.b32.xlu0 %v2873, 64
      %v3338 = vpop.permute.xlu0 %3337
      %3339 = vrot.lane.b32.xlu0 %v2874, 64
      %v3340 = vpop.permute.xlu0 %3339
      %3341 = vrot.lane.b32.xlu0 %v2875, 64
      %v3342 = vpop.permute.xlu0 %3341
      %3343 = vrot.lane.b32.xlu0 %v2876, 64
      %v3344 = vpop.permute.xlu0 %3343
      %3345 = vrot.lane.b32.xlu0 %v2877, 64
      %v3346 = vpop.permute.xlu0 %3345
      %3347 = vrot.lane.b32.xlu0 %v2878, 64
      %v3348 = vpop.permute.xlu0 %3347
      %3349 = vrot.lane.b32.xlu0 %v2879, 64
      %v3350 = vpop.permute.xlu0 %3349
      %3351 = vrot.lane.b32.xlu0 %v2880, 64
      %v3352 = vpop.permute.xlu0 %3351
      %3353 = vrot.lane.b32.xlu0 %v3237, 64
      %v3354 = vpop.permute.xlu0 %3353
      %3355 = vrot.lane.b32.xlu0 %v3324, 64
      %v3356 = vpop.permute.xlu0 %3355
      %v3358 = vunpack.c.l.b16 %v2800
      %v3359 = vpack.c.b16 %v3358, %v3358
      %v3361 = vshrl.u32 %v3324, 16
      %v3363 = vshll.u32 %v3324, 16
      %v3365 = vrot.slane %v3363, 1
      %v3366 = vor.u32 %v3361, %v3365
      %v3368 = vshll.u32 %v3359, 16
      %v3370 = vrot.slane %v3368, 1
      %v3371 = vsel %vm938, %v3366, %v3370
      %3372 = vrot.lane.b32.xlu0 %v2964, 96
      %v3373 = vpop.permute.xlu0 %3372
      %3374 = vrot.lane.b32.xlu0 %v2976, 96
      %v3375 = vpop.permute.xlu0 %3374
      %3376 = vrot.lane.b32.xlu0 %v2988, 96
      %v3377 = vpop.permute.xlu0 %3376
      %3378 = vrot.lane.b32.xlu0 %v3000, 96
      %v3379 = vpop.permute.xlu0 %3378
      %3380 = vrot.lane.b32.xlu0 %v3012, 96
      %v3381 = vpop.permute.xlu0 %3380
      %3382 = vrot.lane.b32.xlu0 %v3024, 96
      %v3383 = vpop.permute.xlu0 %3382
      %3384 = vrot.lane.b32.xlu0 %v3036, 96
      %v3385 = vpop.permute.xlu0 %3384
      %3386 = vrot.lane.b32.xlu0 %v3048, 96
      %v3387 = vpop.permute.xlu0 %3386
      %3388 = vrot.lane.b32.xlu0 %v3060, 96
      %v3389 = vpop.permute.xlu0 %3388
      %3390 = vrot.lane.b32.xlu0 %v3072, 96
      %v3391 = vpop.permute.xlu0 %3390
      %3392 = vrot.lane.b32.xlu0 %v3084, 96
      %v3393 = vpop.permute.xlu0 %3392
      %3394 = vrot.lane.b32.xlu0 %v3096, 96
      %v3395 = vpop.permute.xlu0 %3394
      %3396 = vrot.lane.b32.xlu0 %v3108, 96
      %v3397 = vpop.permute.xlu0 %3396
      %3398 = vrot.lane.b32.xlu0 %v3120, 96
      %v3399 = vpop.permute.xlu0 %3398
      %3400 = vrot.lane.b32.xlu0 %v3284, 96
      %v3401 = vpop.permute.xlu0 %3400
      %3402 = vrot.lane.b32.xlu0 %v3371, 96
      %v3403 = vpop.permute.xlu0 %3402
      %v3404 = vrot.slane %v3324, 1
      %v3405 = vrot.slane %v3359, 1
      %v3406 = vsel %vm1163, %v3404, %v3405
      %v3408 = vsel %vm1418, %v2865, %v3122
      %v3410 = vsel %vm1418, %v2866, %v3124
      %v3412 = vsel %vm1418, %v2867, %v3126
      %v3414 = vsel %vm1418, %v2868, %v3128
      %v3416 = vsel %vm1418, %v2869, %v3130
      %v3418 = vsel %vm1418, %v2870, %v3132
      %v3420 = vsel %vm1418, %v2871, %v3134
      %v3422 = vsel %vm1418, %v2872, %v3136
      %v3424 = vsel %vm1418, %v2873, %v3138
      %v3426 = vsel %vm1418, %v2874, %v3140
      %v3428 = vsel %vm1418, %v2875, %v3142
      %v3430 = vsel %vm1418, %v2876, %v3144
      %v3432 = vsel %vm1418, %v2877, %v3146
      %v3434 = vsel %vm1418, %v2878, %v3148
      %v3436 = vsel %vm1418, %v2879, %v3150
      %v3438 = vsel %vm1418, %v2880, %v3152
      %v3440 = vsel %vm1451, %v3408, %v3202
      %v3442 = vsel %vm1451, %v3410, %v3204
      %v3444 = vsel %vm1451, %v3412, %v3206
      %v3446 = vsel %vm1451, %v3414, %v3208
      %v3448 = vsel %vm1451, %v3416, %v3210
      %v3450 = vsel %vm1451, %v3418, %v3212
      %v3452 = vsel %vm1451, %v3420, %v3214
      %v3454 = vsel %vm1451, %v3422, %v3216
      %v3456 = vsel %vm1451, %v3424, %v3218
      %v3458 = vsel %vm1451, %v3426, %v3220
      %v3460 = vsel %vm1451, %v3428, %v3222
      %v3462 = vsel %vm1451, %v3430, %v3224
      %v3464 = vsel %vm1451, %v3432, %v3226
      %v3466 = vsel %vm1451, %v3434, %v3228
      %v3468 = vsel %vm1451, %v3436, %v3230
      %v3470 = vsel %vm1451, %v3438, %v3232
      %v3472 = vsel %vm1484, %v3440, %v3239
      %v3475 = vsel %vm1484, %v3442, %v3241
      %v3478 = vsel %vm1484, %v3444, %v3243
      %v3481 = vsel %vm1484, %v3446, %v3245
      %v3484 = vsel %vm1484, %v3448, %v3247
      %v3487 = vsel %vm1484, %v3450, %v3249
      %v3490 = vsel %vm1484, %v3452, %v3251
      %v3493 = vsel %vm1484, %v3454, %v3253
      %v3496 = vsel %vm1484, %v3456, %v3255
      %v3499 = vsel %vm1484, %v3458, %v3257
      %v3502 = vsel %vm1484, %v3460, %v3259
      %v3505 = vsel %vm1484, %v3462, %v3261
      %v3508 = vsel %vm1484, %v3464, %v3263
      %v3511 = vsel %vm1484, %v3466, %v3265
      %v3514 = vsel %vm1484, %v3468, %v3267
      %v3517 = vsel %vm1484, %v3470, %v3269
      %v3521 = vsel %vm1418, %v2952, %v3289
      %v3524 = vsel %vm1418, %v2964, %v3291
      %v3527 = vsel %vm1418, %v2976, %v3293
      %v3530 = vsel %vm1418, %v2988, %v3295
      %v3533 = vsel %vm1418, %v3000, %v3297
      %v3536 = vsel %vm1418, %v3012, %v3299
      %v3539 = vsel %vm1418, %v3024, %v3301
      %v3542 = vsel %vm1418, %v3036, %v3303
      %v3545 = vsel %vm1418, %v3048, %v3305
      %v3548 = vsel %vm1418, %v3060, %v3307
      %v3551 = vsel %vm1418, %v3072, %v3309
      %v3554 = vsel %vm1418, %v3084, %v3311
      %v3557 = vsel %vm1418, %v3096, %v3313
      %v3560 = vsel %vm1418, %v3108, %v3315
      %v3563 = vsel %vm1418, %v3120, %v3317
      %v3566 = vsel %vm1418, %v3284, %v3319
      %v3568 = vsel %vm1451, %v3521, %v3326
      %v3570 = vsel %vm1451, %v3524, %v3328
      %v3572 = vsel %vm1451, %v3527, %v3330
      %v3574 = vsel %vm1451, %v3530, %v3332
      %v3576 = vsel %vm1451, %v3533, %v3334
      %v3578 = vsel %vm1451, %v3536, %v3336
      %v3580 = vsel %vm1451, %v3539, %v3338
      %v3582 = vsel %vm1451, %v3542, %v3340
      %v3584 = vsel %vm1451, %v3545, %v3342
      %v3586 = vsel %vm1451, %v3548, %v3344
      %v3588 = vsel %vm1451, %v3551, %v3346
      %v3590 = vsel %vm1451, %v3554, %v3348
      %v3592 = vsel %vm1451, %v3557, %v3350
      %v3594 = vsel %vm1451, %v3560, %v3352
      %v3596 = vsel %vm1451, %v3563, %v3354
      %v3598 = vsel %vm1451, %v3566, %v3356
      %v3600 = vsel %vm1484, %v3568, %v3373
      %v3603 = vsel %vm1484, %v3570, %v3375
      %v3606 = vsel %vm1484, %v3572, %v3377
      %v3609 = vsel %vm1484, %v3574, %v3379
      %v3612 = vsel %vm1484, %v3576, %v3381
      %v3615 = vsel %vm1484, %v3578, %v3383
      %v3618 = vsel %vm1484, %v3580, %v3385
      %v3621 = vsel %vm1484, %v3582, %v3387
      %v3624 = vsel %vm1484, %v3584, %v3389
      %v3627 = vsel %vm1484, %v3586, %v3391
      %v3630 = vsel %vm1484, %v3588, %v3393
      %v3633 = vsel %vm1484, %v3590, %v3395
      %v3636 = vsel %vm1484, %v3592, %v3397
      %v3639 = vsel %vm1484, %v3594, %v3399
      %v3642 = vsel %vm1484, %v3596, %v3401
      %v3645 = vsel %vm1484, %v3598, %v3403
      %s3647 = scalar_lea.vmem %s1, 144
      %v3648 = vld [vmem:[%s3647] sm:$0xf]
      %v3649 = vld [vmem:[%s3647 + $0x4] sm:$0xf]
      %v3650 = vld [vmem:[%s3647 + $0x8] sm:$0xf]
      %v3651 = vld [vmem:[%s3647 + $0xc] sm:$0xf]
      %v3652 = vld [vmem:[%s3647 + $0x10] sm:$0xf]
      %v3653 = vld [vmem:[%s3647 + $0x14] sm:$0xf]
      %v3654 = vld [vmem:[%s3647 + $0x18] sm:$0xf]
      %v3655 = vld [vmem:[%s3647 + $0x1c] sm:$0xf]
      %v3656 = vld [vmem:[%s3647 + $0x20] sm:$0xf]
      %v3657 = vld [vmem:[%s3647 + $0x24] sm:$0xf]
      %v3658 = vld [vmem:[%s3647 + $0x28] sm:$0xf]
      %v3659 = vld [vmem:[%s3647 + $0x2c] sm:$0xf]
      %v3660 = vld [vmem:[%s3647 + $0x30] sm:$0xf]
      %v3661 = vld [vmem:[%s3647 + $0x34] sm:$0xf]
      %v3662 = vld [vmem:[%s3647 + $0x38] sm:$0xf]
      %v3663 = vld [vmem:[%s3647 + $0x3c] sm:$0xf]
      %v3664 = vld [vmem:[%s3647 + $0x40] sm:$0xf]
      %v3665 = vld [vmem:[%s3647 + $0x44] sm:$0xf]
      %v3666 = vld [vmem:[%s3647 + $0x48] sm:$0xf]
      %v3667 = vld [vmem:[%s3647 + $0x4c] sm:$0xf]
      %v3668 = vld [vmem:[%s3647 + $0x50] sm:$0xf]
      %v3669 = vld [vmem:[%s3647 + $0x54] sm:$0xf]
      %v3670 = vld [vmem:[%s3647 + $0x58] sm:$0xf]
      %v3671 = vld [vmem:[%s3647 + $0x5c] sm:$0xf]
      %v3672 = vld [vmem:[%s3647 + $0x60] sm:$0xf]
      %v3673 = vld [vmem:[%s3647 + $0x64] sm:$0xf]
      %v3674 = vld [vmem:[%s3647 + $0x68] sm:$0xf]
      %v3675 = vld [vmem:[%s3647 + $0x6c] sm:$0xf]
      %v3676 = vld [vmem:[%s3647 + $0x70] sm:$0xf]
      %v3677 = vld [vmem:[%s3647 + $0x74] sm:$0xf]
      %v3678 = vld [vmem:[%s3647 + $0x78] sm:$0xf]
      %v3679 = vld [vmem:[%s3647 + $0x7c] sm:$0xf]
      %v3680 = vld [vmem:[%s3647 + $0x80] sm:$0xf]
      %v3681 = vld [vmem:[%s3647 + $0x84] sm:$0xf]
      %v3682 = vld [vmem:[%s3647 + $0x88] sm:$0xf]
      %v3683 = vld [vmem:[%s3647 + $0x8c] sm:$0xf]
      %s3684 = scalar_lea.vmem %s2, 1
      %v3685 = vld [vmem:[%s3684] sm:$0x1]
      %v3687 = vlaneseq
      %v3688 = vshrl.u32 %v3687, 7
      %v3689 = vsub.s32 0, %v3688
      %v3690 = vrot.slane %v3685, %v3689
      %v3728 = vunpack.c.l.b16 %v3648
      %v3729 = vunpack.c.l.b16 %v3649
      %v3730 = vunpack.c.l.b16 %v3650
      %v3731 = vunpack.c.l.b16 %v3651
      %v3732 = vunpack.c.l.b16 %v3652
      %v3733 = vunpack.c.l.b16 %v3653
      %v3734 = vunpack.c.l.b16 %v3654
      %v3735 = vunpack.c.l.b16 %v3655
      %v3736 = vunpack.c.l.b16 %v3656
      %v3737 = vunpack.c.l.b16 %v3657
      %v3738 = vunpack.c.l.b16 %v3658
      %v3739 = vunpack.c.l.b16 %v3659
      %v3740 = vunpack.c.l.b16 %v3660
      %v3741 = vunpack.c.l.b16 %v3661
      %v3742 = vunpack.c.l.b16 %v3662
      %v3743 = vunpack.c.l.b16 %v3663
      %v3744 = vunpack.c.l.b16 %v3664
      %v3745 = vunpack.c.l.b16 %v3665
      %v3746 = vunpack.c.l.b16 %v3666
      %v3747 = vunpack.c.l.b16 %v3667
      %v3748 = vunpack.c.l.b16 %v3668
      %v3749 = vunpack.c.l.b16 %v3669
      %v3750 = vunpack.c.l.b16 %v3670
      %v3751 = vunpack.c.l.b16 %v3671
      %v3752 = vunpack.c.l.b16 %v3672
      %v3753 = vunpack.c.l.b16 %v3673
      %v3754 = vunpack.c.l.b16 %v3674
      %v3755 = vunpack.c.l.b16 %v3675
      %v3756 = vunpack.c.l.b16 %v3676
      %v3757 = vunpack.c.l.b16 %v3677
      %v3758 = vunpack.c.l.b16 %v3678
      %v3759 = vunpack.c.l.b16 %v3679
      %v3760 = vunpack.c.l.b16 %v3680
      %v3761 = vunpack.c.l.b16 %v3681
      %v3762 = vunpack.c.l.b16 %v3682
      %v3763 = vunpack.c.l.b16 %v3683
      %v3764 = vpack.c.b16 %v3729, %v3728
      %v3765 = vpack.c.b16 %v3731, %v3730
      %v3766 = vpack.c.b16 %v3733, %v3732
      %v3767 = vpack.c.b16 %v3735, %v3734
      %v3768 = vpack.c.b16 %v3737, %v3736
      %v3769 = vpack.c.b16 %v3739, %v3738
      %v3770 = vpack.c.b16 %v3741, %v3740
      %v3771 = vpack.c.b16 %v3743, %v3742
      %v3772 = vpack.c.b16 %v3745, %v3744
      %v3773 = vpack.c.b16 %v3747, %v3746
      %v3774 = vpack.c.b16 %v3749, %v3748
      %v3775 = vpack.c.b16 %v3751, %v3750
      %v3776 = vpack.c.b16 %v3753, %v3752
      %v3777 = vpack.c.b16 %v3755, %v3754
      %v3778 = vpack.c.b16 %v3757, %v3756
      %v3779 = vpack.c.b16 %v3759, %v3758
      %v3780 = vpack.c.b16 %v3761, %v3760
      %v3781 = vpack.c.b16 %v3763, %v3762
      %v3801 = vsel %vm1418, %v3161, 0
      %v3804 = vsel %vm1418, %v3164, 0
      %v3807 = vsel %vm1418, %v3167, 0
      %v3810 = vsel %vm1418, %v3170, 0
      %v3813 = vsel %vm1418, %v3173, 0
      %v3816 = vsel %vm1418, %v3176, 0
      %v3819 = vsel %vm1418, %v3179, 0
      %v3822 = vsel %vm1418, %v3182, 0
      %v3825 = vsel %vm1418, %v3185, 0
      %v3828 = vsel %vm1418, %v3188, 0
      %v3831 = vsel %vm1418, %v3191, 0
      %v3834 = vsel %vm1418, %v3194, 0
      %v3837 = vsel %vm1418, %v3197, 0
      %v3840 = vsel %vm1418, %v3200, 0
      %v3843 = vsel %vm1418, %v3287, 0
      %v3846 = vsel %vm1418, %v3406, 0
      %3848 = vmatprep.subr.bf16.mxu0 0
      %3849 = vmatpush1.bf16.msra.mxu0 %v3764
      %3850 = vmatprep.subr.bf16.mxu0 0
      %3851 = vmatpush1.bf16.msra.mxu0 %v3765
      %3852 = vmatprep.subr.bf16.mxu0 0
      %3853 = vmatpush1.bf16.msra.mxu0 %v3766
      %3854 = vmatprep.subr.bf16.mxu0 0
      %3855 = vmatpush1.bf16.msra.mxu0 %v3767
      %3856 = vmatprep.subr.bf16.mxu0 0
      %3857 = vmatpush1.bf16.msra.mxu0 %v3768
      %3858 = vmatprep.subr.bf16.mxu0 0
      %3859 = vmatpush1.bf16.msra.mxu0 %v3769
      %3860 = vmatprep.subr.bf16.mxu0 0
      %3861 = vmatpush1.bf16.msra.mxu0 %v3770
      %3862 = vmatprep.subr.bf16.mxu0 0
      %3863 = vmatpush1.bf16.msra.mxu0 %v3771
      %3864 = vmatprep.subr.bf16.mxu0 0
      %3865 = vmatpush1.bf16.msra.mxu0 %v3772
      %3866 = vmatprep.subr.bf16.mxu0 0
      %3867 = vmatpush1.bf16.msra.mxu0 %v3773
      %3868 = vmatprep.subr.bf16.mxu0 0
      %3869 = vmatpush1.bf16.msra.mxu0 %v3774
      %3870 = vmatprep.subr.bf16.mxu0 0
      %3871 = vmatpush1.bf16.msra.mxu0 %v3775
      %3872 = vmatprep.subr.bf16.mxu0 0
      %3873 = vmatpush1.bf16.msra.mxu0 %v3776
      %3874 = vmatprep.subr.bf16.mxu0 0
      %3875 = vmatpush1.bf16.msra.mxu0 %v3777
      %3876 = vmatprep.subr.bf16.mxu0 0
      %3877 = vmatpush1.bf16.msra.mxu0 %v3778
      %3878 = vmatprep.subr.bf16.mxu0 0
      %3879 = vmatpush1.bf16.msra.mxu0 %v3779
      %3880 = vmatprep.mubr.bf16.mxu0 %v3600
      %3881 = vmatmul.mubr.bf16.gmra.mrb[0].mxu0 %v3472
      %v3882 = vpop.f32.mrb[0].mxu0
      %v3883 = vadd.f32 %v3690, %v3882
      %v3884 = vpop.f32.mrb[0].mxu0
      %v3885 = vpop.f32.mrb[0].mxu0
      %v3886 = vadd.f32 %v3690, %v3885
      %v3887 = vpop.f32.mrb[0].mxu0
      %3888 = vmatprep.mubr.bf16.mxu0 %v3603
      %3889 = vmatmul.mubr.bf16.gmra.mrb[0].mxu0 %v3475
      %v3890 = vpop.f32.mrb[0].mxu0
      %v3891 = vadd.f32 %v3690, %v3890
      %v3892 = vpop.f32.mrb[0].mxu0
      %v3893 = vpop.f32.mrb[0].mxu0
      %v3894 = vadd.f32 %v3690, %v3893
      %v3895 = vpop.f32.mrb[0].mxu0
      %3896 = vmatprep.mubr.bf16.mxu0 %v3606
      %3897 = vmatmul.mubr.bf16.gmra.mrb[0].mxu0 %v3478
      %v3898 = vpop.f32.mrb[0].mxu0
      %v3899 = vadd.f32 %v3690, %v3898
      %v3900 = vpop.f32.mrb[0].mxu0
      %v3901 = vpop.f32.mrb[0].mxu0
      %v3902 = vadd.f32 %v3690, %v3901
      %v3903 = vpop.f32.mrb[0].mxu0
      %3904 = vmatprep.mubr.bf16.mxu0 %v3609
      %3905 = vmatmul.mubr.bf16.gmra.mrb[0].mxu0 %v3481
      %v3906 = vpop.f32.mrb[0].mxu0
      %v3907 = vadd.f32 %v3690, %v3906
      %v3908 = vpop.f32.mrb[0].mxu0
      %v3909 = vpop.f32.mrb[0].mxu0
      %v3910 = vadd.f32 %v3690, %v3909
      %v3911 = vpop.f32.mrb[0].mxu0
      %3912 = vmatprep.mubr.bf16.mxu0 %v3612
      %3913 = vmatmul.mubr.bf16.gmra.mrb[0].mxu0 %v3484
      %v3914 = vpop.f32.mrb[0].mxu0
      %v3915 = vadd.f32 %v3690, %v3914
      %v3916 = vpop.f32.mrb[0].mxu0
      %v3917 = vpop.f32.mrb[0].mxu0
      %v3918 = vadd.f32 %v3690, %v3917
      %v3919 = vpop.f32.mrb[0].mxu0
      %3920 = vmatprep.mubr.bf16.mxu0 %v3615
      %3921 = vmatmul.mubr.bf16.gmra.mrb[0].mxu0 %v3487
      %v3922 = vpop.f32.mrb[0].mxu0
      %v3923 = vadd.f32 %v3690, %v3922
      %v3924 = vpop.f32.mrb[0].mxu0
      %v3925 = vpop.f32.mrb[0].mxu0
      %v3926 = vadd.f32 %v3690, %v3925
      %v3927 = vpop.f32.mrb[0].mxu0
      %3928 = vmatprep.mubr.bf16.mxu0 %v3618
      %3929 = vmatmul.mubr.bf16.gmra.mrb[0].mxu0 %v3490
      %v3930 = vpop.f32.mrb[0].mxu0
      %v3931 = vadd.f32 %v3690, %v3930
      %v3932 = vpop.f32.mrb[0].mxu0
      %v3933 = vpop.f32.mrb[0].mxu0
      %v3934 = vadd.f32 %v3690, %v3933
      %v3935 = vpop.f32.mrb[0].mxu0
      %3936 = vmatprep.mubr.bf16.mxu0 %v3621
      %3937 = vmatmul.mubr.bf16.gmra.mrb[0].mxu0 %v3493
      %v3938 = vpop.f32.mrb[0].mxu0
      %v3939 = vadd.f32 %v3690, %v3938
      %v3940 = vpop.f32.mrb[0].mxu0
      %v3941 = vpop.f32.mrb[0].mxu0
      %v3942 = vadd.f32 %v3690, %v3941
      %v3943 = vpop.f32.mrb[0].mxu0
      %3944 = vmatprep.mubr.bf16.mxu0 %v3624
      %3945 = vmatmul.mubr.bf16.gmra.mrb[0].mxu0 %v3496
      %v3946 = vpop.f32.mrb[0].mxu0
      %v3947 = vadd.f32 %v3690, %v3946
      %v3948 = vpop.f32.mrb[0].mxu0
      %v3949 = vpop.f32.mrb[0].mxu0
      %v3950 = vadd.f32 %v3690, %v3949
      %v3951 = vpop.f32.mrb[0].mxu0
      %3952 = vmatprep.mubr.bf16.mxu0 %v3627
      %3953 = vmatmul.mubr.bf16.gmra.mrb[0].mxu0 %v3499
      %v3954 = vpop.f32.mrb[0].mxu0
      %v3955 = vadd.f32 %v3690, %v3954
      %v3956 = vpop.f32.mrb[0].mxu0
      %v3957 = vpop.f32.mrb[0].mxu0
      %v3958 = vadd.f32 %v3690, %v3957
      %v3959 = vpop.f32.mrb[0].mxu0
      %3960 = vmatprep.mubr.bf16.mxu0 %v3630
      %3961 = vmatmul.mubr.bf16.gmra.mrb[0].mxu0 %v3502
      %v3962 = vpop.f32.mrb[0].mxu0
      %v3963 = vadd.f32 %v3690, %v3962
      %v3964 = vpop.f32.mrb[0].mxu0
      %v3965 = vpop.f32.mrb[0].mxu0
      %v3966 = vadd.f32 %v3690, %v3965
      %v3967 = vpop.f32.mrb[0].mxu0
      %3968 = vmatprep.mubr.bf16.mxu0 %v3633
      %3969 = vmatmul.mubr.bf16.gmra.mrb[0].mxu0 %v3505
      %v3970 = vpop.f32.mrb[0].mxu0
      %v3971 = vadd.f32 %v3690, %v3970
      %v3972 = vpop.f32.mrb[0].mxu0
      %v3973 = vpop.f32.mrb[0].mxu0
      %v3974 = vadd.f32 %v3690, %v3973
      %v3975 = vpop.f32.mrb[0].mxu0
      %3976 = vmatprep.mubr.bf16.mxu0 %v3636
      %3977 = vmatmul.mubr.bf16.gmra.mrb[0].mxu0 %v3508
      %v3978 = vpop.f32.mrb[0].mxu0
      %v3979 = vadd.f32 %v3690, %v3978
      %v3980 = vpop.f32.mrb[0].mxu0
      %v3981 = vpop.f32.mrb[0].mxu0
      %v3982 = vadd.f32 %v3690, %v3981
      %v3983 = vpop.f32.mrb[0].mxu0
      %3984 = vmatprep.mubr.bf16.mxu0 %v3639
      %3985 = vmatmul.mubr.bf16.gmra.mrb[0].mxu0 %v3511
      %v3986 = vpop.f32.mrb[0].mxu0
      %v3987 = vadd.f32 %v3690, %v3986
      %v3988 = vpop.f32.mrb[0].mxu0
      %v3989 = vpop.f32.mrb[0].mxu0
      %v3990 = vadd.f32 %v3690, %v3989
      %v3991 = vpop.f32.mrb[0].mxu0
      %3992 = vmatprep.mubr.bf16.mxu0 %v3642
      %3993 = vmatmul.mubr.bf16.gmra.mrb[0].mxu0 %v3514
      %v3994 = vpop.f32.mrb[0].mxu0
      %v3995 = vadd.f32 %v3690, %v3994
      %v3996 = vpop.f32.mrb[0].mxu0
      %v3997 = vpop.f32.mrb[0].mxu0
      %v3998 = vadd.f32 %v3690, %v3997
      %v3999 = vpop.f32.mrb[0].mxu0
      %4000 = vmatprep.mubr.bf16.mxu0 %v3645
      %4001 = vmatmul.mubr.bf16.gmra.mrb[0].mxu0 %v3517
      %v4002 = vpop.f32.mrb[0].mxu0
      %v4003 = vadd.f32 %v3690, %v4002
      %v4004 = vpop.f32.mrb[0].mxu0
      %v4005 = vpop.f32.mrb[0].mxu0
      %v4006 = vadd.f32 %v3690, %v4005
      %v4007 = vpop.f32.mrb[0].mxu0
      %4008 = vdwg.mxu0
      %4009 = vmatprep.subr.bf16.mxu0 0
      %4010 = vmatpush1.bf16.msra.mxu0 %v3780
      %4011 = vmatprep.subr.bf16.mxu0 0
      %4012 = vmatpush1.bf16.msra.mxu0 %v3781
      %4013 = vmatprep.subr.bf16.mxu0 0
      %4014 = vmatpush1.bf16.msra.mxu0 0
      %4015 = vmatprep.subr.bf16.mxu0 0
      %4016 = vmatpush1.bf16.msra.mxu0 0
      %4017 = vmatprep.subr.bf16.mxu0 0
      %4018 = vmatpush1.bf16.msra.mxu0 0
      %4019 = vmatprep.subr.bf16.mxu0 0
      %4020 = vmatpush1.bf16.msra.mxu0 0
      %4021 = vmatprep.subr.bf16.mxu0 0
      %4022 = vmatpush1.bf16.msra.mxu0 0
      %4023 = vmatprep.subr.bf16.mxu0 0
      %4024 = vmatpush1.bf16.msra.mxu0 0
      %4025 = vmatprep.subr.bf16.mxu0 0
      %4026 = vmatpush1.bf16.msra.mxu0 0
      %4027 = vmatprep.subr.bf16.mxu0 0
      %4028 = vmatpush1.bf16.msra.mxu0 0
      %4029 = vmatprep.subr.bf16.mxu0 0
      %4030 = vmatpush1.bf16.msra.mxu0 0
      %4031 = vmatprep.subr.bf16.mxu0 0
      %4032 = vmatpush1.bf16.msra.mxu0 0
      %4033 = vmatprep.subr.bf16.mxu0 0
      %4034 = vmatpush1.bf16.msra.mxu0 0
      %4035 = vmatprep.subr.bf16.mxu0 0
      %4036 = vmatpush1.bf16.msra.mxu0 0
      %4037 = vmatprep.subr.bf16.mxu0 0
      %4038 = vmatpush1.bf16.msra.mxu0 0
      %4039 = vmatprep.subr.bf16.mxu0 0
      %4040 = vmatpush1.bf16.msra.mxu0 0
      %4041 = vmatprep.mubr.bf16.mxu0 0
      %4042 = vmatmul.mubr.bf16.gmra.mrb[0].mxu0 %v3801
      %v4043 = vpop.f32.mrb[0].mxu0
      %v4044 = vadd.f32 %v3883, %v4043
      %v4045 = vpop.f32.mrb[0].mxu0
      %v4046 = vpop.f32.mrb[0].mxu0
      %v4047 = vadd.f32 %v3886, %v4046
      %v4048 = vpop.f32.mrb[0].mxu0
      %4049 = vmatprep.mubr.bf16.mxu0 0
      %4050 = vmatmul.mubr.bf16.gmra.mrb[0].mxu0 %v3804
      %v4051 = vpop.f32.mrb[0].mxu0
      %v4052 = vadd.f32 %v3891, %v4051
      %v4053 = vpop.f32.mrb[0].mxu0
      %v4054 = vpop.f32.mrb[0].mxu0
      %v4055 = vadd.f32 %v3894, %v4054
      %v4056 = vpop.f32.mrb[0].mxu0
      %4057 = vmatprep.mubr.bf16.mxu0 0
      %4058 = vmatmul.mubr.bf16.gmra.mrb[0].mxu0 %v3807
      %v4059 = vpop.f32.mrb[0].mxu0
      %v4060 = vadd.f32 %v3899, %v4059
      %v4061 = vpop.f32.mrb[0].mxu0
      %v4062 = vpop.f32.mrb[0].mxu0
      %v4063 = vadd.f32 %v3902, %v4062
      %v4064 = vpop.f32.mrb[0].mxu0
      %4065 = vmatprep.mubr.bf16.mxu0 0
      %4066 = vmatmul.mubr.bf16.gmra.mrb[0].mxu0 %v3810
      %v4067 = vpop.f32.mrb[0].mxu0
      %v4068 = vadd.f32 %v3907, %v4067
      %v4069 = vpop.f32.mrb[0].mxu0
      %v4070 = vpop.f32.mrb[0].mxu0
      %v4071 = vadd.f32 %v3910, %v4070
      %v4072 = vpop.f32.mrb[0].mxu0
      %4073 = vmatprep.mubr.bf16.mxu0 0
      %4074 = vmatmul.mubr.bf16.gmra.mrb[0].mxu0 %v3813
      %v4075 = vpop.f32.mrb[0].mxu0
      %v4076 = vadd.f32 %v3915, %v4075
      %v4077 = vpop.f32.mrb[0].mxu0
      %v4078 = vpop.f32.mrb[0].mxu0
      %v4079 = vadd.f32 %v3918, %v4078
      %v4080 = vpop.f32.mrb[0].mxu0
      %4081 = vmatprep.mubr.bf16.mxu0 0
      %4082 = vmatmul.mubr.bf16.gmra.mrb[0].mxu0 %v3816
      %v4083 = vpop.f32.mrb[0].mxu0
      %v4084 = vadd.f32 %v3923, %v4083
      %v4085 = vpop.f32.mrb[0].mxu0
      %v4086 = vpop.f32.mrb[0].mxu0
      %v4087 = vadd.f32 %v3926, %v4086
      %v4088 = vpop.f32.mrb[0].mxu0
      %4089 = vmatprep.mubr.bf16.mxu0 0
      %4090 = vmatmul.mubr.bf16.gmra.mrb[0].mxu0 %v3819
      %v4091 = vpop.f32.mrb[0].mxu0
      %v4092 = vadd.f32 %v3931, %v4091
      %v4093 = vpop.f32.mrb[0].mxu0
      %v4094 = vpop.f32.mrb[0].mxu0
      %v4095 = vadd.f32 %v3934, %v4094
      %v4096 = vpop.f32.mrb[0].mxu0
      %4097 = vmatprep.mubr.bf16.mxu0 0
      %4098 = vmatmul.mubr.bf16.gmra.mrb[0].mxu0 %v3822
      %v4099 = vpop.f32.mrb[0].mxu0
      %v4100 = vadd.f32 %v3939, %v4099
      %v4101 = vpop.f32.mrb[0].mxu0
      %v4102 = vpop.f32.mrb[0].mxu0
      %v4103 = vadd.f32 %v3942, %v4102
      %v4104 = vpop.f32.mrb[0].mxu0
      %4105 = vmatprep.mubr.bf16.mxu0 0
      %4106 = vmatmul.mubr.bf16.gmra.mrb[0].mxu0 %v3825
      %v4107 = vpop.f32.mrb[0].mxu0
      %v4108 = vadd.f32 %v3947, %v4107
      %v4109 = vpop.f32.mrb[0].mxu0
      %v4110 = vpop.f32.mrb[0].mxu0
      %v4111 = vadd.f32 %v3950, %v4110
      %v4112 = vpop.f32.mrb[0].mxu0
      %4113 = vmatprep.mubr.bf16.mxu0 0
      %4114 = vmatmul.mubr.bf16.gmra.mrb[0].mxu0 %v3828
      %v4115 = vpop.f32.mrb[0].mxu0
      %v4116 = vadd.f32 %v3955, %v4115
      %v4117 = vpop.f32.mrb[0].mxu0
      %v4118 = vpop.f32.mrb[0].mxu0
      %v4119 = vadd.f32 %v3958, %v4118
      %v4120 = vpop.f32.mrb[0].mxu0
      %4121 = vmatprep.mubr.bf16.mxu0 0
      %4122 = vmatmul.mubr.bf16.gmra.mrb[0].mxu0 %v3831
      %v4123 = vpop.f32.mrb[0].mxu0
      %v4124 = vadd.f32 %v3963, %v4123
      %v4125 = vpop.f32.mrb[0].mxu0
      %v4126 = vpop.f32.mrb[0].mxu0
      %v4127 = vadd.f32 %v3966, %v4126
      %v4128 = vpop.f32.mrb[0].mxu0
      %4129 = vmatprep.mubr.bf16.mxu0 0
      %4130 = vmatmul.mubr.bf16.gmra.mrb[0].mxu0 %v3834
      %v4131 = vpop.f32.mrb[0].mxu0
      %v4132 = vadd.f32 %v3971, %v4131
      %v4133 = vpop.f32.mrb[0].mxu0
      %v4134 = vpop.f32.mrb[0].mxu0
      %v4135 = vadd.f32 %v3974, %v4134
      %v4136 = vpop.f32.mrb[0].mxu0
      %4137 = vmatprep.mubr.bf16.mxu0 0
      %4138 = vmatmul.mubr.bf16.gmra.mrb[0].mxu0 %v3837
      %v4139 = vpop.f32.mrb[0].mxu0
      %v4140 = vadd.f32 %v3979, %v4139
      %v4141 = vpop.f32.mrb[0].mxu0
      %v4142 = vpop.f32.mrb[0].mxu0
      %v4143 = vadd.f32 %v3982, %v4142
      %v4144 = vpop.f32.mrb[0].mxu0
      %4145 = vmatprep.mubr.bf16.mxu0 0
      %4146 = vmatmul.mubr.bf16.gmra.mrb[0].mxu0 %v3840
      %v4147 = vpop.f32.mrb[0].mxu0
      %v4148 = vadd.f32 %v3987, %v4147
      %v4149 = vpop.f32.mrb[0].mxu0
      %v4150 = vpop.f32.mrb[0].mxu0
      %v4151 = vadd.f32 %v3990, %v4150
      %v4152 = vpop.f32.mrb[0].mxu0
      %4153 = vmatprep.mubr.bf16.mxu0 0
      %4154 = vmatmul.mubr.bf16.gmra.mrb[0].mxu0 %v3843
      %v4155 = vpop.f32.mrb[0].mxu0
      %v4156 = vadd.f32 %v3995, %v4155
      %v4157 = vpop.f32.mrb[0].mxu0
      %v4158 = vpop.f32.mrb[0].mxu0
      %v4159 = vadd.f32 %v3998, %v4158
      %v4160 = vpop.f32.mrb[0].mxu0
      %4161 = vmatprep.mubr.bf16.mxu0 0
      %4162 = vmatmul.mubr.bf16.gmra.mrb[0].mxu0 %v3846
      %v4163 = vpop.f32.mrb[0].mxu0
      %v4164 = vadd.f32 %v4003, %v4163
      %v4165 = vpop.f32.mrb[0].mxu0
      %v4166 = vpop.f32.mrb[0].mxu0
      %v4167 = vadd.f32 %v4006, %v4166
      %v4168 = vpop.f32.mrb[0].mxu0
      %4169 = vdwg.mxu0
      %v4170 = vmax.f32 %v4044, 0.0
      %v4171 = vmax.f32 %v4047, 0.0
      %v4172 = vmax.f32 %v4052, 0.0
      %v4173 = vmax.f32 %v4055, 0.0
      %v4174 = vmax.f32 %v4060, 0.0
      %v4175 = vmax.f32 %v4063, 0.0
      %v4176 = vmax.f32 %v4068, 0.0
      %v4177 = vmax.f32 %v4071, 0.0
      %v4178 = vmax.f32 %v4076, 0.0
      %v4179 = vmax.f32 %v4079, 0.0
      %v4180 = vmax.f32 %v4084, 0.0
      %v4181 = vmax.f32 %v4087, 0.0
      %v4182 = vmax.f32 %v4092, 0.0
      %v4183 = vmax.f32 %v4095, 0.0
      %v4184 = vmax.f32 %v4100, 0.0
      %v4185 = vmax.f32 %v4103, 0.0
      %v4186 = vmax.f32 %v4108, 0.0
      %v4187 = vmax.f32 %v4111, 0.0
      %v4188 = vmax.f32 %v4116, 0.0
      %v4189 = vmax.f32 %v4119, 0.0
      %v4190 = vmax.f32 %v4124, 0.0
      %v4191 = vmax.f32 %v4127, 0.0
      %v4192 = vmax.f32 %v4132, 0.0
      %v4193 = vmax.f32 %v4135, 0.0
      %v4194 = vmax.f32 %v4140, 0.0
      %v4195 = vmax.f32 %v4143, 0.0
      %v4196 = vmax.f32 %v4148, 0.0
      %v4197 = vmax.f32 %v4151, 0.0
      %v4198 = vmax.f32 %v4156, 0.0
      %v4199 = vmax.f32 %v4159, 0.0
      %v4200 = vmax.f32 %v4164, 0.0
      %v4201 = vmax.f32 %v4167, 0.0
      %v4202 = vpack.c.bf16 %v4171, %v4170
      %v4203 = vpack.c.bf16 %v4173, %v4172
      %v4204 = vpack.c.bf16 %v4175, %v4174
      %v4205 = vpack.c.bf16 %v4177, %v4176
      %v4206 = vpack.c.bf16 %v4179, %v4178
      %v4207 = vpack.c.bf16 %v4181, %v4180
      %v4208 = vpack.c.bf16 %v4183, %v4182
      %v4209 = vpack.c.bf16 %v4185, %v4184
      %v4210 = vpack.c.bf16 %v4187, %v4186
      %v4211 = vpack.c.bf16 %v4189, %v4188
      %v4212 = vpack.c.bf16 %v4191, %v4190
      %v4213 = vpack.c.bf16 %v4193, %v4192
      %v4214 = vpack.c.bf16 %v4195, %v4194
      %v4215 = vpack.c.bf16 %v4197, %v4196
      %v4216 = vpack.c.bf16 %v4199, %v4198
      %v4217 = vpack.c.bf16 %v4201, %v4200
      %v4234 = vunpack.c.l.b16 %v4202
      %v4235 = vunpack.c.h.b16 %v4202
      %v4236 = vunpack.c.l.b16 %v4203
      %v4237 = vunpack.c.h.b16 %v4203
      %v4238 = vunpack.c.l.b16 %v4204
      %v4239 = vunpack.c.h.b16 %v4204
      %v4240 = vunpack.c.l.b16 %v4205
      %v4241 = vunpack.c.h.b16 %v4205
      %v4242 = vunpack.c.l.b16 %v4206
      %v4243 = vunpack.c.h.b16 %v4206
      %v4244 = vunpack.c.l.b16 %v4207
      %v4245 = vunpack.c.h.b16 %v4207
      %v4246 = vunpack.c.l.b16 %v4208
      %v4247 = vunpack.c.h.b16 %v4208
      %v4248 = vunpack.c.l.b16 %v4209
      %v4249 = vunpack.c.h.b16 %v4209
      %v4250 = vunpack.c.l.b16 %v4210
      %v4251 = vunpack.c.h.b16 %v4210
      %v4252 = vunpack.c.l.b16 %v4211
      %v4253 = vunpack.c.h.b16 %v4211
      %v4254 = vunpack.c.l.b16 %v4212
      %v4255 = vunpack.c.h.b16 %v4212
      %v4256 = vunpack.c.l.b16 %v4213
      %v4257 = vunpack.c.h.b16 %v4213
      %v4258 = vunpack.c.l.b16 %v4214
      %v4259 = vunpack.c.h.b16 %v4214
      %v4260 = vunpack.c.l.b16 %v4215
      %v4261 = vunpack.c.h.b16 %v4215
      %v4262 = vunpack.c.l.b16 %v4216
      %v4263 = vunpack.c.h.b16 %v4216
      %v4264 = vunpack.c.l.b16 %v4217
      %v4265 = vunpack.c.h.b16 %v4217
      %v4266 = vpack.c.b16 %v4234, %v4234
      %v4267 = vpack.c.b16 %v4235, %v4235
      %v4268 = vpack.c.b16 %v4236, %v4236
      %v4269 = vpack.c.b16 %v4237, %v4237
      %v4270 = vpack.c.b16 %v4238, %v4238
      %v4271 = vpack.c.b16 %v4239, %v4239
      %v4272 = vpack.c.b16 %v4240, %v4240
      %v4273 = vpack.c.b16 %v4241, %v4241
      %v4274 = vpack.c.b16 %v4242, %v4242
      %v4275 = vpack.c.b16 %v4243, %v4243
      %v4276 = vpack.c.b16 %v4244, %v4244
      %v4277 = vpack.c.b16 %v4245, %v4245
      %v4278 = vpack.c.b16 %v4246, %v4246
      %v4279 = vpack.c.b16 %v4247, %v4247
      %v4280 = vpack.c.b16 %v4248, %v4248
      %v4281 = vpack.c.b16 %v4249, %v4249
      %v4282 = vpack.c.b16 %v4250, %v4250
      %v4283 = vpack.c.b16 %v4251, %v4251
      %v4284 = vpack.c.b16 %v4252, %v4252
      %v4285 = vpack.c.b16 %v4253, %v4253
      %v4286 = vpack.c.b16 %v4254, %v4254
      %v4287 = vpack.c.b16 %v4255, %v4255
      %v4288 = vpack.c.b16 %v4256, %v4256
      %v4289 = vpack.c.b16 %v4257, %v4257
      %v4290 = vpack.c.b16 %v4258, %v4258
      %v4291 = vpack.c.b16 %v4259, %v4259
      %v4292 = vpack.c.b16 %v4260, %v4260
      %v4293 = vpack.c.b16 %v4261, %v4261
      %v4294 = vpack.c.b16 %v4262, %v4262
      %v4295 = vpack.c.b16 %v4263, %v4263
      %v4296 = vpack.c.b16 %v4264, %v4264
      %v4297 = vpack.c.b16 %v4265, %v4265
      %v4299 = vshrl.u32 %v4266, 16
      %v4301 = vrot.slane %v4299, 7
      %v4302 = vshll.u32 %v4266, 16
      %v4304 = vor.u32 %v4301, %v4302
      %v4305 = vrot.slane %v4301, 4
      %v4307 = vshrl.u32 %v4267, 16
      %v4309 = vrot.slane %v4307, 7
      %v4310 = vshll.u32 %v4267, 16
      %v4312 = vor.u32 %v4309, %v4310
      %v4313 = vsel %vm316, %v4305, %v4312
      %v4314 = vrot.slane %v4309, 4
      %v4316 = vshrl.u32 %v4268, 16
      %v4318 = vrot.slane %v4316, 7
      %v4319 = vshll.u32 %v4268, 16
      %v4321 = vor.u32 %v4318, %v4319
      %v4322 = vrot.slane %v4318, 4
      %v4324 = vshrl.u32 %v4269, 16
      %v4326 = vrot.slane %v4324, 7
      %v4327 = vshll.u32 %v4269, 16
      %v4329 = vor.u32 %v4326, %v4327
      %v4330 = vsel %vm316, %v4322, %v4329
      %v4331 = vrot.slane %v4326, 4
      %v4333 = vshrl.u32 %v4270, 16
      %v4335 = vrot.slane %v4333, 7
      %v4336 = vshll.u32 %v4270, 16
      %v4338 = vor.u32 %v4335, %v4336
      %v4339 = vrot.slane %v4335, 4
      %v4341 = vshrl.u32 %v4271, 16
      %v4343 = vrot.slane %v4341, 7
      %v4344 = vshll.u32 %v4271, 16
      %v4346 = vor.u32 %v4343, %v4344
      %v4347 = vsel %vm316, %v4339, %v4346
      %v4348 = vrot.slane %v4343, 4
      %v4350 = vshrl.u32 %v4272, 16
      %v4352 = vrot.slane %v4350, 7
      %v4353 = vshll.u32 %v4272, 16
      %v4355 = vor.u32 %v4352, %v4353
      %v4356 = vrot.slane %v4352, 4
      %v4358 = vshrl.u32 %v4273, 16
      %v4360 = vrot.slane %v4358, 7
      %v4361 = vshll.u32 %v4273, 16
      %v4363 = vor.u32 %v4360, %v4361
      %v4364 = vsel %vm316, %v4356, %v4363
      %v4365 = vrot.slane %v4360, 4
      %v4367 = vshrl.u32 %v4274, 16
      %v4369 = vrot.slane %v4367, 7
      %v4370 = vshll.u32 %v4274, 16
      %v4372 = vor.u32 %v4369, %v4370
      %v4373 = vrot.slane %v4369, 4
      %v4375 = vshrl.u32 %v4275, 16
      %v4377 = vrot.slane %v4375, 7
      %v4378 = vshll.u32 %v4275, 16
      %v4380 = vor.u32 %v4377, %v4378
      %v4381 = vsel %vm316, %v4373, %v4380
      %v4382 = vrot.slane %v4377, 4
      %v4384 = vshrl.u32 %v4276, 16
      %v4386 = vrot.slane %v4384, 7
      %v4387 = vshll.u32 %v4276, 16
      %v4389 = vor.u32 %v4386, %v4387
      %v4390 = vrot.slane %v4386, 4
      %v4392 = vshrl.u32 %v4277, 16
      %v4394 = vrot.slane %v4392, 7
      %v4395 = vshll.u32 %v4277, 16
      %v4397 = vor.u32 %v4394, %v4395
      %v4398 = vsel %vm316, %v4390, %v4397
      %v4399 = vrot.slane %v4394, 4
      %v4401 = vshrl.u32 %v4278, 16
      %v4403 = vrot.slane %v4401, 7
      %v4404 = vshll.u32 %v4278, 16
      %v4406 = vor.u32 %v4403, %v4404
      %v4407 = vrot.slane %v4403, 4
      %v4409 = vshrl.u32 %v4279, 16
      %v4411 = vrot.slane %v4409, 7
      %v4412 = vshll.u32 %v4279, 16
      %v4414 = vor.u32 %v4411, %v4412
      %v4415 = vsel %vm316, %v4407, %v4414
      %v4416 = vrot.slane %v4411, 4
      %v4418 = vshrl.u32 %v4280, 16
      %v4420 = vrot.slane %v4418, 7
      %v4421 = vshll.u32 %v4280, 16
      %v4423 = vor.u32 %v4420, %v4421
      %v4424 = vrot.slane %v4420, 4
      %v4426 = vshrl.u32 %v4281, 16
      %v4428 = vrot.slane %v4426, 7
      %v4429 = vshll.u32 %v4281, 16
      %v4431 = vor.u32 %v4428, %v4429
      %v4432 = vsel %vm316, %v4424, %v4431
      %v4433 = vrot.slane %v4428, 4
      %v4435 = vshrl.u32 %v4282, 16
      %v4437 = vrot.slane %v4435, 7
      %v4438 = vshll.u32 %v4282, 16
      %v4440 = vor.u32 %v4437, %v4438
      %v4441 = vrot.slane %v4437, 4
      %v4443 = vshrl.u32 %v4283, 16
      %v4445 = vrot.slane %v4443, 7
      %v4446 = vshll.u32 %v4283, 16
      %v4448 = vor.u32 %v4445, %v4446
      %v4449 = vsel %vm316, %v4441, %v4448
      %v4450 = vrot.slane %v4445, 4
      %v4452 = vshrl.u32 %v4284, 16
      %v4454 = vrot.slane %v4452, 7
      %v4455 = vshll.u32 %v4284, 16
      %v4457 = vor.u32 %v4454, %v4455
      %v4458 = vrot.slane %v4454, 4
      %v4460 = vshrl.u32 %v4285, 16
      %v4462 = vrot.slane %v4460, 7
      %v4463 = vshll.u32 %v4285, 16
      %v4465 = vor.u32 %v4462, %v4463
      %v4466 = vsel %vm316, %v4458, %v4465
      %v4467 = vrot.slane %v4462, 4
      %v4469 = vshrl.u32 %v4286, 16
      %v4471 = vrot.slane %v4469, 7
      %v4472 = vshll.u32 %v4286, 16
      %v4474 = vor.u32 %v4471, %v4472
      %v4475 = vrot.slane %v4471, 4
      %v4477 = vshrl.u32 %v4287, 16
      %v4479 = vrot.slane %v4477, 7
      %v4480 = vshll.u32 %v4287, 16
      %v4482 = vor.u32 %v4479, %v4480
      %v4483 = vsel %vm316, %v4475, %v4482
      %v4484 = vrot.slane %v4479, 4
      %v4486 = vshrl.u32 %v4288, 16
      %v4488 = vrot.slane %v4486, 7
      %v4489 = vshll.u32 %v4288, 16
      %v4491 = vor.u32 %v4488, %v4489
      %v4492 = vrot.slane %v4488, 4
      %v4494 = vshrl.u32 %v4289, 16
      %v4496 = vrot.slane %v4494, 7
      %v4497 = vshll.u32 %v4289, 16
      %v4499 = vor.u32 %v4496, %v4497
      %v4500 = vsel %vm316, %v4492, %v4499
      %v4501 = vrot.slane %v4496, 4
      %v4503 = vshrl.u32 %v4290, 16
      %v4505 = vrot.slane %v4503, 7
      %v4506 = vshll.u32 %v4290, 16
      %v4508 = vor.u32 %v4505, %v4506
      %v4509 = vrot.slane %v4505, 4
      %v4511 = vshrl.u32 %v4291, 16
      %v4513 = vrot.slane %v4511, 7
      %v4514 = vshll.u32 %v4291, 16
      %v4516 = vor.u32 %v4513, %v4514
      %v4517 = vsel %vm316, %v4509, %v4516
      %v4518 = vrot.slane %v4513, 4
      %v4520 = vshrl.u32 %v4292, 16
      %v4522 = vrot.slane %v4520, 7
      %v4523 = vshll.u32 %v4292, 16
      %v4525 = vor.u32 %v4522, %v4523
      %v4526 = vrot.slane %v4522, 4
      %v4528 = vshrl.u32 %v4293, 16
      %v4530 = vrot.slane %v4528, 7
      %v4531 = vshll.u32 %v4293, 16
      %v4533 = vor.u32 %v4530, %v4531
      %v4534 = vsel %vm316, %v4526, %v4533
      %v4535 = vrot.slane %v4530, 4
      %v4537 = vshrl.u32 %v4294, 16
      %v4539 = vrot.slane %v4537, 7
      %v4540 = vshll.u32 %v4294, 16
      %v4542 = vor.u32 %v4539, %v4540
      %v4543 = vrot.slane %v4539, 4
      %v4545 = vshrl.u32 %v4295, 16
      %v4547 = vrot.slane %v4545, 7
      %v4548 = vshll.u32 %v4295, 16
      %v4550 = vor.u32 %v4547, %v4548
      %v4551 = vsel %vm316, %v4543, %v4550
      %v4552 = vrot.slane %v4547, 4
      %v4554 = vshrl.u32 %v4296, 16
      %v4556 = vrot.slane %v4554, 7
      %v4557 = vshll.u32 %v4296, 16
      %v4559 = vor.u32 %v4556, %v4557
      %v4560 = vrot.slane %v4556, 4
      %v4562 = vshrl.u32 %v4297, 16
      %v4564 = vrot.slane %v4562, 7
      %v4565 = vshll.u32 %v4297, 16
      %v4567 = vor.u32 %v4564, %v4565
      %v4568 = vsel %vm316, %v4560, %v4567
      %v4569 = vrot.slane %v4564, 4
      %v4618 = vld [vmem:[%s637] sm:$0xf]
      %v4619 = vsel %vm2632, %v4304, %v4618
      %4620 = vst [vmem:[%s637] sm:$0xf] %v4619
      %4621 = vst.msk [vmem:[%s637 + $0x4] sm:$0xf] %vm172, %v4313
      %v4622 = vld [vmem:[%s637 + $0x8] sm:$0x1]
      %v4623 = vsel %vm2638, %v4314, %v4622
      %4624 = vst [vmem:[%s637 + $0x8] sm:$0x1] %v4623
      %v4625 = vld [vmem:[%s637 + $0xc] sm:$0xf]
      %v4626 = vsel %vm2632, %v4321, %v4625
      %4627 = vst [vmem:[%s637 + $0xc] sm:$0xf] %v4626
      %4628 = vst.msk [vmem:[%s637 + $0x10] sm:$0xf] %vm172, %v4330
      %v4629 = vld [vmem:[%s637 + $0x14] sm:$0x1]
      %v4630 = vsel %vm2638, %v4331, %v4629
      %4631 = vst [vmem:[%s637 + $0x14] sm:$0x1] %v4630
      %v4632 = vld [vmem:[%s637 + $0x18] sm:$0xf]
      %v4633 = vsel %vm2632, %v4338, %v4632
      %4634 = vst [vmem:[%s637 + $0x18] sm:$0xf] %v4633
      %4635 = vst.msk [vmem:[%s637 + $0x1c] sm:$0xf] %vm172, %v4347
      %v4636 = vld [vmem:[%s637 + $0x20] sm:$0x1]
      %v4637 = vsel %vm2638, %v4348, %v4636
      %4638 = vst [vmem:[%s637 + $0x20] sm:$0x1] %v4637
      %v4639 = vld [vmem:[%s637 + $0x24] sm:$0xf]
      %v4640 = vsel %vm2632, %v4355, %v4639
      %4641 = vst [vmem:[%s637 + $0x24] sm:$0xf] %v4640
      %4642 = vst.msk [vmem:[%s637 + $0x28] sm:$0xf] %vm172, %v4364
      %v4643 = vld [vmem:[%s637 + $0x2c] sm:$0x1]
      %v4644 = vsel %vm2638, %v4365, %v4643
      %4645 = vst [vmem:[%s637 + $0x2c] sm:$0x1] %v4644
      %v4646 = vld [vmem:[%s637 + $0x30] sm:$0xf]
      %v4647 = vsel %vm2632, %v4372, %v4646
      %4648 = vst [vmem:[%s637 + $0x30] sm:$0xf] %v4647
      %4649 = vst.msk [vmem:[%s637 + $0x34] sm:$0xf] %vm172, %v4381
      %v4650 = vld [vmem:[%s637 + $0x38] sm:$0x1]
      %v4651 = vsel %vm2638, %v4382, %v4650
      %4652 = vst [vmem:[%s637 + $0x38] sm:$0x1] %v4651
      %v4653 = vld [vmem:[%s637 + $0x3c] sm:$0xf]
      %v4654 = vsel %vm2632, %v4389, %v4653
      %4655 = vst [vmem:[%s637 + $0x3c] sm:$0xf] %v4654
      %4656 = vst.msk [vmem:[%s637 + $0x40] sm:$0xf] %vm172, %v4398
      %v4657 = vld [vmem:[%s637 + $0x44] sm:$0x1]
      %v4658 = vsel %vm2638, %v4399, %v4657
      %4659 = vst [vmem:[%s637 + $0x44] sm:$0x1] %v4658
      %v4660 = vld [vmem:[%s637 + $0x48] sm:$0xf]
      %v4661 = vsel %vm2632, %v4406, %v4660
      %4662 = vst [vmem:[%s637 + $0x48] sm:$0xf] %v4661
      %4663 = vst.msk [vmem:[%s637 + $0x4c] sm:$0xf] %vm172, %v4415
      %v4664 = vld [vmem:[%s637 + $0x50] sm:$0x1]
      %v4665 = vsel %vm2638, %v4416, %v4664
      %4666 = vst [vmem:[%s637 + $0x50] sm:$0x1] %v4665
      %v4667 = vld [vmem:[%s637 + $0x54] sm:$0xf]
      %v4668 = vsel %vm2632, %v4423, %v4667
      %4669 = vst [vmem:[%s637 + $0x54] sm:$0xf] %v4668
      %4670 = vst.msk [vmem:[%s637 + $0x58] sm:$0xf] %vm172, %v4432
      %v4671 = vld [vmem:[%s637 + $0x5c] sm:$0x1]
      %v4672 = vsel %vm2638, %v4433, %v4671
      %4673 = vst [vmem:[%s637 + $0x5c] sm:$0x1] %v4672
      %v4674 = vld [vmem:[%s637 + $0x60] sm:$0xf]
      %v4675 = vsel %vm2632, %v4440, %v4674
      %4676 = vst [vmem:[%s637 + $0x60] sm:$0xf] %v4675
      %4677 = vst.msk [vmem:[%s637 + $0x64] sm:$0xf] %vm172, %v4449
      %v4678 = vld [vmem:[%s637 + $0x68] sm:$0x1]
      %v4679 = vsel %vm2638, %v4450, %v4678
      %4680 = vst [vmem:[%s637 + $0x68] sm:$0x1] %v4679
      %v4681 = vld [vmem:[%s637 + $0x6c] sm:$0xf]
      %v4682 = vsel %vm2632, %v4457, %v4681
      %4683 = vst [vmem:[%s637 + $0x6c] sm:$0xf] %v4682
      %4684 = vst.msk [vmem:[%s637 + $0x70] sm:$0xf] %vm172, %v4466
      %v4685 = vld [vmem:[%s637 + $0x74] sm:$0x1]
      %v4686 = vsel %vm2638, %v4467, %v4685
      %4687 = vst [vmem:[%s637 + $0x74] sm:$0x1] %v4686
      %v4688 = vld [vmem:[%s637 + $0x78] sm:$0xf]
      %v4689 = vsel %vm2632, %v4474, %v4688
      %4690 = vst [vmem:[%s637 + $0x78] sm:$0xf] %v4689
      %4691 = vst.msk [vmem:[%s637 + $0x7c] sm:$0xf] %vm172, %v4483
      %v4692 = vld [vmem:[%s637 + $0x80] sm:$0x1]
      %v4693 = vsel %vm2638, %v4484, %v4692
      %4694 = vst [vmem:[%s637 + $0x80] sm:$0x1] %v4693
      %v4695 = vld [vmem:[%s637 + $0x84] sm:$0xf]
      %v4696 = vsel %vm2632, %v4491, %v4695
      %4697 = vst [vmem:[%s637 + $0x84] sm:$0xf] %v4696
      %4698 = vst.msk [vmem:[%s637 + $0x88] sm:$0xf] %vm172, %v4500
      %v4699 = vld [vmem:[%s637 + $0x8c] sm:$0x1]
      %v4700 = vsel %vm2638, %v4501, %v4699
      %4701 = vst [vmem:[%s637 + $0x8c] sm:$0x1] %v4700
      %v4702 = vld [vmem:[%s637 + $0x90] sm:$0xf]
      %v4703 = vsel %vm2632, %v4508, %v4702
      %4704 = vst [vmem:[%s637 + $0x90] sm:$0xf] %v4703
      %4705 = vst.msk [vmem:[%s637 + $0x94] sm:$0xf] %vm172, %v4517
      %v4706 = vld [vmem:[%s637 + $0x98] sm:$0x1]
      %v4707 = vsel %vm2638, %v4518, %v4706
      %4708 = vst [vmem:[%s637 + $0x98] sm:$0x1] %v4707
      %v4709 = vld [vmem:[%s637 + $0x9c] sm:$0xf]
      %v4710 = vsel %vm2632, %v4525, %v4709
      %4711 = vst [vmem:[%s637 + $0x9c] sm:$0xf] %v4710
      %4712 = vst.msk [vmem:[%s637 + $0xa0] sm:$0xf] %vm172, %v4534
      %v4713 = vld [vmem:[%s637 + $0xa4] sm:$0x1]
      %v4714 = vsel %vm2638, %v4535, %v4713
      %4715 = vst [vmem:[%s637 + $0xa4] sm:$0x1] %v4714
      %v4716 = vld [vmem:[%s637 + $0xa8] sm:$0xf]
      %v4717 = vsel %vm2632, %v4542, %v4716
      %4718 = vst [vmem:[%s637 + $0xa8] sm:$0xf] %v4717
      %4719 = vst.msk [vmem:[%s637 + $0xac] sm:$0xf] %vm172, %v4551
      %v4720 = vld [vmem:[%s637 + $0xb0] sm:$0x1]
      %v4721 = vsel %vm2638, %v4552, %v4720
      %4722 = vst [vmem:[%s637 + $0xb0] sm:$0x1] %v4721
      %v4723 = vld [vmem:[%s637 + $0xb4] sm:$0xf]
      %v4724 = vsel %vm2632, %v4559, %v4723
      %4725 = vst [vmem:[%s637 + $0xb4] sm:$0xf] %v4724
      %4726 = vst.msk [vmem:[%s637 + $0xb8] sm:$0xf] %vm172, %v4568
      %v4727 = vld [vmem:[%s637 + $0xbc] sm:$0x1]
      %v4728 = vsel %vm2638, %v4569, %v4727
      %4729 = vst [vmem:[%s637 + $0xbc] sm:$0x1] %v4728
      %v4730 = vld [vmem:[#allocation2] sm:$0xf]
      %v4731 = vld [vmem:[#allocation2 + $0x4] sm:$0xf]
      %v4732 = vld [vmem:[#allocation2 + $0x8] sm:$0x1]
      %v4733 = vld [vmem:[#allocation2 + $0xc] sm:$0xf]
      %v4734 = vld [vmem:[#allocation2 + $0x10] sm:$0xf]
      %v4735 = vld [vmem:[#allocation2 + $0x14] sm:$0x1]
      %v4736 = vld [vmem:[#allocation2 + $0x18] sm:$0xf]
      %v4737 = vld [vmem:[#allocation2 + $0x1c] sm:$0xf]
      %v4738 = vld [vmem:[#allocation2 + $0x20] sm:$0x1]
      %v4739 = vld [vmem:[#allocation2 + $0x24] sm:$0xf]
      %v4740 = vld [vmem:[#allocation2 + $0x28] sm:$0xf]
      %v4741 = vld [vmem:[#allocation2 + $0x2c] sm:$0x1]
      %v4742 = vld [vmem:[#allocation2 + $0x30] sm:$0xf]
      %v4743 = vld [vmem:[#allocation2 + $0x34] sm:$0xf]
      %v4744 = vld [vmem:[#allocation2 + $0x38] sm:$0x1]
      %v4745 = vld [vmem:[#allocation2 + $0x3c] sm:$0xf]
      %v4746 = vld [vmem:[#allocation2 + $0x40] sm:$0xf]
      %v4747 = vld [vmem:[#allocation2 + $0x44] sm:$0x1]
      %v4748 = vld [vmem:[#allocation2 + $0x48] sm:$0xf]
      %v4749 = vld [vmem:[#allocation2 + $0x4c] sm:$0xf]
      %v4750 = vld [vmem:[#allocation2 + $0x50] sm:$0x1]
      %v4751 = vld [vmem:[#allocation2 + $0x54] sm:$0xf]
      %v4752 = vld [vmem:[#allocation2 + $0x58] sm:$0xf]
      %v4753 = vld [vmem:[#allocation2 + $0x5c] sm:$0x1]
      %v4754 = vld [vmem:[#allocation2 + $0x60] sm:$0xf]
      %v4755 = vld [vmem:[#allocation2 + $0x64] sm:$0xf]
      %v4756 = vld [vmem:[#allocation2 + $0x68] sm:$0x1]
      %v4757 = vld [vmem:[#allocation2 + $0x6c] sm:$0xf]
      %v4758 = vld [vmem:[#allocation2 + $0x70] sm:$0xf]
      %v4759 = vld [vmem:[#allocation2 + $0x74] sm:$0x1]
      %v4760 = vld [vmem:[#allocation2 + $0x78] sm:$0xf]
      %v4761 = vld [vmem:[#allocation2 + $0x7c] sm:$0xf]
      %v4762 = vld [vmem:[#allocation2 + $0x80] sm:$0x1]
      %v4763 = vld [vmem:[#allocation2 + $0x84] sm:$0xf]
      %v4764 = vld [vmem:[#allocation2 + $0x88] sm:$0xf]
      %v4765 = vld [vmem:[#allocation2 + $0x8c] sm:$0x1]
      %v4766 = vld [vmem:[#allocation2 + $0x90] sm:$0xf]
      %v4767 = vld [vmem:[#allocation2 + $0x94] sm:$0xf]
      %v4768 = vld [vmem:[#allocation2 + $0x98] sm:$0x1]
      %v4769 = vld [vmem:[#allocation2 + $0x9c] sm:$0xf]
      %v4770 = vld [vmem:[#allocation2 + $0xa0] sm:$0xf]
      %v4771 = vld [vmem:[#allocation2 + $0xa4] sm:$0x1]
      %v4772 = vld [vmem:[#allocation2 + $0xa8] sm:$0xf]
      %v4773 = vld [vmem:[#allocation2 + $0xac] sm:$0xf]
      %v4774 = vld [vmem:[#allocation2 + $0xb0] sm:$0x1]
      %v4775 = vld [vmem:[#allocation2 + $0xb4] sm:$0xf]
      %v4776 = vld [vmem:[#allocation2 + $0xb8] sm:$0xf]
      %v4777 = vld [vmem:[#allocation2 + $0xbc] sm:$0x1]
      %v4778 = vld [vmem:[#allocation2 + $0xc0] sm:$0xf]
      %v4779 = vld [vmem:[#allocation2 + $0xc4] sm:$0xf]
      %v4780 = vld [vmem:[#allocation2 + $0xc8] sm:$0x1]
      %v4781 = vld [vmem:[#allocation2 + $0xcc] sm:$0xf]
      %v4782 = vld [vmem:[#allocation2 + $0xd0] sm:$0xf]
      %v4783 = vld [vmem:[#allocation2 + $0xd4] sm:$0x1]
      %v4816 = vunpack.c.l.b16 %v4730
      %v4817 = vunpack.c.l.b16 %v4731
      %v4818 = vunpack.c.l.b16 %v4733
      %v4819 = vunpack.c.l.b16 %v4734
      %v4820 = vunpack.c.l.b16 %v4736
      %v4821 = vunpack.c.l.b16 %v4737
      %v4822 = vunpack.c.l.b16 %v4739
      %v4823 = vunpack.c.l.b16 %v4740
      %v4824 = vunpack.c.l.b16 %v4742
      %v4825 = vunpack.c.l.b16 %v4743
      %v4826 = vunpack.c.l.b16 %v4745
      %v4827 = vunpack.c.l.b16 %v4746
      %v4828 = vunpack.c.l.b16 %v4748
      %v4829 = vunpack.c.l.b16 %v4749
      %v4830 = vunpack.c.l.b16 %v4751
      %v4831 = vunpack.c.l.b16 %v4752
      %v4832 = vunpack.c.l.b16 %v4754
      %v4833 = vunpack.c.l.b16 %v4755
      %v4834 = vunpack.c.l.b16 %v4757
      %v4835 = vunpack.c.l.b16 %v4758
      %v4836 = vunpack.c.l.b16 %v4760
      %v4837 = vunpack.c.l.b16 %v4761
      %v4838 = vunpack.c.l.b16 %v4763
      %v4839 = vunpack.c.l.b16 %v4764
      %v4840 = vunpack.c.l.b16 %v4766
      %v4841 = vunpack.c.l.b16 %v4767
      %v4842 = vunpack.c.l.b16 %v4769
      %v4843 = vunpack.c.l.b16 %v4770
      %v4844 = vunpack.c.l.b16 %v4772
      %v4845 = vunpack.c.l.b16 %v4773
      %v4846 = vunpack.c.l.b16 %v4775
      %v4847 = vunpack.c.l.b16 %v4776
      %v4848 = vpack.c.b16 %v4817, %v4816
      %v4849 = vpack.c.b16 %v4819, %v4818
      %v4850 = vpack.c.b16 %v4821, %v4820
      %v4851 = vpack.c.b16 %v4823, %v4822
      %v4852 = vpack.c.b16 %v4825, %v4824
      %v4853 = vpack.c.b16 %v4827, %v4826
      %v4854 = vpack.c.b16 %v4829, %v4828
      %v4855 = vpack.c.b16 %v4831, %v4830
      %v4856 = vpack.c.b16 %v4833, %v4832
      %v4857 = vpack.c.b16 %v4835, %v4834
      %v4858 = vpack.c.b16 %v4837, %v4836
      %v4859 = vpack.c.b16 %v4839, %v4838
      %v4860 = vpack.c.b16 %v4841, %v4840
      %v4861 = vpack.c.b16 %v4843, %v4842
      %v4862 = vpack.c.b16 %v4845, %v4844
      %v4863 = vpack.c.b16 %v4847, %v4846
      %v4880 = vunpack.c.l.b16 %v4732
      %v4881 = vunpack.c.l.b16 %v4735
      %v4882 = vunpack.c.l.b16 %v4738
      %v4883 = vunpack.c.l.b16 %v4741
      %v4884 = vunpack.c.l.b16 %v4744
      %v4885 = vunpack.c.l.b16 %v4747
      %v4886 = vunpack.c.l.b16 %v4750
      %v4887 = vunpack.c.l.b16 %v4753
      %v4888 = vunpack.c.l.b16 %v4756
      %v4889 = vunpack.c.l.b16 %v4759
      %v4890 = vunpack.c.l.b16 %v4762
      %v4891 = vunpack.c.l.b16 %v4765
      %v4892 = vunpack.c.l.b16 %v4768
      %v4893 = vunpack.c.l.b16 %v4771
      %v4894 = vunpack.c.l.b16 %v4774
      %v4895 = vunpack.c.l.b16 %v4777
      %v4896 = vpack.c.b16 %v4880, %v4880
      %v4897 = vpack.c.b16 %v4881, %v4881
      %v4898 = vpack.c.b16 %v4882, %v4882
      %v4899 = vpack.c.b16 %v4883, %v4883
      %v4900 = vpack.c.b16 %v4884, %v4884
      %v4901 = vpack.c.b16 %v4885, %v4885
      %v4902 = vpack.c.b16 %v4886, %v4886
      %v4903 = vpack.c.b16 %v4887, %v4887
      %v4904 = vpack.c.b16 %v4888, %v4888
      %v4905 = vpack.c.b16 %v4889, %v4889
      %v4906 = vpack.c.b16 %v4890, %v4890
      %v4907 = vpack.c.b16 %v4891, %v4891
      %v4908 = vpack.c.b16 %v4892, %v4892
      %v4909 = vpack.c.b16 %v4893, %v4893
      %v4910 = vpack.c.b16 %v4894, %v4894
      %v4911 = vpack.c.b16 %v4895, %v4895
      %v4913 = vshrl.u32 %v4848, 16
      %v4915 = vshll.u32 %v4848, 16
      %v4917 = vrot.slane %v4915, 1
      %v4918 = vor.u32 %v4913, %v4917
      %v4920 = vshll.u32 %v4896, 16
      %v4922 = vrot.slane %v4920, 1
      %v4923 = vsel %vm938, %v4918, %v4922
      %v4925 = vshrl.u32 %v4849, 16
      %v4927 = vshll.u32 %v4849, 16
      %v4929 = vrot.slane %v4927, 1
      %v4930 = vor.u32 %v4925, %v4929
      %v4932 = vshll.u32 %v4897, 16
      %v4934 = vrot.slane %v4932, 1
      %v4935 = vsel %vm938, %v4930, %v4934
      %v4937 = vshrl.u32 %v4850, 16
      %v4939 = vshll.u32 %v4850, 16
      %v4941 = vrot.slane %v4939, 1
      %v4942 = vor.u32 %v4937, %v4941
      %v4944 = vshll.u32 %v4898, 16
      %v4946 = vrot.slane %v4944, 1
      %v4947 = vsel %vm938, %v4942, %v4946
      %v4949 = vshrl.u32 %v4851, 16
      %v4951 = vshll.u32 %v4851, 16
      %v4953 = vrot.slane %v4951, 1
      %v4954 = vor.u32 %v4949, %v4953
      %v4956 = vshll.u32 %v4899, 16
      %v4958 = vrot.slane %v4956, 1
      %v4959 = vsel %vm938, %v4954, %v4958
      %v4961 = vshrl.u32 %v4852, 16
      %v4963 = vshll.u32 %v4852, 16
      %v4965 = vrot.slane %v4963, 1
      %v4966 = vor.u32 %v4961, %v4965
      %v4968 = vshll.u32 %v4900, 16
      %v4970 = vrot.slane %v4968, 1
      %v4971 = vsel %vm938, %v4966, %v4970
      %v4973 = vshrl.u32 %v4853, 16
      %v4975 = vshll.u32 %v4853, 16
      %v4977 = vrot.slane %v4975, 1
      %v4978 = vor.u32 %v4973, %v4977
      %v4980 = vshll.u32 %v4901, 16
      %v4982 = vrot.slane %v4980, 1
      %v4983 = vsel %vm938, %v4978, %v4982
      %v4985 = vshrl.u32 %v4854, 16
      %v4987 = vshll.u32 %v4854, 16
      %v4989 = vrot.slane %v4987, 1
      %v4990 = vor.u32 %v4985, %v4989
      %v4992 = vshll.u32 %v4902, 16
      %v4994 = vrot.slane %v4992, 1
      %v4995 = vsel %vm938, %v4990, %v4994
      %v4997 = vshrl.u32 %v4855, 16
      %v4999 = vshll.u32 %v4855, 16
      %v5001 = vrot.slane %v4999, 1
      %v5002 = vor.u32 %v4997, %v5001
      %v5004 = vshll.u32 %v4903, 16
      %v5006 = vrot.slane %v5004, 1
      %v5007 = vsel %vm938, %v5002, %v5006
      %v5009 = vshrl.u32 %v4856, 16
      %v5011 = vshll.u32 %v4856, 16
      %v5013 = vrot.slane %v5011, 1
      %v5014 = vor.u32 %v5009, %v5013
      %v5016 = vshll.u32 %v4904, 16
      %v5018 = vrot.slane %v5016, 1
      %v5019 = vsel %vm938, %v5014, %v5018
      %v5021 = vshrl.u32 %v4857, 16
      %v5023 = vshll.u32 %v4857, 16
      %v5025 = vrot.slane %v5023, 1
      %v5026 = vor.u32 %v5021, %v5025
      %v5028 = vshll.u32 %v4905, 16
      %v5030 = vrot.slane %v5028, 1
      %v5031 = vsel %vm938, %v5026, %v5030
      %v5033 = vshrl.u32 %v4858, 16
      %v5035 = vshll.u32 %v4858, 16
      %v5037 = vrot.slane %v5035, 1
      %v5038 = vor.u32 %v5033, %v5037
      %v5040 = vshll.u32 %v4906, 16
      %v5042 = vrot.slane %v5040, 1
      %v5043 = vsel %vm938, %v5038, %v5042
      %v5045 = vshrl.u32 %v4859, 16
      %v5047 = vshll.u32 %v4859, 16
      %v5049 = vrot.slane %v5047, 1
      %v5050 = vor.u32 %v5045, %v5049
      %v5052 = vshll.u32 %v4907, 16
      %v5054 = vrot.slane %v5052, 1
      %v5055 = vsel %vm938, %v5050, %v5054
      %v5057 = vshrl.u32 %v4860, 16
      %v5059 = vshll.u32 %v4860, 16
      %v5061 = vrot.slane %v5059, 1
      %v5062 = vor.u32 %v5057, %v5061
      %v5064 = vshll.u32 %v4908, 16
      %v5066 = vrot.slane %v5064, 1
      %v5067 = vsel %vm938, %v5062, %v5066
      %v5069 = vshrl.u32 %v4861, 16
      %v5071 = vshll.u32 %v4861, 16
      %v5073 = vrot.slane %v5071, 1
      %v5074 = vor.u32 %v5069, %v5073
      %v5076 = vshll.u32 %v4909, 16
      %v5078 = vrot.slane %v5076, 1
      %v5079 = vsel %vm938, %v5074, %v5078
      %v5081 = vshrl.u32 %v4862, 16
      %v5083 = vshll.u32 %v4862, 16
      %v5085 = vrot.slane %v5083, 1
      %v5086 = vor.u32 %v5081, %v5085
      %v5088 = vshll.u32 %v4910, 16
      %v5090 = vrot.slane %v5088, 1
      %v5091 = vsel %vm938, %v5086, %v5090
      %v5093 = vshrl.u32 %v4863, 16
      %v5095 = vshll.u32 %v4863, 16
      %v5097 = vrot.slane %v5095, 1
      %v5098 = vor.u32 %v5093, %v5097
      %v5100 = vshll.u32 %v4911, 16
      %v5102 = vrot.slane %v5100, 1
      %v5103 = vsel %vm938, %v5098, %v5102
      %5104 = vrot.lane.b32.xlu0 %v4923, 32
      %v5105 = vpop.permute.xlu0 %5104
      %5106 = vrot.lane.b32.xlu0 %v4935, 32
      %v5107 = vpop.permute.xlu0 %5106
      %5108 = vrot.lane.b32.xlu0 %v4947, 32
      %v5109 = vpop.permute.xlu0 %5108
      %5110 = vrot.lane.b32.xlu0 %v4959, 32
      %v5111 = vpop.permute.xlu0 %5110
      %5112 = vrot.lane.b32.xlu0 %v4971, 32
      %v5113 = vpop.permute.xlu0 %5112
      %5114 = vrot.lane.b32.xlu0 %v4983, 32
      %v5115 = vpop.permute.xlu0 %5114
      %5116 = vrot.lane.b32.xlu0 %v4995, 32
      %v5117 = vpop.permute.xlu0 %5116
      %5118 = vrot.lane.b32.xlu0 %v5007, 32
      %v5119 = vpop.permute.xlu0 %5118
      %5120 = vrot.lane.b32.xlu0 %v5019, 32
      %v5121 = vpop.permute.xlu0 %5120
      %5122 = vrot.lane.b32.xlu0 %v5031, 32
      %v5123 = vpop.permute.xlu0 %5122
      %5124 = vrot.lane.b32.xlu0 %v5043, 32
      %v5125 = vpop.permute.xlu0 %5124
      %5126 = vrot.lane.b32.xlu0 %v5055, 32
      %v5127 = vpop.permute.xlu0 %5126
      %5128 = vrot.lane.b32.xlu0 %v5067, 32
      %v5129 = vpop.permute.xlu0 %5128
      %5130 = vrot.lane.b32.xlu0 %v5079, 32
      %v5131 = vpop.permute.xlu0 %5130
      %5132 = vrot.lane.b32.xlu0 %v5091, 32
      %v5133 = vpop.permute.xlu0 %5132
      %5134 = vrot.lane.b32.xlu0 %v5103, 32
      %v5135 = vpop.permute.xlu0 %5134
      %v5136 = vrot.slane %v4848, 1
      %v5137 = vrot.slane %v4896, 1
      %v5138 = vsel %vm1163, %v5136, %v5137
      %v5139 = vrot.slane %v4849, 1
      %v5140 = vrot.slane %v4897, 1
      %v5141 = vsel %vm1163, %v5139, %v5140
      %v5142 = vrot.slane %v4850, 1
      %v5143 = vrot.slane %v4898, 1
      %v5144 = vsel %vm1163, %v5142, %v5143
      %v5145 = vrot.slane %v4851, 1
      %v5146 = vrot.slane %v4899, 1
      %v5147 = vsel %vm1163, %v5145, %v5146
      %v5148 = vrot.slane %v4852, 1
      %v5149 = vrot.slane %v4900, 1
      %v5150 = vsel %vm1163, %v5148, %v5149
      %v5151 = vrot.slane %v4853, 1
      %v5152 = vrot.slane %v4901, 1
      %v5153 = vsel %vm1163, %v5151, %v5152
      %v5154 = vrot.slane %v4854, 1
      %v5155 = vrot.slane %v4902, 1
      %v5156 = vsel %vm1163, %v5154, %v5155
      %v5157 = vrot.slane %v4855, 1
      %v5158 = vrot.slane %v4903, 1
      %v5159 = vsel %vm1163, %v5157, %v5158
      %v5160 = vrot.slane %v4856, 1
      %v5161 = vrot.slane %v4904, 1
      %v5162 = vsel %vm1163, %v5160, %v5161
      %v5163 = vrot.slane %v4857, 1
      %v5164 = vrot.slane %v4905, 1
      %v5165 = vsel %vm1163, %v5163, %v5164
      %v5166 = vrot.slane %v4858, 1
      %v5167 = vrot.slane %v4906, 1
      %v5168 = vsel %vm1163, %v5166, %v5167
      %v5169 = vrot.slane %v4859, 1
      %v5170 = vrot.slane %v4907, 1
      %v5171 = vsel %vm1163, %v5169, %v5170
      %v5172 = vrot.slane %v4860, 1
      %v5173 = vrot.slane %v4908, 1
      %v5174 = vsel %vm1163, %v5172, %v5173
      %v5175 = vrot.slane %v4861, 1
      %v5176 = vrot.slane %v4909, 1
      %v5177 = vsel %vm1163, %v5175, %v5176
      %v5178 = vrot.slane %v4862, 1
      %v5179 = vrot.slane %v4910, 1
      %v5180 = vsel %vm1163, %v5178, %v5179
      %v5181 = vrot.slane %v4863, 1
      %v5182 = vrot.slane %v4911, 1
      %v5183 = vsel %vm1163, %v5181, %v5182
      %5184 = vrot.lane.b32.xlu0 %v5138, 64
      %v5185 = vpop.permute.xlu0 %5184
      %5186 = vrot.lane.b32.xlu0 %v5141, 64
      %v5187 = vpop.permute.xlu0 %5186
      %5188 = vrot.lane.b32.xlu0 %v5144, 64
      %v5189 = vpop.permute.xlu0 %5188
      %5190 = vrot.lane.b32.xlu0 %v5147, 64
      %v5191 = vpop.permute.xlu0 %5190
      %5192 = vrot.lane.b32.xlu0 %v5150, 64
      %v5193 = vpop.permute.xlu0 %5192
      %5194 = vrot.lane.b32.xlu0 %v5153, 64
      %v5195 = vpop.permute.xlu0 %5194
      %5196 = vrot.lane.b32.xlu0 %v5156, 64
      %v5197 = vpop.permute.xlu0 %5196
      %5198 = vrot.lane.b32.xlu0 %v5159, 64
      %v5199 = vpop.permute.xlu0 %5198
      %5200 = vrot.lane.b32.xlu0 %v5162, 64
      %v5201 = vpop.permute.xlu0 %5200
      %5202 = vrot.lane.b32.xlu0 %v5165, 64
      %v5203 = vpop.permute.xlu0 %5202
      %5204 = vrot.lane.b32.xlu0 %v5168, 64
      %v5205 = vpop.permute.xlu0 %5204
      %5206 = vrot.lane.b32.xlu0 %v5171, 64
      %v5207 = vpop.permute.xlu0 %5206
      %5208 = vrot.lane.b32.xlu0 %v5174, 64
      %v5209 = vpop.permute.xlu0 %5208
      %5210 = vrot.lane.b32.xlu0 %v5177, 64
      %v5211 = vpop.permute.xlu0 %5210
      %5212 = vrot.lane.b32.xlu0 %v5180, 64
      %v5213 = vpop.permute.xlu0 %5212
      %5214 = vrot.lane.b32.xlu0 %v5183, 64
      %v5215 = vpop.permute.xlu0 %5214
      %v5218 = vunpack.c.l.b16 %v4778
      %v5219 = vunpack.c.l.b16 %v4779
      %v5220 = vpack.c.b16 %v5219, %v5218
      %5221 = vrot.lane.b32.xlu0 %v4849, 96
      %v5222 = vpop.permute.xlu0 %5221
      %5223 = vrot.lane.b32.xlu0 %v4850, 96
      %v5224 = vpop.permute.xlu0 %5223
      %5225 = vrot.lane.b32.xlu0 %v4851, 96
      %v5226 = vpop.permute.xlu0 %5225
      %5227 = vrot.lane.b32.xlu0 %v4852, 96
      %v5228 = vpop.permute.xlu0 %5227
      %5229 = vrot.lane.b32.xlu0 %v4853, 96
      %v5230 = vpop.permute.xlu0 %5229
      %5231 = vrot.lane.b32.xlu0 %v4854, 96
      %v5232 = vpop.permute.xlu0 %5231
      %5233 = vrot.lane.b32.xlu0 %v4855, 96
      %v5234 = vpop.permute.xlu0 %5233
      %5235 = vrot.lane.b32.xlu0 %v4856, 96
      %v5236 = vpop.permute.xlu0 %5235
      %5237 = vrot.lane.b32.xlu0 %v4857, 96
      %v5238 = vpop.permute.xlu0 %5237
      %5239 = vrot.lane.b32.xlu0 %v4858, 96
      %v5240 = vpop.permute.xlu0 %5239
      %5241 = vrot.lane.b32.xlu0 %v4859, 96
      %v5242 = vpop.permute.xlu0 %5241
      %5243 = vrot.lane.b32.xlu0 %v4860, 96
      %v5244 = vpop.permute.xlu0 %5243
      %5245 = vrot.lane.b32.xlu0 %v4861, 96
      %v5246 = vpop.permute.xlu0 %5245
      %5247 = vrot.lane.b32.xlu0 %v4862, 96
      %v5248 = vpop.permute.xlu0 %5247
      %5249 = vrot.lane.b32.xlu0 %v4863, 96
      %v5250 = vpop.permute.xlu0 %5249
      %5251 = vrot.lane.b32.xlu0 %v5220, 96
      %v5252 = vpop.permute.xlu0 %5251
      %v5254 = vunpack.c.l.b16 %v4780
      %v5255 = vpack.c.b16 %v5254, %v5254
      %v5257 = vshrl.u32 %v5220, 16
      %v5259 = vshll.u32 %v5220, 16
      %v5261 = vrot.slane %v5259, 1
      %v5262 = vor.u32 %v5257, %v5261
      %v5264 = vshll.u32 %v5255, 16
      %v5266 = vrot.slane %v5264, 1
      %v5267 = vsel %vm938, %v5262, %v5266
      %v5268 = vrot.slane %v5220, 1
      %v5269 = vrot.slane %v5255, 1
      %v5270 = vsel %vm1163, %v5268, %v5269
      %5271 = vrot.lane.b32.xlu0 %v5141, 32
      %v5272 = vpop.permute.xlu0 %5271
      %5273 = vrot.lane.b32.xlu0 %v5144, 32
      %v5274 = vpop.permute.xlu0 %5273
      %5275 = vrot.lane.b32.xlu0 %v5147, 32
      %v5276 = vpop.permute.xlu0 %5275
      %5277 = vrot.lane.b32.xlu0 %v5150, 32
      %v5278 = vpop.permute.xlu0 %5277
      %5279 = vrot.lane.b32.xlu0 %v5153, 32
      %v5280 = vpop.permute.xlu0 %5279
      %5281 = vrot.lane.b32.xlu0 %v5156, 32
      %v5282 = vpop.permute.xlu0 %5281
      %5283 = vrot.lane.b32.xlu0 %v5159, 32
      %v5284 = vpop.permute.xlu0 %5283
      %5285 = vrot.lane.b32.xlu0 %v5162, 32
      %v5286 = vpop.permute.xlu0 %5285
      %5287 = vrot.lane.b32.xlu0 %v5165, 32
      %v5288 = vpop.permute.xlu0 %5287
      %5289 = vrot.lane.b32.xlu0 %v5168, 32
      %v5290 = vpop.permute.xlu0 %5289
      %5291 = vrot.lane.b32.xlu0 %v5171, 32
      %v5292 = vpop.permute.xlu0 %5291
      %5293 = vrot.lane.b32.xlu0 %v5174, 32
      %v5294 = vpop.permute.xlu0 %5293
      %5295 = vrot.lane.b32.xlu0 %v5177, 32
      %v5296 = vpop.permute.xlu0 %5295
      %5297 = vrot.lane.b32.xlu0 %v5180, 32
      %v5298 = vpop.permute.xlu0 %5297
      %5299 = vrot.lane.b32.xlu0 %v5183, 32
      %v5300 = vpop.permute.xlu0 %5299
      %5301 = vrot.lane.b32.xlu0 %v5270, 32
      %v5302 = vpop.permute.xlu0 %5301
      %v5305 = vunpack.c.l.b16 %v4781
      %v5306 = vunpack.c.l.b16 %v4782
      %v5307 = vpack.c.b16 %v5306, %v5305
      %5308 = vrot.lane.b32.xlu0 %v4850, 64
      %v5309 = vpop.permute.xlu0 %5308
      %5310 = vrot.lane.b32.xlu0 %v4851, 64
      %v5311 = vpop.permute.xlu0 %5310
      %5312 = vrot.lane.b32.xlu0 %v4852, 64
      %v5313 = vpop.permute.xlu0 %5312
      %5314 = vrot.lane.b32.xlu0 %v4853, 64
      %v5315 = vpop.permute.xlu0 %5314
      %5316 = vrot.lane.b32.xlu0 %v4854, 64
      %v5317 = vpop.permute.xlu0 %5316
      %5318 = vrot.lane.b32.xlu0 %v4855, 64
      %v5319 = vpop.permute.xlu0 %5318
      %5320 = vrot.lane.b32.xlu0 %v4856, 64
      %v5321 = vpop.permute.xlu0 %5320
      %5322 = vrot.lane.b32.xlu0 %v4857, 64
      %v5323 = vpop.permute.xlu0 %5322
      %5324 = vrot.lane.b32.xlu0 %v4858, 64
      %v5325 = vpop.permute.xlu0 %5324
      %5326 = vrot.lane.b32.xlu0 %v4859, 64
      %v5327 = vpop.permute.xlu0 %5326
      %5328 = vrot.lane.b32.xlu0 %v4860, 64
      %v5329 = vpop.permute.xlu0 %5328
      %5330 = vrot.lane.b32.xlu0 %v4861, 64
      %v5331 = vpop.permute.xlu0 %5330
      %5332 = vrot.lane.b32.xlu0 %v4862, 64
      %v5333 = vpop.permute.xlu0 %5332
      %5334 = vrot.lane.b32.xlu0 %v4863, 64
      %v5335 = vpop.permute.xlu0 %5334
      %5336 = vrot.lane.b32.xlu0 %v5220, 64
      %v5337 = vpop.permute.xlu0 %5336
      %5338 = vrot.lane.b32.xlu0 %v5307, 64
      %v5339 = vpop.permute.xlu0 %5338
      %v5341 = vunpack.c.l.b16 %v4783
      %v5342 = vpack.c.b16 %v5341, %v5341
      %v5344 = vshrl.u32 %v5307, 16
      %v5346 = vshll.u32 %v5307, 16
      %v5348 = vrot.slane %v5346, 1
      %v5349 = vor.u32 %v5344, %v5348
      %v5351 = vshll.u32 %v5342, 16
      %v5353 = vrot.slane %v5351, 1
      %v5354 = vsel %vm938, %v5349, %v5353
      %5355 = vrot.lane.b32.xlu0 %v4947, 96
      %v5356 = vpop.permute.xlu0 %5355
      %5357 = vrot.lane.b32.xlu0 %v4959, 96
      %v5358 = vpop.permute.xlu0 %5357
      %5359 = vrot.lane.b32.xlu0 %v4971, 96
      %v5360 = vpop.permute.xlu0 %5359
      %5361 = vrot.lane.b32.xlu0 %v4983, 96
      %v5362 = vpop.permute.xlu0 %5361
      %5363 = vrot.lane.b32.xlu0 %v4995, 96
      %v5364 = vpop.permute.xlu0 %5363
      %5365 = vrot.lane.b32.xlu0 %v5007, 96
      %v5366 = vpop.permute.xlu0 %5365
      %5367 = vrot.lane.b32.xlu0 %v5019, 96
      %v5368 = vpop.permute.xlu0 %5367
      %5369 = vrot.lane.b32.xlu0 %v5031, 96
      %v5370 = vpop.permute.xlu0 %5369
      %5371 = vrot.lane.b32.xlu0 %v5043, 96
      %v5372 = vpop.permute.xlu0 %5371
      %5373 = vrot.lane.b32.xlu0 %v5055, 96
      %v5374 = vpop.permute.xlu0 %5373
      %5375 = vrot.lane.b32.xlu0 %v5067, 96
      %v5376 = vpop.permute.xlu0 %5375
      %5377 = vrot.lane.b32.xlu0 %v5079, 96
      %v5378 = vpop.permute.xlu0 %5377
      %5379 = vrot.lane.b32.xlu0 %v5091, 96
      %v5380 = vpop.permute.xlu0 %5379
      %5381 = vrot.lane.b32.xlu0 %v5103, 96
      %v5382 = vpop.permute.xlu0 %5381
      %5383 = vrot.lane.b32.xlu0 %v5267, 96
      %v5384 = vpop.permute.xlu0 %5383
      %5385 = vrot.lane.b32.xlu0 %v5354, 96
      %v5386 = vpop.permute.xlu0 %5385
      %v5387 = vrot.slane %v5307, 1
      %v5388 = vrot.slane %v5342, 1
      %v5389 = vsel %vm1163, %v5387, %v5388
      %v5391 = vsel %vm1418, %v4848, %v5105
      %v5393 = vsel %vm1418, %v4849, %v5107
      %v5395 = vsel %vm1418, %v4850, %v5109
      %v5397 = vsel %vm1418, %v4851, %v5111
      %v5399 = vsel %vm1418, %v4852, %v5113
      %v5401 = vsel %vm1418, %v4853, %v5115
      %v5403 = vsel %vm1418, %v4854, %v5117
      %v5405 = vsel %vm1418, %v4855, %v5119
      %v5407 = vsel %vm1418, %v4856, %v5121
      %v5409 = vsel %vm1418, %v4857, %v5123
      %v5411 = vsel %vm1418, %v4858, %v5125
      %v5413 = vsel %vm1418, %v4859, %v5127
      %v5415 = vsel %vm1418, %v4860, %v5129
      %v5417 = vsel %vm1418, %v4861, %v5131
      %v5419 = vsel %vm1418, %v4862, %v5133
      %v5421 = vsel %vm1418, %v4863, %v5135
      %v5423 = vsel %vm1451, %v5391, %v5185
      %v5425 = vsel %vm1451, %v5393, %v5187
      %v5427 = vsel %vm1451, %v5395, %v5189
      %v5429 = vsel %vm1451, %v5397, %v5191
      %v5431 = vsel %vm1451, %v5399, %v5193
      %v5433 = vsel %vm1451, %v5401, %v5195
      %v5435 = vsel %vm1451, %v5403, %v5197
      %v5437 = vsel %vm1451, %v5405, %v5199
      %v5439 = vsel %vm1451, %v5407, %v5201
      %v5441 = vsel %vm1451, %v5409, %v5203
      %v5443 = vsel %vm1451, %v5411, %v5205
      %v5445 = vsel %vm1451, %v5413, %v5207
      %v5447 = vsel %vm1451, %v5415, %v5209
      %v5449 = vsel %vm1451, %v5417, %v5211
      %v5451 = vsel %vm1451, %v5419, %v5213
      %v5453 = vsel %vm1451, %v5421, %v5215
      %v5455 = vsel %vm1484, %v5423, %v5222
      %v5458 = vsel %vm1484, %v5425, %v5224
      %v5461 = vsel %vm1484, %v5427, %v5226
      %v5464 = vsel %vm1484, %v5429, %v5228
      %v5467 = vsel %vm1484, %v5431, %v5230
      %v5470 = vsel %vm1484, %v5433, %v5232
      %v5473 = vsel %vm1484, %v5435, %v5234
      %v5476 = vsel %vm1484, %v5437, %v5236
      %v5479 = vsel %vm1484, %v5439, %v5238
      %v5482 = vsel %vm1484, %v5441, %v5240
      %v5485 = vsel %vm1484, %v5443, %v5242
      %v5488 = vsel %vm1484, %v5445, %v5244
      %v5491 = vsel %vm1484, %v5447, %v5246
      %v5494 = vsel %vm1484, %v5449, %v5248
      %v5497 = vsel %vm1484, %v5451, %v5250
      %v5500 = vsel %vm1484, %v5453, %v5252
      %v5504 = vsel %vm1418, %v4935, %v5272
      %v5507 = vsel %vm1418, %v4947, %v5274
      %v5510 = vsel %vm1418, %v4959, %v5276
      %v5513 = vsel %vm1418, %v4971, %v5278
      %v5516 = vsel %vm1418, %v4983, %v5280
      %v5519 = vsel %vm1418, %v4995, %v5282
      %v5522 = vsel %vm1418, %v5007, %v5284
      %v5525 = vsel %vm1418, %v5019, %v5286
      %v5528 = vsel %vm1418, %v5031, %v5288
      %v5531 = vsel %vm1418, %v5043, %v5290
      %v5534 = vsel %vm1418, %v5055, %v5292
      %v5537 = vsel %vm1418, %v5067, %v5294
      %v5540 = vsel %vm1418, %v5079, %v5296
      %v5543 = vsel %vm1418, %v5091, %v5298
      %v5546 = vsel %vm1418, %v5103, %v5300
      %v5549 = vsel %vm1418, %v5267, %v5302
      %v5551 = vsel %vm1451, %v5504, %v5309
      %v5553 = vsel %vm1451, %v5507, %v5311
      %v5555 = vsel %vm1451, %v5510, %v5313
      %v5557 = vsel %vm1451, %v5513, %v5315
      %v5559 = vsel %vm1451, %v5516, %v5317
      %v5561 = vsel %vm1451, %v5519, %v5319
      %v5563 = vsel %vm1451, %v5522, %v5321
      %v5565 = vsel %vm1451, %v5525, %v5323
      %v5567 = vsel %vm1451, %v5528, %v5325
      %v5569 = vsel %vm1451, %v5531, %v5327
      %v5571 = vsel %vm1451, %v5534, %v5329
      %v5573 = vsel %vm1451, %v5537, %v5331
      %v5575 = vsel %vm1451, %v5540, %v5333
      %v5577 = vsel %vm1451, %v5543, %v5335
      %v5579 = vsel %vm1451, %v5546, %v5337
      %v5581 = vsel %vm1451, %v5549, %v5339
      %v5583 = vsel %vm1484, %v5551, %v5356
      %v5586 = vsel %vm1484, %v5553, %v5358
      %v5589 = vsel %vm1484, %v5555, %v5360
      %v5592 = vsel %vm1484, %v5557, %v5362
      %v5595 = vsel %vm1484, %v5559, %v5364
      %v5598 = vsel %vm1484, %v5561, %v5366
      %v5601 = vsel %vm1484, %v5563, %v5368
      %v5604 = vsel %vm1484, %v5565, %v5370
      %v5607 = vsel %vm1484, %v5567, %v5372
      %v5610 = vsel %vm1484, %v5569, %v5374
      %v5613 = vsel %vm1484, %v5571, %v5376
      %v5616 = vsel %vm1484, %v5573, %v5378
      %v5619 = vsel %vm1484, %v5575, %v5380
      %v5622 = vsel %vm1484, %v5577, %v5382
      %v5625 = vsel %vm1484, %v5579, %v5384
      %v5628 = vsel %vm1484, %v5581, %v5386
      %s5630 = scalar_lea.vmem %s1, 288
      %v5631 = vld [vmem:[%s5630] sm:$0xf]
      %v5632 = vld [vmem:[%s5630 + $0x4] sm:$0xf]
      %v5633 = vld [vmem:[%s5630 + $0x8] sm:$0xf]
      %v5634 = vld [vmem:[%s5630 + $0xc] sm:$0xf]
      %v5635 = vld [vmem:[%s5630 + $0x10] sm:$0xf]
      %v5636 = vld [vmem:[%s5630 + $0x14] sm:$0xf]
      %v5637 = vld [vmem:[%s5630 + $0x18] sm:$0xf]
      %v5638 = vld [vmem:[%s5630 + $0x1c] sm:$0xf]
      %v5639 = vld [vmem:[%s5630 + $0x20] sm:$0xf]
      %v5640 = vld [vmem:[%s5630 + $0x24] sm:$0xf]
      %v5641 = vld [vmem:[%s5630 + $0x28] sm:$0xf]
      %v5642 = vld [vmem:[%s5630 + $0x2c] sm:$0xf]
      %v5643 = vld [vmem:[%s5630 + $0x30] sm:$0xf]
      %v5644 = vld [vmem:[%s5630 + $0x34] sm:$0xf]
      %v5645 = vld [vmem:[%s5630 + $0x38] sm:$0xf]
      %v5646 = vld [vmem:[%s5630 + $0x3c] sm:$0xf]
      %v5647 = vld [vmem:[%s5630 + $0x40] sm:$0xf]
      %v5648 = vld [vmem:[%s5630 + $0x44] sm:$0xf]
      %v5649 = vld [vmem:[%s5630 + $0x48] sm:$0xf]
      %v5650 = vld [vmem:[%s5630 + $0x4c] sm:$0xf]
      %v5651 = vld [vmem:[%s5630 + $0x50] sm:$0xf]
      %v5652 = vld [vmem:[%s5630 + $0x54] sm:$0xf]
      %v5653 = vld [vmem:[%s5630 + $0x58] sm:$0xf]
      %v5654 = vld [vmem:[%s5630 + $0x5c] sm:$0xf]
      %v5655 = vld [vmem:[%s5630 + $0x60] sm:$0xf]
      %v5656 = vld [vmem:[%s5630 + $0x64] sm:$0xf]
      %v5657 = vld [vmem:[%s5630 + $0x68] sm:$0xf]
      %v5658 = vld [vmem:[%s5630 + $0x6c] sm:$0xf]
      %v5659 = vld [vmem:[%s5630 + $0x70] sm:$0xf]
      %v5660 = vld [vmem:[%s5630 + $0x74] sm:$0xf]
      %v5661 = vld [vmem:[%s5630 + $0x78] sm:$0xf]
      %v5662 = vld [vmem:[%s5630 + $0x7c] sm:$0xf]
      %v5663 = vld [vmem:[%s5630 + $0x80] sm:$0xf]
      %v5664 = vld [vmem:[%s5630 + $0x84] sm:$0xf]
      %v5665 = vld [vmem:[%s5630 + $0x88] sm:$0xf]
      %v5666 = vld [vmem:[%s5630 + $0x8c] sm:$0xf]
      %s5667 = scalar_lea.vmem %s2, 2
      %v5668 = vld [vmem:[%s5667] sm:$0x1]
      %v5670 = vlaneseq
      %v5671 = vshrl.u32 %v5670, 7
      %v5672 = vsub.s32 0, %v5671
      %v5673 = vrot.slane %v5668, %v5672
      %v5711 = vunpack.c.l.b16 %v5631
      %v5712 = vunpack.c.l.b16 %v5632
      %v5713 = vunpack.c.l.b16 %v5633
      %v5714 = vunpack.c.l.b16 %v5634
      %v5715 = vunpack.c.l.b16 %v5635
      %v5716 = vunpack.c.l.b16 %v5636
      %v5717 = vunpack.c.l.b16 %v5637
      %v5718 = vunpack.c.l.b16 %v5638
      %v5719 = vunpack.c.l.b16 %v5639
      %v5720 = vunpack.c.l.b16 %v5640
      %v5721 = vunpack.c.l.b16 %v5641
      %v5722 = vunpack.c.l.b16 %v5642
      %v5723 = vunpack.c.l.b16 %v5643
      %v5724 = vunpack.c.l.b16 %v5644
      %v5725 = vunpack.c.l.b16 %v5645
      %v5726 = vunpack.c.l.b16 %v5646
      %v5727 = vunpack.c.l.b16 %v5647
      %v5728 = vunpack.c.l.b16 %v5648
      %v5729 = vunpack.c.l.b16 %v5649
      %v5730 = vunpack.c.l.b16 %v5650
      %v5731 = vunpack.c.l.b16 %v5651
      %v5732 = vunpack.c.l.b16 %v5652
      %v5733 = vunpack.c.l.b16 %v5653
      %v5734 = vunpack.c.l.b16 %v5654
      %v5735 = vunpack.c.l.b16 %v5655
      %v5736 = vunpack.c.l.b16 %v5656
      %v5737 = vunpack.c.l.b16 %v5657
      %v5738 = vunpack.c.l.b16 %v5658
      %v5739 = vunpack.c.l.b16 %v5659
      %v5740 = vunpack.c.l.b16 %v5660
      %v5741 = vunpack.c.l.b16 %v5661
      %v5742 = vunpack.c.l.b16 %v5662
      %v5743 = vunpack.c.l.b16 %v5663
      %v5744 = vunpack.c.l.b16 %v5664
      %v5745 = vunpack.c.l.b16 %v5665
      %v5746 = vunpack.c.l.b16 %v5666
      %v5747 = vpack.c.b16 %v5712, %v5711
      %v5748 = vpack.c.b16 %v5714, %v5713
      %v5749 = vpack.c.b16 %v5716, %v5715
      %v5750 = vpack.c.b16 %v5718, %v5717
      %v5751 = vpack.c.b16 %v5720, %v5719
      %v5752 = vpack.c.b16 %v5722, %v5721
      %v5753 = vpack.c.b16 %v5724, %v5723
      %v5754 = vpack.c.b16 %v5726, %v5725
      %v5755 = vpack.c.b16 %v5728, %v5727
      %v5756 = vpack.c.b16 %v5730, %v5729
      %v5757 = vpack.c.b16 %v5732, %v5731
      %v5758 = vpack.c.b16 %v5734, %v5733
      %v5759 = vpack.c.b16 %v5736, %v5735
      %v5760 = vpack.c.b16 %v5738, %v5737
      %v5761 = vpack.c.b16 %v5740, %v5739
      %v5762 = vpack.c.b16 %v5742, %v5741
      %v5763 = vpack.c.b16 %v5744, %v5743
      %v5764 = vpack.c.b16 %v5746, %v5745
      %v5784 = vsel %vm1418, %v5144, 0
      %v5787 = vsel %vm1418, %v5147, 0
      %v5790 = vsel %vm1418, %v5150, 0
      %v5793 = vsel %vm1418, %v5153, 0
      %v5796 = vsel %vm1418, %v5156, 0
      %v5799 = vsel %vm1418, %v5159, 0
      %v5802 = vsel %vm1418, %v5162, 0
      %v5805 = vsel %vm1418, %v5165, 0
      %v5808 = vsel %vm1418, %v5168, 0
      %v5811 = vsel %vm1418, %v5171, 0
      %v5814 = vsel %vm1418, %v5174, 0
      %v5817 = vsel %vm1418, %v5177, 0
      %v5820 = vsel %vm1418, %v5180, 0
      %v5823 = vsel %vm1418, %v5183, 0
      %v5826 = vsel %vm1418, %v5270, 0
      %v5829 = vsel %vm1418, %v5389, 0
      %5831 = vmatprep.subr.bf16.mxu0 0
      %5832 = vmatpush1.bf16.msra.mxu0 %v5747
      %5833 = vmatprep.subr.bf16.mxu0 0
      %5834 = vmatpush1.bf16.msra.mxu0 %v5748
      %5835 = vmatprep.subr.bf16.mxu0 0
      %5836 = vmatpush1.bf16.msra.mxu0 %v5749
      %5837 = vmatprep.subr.bf16.mxu0 0
      %5838 = vmatpush1.bf16.msra.mxu0 %v5750
      %5839 = vmatprep.subr.bf16.mxu0 0
      %5840 = vmatpush1.bf16.msra.mxu0 %v5751
      %5841 = vmatprep.subr.bf16.mxu0 0
      %5842 = vmatpush1.bf16.msra.mxu0 %v5752
      %5843 = vmatprep.subr.bf16.mxu0 0
      %5844 = vmatpush1.bf16.msra.mxu0 %v5753
      %5845 = vmatprep.subr.bf16.mxu0 0
      %5846 = vmatpush1.bf16.msra.mxu0 %v5754
      %5847 = vmatprep.subr.bf16.mxu0 0
      %5848 = vmatpush1.bf16.msra.mxu0 %v5755
      %5849 = vmatprep.subr.bf16.mxu0 0
      %5850 = vmatpush1.bf16.msra.mxu0 %v5756
      %5851 = vmatprep.subr.bf16.mxu0 0
      %5852 = vmatpush1.bf16.msra.mxu0 %v5757
      %5853 = vmatprep.subr.bf16.mxu0 0
      %5854 = vmatpush1.bf16.msra.mxu0 %v5758
      %5855 = vmatprep.subr.bf16.mxu0 0
      %5856 = vmatpush1.bf16.msra.mxu0 %v5759
      %5857 = vmatprep.subr.bf16.mxu0 0
      %5858 = vmatpush1.bf16.msra.mxu0 %v5760
      %5859 = vmatprep.subr.bf16.mxu0 0
      %5860 = vmatpush1.bf16.msra.mxu0 %v5761
      %5861 = vmatprep.subr.bf16.mxu0 0
      %5862 = vmatpush1.bf16.msra.mxu0 %v5762
      %5863 = vmatprep.mubr.bf16.mxu0 %v5583
      %5864 = vmatmul.mubr.bf16.gmra.mrb[0].mxu0 %v5455
      %v5865 = vpop.f32.mrb[0].mxu0
      %v5866 = vadd.f32 %v5673, %v5865
      %v5867 = vpop.f32.mrb[0].mxu0
      %v5868 = vpop.f32.mrb[0].mxu0
      %v5869 = vadd.f32 %v5673, %v5868
      %v5870 = vpop.f32.mrb[0].mxu0
      %5871 = vmatprep.mubr.bf16.mxu0 %v5586
      %5872 = vmatmul.mubr.bf16.gmra.mrb[0].mxu0 %v5458
      %v5873 = vpop.f32.mrb[0].mxu0
      %v5874 = vadd.f32 %v5673, %v5873
      %v5875 = vpop.f32.mrb[0].mxu0
      %v5876 = vpop.f32.mrb[0].mxu0
      %v5877 = vadd.f32 %v5673, %v5876
      %v5878 = vpop.f32.mrb[0].mxu0
      %5879 = vmatprep.mubr.bf16.mxu0 %v5589
      %5880 = vmatmul.mubr.bf16.gmra.mrb[0].mxu0 %v5461
      %v5881 = vpop.f32.mrb[0].mxu0
      %v5882 = vadd.f32 %v5673, %v5881
      %v5883 = vpop.f32.mrb[0].mxu0
      %v5884 = vpop.f32.mrb[0].mxu0
      %v5885 = vadd.f32 %v5673, %v5884
      %v5886 = vpop.f32.mrb[0].mxu0
      %5887 = vmatprep.mubr.bf16.mxu0 %v5592
      %5888 = vmatmul.mubr.bf16.gmra.mrb[0].mxu0 %v5464
      %v5889 = vpop.f32.mrb[0].mxu0
      %v5890 = vadd.f32 %v5673, %v5889
      %v5891 = vpop.f32.mrb[0].mxu0
      %v5892 = vpop.f32.mrb[0].mxu0
      %v5893 = vadd.f32 %v5673, %v5892
      %v5894 = vpop.f32.mrb[0].mxu0
      %5895 = vmatprep.mubr.bf16.mxu0 %v5595
      %5896 = vmatmul.mubr.bf16.gmra.mrb[0].mxu0 %v5467
      %v5897 = vpop.f32.mrb[0].mxu0
      %v5898 = vadd.f32 %v5673, %v5897
      %v5899 = vpop.f32.mrb[0].mxu0
      %v5900 = vpop.f32.mrb[0].mxu0
      %v5901 = vadd.f32 %v5673, %v5900
      %v5902 = vpop.f32.mrb[0].mxu0
      %5903 = vmatprep.mubr.bf16.mxu0 %v5598
      %5904 = vmatmul.mubr.bf16.gmra.mrb[0].mxu0 %v5470
      %v5905 = vpop.f32.mrb[0].mxu0
      %v5906 = vadd.f32 %v5673, %v5905
      %v5907 = vpop.f32.mrb[0].mxu0
      %v5908 = vpop.f32.mrb[0].mxu0
      %v5909 = vadd.f32 %v5673, %v5908
      %v5910 = vpop.f32.mrb[0].mxu0
      %5911 = vmatprep.mubr.bf16.mxu0 %v5601
      %5912 = vmatmul.mubr.bf16.gmra.mrb[0].mxu0 %v5473
      %v5913 = vpop.f32.mrb[0].mxu0
      %v5914 = vadd.f32 %v5673, %v5913
      %v5915 = vpop.f32.mrb[0].mxu0
      %v5916 = vpop.f32.mrb[0].mxu0
      %v5917 = vadd.f32 %v5673, %v5916
      %v5918 = vpop.f32.mrb[0].mxu0
      %5919 = vmatprep.mubr.bf16.mxu0 %v5604
      %5920 = vmatmul.mubr.bf16.gmra.mrb[0].mxu0 %v5476
      %v5921 = vpop.f32.mrb[0].mxu0
      %v5922 = vadd.f32 %v5673, %v5921
      %v5923 = vpop.f32.mrb[0].mxu0
      %v5924 = vpop.f32.mrb[0].mxu0
      %v5925 = vadd.f32 %v5673, %v5924
      %v5926 = vpop.f32.mrb[0].mxu0
      %5927 = vmatprep.mubr.bf16.mxu0 %v5607
      %5928 = vmatmul.mubr.bf16.gmra.mrb[0].mxu0 %v5479
      %v5929 = vpop.f32.mrb[0].mxu0
      %v5930 = vadd.f32 %v5673, %v5929
      %v5931 = vpop.f32.mrb[0].mxu0
      %v5932 = vpop.f32.mrb[0].mxu0
      %v5933 = vadd.f32 %v5673, %v5932
      %v5934 = vpop.f32.mrb[0].mxu0
      %5935 = vmatprep.mubr.bf16.mxu0 %v5610
      %5936 = vmatmul.mubr.bf16.gmra.mrb[0].mxu0 %v5482
      %v5937 = vpop.f32.mrb[0].mxu0
      %v5938 = vadd.f32 %v5673, %v5937
      %v5939 = vpop.f32.mrb[0].mxu0
      %v5940 = vpop.f32.mrb[0].mxu0
      %v5941 = vadd.f32 %v5673, %v5940
      %v5942 = vpop.f32.mrb[0].mxu0
      %5943 = vmatprep.mubr.bf16.mxu0 %v5613
      %5944 = vmatmul.mubr.bf16.gmra.mrb[0].mxu0 %v5485
      %v5945 = vpop.f32.mrb[0].mxu0
      %v5946 = vadd.f32 %v5673, %v5945
      %v5947 = vpop.f32.mrb[0].mxu0
      %v5948 = vpop.f32.mrb[0].mxu0
      %v5949 = vadd.f32 %v5673, %v5948
      %v5950 = vpop.f32.mrb[0].mxu0
      %5951 = vmatprep.mubr.bf16.mxu0 %v5616
      %5952 = vmatmul.mubr.bf16.gmra.mrb[0].mxu0 %v5488
      %v5953 = vpop.f32.mrb[0].mxu0
      %v5954 = vadd.f32 %v5673, %v5953
      %v5955 = vpop.f32.mrb[0].mxu0
      %v5956 = vpop.f32.mrb[0].mxu0
      %v5957 = vadd.f32 %v5673, %v5956
      %v5958 = vpop.f32.mrb[0].mxu0
      %5959 = vmatprep.mubr.bf16.mxu0 %v5619
      %5960 = vmatmul.mubr.bf16.gmra.mrb[0].mxu0 %v5491
      %v5961 = vpop.f32.mrb[0].mxu0
      %v5962 = vadd.f32 %v5673, %v5961
      %v5963 = vpop.f32.mrb[0].mxu0
      %v5964 = vpop.f32.mrb[0].mxu0
      %v5965 = vadd.f32 %v5673, %v5964
      %v5966 = vpop.f32.mrb[0].mxu0
      %5967 = vmatprep.mubr.bf16.mxu0 %v5622
      %5968 = vmatmul.mubr.bf16.gmra.mrb[0].mxu0 %v5494
      %v5969 = vpop.f32.mrb[0].mxu0
      %v5970 = vadd.f32 %v5673, %v5969
      %v5971 = vpop.f32.mrb[0].mxu0
      %v5972 = vpop.f32.mrb[0].mxu0
      %v5973 = vadd.f32 %v5673, %v5972
      %v5974 = vpop.f32.mrb[0].mxu0
      %5975 = vmatprep.mubr.bf16.mxu0 %v5625
      %5976 = vmatmul.mubr.bf16.gmra.mrb[0].mxu0 %v5497
      %v5977 = vpop.f32.mrb[0].mxu0
      %v5978 = vadd.f32 %v5673, %v5977
      %v5979 = vpop.f32.mrb[0].mxu0
      %v5980 = vpop.f32.mrb[0].mxu0
      %v5981 = vadd.f32 %v5673, %v5980
      %v5982 = vpop.f32.mrb[0].mxu0
      %5983 = vmatprep.mubr.bf16.mxu0 %v5628
      %5984 = vmatmul.mubr.bf16.gmra.mrb[0].mxu0 %v5500
      %v5985 = vpop.f32.mrb[0].mxu0
      %v5986 = vadd.f32 %v5673, %v5985
      %v5987 = vpop.f32.mrb[0].mxu0
      %v5988 = vpop.f32.mrb[0].mxu0
      %v5989 = vadd.f32 %v5673, %v5988
      %v5990 = vpop.f32.mrb[0].mxu0
      %5991 = vdwg.mxu0
      %5992 = vmatprep.subr.bf16.mxu0 0
      %5993 = vmatpush1.bf16.msra.mxu0 %v5763
      %5994 = vmatprep.subr.bf16.mxu0 0
      %5995 = vmatpush1.bf16.msra.mxu0 %v5764
      %5996 = vmatprep.subr.bf16.mxu0 0
      %5997 = vmatpush1.bf16.msra.mxu0 0
      %5998 = vmatprep.subr.bf16.mxu0 0
      %5999 = vmatpush1.bf16.msra.mxu0 0
      %6000 = vmatprep.subr.bf16.mxu0 0
      %6001 = vmatpush1.bf16.msra.mxu0 0
      %6002 = vmatprep.subr.bf16.mxu0 0
      %6003 = vmatpush1.bf16.msra.mxu0 0
      %6004 = vmatprep.subr.bf16.mxu0 0
      %6005 = vmatpush1.bf16.msra.mxu0 0
      %6006 = vmatprep.subr.bf16.mxu0 0
      %6007 = vmatpush1.bf16.msra.mxu0 0
      %6008 = vmatprep.subr.bf16.mxu0 0
      %6009 = vmatpush1.bf16.msra.mxu0 0
      %6010 = vmatprep.subr.bf16.mxu0 0
      %6011 = vmatpush1.bf16.msra.mxu0 0
      %6012 = vmatprep.subr.bf16.mxu0 0
      %6013 = vmatpush1.bf16.msra.mxu0 0
      %6014 = vmatprep.subr.bf16.mxu0 0
      %6015 = vmatpush1.bf16.msra.mxu0 0
      %6016 = vmatprep.subr.bf16.mxu0 0
      %6017 = vmatpush1.bf16.msra.mxu0 0
      %6018 = vmatprep.subr.bf16.mxu0 0
      %6019 = vmatpush1.bf16.msra.mxu0 0
      %6020 = vmatprep.subr.bf16.mxu0 0
      %6021 = vmatpush1.bf16.msra.mxu0 0
      %6022 = vmatprep.subr.bf16.mxu0 0
      %6023 = vmatpush1.bf16.msra.mxu0 0
      %6024 = vmatprep.mubr.bf16.mxu0 0
      %6025 = vmatmul.mubr.bf16.gmra.mrb[0].mxu0 %v5784
      %v6026 = vpop.f32.mrb[0].mxu0
      %v6027 = vadd.f32 %v5866, %v6026
      %v6028 = vpop.f32.mrb[0].mxu0
      %v6029 = vpop.f32.mrb[0].mxu0
      %v6030 = vadd.f32 %v5869, %v6029
      %v6031 = vpop.f32.mrb[0].mxu0
      %6032 = vmatprep.mubr.bf16.mxu0 0
      %6033 = vmatmul.mubr.bf16.gmra.mrb[0].mxu0 %v5787
      %v6034 = vpop.f32.mrb[0].mxu0
      %v6035 = vadd.f32 %v5874, %v6034
      %v6036 = vpop.f32.mrb[0].mxu0
      %v6037 = vpop.f32.mrb[0].mxu0
      %v6038 = vadd.f32 %v5877, %v6037
      %v6039 = vpop.f32.mrb[0].mxu0
      %6040 = vmatprep.mubr.bf16.mxu0 0
      %6041 = vmatmul.mubr.bf16.gmra.mrb[0].mxu0 %v5790
      %v6042 = vpop.f32.mrb[0].mxu0
      %v6043 = vadd.f32 %v5882, %v6042
      %v6044 = vpop.f32.mrb[0].mxu0
      %v6045 = vpop.f32.mrb[0].mxu0
      %v6046 = vadd.f32 %v5885, %v6045
      %v6047 = vpop.f32.mrb[0].mxu0
      %6048 = vmatprep.mubr.bf16.mxu0 0
      %6049 = vmatmul.mubr.bf16.gmra.mrb[0].mxu0 %v5793
      %v6050 = vpop.f32.mrb[0].mxu0
      %v6051 = vadd.f32 %v5890, %v6050
      %v6052 = vpop.f32.mrb[0].mxu0
      %v6053 = vpop.f32.mrb[0].mxu0
      %v6054 = vadd.f32 %v5893, %v6053
      %v6055 = vpop.f32.mrb[0].mxu0
      %6056 = vmatprep.mubr.bf16.mxu0 0
      %6057 = vmatmul.mubr.bf16.gmra.mrb[0].mxu0 %v5796
      %v6058 = vpop.f32.mrb[0].mxu0
      %v6059 = vadd.f32 %v5898, %v6058
      %v6060 = vpop.f32.mrb[0].mxu0
      %v6061 = vpop.f32.mrb[0].mxu0
      %v6062 = vadd.f32 %v5901, %v6061
      %v6063 = vpop.f32.mrb[0].mxu0
      %6064 = vmatprep.mubr.bf16.mxu0 0
      %6065 = vmatmul.mubr.bf16.gmra.mrb[0].mxu0 %v5799
      %v6066 = vpop.f32.mrb[0].mxu0
      %v6067 = vadd.f32 %v5906, %v6066
      %v6068 = vpop.f32.mrb[0].mxu0
      %v6069 = vpop.f32.mrb[0].mxu0
      %v6070 = vadd.f32 %v5909, %v6069
      %v6071 = vpop.f32.mrb[0].mxu0
      %6072 = vmatprep.mubr.bf16.mxu0 0
      %6073 = vmatmul.mubr.bf16.gmra.mrb[0].mxu0 %v5802
      %v6074 = vpop.f32.mrb[0].mxu0
      %v6075 = vadd.f32 %v5914, %v6074
      %v6076 = vpop.f32.mrb[0].mxu0
      %v6077 = vpop.f32.mrb[0].mxu0
      %v6078 = vadd.f32 %v5917, %v6077
      %v6079 = vpop.f32.mrb[0].mxu0
      %6080 = vmatprep.mubr.bf16.mxu0 0
      %6081 = vmatmul.mubr.bf16.gmra.mrb[0].mxu0 %v5805
      %v6082 = vpop.f32.mrb[0].mxu0
      %v6083 = vadd.f32 %v5922, %v6082
      %v6084 = vpop.f32.mrb[0].mxu0
      %v6085 = vpop.f32.mrb[0].mxu0
      %v6086 = vadd.f32 %v5925, %v6085
      %v6087 = vpop.f32.mrb[0].mxu0
      %6088 = vmatprep.mubr.bf16.mxu0 0
      %6089 = vmatmul.mubr.bf16.gmra.mrb[0].mxu0 %v5808
      %v6090 = vpop.f32.mrb[0].mxu0
      %v6091 = vadd.f32 %v5930, %v6090
      %v6092 = vpop.f32.mrb[0].mxu0
      %v6093 = vpop.f32.mrb[0].mxu0
      %v6094 = vadd.f32 %v5933, %v6093
      %v6095 = vpop.f32.mrb[0].mxu0
      %6096 = vmatprep.mubr.bf16.mxu0 0
      %6097 = vmatmul.mubr.bf16.gmra.mrb[0].mxu0 %v5811
      %v6098 = vpop.f32.mrb[0].mxu0
      %v6099 = vadd.f32 %v5938, %v6098
      %v6100 = vpop.f32.mrb[0].mxu0
      %v6101 = vpop.f32.mrb[0].mxu0
      %v6102 = vadd.f32 %v5941, %v6101
      %v6103 = vpop.f32.mrb[0].mxu0
      %6104 = vmatprep.mubr.bf16.mxu0 0
      %6105 = vmatmul.mubr.bf16.gmra.mrb[0].mxu0 %v5814
      %v6106 = vpop.f32.mrb[0].mxu0
      %v6107 = vadd.f32 %v5946, %v6106
      %v6108 = vpop.f32.mrb[0].mxu0
      %v6109 = vpop.f32.mrb[0].mxu0
      %v6110 = vadd.f32 %v5949, %v6109
      %v6111 = vpop.f32.mrb[0].mxu0
      %6112 = vmatprep.mubr.bf16.mxu0 0
      %6113 = vmatmul.mubr.bf16.gmra.mrb[0].mxu0 %v5817
      %v6114 = vpop.f32.mrb[0].mxu0
      %v6115 = vadd.f32 %v5954, %v6114
      %v6116 = vpop.f32.mrb[0].mxu0
      %v6117 = vpop.f32.mrb[0].mxu0
      %v6118 = vadd.f32 %v5957, %v6117
      %v6119 = vpop.f32.mrb[0].mxu0
      %6120 = vmatprep.mubr.bf16.mxu0 0
      %6121 = vmatmul.mubr.bf16.gmra.mrb[0].mxu0 %v5820
      %v6122 = vpop.f32.mrb[0].mxu0
      %v6123 = vadd.f32 %v5962, %v6122
      %v6124 = vpop.f32.mrb[0].mxu0
      %v6125 = vpop.f32.mrb[0].mxu0
      %v6126 = vadd.f32 %v5965, %v6125
      %v6127 = vpop.f32.mrb[0].mxu0
      %6128 = vmatprep.mubr.bf16.mxu0 0
      %6129 = vmatmul.mubr.bf16.gmra.mrb[0].mxu0 %v5823
      %v6130 = vpop.f32.mrb[0].mxu0
      %v6131 = vadd.f32 %v5970, %v6130
      %v6132 = vpop.f32.mrb[0].mxu0
      %v6133 = vpop.f32.mrb[0].mxu0
      %v6134 = vadd.f32 %v5973, %v6133
      %v6135 = vpop.f32.mrb[0].mxu0
      %6136 = vmatprep.mubr.bf16.mxu0 0
      %6137 = vmatmul.mubr.bf16.gmra.mrb[0].mxu0 %v5826
      %v6138 = vpop.f32.mrb[0].mxu0
      %v6139 = vadd.f32 %v5978, %v6138
      %v6140 = vpop.f32.mrb[0].mxu0
      %v6141 = vpop.f32.mrb[0].mxu0
      %v6142 = vadd.f32 %v5981, %v6141
      %v6143 = vpop.f32.mrb[0].mxu0
      %6144 = vmatprep.mubr.bf16.mxu0 0
      %6145 = vmatmul.mubr.bf16.gmra.mrb[0].mxu0 %v5829
      %v6146 = vpop.f32.mrb[0].mxu0
      %v6147 = vadd.f32 %v5986, %v6146
      %v6148 = vpop.f32.mrb[0].mxu0
      %v6149 = vpop.f32.mrb[0].mxu0
      %v6150 = vadd.f32 %v5989, %v6149
      %v6151 = vpop.f32.mrb[0].mxu0
      %6152 = vdwg.mxu0
      %v6153 = vmax.f32 %v6027, 0.0
      %v6154 = vmax.f32 %v6030, 0.0
      %v6155 = vmax.f32 %v6035, 0.0
      %v6156 = vmax.f32 %v6038, 0.0
      %v6157 = vmax.f32 %v6043, 0.0
      %v6158 = vmax.f32 %v6046, 0.0
      %v6159 = vmax.f32 %v6051, 0.0
      %v6160 = vmax.f32 %v6054, 0.0
      %v6161 = vmax.f32 %v6059, 0.0
      %v6162 = vmax.f32 %v6062, 0.0
      %v6163 = vmax.f32 %v6067, 0.0
      %v6164 = vmax.f32 %v6070, 0.0
      %v6165 = vmax.f32 %v6075, 0.0
      %v6166 = vmax.f32 %v6078, 0.0
      %v6167 = vmax.f32 %v6083, 0.0
      %v6168 = vmax.f32 %v6086, 0.0
      %v6169 = vmax.f32 %v6091, 0.0
      %v6170 = vmax.f32 %v6094, 0.0
      %v6171 = vmax.f32 %v6099, 0.0
      %v6172 = vmax.f32 %v6102, 0.0
      %v6173 = vmax.f32 %v6107, 0.0
      %v6174 = vmax.f32 %v6110, 0.0
      %v6175 = vmax.f32 %v6115, 0.0
      %v6176 = vmax.f32 %v6118, 0.0
      %v6177 = vmax.f32 %v6123, 0.0
      %v6178 = vmax.f32 %v6126, 0.0
      %v6179 = vmax.f32 %v6131, 0.0
      %v6180 = vmax.f32 %v6134, 0.0
      %v6181 = vmax.f32 %v6139, 0.0
      %v6182 = vmax.f32 %v6142, 0.0
      %v6183 = vmax.f32 %v6147, 0.0
      %v6184 = vmax.f32 %v6150, 0.0
      %v6185 = vpack.c.bf16 %v6154, %v6153
      %v6186 = vpack.c.bf16 %v6156, %v6155
      %v6187 = vpack.c.bf16 %v6158, %v6157
      %v6188 = vpack.c.bf16 %v6160, %v6159
      %v6189 = vpack.c.bf16 %v6162, %v6161
      %v6190 = vpack.c.bf16 %v6164, %v6163
      %v6191 = vpack.c.bf16 %v6166, %v6165
      %v6192 = vpack.c.bf16 %v6168, %v6167
      %v6193 = vpack.c.bf16 %v6170, %v6169
      %v6194 = vpack.c.bf16 %v6172, %v6171
      %v6195 = vpack.c.bf16 %v6174, %v6173
      %v6196 = vpack.c.bf16 %v6176, %v6175
      %v6197 = vpack.c.bf16 %v6178, %v6177
      %v6198 = vpack.c.bf16 %v6180, %v6179
      %v6199 = vpack.c.bf16 %v6182, %v6181
      %v6200 = vpack.c.bf16 %v6184, %v6183
      %v6217 = vunpack.c.l.b16 %v6185
      %v6218 = vunpack.c.h.b16 %v6185
      %v6219 = vunpack.c.l.b16 %v6186
      %v6220 = vunpack.c.h.b16 %v6186
      %v6221 = vunpack.c.l.b16 %v6187
      %v6222 = vunpack.c.h.b16 %v6187
      %v6223 = vunpack.c.l.b16 %v6188
      %v6224 = vunpack.c.h.b16 %v6188
      %v6225 = vunpack.c.l.b16 %v6189
      %v6226 = vunpack.c.h.b16 %v6189
      %v6227 = vunpack.c.l.b16 %v6190
      %v6228 = vunpack.c.h.b16 %v6190
      %v6229 = vunpack.c.l.b16 %v6191
      %v6230 = vunpack.c.h.b16 %v6191
      %v6231 = vunpack.c.l.b16 %v6192
      %v6232 = vunpack.c.h.b16 %v6192
      %v6233 = vunpack.c.l.b16 %v6193
      %v6234 = vunpack.c.h.b16 %v6193
      %v6235 = vunpack.c.l.b16 %v6194
      %v6236 = vunpack.c.h.b16 %v6194
      %v6237 = vunpack.c.l.b16 %v6195
      %v6238 = vunpack.c.h.b16 %v6195
      %v6239 = vunpack.c.l.b16 %v6196
      %v6240 = vunpack.c.h.b16 %v6196
      %v6241 = vunpack.c.l.b16 %v6197
      %v6242 = vunpack.c.h.b16 %v6197
      %v6243 = vunpack.c.l.b16 %v6198
      %v6244 = vunpack.c.h.b16 %v6198
      %v6245 = vunpack.c.l.b16 %v6199
      %v6246 = vunpack.c.h.b16 %v6199
      %v6247 = vunpack.c.l.b16 %v6200
      %v6248 = vunpack.c.h.b16 %v6200
      %v6249 = vpack.c.b16 %v6217, %v6217
      %v6250 = vpack.c.b16 %v6218, %v6218
      %v6251 = vpack.c.b16 %v6219, %v6219
      %v6252 = vpack.c.b16 %v6220, %v6220
      %v6253 = vpack.c.b16 %v6221, %v6221
      %v6254 = vpack.c.b16 %v6222, %v6222
      %v6255 = vpack.c.b16 %v6223, %v6223
      %v6256 = vpack.c.b16 %v6224, %v6224
      %v6257 = vpack.c.b16 %v6225, %v6225
      %v6258 = vpack.c.b16 %v6226, %v6226
      %v6259 = vpack.c.b16 %v6227, %v6227
      %v6260 = vpack.c.b16 %v6228, %v6228
      %v6261 = vpack.c.b16 %v6229, %v6229
      %v6262 = vpack.c.b16 %v6230, %v6230
      %v6263 = vpack.c.b16 %v6231, %v6231
      %v6264 = vpack.c.b16 %v6232, %v6232
      %v6265 = vpack.c.b16 %v6233, %v6233
      %v6266 = vpack.c.b16 %v6234, %v6234
      %v6267 = vpack.c.b16 %v6235, %v6235
      %v6268 = vpack.c.b16 %v6236, %v6236
      %v6269 = vpack.c.b16 %v6237, %v6237
      %v6270 = vpack.c.b16 %v6238, %v6238
      %v6271 = vpack.c.b16 %v6239, %v6239
      %v6272 = vpack.c.b16 %v6240, %v6240
      %v6273 = vpack.c.b16 %v6241, %v6241
      %v6274 = vpack.c.b16 %v6242, %v6242
      %v6275 = vpack.c.b16 %v6243, %v6243
      %v6276 = vpack.c.b16 %v6244, %v6244
      %v6277 = vpack.c.b16 %v6245, %v6245
      %v6278 = vpack.c.b16 %v6246, %v6246
      %v6279 = vpack.c.b16 %v6247, %v6247
      %v6280 = vpack.c.b16 %v6248, %v6248
      %v6282 = vshrl.u32 %v6249, 16
      %v6284 = vrot.slane %v6282, 7
      %v6285 = vshll.u32 %v6249, 16
      %v6287 = vor.u32 %v6284, %v6285
      %v6288 = vrot.slane %v6284, 4
      %v6290 = vshrl.u32 %v6250, 16
      %v6292 = vrot.slane %v6290, 7
      %v6293 = vshll.u32 %v6250, 16
      %v6295 = vor.u32 %v6292, %v6293
      %v6296 = vsel %vm316, %v6288, %v6295
      %v6297 = vrot.slane %v6292, 4
      %v6299 = vshrl.u32 %v6251, 16
      %v6301 = vrot.slane %v6299, 7
      %v6302 = vshll.u32 %v6251, 16
      %v6304 = vor.u32 %v6301, %v6302
      %v6305 = vrot.slane %v6301, 4
      %v6307 = vshrl.u32 %v6252, 16
      %v6309 = vrot.slane %v6307, 7
      %v6310 = vshll.u32 %v6252, 16
      %v6312 = vor.u32 %v6309, %v6310
      %v6313 = vsel %vm316, %v6305, %v6312
      %v6314 = vrot.slane %v6309, 4
      %v6316 = vshrl.u32 %v6253, 16
      %v6318 = vrot.slane %v6316, 7
      %v6319 = vshll.u32 %v6253, 16
      %v6321 = vor.u32 %v6318, %v6319
      %v6322 = vrot.slane %v6318, 4
      %v6324 = vshrl.u32 %v6254, 16
      %v6326 = vrot.slane %v6324, 7
      %v6327 = vshll.u32 %v6254, 16
      %v6329 = vor.u32 %v6326, %v6327
      %v6330 = vsel %vm316, %v6322, %v6329
      %v6331 = vrot.slane %v6326, 4
      %v6333 = vshrl.u32 %v6255, 16
      %v6335 = vrot.slane %v6333, 7
      %v6336 = vshll.u32 %v6255, 16
      %v6338 = vor.u32 %v6335, %v6336
      %v6339 = vrot.slane %v6335, 4
      %v6341 = vshrl.u32 %v6256, 16
      %v6343 = vrot.slane %v6341, 7
      %v6344 = vshll.u32 %v6256, 16
      %v6346 = vor.u32 %v6343, %v6344
      %v6347 = vsel %vm316, %v6339, %v6346
      %v6348 = vrot.slane %v6343, 4
      %v6350 = vshrl.u32 %v6257, 16
      %v6352 = vrot.slane %v6350, 7
      %v6353 = vshll.u32 %v6257, 16
      %v6355 = vor.u32 %v6352, %v6353
      %v6356 = vrot.slane %v6352, 4
      %v6358 = vshrl.u32 %v6258, 16
      %v6360 = vrot.slane %v6358, 7
      %v6361 = vshll.u32 %v6258, 16
      %v6363 = vor.u32 %v6360, %v6361
      %v6364 = vsel %vm316, %v6356, %v6363
      %v6365 = vrot.slane %v6360, 4
      %v6367 = vshrl.u32 %v6259, 16
      %v6369 = vrot.slane %v6367, 7
      %v6370 = vshll.u32 %v6259, 16
      %v6372 = vor.u32 %v6369, %v6370
      %v6373 = vrot.slane %v6369, 4
      %v6375 = vshrl.u32 %v6260, 16
      %v6377 = vrot.slane %v6375, 7
      %v6378 = vshll.u32 %v6260, 16
      %v6380 = vor.u32 %v6377, %v6378
      %v6381 = vsel %vm316, %v6373, %v6380
      %v6382 = vrot.slane %v6377, 4
      %v6384 = vshrl.u32 %v6261, 16
      %v6386 = vrot.slane %v6384, 7
      %v6387 = vshll.u32 %v6261, 16
      %v6389 = vor.u32 %v6386, %v6387
      %v6390 = vrot.slane %v6386, 4
      %v6392 = vshrl.u32 %v6262, 16
      %v6394 = vrot.slane %v6392, 7
      %v6395 = vshll.u32 %v6262, 16
      %v6397 = vor.u32 %v6394, %v6395
      %v6398 = vsel %vm316, %v6390, %v6397
      %v6399 = vrot.slane %v6394, 4
      %v6401 = vshrl.u32 %v6263, 16
      %v6403 = vrot.slane %v6401, 7
      %v6404 = vshll.u32 %v6263, 16
      %v6406 = vor.u32 %v6403, %v6404
      %v6407 = vrot.slane %v6403, 4
      %v6409 = vshrl.u32 %v6264, 16
      %v6411 = vrot.slane %v6409, 7
      %v6412 = vshll.u32 %v6264, 16
      %v6414 = vor.u32 %v6411, %v6412
      %v6415 = vsel %vm316, %v6407, %v6414
      %v6416 = vrot.slane %v6411, 4
      %v6418 = vshrl.u32 %v6265, 16
      %v6420 = vrot.slane %v6418, 7
      %v6421 = vshll.u32 %v6265, 16
      %v6423 = vor.u32 %v6420, %v6421
      %v6424 = vrot.slane %v6420, 4
      %v6426 = vshrl.u32 %v6266, 16
      %v6428 = vrot.slane %v6426, 7
      %v6429 = vshll.u32 %v6266, 16
      %v6431 = vor.u32 %v6428, %v6429
      %v6432 = vsel %vm316, %v6424, %v6431
      %v6433 = vrot.slane %v6428, 4
      %v6435 = vshrl.u32 %v6267, 16
      %v6437 = vrot.slane %v6435, 7
      %v6438 = vshll.u32 %v6267, 16
      %v6440 = vor.u32 %v6437, %v6438
      %v6441 = vrot.slane %v6437, 4
      %v6443 = vshrl.u32 %v6268, 16
      %v6445 = vrot.slane %v6443, 7
      %v6446 = vshll.u32 %v6268, 16
      %v6448 = vor.u32 %v6445, %v6446
      %v6449 = vsel %vm316, %v6441, %v6448
      %v6450 = vrot.slane %v6445, 4
      %v6452 = vshrl.u32 %v6269, 16
      %v6454 = vrot.slane %v6452, 7
      %v6455 = vshll.u32 %v6269, 16
      %v6457 = vor.u32 %v6454, %v6455
      %v6458 = vrot.slane %v6454, 4
      %v6460 = vshrl.u32 %v6270, 16
      %v6462 = vrot.slane %v6460, 7
      %v6463 = vshll.u32 %v6270, 16
      %v6465 = vor.u32 %v6462, %v6463
      %v6466 = vsel %vm316, %v6458, %v6465
      %v6467 = vrot.slane %v6462, 4
      %v6469 = vshrl.u32 %v6271, 16
      %v6471 = vrot.slane %v6469, 7
      %v6472 = vshll.u32 %v6271, 16
      %v6474 = vor.u32 %v6471, %v6472
      %v6475 = vrot.slane %v6471, 4
      %v6477 = vshrl.u32 %v6272, 16
      %v6479 = vrot.slane %v6477, 7
      %v6480 = vshll.u32 %v6272, 16
      %v6482 = vor.u32 %v6479, %v6480
      %v6483 = vsel %vm316, %v6475, %v6482
      %v6484 = vrot.slane %v6479, 4
      %v6486 = vshrl.u32 %v6273, 16
      %v6488 = vrot.slane %v6486, 7
      %v6489 = vshll.u32 %v6273, 16
      %v6491 = vor.u32 %v6488, %v6489
      %v6492 = vrot.slane %v6488, 4
      %v6494 = vshrl.u32 %v6274, 16
      %v6496 = vrot.slane %v6494, 7
      %v6497 = vshll.u32 %v6274, 16
      %v6499 = vor.u32 %v6496, %v6497
      %v6500 = vsel %vm316, %v6492, %v6499
      %v6501 = vrot.slane %v6496, 4
      %v6503 = vshrl.u32 %v6275, 16
      %v6505 = vrot.slane %v6503, 7
      %v6506 = vshll.u32 %v6275, 16
      %v6508 = vor.u32 %v6505, %v6506
      %v6509 = vrot.slane %v6505, 4
      %v6511 = vshrl.u32 %v6276, 16
      %v6513 = vrot.slane %v6511, 7
      %v6514 = vshll.u32 %v6276, 16
      %v6516 = vor.u32 %v6513, %v6514
      %v6517 = vsel %vm316, %v6509, %v6516
      %v6518 = vrot.slane %v6513, 4
      %v6520 = vshrl.u32 %v6277, 16
      %v6522 = vrot.slane %v6520, 7
      %v6523 = vshll.u32 %v6277, 16
      %v6525 = vor.u32 %v6522, %v6523
      %v6526 = vrot.slane %v6522, 4
      %v6528 = vshrl.u32 %v6278, 16
      %v6530 = vrot.slane %v6528, 7
      %v6531 = vshll.u32 %v6278, 16
      %v6533 = vor.u32 %v6530, %v6531
      %v6534 = vsel %vm316, %v6526, %v6533
      %v6535 = vrot.slane %v6530, 4
      %v6537 = vshrl.u32 %v6279, 16
      %v6539 = vrot.slane %v6537, 7
      %v6540 = vshll.u32 %v6279, 16
      %v6542 = vor.u32 %v6539, %v6540
      %v6543 = vrot.slane %v6539, 4
      %v6545 = vshrl.u32 %v6280, 16
      %v6547 = vrot.slane %v6545, 7
      %v6548 = vshll.u32 %v6280, 16
      %v6550 = vor.u32 %v6547, %v6548
      %v6551 = vsel %vm316, %v6543, %v6550
      %v6552 = vrot.slane %v6547, 4
      %v6601 = vld [vmem:[%s2630] sm:$0xf]
      %v6602 = vsel %vm2632, %v6287, %v6601
      %6603 = vst [vmem:[%s2630] sm:$0xf] %v6602
      %6604 = vst.msk [vmem:[%s2630 + $0x4] sm:$0xf] %vm172, %v6296
      %v6605 = vld [vmem:[%s2630 + $0x8] sm:$0x1]
      %v6606 = vsel %vm2638, %v6297, %v6605
      %6607 = vst [vmem:[%s2630 + $0x8] sm:$0x1] %v6606
      %v6608 = vld [vmem:[%s2630 + $0xc] sm:$0xf]
      %v6609 = vsel %vm2632, %v6304, %v6608
      %6610 = vst [vmem:[%s2630 + $0xc] sm:$0xf] %v6609
      %6611 = vst.msk [vmem:[%s2630 + $0x10] sm:$0xf] %vm172, %v6313
      %v6612 = vld [vmem:[%s2630 + $0x14] sm:$0x1]
      %v6613 = vsel %vm2638, %v6314, %v6612
      %6614 = vst [vmem:[%s2630 + $0x14] sm:$0x1] %v6613
      %v6615 = vld [vmem:[%s2630 + $0x18] sm:$0xf]
      %v6616 = vsel %vm2632, %v6321, %v6615
      %6617 = vst [vmem:[%s2630 + $0x18] sm:$0xf] %v6616
      %6618 = vst.msk [vmem:[%s2630 + $0x1c] sm:$0xf] %vm172, %v6330
      %v6619 = vld [vmem:[%s2630 + $0x20] sm:$0x1]
      %v6620 = vsel %vm2638, %v6331, %v6619
      %6621 = vst [vmem:[%s2630 + $0x20] sm:$0x1] %v6620
      %v6622 = vld [vmem:[%s2630 + $0x24] sm:$0xf]
      %v6623 = vsel %vm2632, %v6338, %v6622
      %6624 = vst [vmem:[%s2630 + $0x24] sm:$0xf] %v6623
      %6625 = vst.msk [vmem:[%s2630 + $0x28] sm:$0xf] %vm172, %v6347
      %v6626 = vld [vmem:[%s2630 + $0x2c] sm:$0x1]
      %v6627 = vsel %vm2638, %v6348, %v6626
      %6628 = vst [vmem:[%s2630 + $0x2c] sm:$0x1] %v6627
      %v6629 = vld [vmem:[%s2630 + $0x30] sm:$0xf]
      %v6630 = vsel %vm2632, %v6355, %v6629
      %6631 = vst [vmem:[%s2630 + $0x30] sm:$0xf] %v6630
      %6632 = vst.msk [vmem:[%s2630 + $0x34] sm:$0xf] %vm172, %v6364
      %v6633 = vld [vmem:[%s2630 + $0x38] sm:$0x1]
      %v6634 = vsel %vm2638, %v6365, %v6633
      %6635 = vst [vmem:[%s2630 + $0x38] sm:$0x1] %v6634
      %v6636 = vld [vmem:[%s2630 + $0x3c] sm:$0xf]
      %v6637 = vsel %vm2632, %v6372, %v6636
      %6638 = vst [vmem:[%s2630 + $0x3c] sm:$0xf] %v6637
      %6639 = vst.msk [vmem:[%s2630 + $0x40] sm:$0xf] %vm172, %v6381
      %v6640 = vld [vmem:[%s2630 + $0x44] sm:$0x1]
      %v6641 = vsel %vm2638, %v6382, %v6640
      %6642 = vst [vmem:[%s2630 + $0x44] sm:$0x1] %v6641
      %v6643 = vld [vmem:[%s2630 + $0x48] sm:$0xf]
      %v6644 = vsel %vm2632, %v6389, %v6643
      %6645 = vst [vmem:[%s2630 + $0x48] sm:$0xf] %v6644
      %6646 = vst.msk [vmem:[%s2630 + $0x4c] sm:$0xf] %vm172, %v6398
      %v6647 = vld [vmem:[%s2630 + $0x50] sm:$0x1]
      %v6648 = vsel %vm2638, %v6399, %v6647
      %6649 = vst [vmem:[%s2630 + $0x50] sm:$0x1] %v6648
      %v6650 = vld [vmem:[%s2630 + $0x54] sm:$0xf]
      %v6651 = vsel %vm2632, %v6406, %v6650
      %6652 = vst [vmem:[%s2630 + $0x54] sm:$0xf] %v6651
      %6653 = vst.msk [vmem:[%s2630 + $0x58] sm:$0xf] %vm172, %v6415
      %v6654 = vld [vmem:[%s2630 + $0x5c] sm:$0x1]
      %v6655 = vsel %vm2638, %v6416, %v6654
      %6656 = vst [vmem:[%s2630 + $0x5c] sm:$0x1] %v6655
      %v6657 = vld [vmem:[%s2630 + $0x60] sm:$0xf]
      %v6658 = vsel %vm2632, %v6423, %v6657
      %6659 = vst [vmem:[%s2630 + $0x60] sm:$0xf] %v6658
      %6660 = vst.msk [vmem:[%s2630 + $0x64] sm:$0xf] %vm172, %v6432
      %v6661 = vld [vmem:[%s2630 + $0x68] sm:$0x1]
      %v6662 = vsel %vm2638, %v6433, %v6661
      %6663 = vst [vmem:[%s2630 + $0x68] sm:$0x1] %v6662
      %v6664 = vld [vmem:[%s2630 + $0x6c] sm:$0xf]
      %v6665 = vsel %vm2632, %v6440, %v6664
      %6666 = vst [vmem:[%s2630 + $0x6c] sm:$0xf] %v6665
      %6667 = vst.msk [vmem:[%s2630 + $0x70] sm:$0xf] %vm172, %v6449
      %v6668 = vld [vmem:[%s2630 + $0x74] sm:$0x1]
      %v6669 = vsel %vm2638, %v6450, %v6668
      %6670 = vst [vmem:[%s2630 + $0x74] sm:$0x1] %v6669
      %v6671 = vld [vmem:[%s2630 + $0x78] sm:$0xf]
      %v6672 = vsel %vm2632, %v6457, %v6671
      %6673 = vst [vmem:[%s2630 + $0x78] sm:$0xf] %v6672
      %6674 = vst.msk [vmem:[%s2630 + $0x7c] sm:$0xf] %vm172, %v6466
      %v6675 = vld [vmem:[%s2630 + $0x80] sm:$0x1]
      %v6676 = vsel %vm2638, %v6467, %v6675
      %6677 = vst [vmem:[%s2630 + $0x80] sm:$0x1] %v6676
      %v6678 = vld [vmem:[%s2630 + $0x84] sm:$0xf]
      %v6679 = vsel %vm2632, %v6474, %v6678
      %6680 = vst [vmem:[%s2630 + $0x84] sm:$0xf] %v6679
      %6681 = vst.msk [vmem:[%s2630 + $0x88] sm:$0xf] %vm172, %v6483
      %v6682 = vld [vmem:[%s2630 + $0x8c] sm:$0x1]
      %v6683 = vsel %vm2638, %v6484, %v6682
      %6684 = vst [vmem:[%s2630 + $0x8c] sm:$0x1] %v6683
      %v6685 = vld [vmem:[%s2630 + $0x90] sm:$0xf]
      %v6686 = vsel %vm2632, %v6491, %v6685
      %6687 = vst [vmem:[%s2630 + $0x90] sm:$0xf] %v6686
      %6688 = vst.msk [vmem:[%s2630 + $0x94] sm:$0xf] %vm172, %v6500
      %v6689 = vld [vmem:[%s2630 + $0x98] sm:$0x1]
      %v6690 = vsel %vm2638, %v6501, %v6689
      %6691 = vst [vmem:[%s2630 + $0x98] sm:$0x1] %v6690
      %v6692 = vld [vmem:[%s2630 + $0x9c] sm:$0xf]
      %v6693 = vsel %vm2632, %v6508, %v6692
      %6694 = vst [vmem:[%s2630 + $0x9c] sm:$0xf] %v6693
      %6695 = vst.msk [vmem:[%s2630 + $0xa0] sm:$0xf] %vm172, %v6517
      %v6696 = vld [vmem:[%s2630 + $0xa4] sm:$0x1]
      %v6697 = vsel %vm2638, %v6518, %v6696
      %6698 = vst [vmem:[%s2630 + $0xa4] sm:$0x1] %v6697
      %v6699 = vld [vmem:[%s2630 + $0xa8] sm:$0xf]
      %v6700 = vsel %vm2632, %v6525, %v6699
      %6701 = vst [vmem:[%s2630 + $0xa8] sm:$0xf] %v6700
      %6702 = vst.msk [vmem:[%s2630 + $0xac] sm:$0xf] %vm172, %v6534
      %v6703 = vld [vmem:[%s2630 + $0xb0] sm:$0x1]
      %v6704 = vsel %vm2638, %v6535, %v6703
      %6705 = vst [vmem:[%s2630 + $0xb0] sm:$0x1] %v6704
      %v6706 = vld [vmem:[%s2630 + $0xb4] sm:$0xf]
      %v6707 = vsel %vm2632, %v6542, %v6706
      %6708 = vst [vmem:[%s2630 + $0xb4] sm:$0xf] %v6707
      %6709 = vst.msk [vmem:[%s2630 + $0xb8] sm:$0xf] %vm172, %v6551
      %v6710 = vld [vmem:[%s2630 + $0xbc] sm:$0x1]
      %v6711 = vsel %vm2638, %v6552, %v6710
      %6712 = vst [vmem:[%s2630 + $0xbc] sm:$0x1] %v6711
      %v6713 = vld [vmem:[#allocation3] sm:$0xf]
      %v6714 = vld [vmem:[#allocation3 + $0x4] sm:$0xf]
      %v6715 = vld [vmem:[#allocation3 + $0x8] sm:$0x1]
      %v6716 = vld [vmem:[#allocation3 + $0xc] sm:$0xf]
      %v6717 = vld [vmem:[#allocation3 + $0x10] sm:$0xf]
      %v6718 = vld [vmem:[#allocation3 + $0x14] sm:$0x1]
      %v6719 = vld [vmem:[#allocation3 + $0x18] sm:$0xf]
      %v6720 = vld [vmem:[#allocation3 + $0x1c] sm:$0xf]
      %v6721 = vld [vmem:[#allocation3 + $0x20] sm:$0x1]
      %v6722 = vld [vmem:[#allocation3 + $0x24] sm:$0xf]
      %v6723 = vld [vmem:[#allocation3 + $0x28] sm:$0xf]
      %v6724 = vld [vmem:[#allocation3 + $0x2c] sm:$0x1]
      %v6725 = vld [vmem:[#allocation3 + $0x30] sm:$0xf]
      %v6726 = vld [vmem:[#allocation3 + $0x34] sm:$0xf]
      %v6727 = vld [vmem:[#allocation3 + $0x38] sm:$0x1]
      %v6728 = vld [vmem:[#allocation3 + $0x3c] sm:$0xf]
      %v6729 = vld [vmem:[#allocation3 + $0x40] sm:$0xf]
      %v6730 = vld [vmem:[#allocation3 + $0x44] sm:$0x1]
      %v6731 = vld [vmem:[#allocation3 + $0x48] sm:$0xf]
      %v6732 = vld [vmem:[#allocation3 + $0x4c] sm:$0xf]
      %v6733 = vld [vmem:[#allocation3 + $0x50] sm:$0x1]
      %v6734 = vld [vmem:[#allocation3 + $0x54] sm:$0xf]
      %v6735 = vld [vmem:[#allocation3 + $0x58] sm:$0xf]
      %v6736 = vld [vmem:[#allocation3 + $0x5c] sm:$0x1]
      %v6737 = vld [vmem:[#allocation3 + $0x60] sm:$0xf]
      %v6738 = vld [vmem:[#allocation3 + $0x64] sm:$0xf]
      %v6739 = vld [vmem:[#allocation3 + $0x68] sm:$0x1]
      %v6740 = vld [vmem:[#allocation3 + $0x6c] sm:$0xf]
      %v6741 = vld [vmem:[#allocation3 + $0x70] sm:$0xf]
      %v6742 = vld [vmem:[#allocation3 + $0x74] sm:$0x1]
      %v6743 = vld [vmem:[#allocation3 + $0x78] sm:$0xf]
      %v6744 = vld [vmem:[#allocation3 + $0x7c] sm:$0xf]
      %v6745 = vld [vmem:[#allocation3 + $0x80] sm:$0x1]
      %v6746 = vld [vmem:[#allocation3 + $0x84] sm:$0xf]
      %v6747 = vld [vmem:[#allocation3 + $0x88] sm:$0xf]
      %v6748 = vld [vmem:[#allocation3 + $0x8c] sm:$0x1]
      %v6749 = vld [vmem:[#allocation3 + $0x90] sm:$0xf]
      %v6750 = vld [vmem:[#allocation3 + $0x94] sm:$0xf]
      %v6751 = vld [vmem:[#allocation3 + $0x98] sm:$0x1]
      %v6752 = vld [vmem:[#allocation3 + $0x9c] sm:$0xf]
      %v6753 = vld [vmem:[#allocation3 + $0xa0] sm:$0xf]
      %v6754 = vld [vmem:[#allocation3 + $0xa4] sm:$0x1]
      %v6755 = vld [vmem:[#allocation3 + $0xa8] sm:$0xf]
      %v6756 = vld [vmem:[#allocation3 + $0xac] sm:$0xf]
      %v6757 = vld [vmem:[#allocation3 + $0xb0] sm:$0x1]
      %v6758 = vld [vmem:[#allocation3 + $0xb4] sm:$0xf]
      %v6759 = vld [vmem:[#allocation3 + $0xb8] sm:$0xf]
      %v6760 = vld [vmem:[#allocation3 + $0xbc] sm:$0x1]
      %v6761 = vld [vmem:[#allocation3 + $0xc0] sm:$0xf]
      %v6762 = vld [vmem:[#allocation3 + $0xc4] sm:$0xf]
      %v6763 = vld [vmem:[#allocation3 + $0xc8] sm:$0x1]
      %v6764 = vld [vmem:[#allocation3 + $0xcc] sm:$0xf]
      %v6765 = vld [vmem:[#allocation3 + $0xd0] sm:$0xf]
      %v6766 = vld [vmem:[#allocation3 + $0xd4] sm:$0x1]
      %v6799 = vunpack.c.l.b16 %v6713
      %v6800 = vunpack.c.l.b16 %v6714
      %v6801 = vunpack.c.l.b16 %v6716
      %v6802 = vunpack.c.l.b16 %v6717
      %v6803 = vunpack.c.l.b16 %v6719
      %v6804 = vunpack.c.l.b16 %v6720
      %v6805 = vunpack.c.l.b16 %v6722
      %v6806 = vunpack.c.l.b16 %v6723
      %v6807 = vunpack.c.l.b16 %v6725
      %v6808 = vunpack.c.l.b16 %v6726
      %v6809 = vunpack.c.l.b16 %v6728
      %v6810 = vunpack.c.l.b16 %v6729
      %v6811 = vunpack.c.l.b16 %v6731
      %v6812 = vunpack.c.l.b16 %v6732
      %v6813 = vunpack.c.l.b16 %v6734
      %v6814 = vunpack.c.l.b16 %v6735
      %v6815 = vunpack.c.l.b16 %v6737
      %v6816 = vunpack.c.l.b16 %v6738
      %v6817 = vunpack.c.l.b16 %v6740
      %v6818 = vunpack.c.l.b16 %v6741
      %v6819 = vunpack.c.l.b16 %v6743
      %v6820 = vunpack.c.l.b16 %v6744
      %v6821 = vunpack.c.l.b16 %v6746
      %v6822 = vunpack.c.l.b16 %v6747
      %v6823 = vunpack.c.l.b16 %v6749
      %v6824 = vunpack.c.l.b16 %v6750
      %v6825 = vunpack.c.l.b16 %v6752
      %v6826 = vunpack.c.l.b16 %v6753
      %v6827 = vunpack.c.l.b16 %v6755
      %v6828 = vunpack.c.l.b16 %v6756
      %v6829 = vunpack.c.l.b16 %v6758
      %v6830 = vunpack.c.l.b16 %v6759
      %v6831 = vpack.c.b16 %v6800, %v6799
      %v6832 = vpack.c.b16 %v6802, %v6801
      %v6833 = vpack.c.b16 %v6804, %v6803
      %v6834 = vpack.c.b16 %v6806, %v6805
      %v6835 = vpack.c.b16 %v6808, %v6807
      %v6836 = vpack.c.b16 %v6810, %v6809
      %v6837 = vpack.c.b16 %v6812, %v6811
      %v6838 = vpack.c.b16 %v6814, %v6813
      %v6839 = vpack.c.b16 %v6816, %v6815
      %v6840 = vpack.c.b16 %v6818, %v6817
      %v6841 = vpack.c.b16 %v6820, %v6819
      %v6842 = vpack.c.b16 %v6822, %v6821
      %v6843 = vpack.c.b16 %v6824, %v6823
      %v6844 = vpack.c.b16 %v6826, %v6825
      %v6845 = vpack.c.b16 %v6828, %v6827
      %v6846 = vpack.c.b16 %v6830, %v6829
      %v6863 = vunpack.c.l.b16 %v6715
      %v6864 = vunpack.c.l.b16 %v6718
      %v6865 = vunpack.c.l.b16 %v6721
      %v6866 = vunpack.c.l.b16 %v6724
      %v6867 = vunpack.c.l.b16 %v6727
      %v6868 = vunpack.c.l.b16 %v6730
      %v6869 = vunpack.c.l.b16 %v6733
      %v6870 = vunpack.c.l.b16 %v6736
      %v6871 = vunpack.c.l.b16 %v6739
      %v6872 = vunpack.c.l.b16 %v6742
      %v6873 = vunpack.c.l.b16 %v6745
      %v6874 = vunpack.c.l.b16 %v6748
      %v6875 = vunpack.c.l.b16 %v6751
      %v6876 = vunpack.c.l.b16 %v6754
      %v6877 = vunpack.c.l.b16 %v6757
      %v6878 = vunpack.c.l.b16 %v6760
      %v6879 = vpack.c.b16 %v6863, %v6863
      %v6880 = vpack.c.b16 %v6864, %v6864
      %v6881 = vpack.c.b16 %v6865, %v6865
      %v6882 = vpack.c.b16 %v6866, %v6866
      %v6883 = vpack.c.b16 %v6867, %v6867
      %v6884 = vpack.c.b16 %v6868, %v6868
      %v6885 = vpack.c.b16 %v6869, %v6869
      %v6886 = vpack.c.b16 %v6870, %v6870
      %v6887 = vpack.c.b16 %v6871, %v6871
      %v6888 = vpack.c.b16 %v6872, %v6872
      %v6889 = vpack.c.b16 %v6873, %v6873
      %v6890 = vpack.c.b16 %v6874, %v6874
      %v6891 = vpack.c.b16 %v6875, %v6875
      %v6892 = vpack.c.b16 %v6876, %v6876
      %v6893 = vpack.c.b16 %v6877, %v6877
      %v6894 = vpack.c.b16 %v6878, %v6878
      %v6896 = vshrl.u32 %v6831, 16
      %v6898 = vshll.u32 %v6831, 16
      %v6900 = vrot.slane %v6898, 1
      %v6901 = vor.u32 %v6896, %v6900
      %v6903 = vshll.u32 %v6879, 16
      %v6905 = vrot.slane %v6903, 1
      %v6906 = vsel %vm938, %v6901, %v6905
      %v6908 = vshrl.u32 %v6832, 16
      %v6910 = vshll.u32 %v6832, 16
      %v6912 = vrot.slane %v6910, 1
      %v6913 = vor.u32 %v6908, %v6912
      %v6915 = vshll.u32 %v6880, 16
      %v6917 = vrot.slane %v6915, 1
      %v6918 = vsel %vm938, %v6913, %v6917
      %v6920 = vshrl.u32 %v6833, 16
      %v6922 = vshll.u32 %v6833, 16
      %v6924 = vrot.slane %v6922, 1
      %v6925 = vor.u32 %v6920, %v6924
      %v6927 = vshll.u32 %v6881, 16
      %v6929 = vrot.slane %v6927, 1
      %v6930 = vsel %vm938, %v6925, %v6929
      %v6932 = vshrl.u32 %v6834, 16
      %v6934 = vshll.u32 %v6834, 16
      %v6936 = vrot.slane %v6934, 1
      %v6937 = vor.u32 %v6932, %v6936
      %v6939 = vshll.u32 %v6882, 16
      %v6941 = vrot.slane %v6939, 1
      %v6942 = vsel %vm938, %v6937, %v6941
      %v6944 = vshrl.u32 %v6835, 16
      %v6946 = vshll.u32 %v6835, 16
      %v6948 = vrot.slane %v6946, 1
      %v6949 = vor.u32 %v6944, %v6948
      %v6951 = vshll.u32 %v6883, 16
      %v6953 = vrot.slane %v6951, 1
      %v6954 = vsel %vm938, %v6949, %v6953
      %v6956 = vshrl.u32 %v6836, 16
      %v6958 = vshll.u32 %v6836, 16
      %v6960 = vrot.slane %v6958, 1
      %v6961 = vor.u32 %v6956, %v6960
      %v6963 = vshll.u32 %v6884, 16
      %v6965 = vrot.slane %v6963, 1
      %v6966 = vsel %vm938, %v6961, %v6965
      %v6968 = vshrl.u32 %v6837, 16
      %v6970 = vshll.u32 %v6837, 16
      %v6972 = vrot.slane %v6970, 1
      %v6973 = vor.u32 %v6968, %v6972
      %v6975 = vshll.u32 %v6885, 16
      %v6977 = vrot.slane %v6975, 1
      %v6978 = vsel %vm938, %v6973, %v6977
      %v6980 = vshrl.u32 %v6838, 16
      %v6982 = vshll.u32 %v6838, 16
      %v6984 = vrot.slane %v6982, 1
      %v6985 = vor.u32 %v6980, %v6984
      %v6987 = vshll.u32 %v6886, 16
      %v6989 = vrot.slane %v6987, 1
      %v6990 = vsel %vm938, %v6985, %v6989
      %v6992 = vshrl.u32 %v6839, 16
      %v6994 = vshll.u32 %v6839, 16
      %v6996 = vrot.slane %v6994, 1
      %v6997 = vor.u32 %v6992, %v6996
      %v6999 = vshll.u32 %v6887, 16
      %v7001 = vrot.slane %v6999, 1
      %v7002 = vsel %vm938, %v6997, %v7001
      %v7004 = vshrl.u32 %v6840, 16
      %v7006 = vshll.u32 %v6840, 16
      %v7008 = vrot.slane %v7006, 1
      %v7009 = vor.u32 %v7004, %v7008
      %v7011 = vshll.u32 %v6888, 16
      %v7013 = vrot.slane %v7011, 1
      %v7014 = vsel %vm938, %v7009, %v7013
      %v7016 = vshrl.u32 %v6841, 16
      %v7018 = vshll.u32 %v6841, 16
      %v7020 = vrot.slane %v7018, 1
      %v7021 = vor.u32 %v7016, %v7020
      %v7023 = vshll.u32 %v6889, 16
      %v7025 = vrot.slane %v7023, 1
      %v7026 = vsel %vm938, %v7021, %v7025
      %v7028 = vshrl.u32 %v6842, 16
      %v7030 = vshll.u32 %v6842, 16
      %v7032 = vrot.slane %v7030, 1
      %v7033 = vor.u32 %v7028, %v7032
      %v7035 = vshll.u32 %v6890, 16
      %v7037 = vrot.slane %v7035, 1
      %v7038 = vsel %vm938, %v7033, %v7037
      %v7040 = vshrl.u32 %v6843, 16
      %v7042 = vshll.u32 %v6843, 16
      %v7044 = vrot.slane %v7042, 1
      %v7045 = vor.u32 %v7040, %v7044
      %v7047 = vshll.u32 %v6891, 16
      %v7049 = vrot.slane %v7047, 1
      %v7050 = vsel %vm938, %v7045, %v7049
      %v7052 = vshrl.u32 %v6844, 16
      %v7054 = vshll.u32 %v6844, 16
      %v7056 = vrot.slane %v7054, 1
      %v7057 = vor.u32 %v7052, %v7056
      %v7059 = vshll.u32 %v6892, 16
      %v7061 = vrot.slane %v7059, 1
      %v7062 = vsel %vm938, %v7057, %v7061
      %v7064 = vshrl.u32 %v6845, 16
      %v7066 = vshll.u32 %v6845, 16
      %v7068 = vrot.slane %v7066, 1
      %v7069 = vor.u32 %v7064, %v7068
      %v7071 = vshll.u32 %v6893, 16
      %v7073 = vrot.slane %v7071, 1
      %v7074 = vsel %vm938, %v7069, %v7073
      %v7076 = vshrl.u32 %v6846, 16
      %v7078 = vshll.u32 %v6846, 16
      %v7080 = vrot.slane %v7078, 1
      %v7081 = vor.u32 %v7076, %v7080
      %v7083 = vshll.u32 %v6894, 16
      %v7085 = vrot.slane %v7083, 1
      %v7086 = vsel %vm938, %v7081, %v7085
      %7087 = vrot.lane.b32.xlu0 %v6906, 32
      %v7088 = vpop.permute.xlu0 %7087
      %7089 = vrot.lane.b32.xlu0 %v6918, 32
      %v7090 = vpop.permute.xlu0 %7089
      %7091 = vrot.lane.b32.xlu0 %v6930, 32
      %v7092 = vpop.permute.xlu0 %7091
      %7093 = vrot.lane.b32.xlu0 %v6942, 32
      %v7094 = vpop.permute.xlu0 %7093
      %7095 = vrot.lane.b32.xlu0 %v6954, 32
      %v7096 = vpop.permute.xlu0 %7095
      %7097 = vrot.lane.b32.xlu0 %v6966, 32
      %v7098 = vpop.permute.xlu0 %7097
      %7099 = vrot.lane.b32.xlu0 %v6978, 32
      %v7100 = vpop.permute.xlu0 %7099
      %7101 = vrot.lane.b32.xlu0 %v6990, 32
      %v7102 = vpop.permute.xlu0 %7101
      %7103 = vrot.lane.b32.xlu0 %v7002, 32
      %v7104 = vpop.permute.xlu0 %7103
      %7105 = vrot.lane.b32.xlu0 %v7014, 32
      %v7106 = vpop.permute.xlu0 %7105
      %7107 = vrot.lane.b32.xlu0 %v7026, 32
      %v7108 = vpop.permute.xlu0 %7107
      %7109 = vrot.lane.b32.xlu0 %v7038, 32
      %v7110 = vpop.permute.xlu0 %7109
      %7111 = vrot.lane.b32.xlu0 %v7050, 32
      %v7112 = vpop.permute.xlu0 %7111
      %7113 = vrot.lane.b32.xlu0 %v7062, 32
      %v7114 = vpop.permute.xlu0 %7113
      %7115 = vrot.lane.b32.xlu0 %v7074, 32
      %v7116 = vpop.permute.xlu0 %7115
      %7117 = vrot.lane.b32.xlu0 %v7086, 32
      %v7118 = vpop.permute.xlu0 %7117
      %v7119 = vrot.slane %v6831, 1
      %v7120 = vrot.slane %v6879, 1
      %v7121 = vsel %vm1163, %v7119, %v7120
      %v7122 = vrot.slane %v6832, 1
      %v7123 = vrot.slane %v6880, 1
      %v7124 = vsel %vm1163, %v7122, %v7123
      %v7125 = vrot.slane %v6833, 1
      %v7126 = vrot.slane %v6881, 1
      %v7127 = vsel %vm1163, %v7125, %v7126
      %v7128 = vrot.slane %v6834, 1
      %v7129 = vrot.slane %v6882, 1
      %v7130 = vsel %vm1163, %v7128, %v7129
      %v7131 = vrot.slane %v6835, 1
      %v7132 = vrot.slane %v6883, 1
      %v7133 = vsel %vm1163, %v7131, %v7132
      %v7134 = vrot.slane %v6836, 1
      %v7135 = vrot.slane %v6884, 1
      %v7136 = vsel %vm1163, %v7134, %v7135
      %v7137 = vrot.slane %v6837, 1
      %v7138 = vrot.slane %v6885, 1
      %v7139 = vsel %vm1163, %v7137, %v7138
      %v7140 = vrot.slane %v6838, 1
      %v7141 = vrot.slane %v6886, 1
      %v7142 = vsel %vm1163, %v7140, %v7141
      %v7143 = vrot.slane %v6839, 1
      %v7144 = vrot.slane %v6887, 1
      %v7145 = vsel %vm1163, %v7143, %v7144
      %v7146 = vrot.slane %v6840, 1
      %v7147 = vrot.slane %v6888, 1
      %v7148 = vsel %vm1163, %v7146, %v7147
      %v7149 = vrot.slane %v6841, 1
      %v7150 = vrot.slane %v6889, 1
      %v7151 = vsel %vm1163, %v7149, %v7150
      %v7152 = vrot.slane %v6842, 1
      %v7153 = vrot.slane %v6890, 1
      %v7154 = vsel %vm1163, %v7152, %v7153
      %v7155 = vrot.slane %v6843, 1
      %v7156 = vrot.slane %v6891, 1
      %v7157 = vsel %vm1163, %v7155, %v7156
      %v7158 = vrot.slane %v6844, 1
      %v7159 = vrot.slane %v6892, 1
      %v7160 = vsel %vm1163, %v7158, %v7159
      %v7161 = vrot.slane %v6845, 1
      %v7162 = vrot.slane %v6893, 1
      %v7163 = vsel %vm1163, %v7161, %v7162
      %v7164 = vrot.slane %v6846, 1
      %v7165 = vrot.slane %v6894, 1
      %v7166 = vsel %vm1163, %v7164, %v7165
      %7167 = vrot.lane.b32.xlu0 %v7121, 64
      %v7168 = vpop.permute.xlu0 %7167
      %7169 = vrot.lane.b32.xlu0 %v7124, 64
      %v7170 = vpop.permute.xlu0 %7169
      %7171 = vrot.lane.b32.xlu0 %v7127, 64
      %v7172 = vpop.permute.xlu0 %7171
      %7173 = vrot.lane.b32.xlu0 %v7130, 64
      %v7174 = vpop.permute.xlu0 %7173
      %7175 = vrot.lane.b32.xlu0 %v7133, 64
      %v7176 = vpop.permute.xlu0 %7175
      %7177 = vrot.lane.b32.xlu0 %v7136, 64
      %v7178 = vpop.permute.xlu0 %7177
      %7179 = vrot.lane.b32.xlu0 %v7139, 64
      %v7180 = vpop.permute.xlu0 %7179
      %7181 = vrot.lane.b32.xlu0 %v7142, 64
      %v7182 = vpop.permute.xlu0 %7181
      %7183 = vrot.lane.b32.xlu0 %v7145, 64
      %v7184 = vpop.permute.xlu0 %7183
      %7185 = vrot.lane.b32.xlu0 %v7148, 64
      %v7186 = vpop.permute.xlu0 %7185
      %7187 = vrot.lane.b32.xlu0 %v7151, 64
      %v7188 = vpop.permute.xlu0 %7187
      %7189 = vrot.lane.b32.xlu0 %v7154, 64
      %v7190 = vpop.permute.xlu0 %7189
      %7191 = vrot.lane.b32.xlu0 %v7157, 64
      %v7192 = vpop.permute.xlu0 %7191
      %7193 = vrot.lane.b32.xlu0 %v7160, 64
      %v7194 = vpop.permute.xlu0 %7193
      %7195 = vrot.lane.b32.xlu0 %v7163, 64
      %v7196 = vpop.permute.xlu0 %7195
      %7197 = vrot.lane.b32.xlu0 %v7166, 64
      %v7198 = vpop.permute.xlu0 %7197
      %v7201 = vunpack.c.l.b16 %v6761
      %v7202 = vunpack.c.l.b16 %v6762
      %v7203 = vpack.c.b16 %v7202, %v7201
      %7204 = vrot.lane.b32.xlu0 %v6832, 96
      %v7205 = vpop.permute.xlu0 %7204
      %7206 = vrot.lane.b32.xlu0 %v6833, 96
      %v7207 = vpop.permute.xlu0 %7206
      %7208 = vrot.lane.b32.xlu0 %v6834, 96
      %v7209 = vpop.permute.xlu0 %7208
      %7210 = vrot.lane.b32.xlu0 %v6835, 96
      %v7211 = vpop.permute.xlu0 %7210
      %7212 = vrot.lane.b32.xlu0 %v6836, 96
      %v7213 = vpop.permute.xlu0 %7212
      %7214 = vrot.lane.b32.xlu0 %v6837, 96
      %v7215 = vpop.permute.xlu0 %7214
      %7216 = vrot.lane.b32.xlu0 %v6838, 96
      %v7217 = vpop.permute.xlu0 %7216
      %7218 = vrot.lane.b32.xlu0 %v6839, 96
      %v7219 = vpop.permute.xlu0 %7218
      %7220 = vrot.lane.b32.xlu0 %v6840, 96
      %v7221 = vpop.permute.xlu0 %7220
      %7222 = vrot.lane.b32.xlu0 %v6841, 96
      %v7223 = vpop.permute.xlu0 %7222
      %7224 = vrot.lane.b32.xlu0 %v6842, 96
      %v7225 = vpop.permute.xlu0 %7224
      %7226 = vrot.lane.b32.xlu0 %v6843, 96
      %v7227 = vpop.permute.xlu0 %7226
      %7228 = vrot.lane.b32.xlu0 %v6844, 96
      %v7229 = vpop.permute.xlu0 %7228
      %7230 = vrot.lane.b32.xlu0 %v6845, 96
      %v7231 = vpop.permute.xlu0 %7230
      %7232 = vrot.lane.b32.xlu0 %v6846, 96
      %v7233 = vpop.permute.xlu0 %7232
      %7234 = vrot.lane.b32.xlu0 %v7203, 96
      %v7235 = vpop.permute.xlu0 %7234
      %v7237 = vunpack.c.l.b16 %v6763
      %v7238 = vpack.c.b16 %v7237, %v7237
      %v7240 = vshrl.u32 %v7203, 16
      %v7242 = vshll.u32 %v7203, 16
      %v7244 = vrot.slane %v7242, 1
      %v7245 = vor.u32 %v7240, %v7244
      %v7247 = vshll.u32 %v7238, 16
      %v7249 = vrot.slane %v7247, 1
      %v7250 = vsel %vm938, %v7245, %v7249
      %v7251 = vrot.slane %v7203, 1
      %v7252 = vrot.slane %v7238, 1
      %v7253 = vsel %vm1163, %v7251, %v7252
      %7254 = vrot.lane.b32.xlu0 %v7124, 32
      %v7255 = vpop.permute.xlu0 %7254
      %7256 = vrot.lane.b32.xlu0 %v7127, 32
      %v7257 = vpop.permute.xlu0 %7256
      %7258 = vrot.lane.b32.xlu0 %v7130, 32
      %v7259 = vpop.permute.xlu0 %7258
      %7260 = vrot.lane.b32.xlu0 %v7133, 32
      %v7261 = vpop.permute.xlu0 %7260
      %7262 = vrot.lane.b32.xlu0 %v7136, 32
      %v7263 = vpop.permute.xlu0 %7262
      %7264 = vrot.lane.b32.xlu0 %v7139, 32
      %v7265 = vpop.permute.xlu0 %7264
      %7266 = vrot.lane.b32.xlu0 %v7142, 32
      %v7267 = vpop.permute.xlu0 %7266
      %7268 = vrot.lane.b32.xlu0 %v7145, 32
      %v7269 = vpop.permute.xlu0 %7268
      %7270 = vrot.lane.b32.xlu0 %v7148, 32
      %v7271 = vpop.permute.xlu0 %7270
      %7272 = vrot.lane.b32.xlu0 %v7151, 32
      %v7273 = vpop.permute.xlu0 %7272
      %7274 = vrot.lane.b32.xlu0 %v7154, 32
      %v7275 = vpop.permute.xlu0 %7274
      %7276 = vrot.lane.b32.xlu0 %v7157, 32
      %v7277 = vpop.permute.xlu0 %7276
      %7278 = vrot.lane.b32.xlu0 %v7160, 32
      %v7279 = vpop.permute.xlu0 %7278
      %7280 = vrot.lane.b32.xlu0 %v7163, 32
      %v7281 = vpop.permute.xlu0 %7280
      %7282 = vrot.lane.b32.xlu0 %v7166, 32
      %v7283 = vpop.permute.xlu0 %7282
      %7284 = vrot.lane.b32.xlu0 %v7253, 32
      %v7285 = vpop.permute.xlu0 %7284
      %v7288 = vunpack.c.l.b16 %v6764
      %v7289 = vunpack.c.l.b16 %v6765
      %v7290 = vpack.c.b16 %v7289, %v7288
      %7291 = vrot.lane.b32.xlu0 %v6833, 64
      %v7292 = vpop.permute.xlu0 %7291
      %7293 = vrot.lane.b32.xlu0 %v6834, 64
      %v7294 = vpop.permute.xlu0 %7293
      %7295 = vrot.lane.b32.xlu0 %v6835, 64
      %v7296 = vpop.permute.xlu0 %7295
      %7297 = vrot.lane.b32.xlu0 %v6836, 64
      %v7298 = vpop.permute.xlu0 %7297
      %7299 = vrot.lane.b32.xlu0 %v6837, 64
      %v7300 = vpop.permute.xlu0 %7299
      %7301 = vrot.lane.b32.xlu0 %v6838, 64
      %v7302 = vpop.permute.xlu0 %7301
      %7303 = vrot.lane.b32.xlu0 %v6839, 64
      %v7304 = vpop.permute.xlu0 %7303
      %7305 = vrot.lane.b32.xlu0 %v6840, 64
      %v7306 = vpop.permute.xlu0 %7305
      %7307 = vrot.lane.b32.xlu0 %v6841, 64
      %v7308 = vpop.permute.xlu0 %7307
      %7309 = vrot.lane.b32.xlu0 %v6842, 64
      %v7310 = vpop.permute.xlu0 %7309
      %7311 = vrot.lane.b32.xlu0 %v6843, 64
      %v7312 = vpop.permute.xlu0 %7311
      %7313 = vrot.lane.b32.xlu0 %v6844, 64
      %v7314 = vpop.permute.xlu0 %7313
      %7315 = vrot.lane.b32.xlu0 %v6845, 64
      %v7316 = vpop.permute.xlu0 %7315
      %7317 = vrot.lane.b32.xlu0 %v6846, 64
      %v7318 = vpop.permute.xlu0 %7317
      %7319 = vrot.lane.b32.xlu0 %v7203, 64
      %v7320 = vpop.permute.xlu0 %7319
      %7321 = vrot.lane.b32.xlu0 %v7290, 64
      %v7322 = vpop.permute.xlu0 %7321
      %v7324 = vunpack.c.l.b16 %v6766
      %v7325 = vpack.c.b16 %v7324, %v7324
      %v7327 = vshrl.u32 %v7290, 16
      %v7329 = vshll.u32 %v7290, 16
      %v7331 = vrot.slane %v7329, 1
      %v7332 = vor.u32 %v7327, %v7331
      %v7334 = vshll.u32 %v7325, 16
      %v7336 = vrot.slane %v7334, 1
      %v7337 = vsel %vm938, %v7332, %v7336
      %7338 = vrot.lane.b32.xlu0 %v6930, 96
      %v7339 = vpop.permute.xlu0 %7338
      %7340 = vrot.lane.b32.xlu0 %v6942, 96
      %v7341 = vpop.permute.xlu0 %7340
      %7342 = vrot.lane.b32.xlu0 %v6954, 96
      %v7343 = vpop.permute.xlu0 %7342
      %7344 = vrot.lane.b32.xlu0 %v6966, 96
      %v7345 = vpop.permute.xlu0 %7344
      %7346 = vrot.lane.b32.xlu0 %v6978, 96
      %v7347 = vpop.permute.xlu0 %7346
      %7348 = vrot.lane.b32.xlu0 %v6990, 96
      %v7349 = vpop.permute.xlu0 %7348
      %7350 = vrot.lane.b32.xlu0 %v7002, 96
      %v7351 = vpop.permute.xlu0 %7350
      %7352 = vrot.lane.b32.xlu0 %v7014, 96
      %v7353 = vpop.permute.xlu0 %7352
      %7354 = vrot.lane.b32.xlu0 %v7026, 96
      %v7355 = vpop.permute.xlu0 %7354
      %7356 = vrot.lane.b32.xlu0 %v7038, 96
      %v7357 = vpop.permute.xlu0 %7356
      %7358 = vrot.lane.b32.xlu0 %v7050, 96
      %v7359 = vpop.permute.xlu0 %7358
      %7360 = vrot.lane.b32.xlu0 %v7062, 96
      %v7361 = vpop.permute.xlu0 %7360
      %7362 = vrot.lane.b32.xlu0 %v7074, 96
      %v7363 = vpop.permute.xlu0 %7362
      %7364 = vrot.lane.b32.xlu0 %v7086, 96
      %v7365 = vpop.permute.xlu0 %7364
      %7366 = vrot.lane.b32.xlu0 %v7250, 96
      %v7367 = vpop.permute.xlu0 %7366
      %7368 = vrot.lane.b32.xlu0 %v7337, 96
      %v7369 = vpop.permute.xlu0 %7368
      %v7370 = vrot.slane %v7290, 1
      %v7371 = vrot.slane %v7325, 1
      %v7372 = vsel %vm1163, %v7370, %v7371
      %v7374 = vsel %vm1418, %v6831, %v7088
      %v7376 = vsel %vm1418, %v6832, %v7090
      %v7378 = vsel %vm1418, %v6833, %v7092
      %v7380 = vsel %vm1418, %v6834, %v7094
      %v7382 = vsel %vm1418, %v6835, %v7096
      %v7384 = vsel %vm1418, %v6836, %v7098
      %v7386 = vsel %vm1418, %v6837, %v7100
      %v7388 = vsel %vm1418, %v6838, %v7102
      %v7390 = vsel %vm1418, %v6839, %v7104
      %v7392 = vsel %vm1418, %v6840, %v7106
      %v7394 = vsel %vm1418, %v6841, %v7108
      %v7396 = vsel %vm1418, %v6842, %v7110
      %v7398 = vsel %vm1418, %v6843, %v7112
      %v7400 = vsel %vm1418, %v6844, %v7114
      %v7402 = vsel %vm1418, %v6845, %v7116
      %v7404 = vsel %vm1418, %v6846, %v7118
      %v7406 = vsel %vm1451, %v7374, %v7168
      %v7408 = vsel %vm1451, %v7376, %v7170
      %v7410 = vsel %vm1451, %v7378, %v7172
      %v7412 = vsel %vm1451, %v7380, %v7174
      %v7414 = vsel %vm1451, %v7382, %v7176
      %v7416 = vsel %vm1451, %v7384, %v7178
      %v7418 = vsel %vm1451, %v7386, %v7180
      %v7420 = vsel %vm1451, %v7388, %v7182
      %v7422 = vsel %vm1451, %v7390, %v7184
      %v7424 = vsel %vm1451, %v7392, %v7186
      %v7426 = vsel %vm1451, %v7394, %v7188
      %v7428 = vsel %vm1451, %v7396, %v7190
      %v7430 = vsel %vm1451, %v7398, %v7192
      %v7432 = vsel %vm1451, %v7400, %v7194
      %v7434 = vsel %vm1451, %v7402, %v7196
      %v7436 = vsel %vm1451, %v7404, %v7198
      %v7438 = vsel %vm1484, %v7406, %v7205
      %v7441 = vsel %vm1484, %v7408, %v7207
      %v7444 = vsel %vm1484, %v7410, %v7209
      %v7447 = vsel %vm1484, %v7412, %v7211
      %v7450 = vsel %vm1484, %v7414, %v7213
      %v7453 = vsel %vm1484, %v7416, %v7215
      %v7456 = vsel %vm1484, %v7418, %v7217
      %v7459 = vsel %vm1484, %v7420, %v7219
      %v7462 = vsel %vm1484, %v7422, %v7221
      %v7465 = vsel %vm1484, %v7424, %v7223
      %v7468 = vsel %vm1484, %v7426, %v7225
      %v7471 = vsel %vm1484, %v7428, %v7227
      %v7474 = vsel %vm1484, %v7430, %v7229
      %v7477 = vsel %vm1484, %v7432, %v7231
      %v7480 = vsel %vm1484, %v7434, %v7233
      %v7483 = vsel %vm1484, %v7436, %v7235
      %v7487 = vsel %vm1418, %v6918, %v7255
      %v7490 = vsel %vm1418, %v6930, %v7257
      %v7493 = vsel %vm1418, %v6942, %v7259
      %v7496 = vsel %vm1418, %v6954, %v7261
      %v7499 = vsel %vm1418, %v6966, %v7263
      %v7502 = vsel %vm1418, %v6978, %v7265
      %v7505 = vsel %vm1418, %v6990, %v7267
      %v7508 = vsel %vm1418, %v7002, %v7269
      %v7511 = vsel %vm1418, %v7014, %v7271
      %v7514 = vsel %vm1418, %v7026, %v7273
      %v7517 = vsel %vm1418, %v7038, %v7275
      %v7520 = vsel %vm1418, %v7050, %v7277
      %v7523 = vsel %vm1418, %v7062, %v7279
      %v7526 = vsel %vm1418, %v7074, %v7281
      %v7529 = vsel %vm1418, %v7086, %v7283
      %v7532 = vsel %vm1418, %v7250, %v7285
      %v7534 = vsel %vm1451, %v7487, %v7292
      %v7536 = vsel %vm1451, %v7490, %v7294
      %v7538 = vsel %vm1451, %v7493, %v7296
      %v7540 = vsel %vm1451, %v7496, %v7298
      %v7542 = vsel %vm1451, %v7499, %v7300
      %v7544 = vsel %vm1451, %v7502, %v7302
      %v7546 = vsel %vm1451, %v7505, %v7304
      %v7548 = vsel %vm1451, %v7508, %v7306
      %v7550 = vsel %vm1451, %v7511, %v7308
      %v7552 = vsel %vm1451, %v7514, %v7310
      %v7554 = vsel %vm1451, %v7517, %v7312
      %v7556 = vsel %vm1451, %v7520, %v7314
      %v7558 = vsel %vm1451, %v7523, %v7316
      %v7560 = vsel %vm1451, %v7526, %v7318
      %v7562 = vsel %vm1451, %v7529, %v7320
      %v7564 = vsel %vm1451, %v7532, %v7322
      %v7566 = vsel %vm1484, %v7534, %v7339
      %v7569 = vsel %vm1484, %v7536, %v7341
      %v7572 = vsel %vm1484, %v7538, %v7343
      %v7575 = vsel %vm1484, %v7540, %v7345
      %v7578 = vsel %vm1484, %v7542, %v7347
      %v7581 = vsel %vm1484, %v7544, %v7349
      %v7584 = vsel %vm1484, %v7546, %v7351
      %v7587 = vsel %vm1484, %v7548, %v7353
      %v7590 = vsel %vm1484, %v7550, %v7355
      %v7593 = vsel %vm1484, %v7552, %v7357
      %v7596 = vsel %vm1484, %v7554, %v7359
      %v7599 = vsel %vm1484, %v7556, %v7361
      %v7602 = vsel %vm1484, %v7558, %v7363
      %v7605 = vsel %vm1484, %v7560, %v7365
      %v7608 = vsel %vm1484, %v7562, %v7367
      %v7611 = vsel %vm1484, %v7564, %v7369
      %s7613 = scalar_lea.vmem %s1, 432
      %v7614 = vld [vmem:[%s7613] sm:$0xf]
      %v7615 = vld [vmem:[%s7613 + $0x4] sm:$0xf]
      %v7616 = vld [vmem:[%s7613 + $0x8] sm:$0xf]
      %v7617 = vld [vmem:[%s7613 + $0xc] sm:$0xf]
      %v7618 = vld [vmem:[%s7613 + $0x10] sm:$0xf]
      %v7619 = vld [vmem:[%s7613 + $0x14] sm:$0xf]
      %v7620 = vld [vmem:[%s7613 + $0x18] sm:$0xf]
      %v7621 = vld [vmem:[%s7613 + $0x1c] sm:$0xf]
      %v7622 = vld [vmem:[%s7613 + $0x20] sm:$0xf]
      %v7623 = vld [vmem:[%s7613 + $0x24] sm:$0xf]
      %v7624 = vld [vmem:[%s7613 + $0x28] sm:$0xf]
      %v7625 = vld [vmem:[%s7613 + $0x2c] sm:$0xf]
      %v7626 = vld [vmem:[%s7613 + $0x30] sm:$0xf]
      %v7627 = vld [vmem:[%s7613 + $0x34] sm:$0xf]
      %v7628 = vld [vmem:[%s7613 + $0x38] sm:$0xf]
      %v7629 = vld [vmem:[%s7613 + $0x3c] sm:$0xf]
      %v7630 = vld [vmem:[%s7613 + $0x40] sm:$0xf]
      %v7631 = vld [vmem:[%s7613 + $0x44] sm:$0xf]
      %v7632 = vld [vmem:[%s7613 + $0x48] sm:$0xf]
      %v7633 = vld [vmem:[%s7613 + $0x4c] sm:$0xf]
      %v7634 = vld [vmem:[%s7613 + $0x50] sm:$0xf]
      %v7635 = vld [vmem:[%s7613 + $0x54] sm:$0xf]
      %v7636 = vld [vmem:[%s7613 + $0x58] sm:$0xf]
      %v7637 = vld [vmem:[%s7613 + $0x5c] sm:$0xf]
      %v7638 = vld [vmem:[%s7613 + $0x60] sm:$0xf]
      %v7639 = vld [vmem:[%s7613 + $0x64] sm:$0xf]
      %v7640 = vld [vmem:[%s7613 + $0x68] sm:$0xf]
      %v7641 = vld [vmem:[%s7613 + $0x6c] sm:$0xf]
      %v7642 = vld [vmem:[%s7613 + $0x70] sm:$0xf]
      %v7643 = vld [vmem:[%s7613 + $0x74] sm:$0xf]
      %v7644 = vld [vmem:[%s7613 + $0x78] sm:$0xf]
      %v7645 = vld [vmem:[%s7613 + $0x7c] sm:$0xf]
      %v7646 = vld [vmem:[%s7613 + $0x80] sm:$0xf]
      %v7647 = vld [vmem:[%s7613 + $0x84] sm:$0xf]
      %v7648 = vld [vmem:[%s7613 + $0x88] sm:$0xf]
      %v7649 = vld [vmem:[%s7613 + $0x8c] sm:$0xf]
      %s7650 = scalar_lea.vmem %s2, 3
      %v7651 = vld [vmem:[%s7650] sm:$0x1]
      %v7653 = vlaneseq
      %v7654 = vshrl.u32 %v7653, 7
      %v7655 = vsub.s32 0, %v7654
      %v7656 = vrot.slane %v7651, %v7655
      %v7694 = vunpack.c.l.b16 %v7614
      %v7695 = vunpack.c.l.b16 %v7615
      %v7696 = vunpack.c.l.b16 %v7616
      %v7697 = vunpack.c.l.b16 %v7617
      %v7698 = vunpack.c.l.b16 %v7618
      %v7699 = vunpack.c.l.b16 %v7619
      %v7700 = vunpack.c.l.b16 %v7620
      %v7701 = vunpack.c.l.b16 %v7621
      %v7702 = vunpack.c.l.b16 %v7622
      %v7703 = vunpack.c.l.b16 %v7623
      %v7704 = vunpack.c.l.b16 %v7624
      %v7705 = vunpack.c.l.b16 %v7625
      %v7706 = vunpack.c.l.b16 %v7626
      %v7707 = vunpack.c.l.b16 %v7627
      %v7708 = vunpack.c.l.b16 %v7628
      %v7709 = vunpack.c.l.b16 %v7629
      %v7710 = vunpack.c.l.b16 %v7630
      %v7711 = vunpack.c.l.b16 %v7631
      %v7712 = vunpack.c.l.b16 %v7632
      %v7713 = vunpack.c.l.b16 %v7633
      %v7714 = vunpack.c.l.b16 %v7634
      %v7715 = vunpack.c.l.b16 %v7635
      %v7716 = vunpack.c.l.b16 %v7636
      %v7717 = vunpack.c.l.b16 %v7637
      %v7718 = vunpack.c.l.b16 %v7638
      %v7719 = vunpack.c.l.b16 %v7639
      %v7720 = vunpack.c.l.b16 %v7640
      %v7721 = vunpack.c.l.b16 %v7641
      %v7722 = vunpack.c.l.b16 %v7642
      %v7723 = vunpack.c.l.b16 %v7643
      %v7724 = vunpack.c.l.b16 %v7644
      %v7725 = vunpack.c.l.b16 %v7645
      %v7726 = vunpack.c.l.b16 %v7646
      %v7727 = vunpack.c.l.b16 %v7647
      %v7728 = vunpack.c.l.b16 %v7648
      %v7729 = vunpack.c.l.b16 %v7649
      %v7730 = vpack.c.b16 %v7695, %v7694
      %v7731 = vpack.c.b16 %v7697, %v7696
      %v7732 = vpack.c.b16 %v7699, %v7698
      %v7733 = vpack.c.b16 %v7701, %v7700
      %v7734 = vpack.c.b16 %v7703, %v7702
      %v7735 = vpack.c.b16 %v7705, %v7704
      %v7736 = vpack.c.b16 %v7707, %v7706
      %v7737 = vpack.c.b16 %v7709, %v7708
      %v7738 = vpack.c.b16 %v7711, %v7710
      %v7739 = vpack.c.b16 %v7713, %v7712
      %v7740 = vpack.c.b16 %v7715, %v7714
      %v7741 = vpack.c.b16 %v7717, %v7716
      %v7742 = vpack.c.b16 %v7719, %v7718
      %v7743 = vpack.c.b16 %v7721, %v7720
      %v7744 = vpack.c.b16 %v7723, %v7722
      %v7745 = vpack.c.b16 %v7725, %v7724
      %v7746 = vpack.c.b16 %v7727, %v7726
      %v7747 = vpack.c.b16 %v7729, %v7728
      %v7767 = vsel %vm1418, %v7127, 0
      %v7770 = vsel %vm1418, %v7130, 0
      %v7773 = vsel %vm1418, %v7133, 0
      %v7776 = vsel %vm1418, %v7136, 0
      %v7779 = vsel %vm1418, %v7139, 0
      %v7782 = vsel %vm1418, %v7142, 0
      %v7785 = vsel %vm1418, %v7145, 0
      %v7788 = vsel %vm1418, %v7148, 0
      %v7791 = vsel %vm1418, %v7151, 0
      %v7794 = vsel %vm1418, %v7154, 0
      %v7797 = vsel %vm1418, %v7157, 0
      %v7800 = vsel %vm1418, %v7160, 0
      %v7803 = vsel %vm1418, %v7163, 0
      %v7806 = vsel %vm1418, %v7166, 0
      %v7809 = vsel %vm1418, %v7253, 0
      %v7812 = vsel %vm1418, %v7372, 0
      %7814 = vmatprep.subr.bf16.mxu0 0
      %7815 = vmatpush1.bf16.msra.mxu0 %v7730
      %7816 = vmatprep.subr.bf16.mxu0 0
      %7817 = vmatpush1.bf16.msra.mxu0 %v7731
      %7818 = vmatprep.subr.bf16.mxu0 0
      %7819 = vmatpush1.bf16.msra.mxu0 %v7732
      %7820 = vmatprep.subr.bf16.mxu0 0
      %7821 = vmatpush1.bf16.msra.mxu0 %v7733
      %7822 = vmatprep.subr.bf16.mxu0 0
      %7823 = vmatpush1.bf16.msra.mxu0 %v7734
      %7824 = vmatprep.subr.bf16.mxu0 0
      %7825 = vmatpush1.bf16.msra.mxu0 %v7735
      %7826 = vmatprep.subr.bf16.mxu0 0
      %7827 = vmatpush1.bf16.msra.mxu0 %v7736
      %7828 = vmatprep.subr.bf16.mxu0 0
      %7829 = vmatpush1.bf16.msra.mxu0 %v7737
      %7830 = vmatprep.subr.bf16.mxu0 0
      %7831 = vmatpush1.bf16.msra.mxu0 %v7738
      %7832 = vmatprep.subr.bf16.mxu0 0
      %7833 = vmatpush1.bf16.msra.mxu0 %v7739
      %7834 = vmatprep.subr.bf16.mxu0 0
      %7835 = vmatpush1.bf16.msra.mxu0 %v7740
      %7836 = vmatprep.subr.bf16.mxu0 0
      %7837 = vmatpush1.bf16.msra.mxu0 %v7741
      %7838 = vmatprep.subr.bf16.mxu0 0
      %7839 = vmatpush1.bf16.msra.mxu0 %v7742
      %7840 = vmatprep.subr.bf16.mxu0 0
      %7841 = vmatpush1.bf16.msra.mxu0 %v7743
      %7842 = vmatprep.subr.bf16.mxu0 0
      %7843 = vmatpush1.bf16.msra.mxu0 %v7744
      %7844 = vmatprep.subr.bf16.mxu0 0
      %7845 = vmatpush1.bf16.msra.mxu0 %v7745
      %7846 = vmatprep.mubr.bf16.mxu0 %v7566
      %7847 = vmatmul.mubr.bf16.gmra.mrb[0].mxu0 %v7438
      %v7848 = vpop.f32.mrb[0].mxu0
      %v7849 = vadd.f32 %v7656, %v7848
      %v7850 = vpop.f32.mrb[0].mxu0
      %v7851 = vpop.f32.mrb[0].mxu0
      %v7852 = vadd.f32 %v7656, %v7851
      %v7853 = vpop.f32.mrb[0].mxu0
      %7854 = vmatprep.mubr.bf16.mxu0 %v7569
      %7855 = vmatmul.mubr.bf16.gmra.mrb[0].mxu0 %v7441
      %v7856 = vpop.f32.mrb[0].mxu0
      %v7857 = vadd.f32 %v7656, %v7856
      %v7858 = vpop.f32.mrb[0].mxu0
      %v7859 = vpop.f32.mrb[0].mxu0
      %v7860 = vadd.f32 %v7656, %v7859
      %v7861 = vpop.f32.mrb[0].mxu0
      %7862 = vmatprep.mubr.bf16.mxu0 %v7572
      %7863 = vmatmul.mubr.bf16.gmra.mrb[0].mxu0 %v7444
      %v7864 = vpop.f32.mrb[0].mxu0
      %v7865 = vadd.f32 %v7656, %v7864
      %v7866 = vpop.f32.mrb[0].mxu0
      %v7867 = vpop.f32.mrb[0].mxu0
      %v7868 = vadd.f32 %v7656, %v7867
      %v7869 = vpop.f32.mrb[0].mxu0
      %7870 = vmatprep.mubr.bf16.mxu0 %v7575
      %7871 = vmatmul.mubr.bf16.gmra.mrb[0].mxu0 %v7447
      %v7872 = vpop.f32.mrb[0].mxu0
      %v7873 = vadd.f32 %v7656, %v7872
      %v7874 = vpop.f32.mrb[0].mxu0
      %v7875 = vpop.f32.mrb[0].mxu0
      %v7876 = vadd.f32 %v7656, %v7875
      %v7877 = vpop.f32.mrb[0].mxu0
      %7878 = vmatprep.mubr.bf16.mxu0 %v7578
      %7879 = vmatmul.mubr.bf16.gmra.mrb[0].mxu0 %v7450
      %v7880 = vpop.f32.mrb[0].mxu0
      %v7881 = vadd.f32 %v7656, %v7880
      %v7882 = vpop.f32.mrb[0].mxu0
      %v7883 = vpop.f32.mrb[0].mxu0
      %v7884 = vadd.f32 %v7656, %v7883
      %v7885 = vpop.f32.mrb[0].mxu0
      %7886 = vmatprep.mubr.bf16.mxu0 %v7581
      %7887 = vmatmul.mubr.bf16.gmra.mrb[0].mxu0 %v7453
      %v7888 = vpop.f32.mrb[0].mxu0
      %v7889 = vadd.f32 %v7656, %v7888
      %v7890 = vpop.f32.mrb[0].mxu0
      %v7891 = vpop.f32.mrb[0].mxu0
      %v7892 = vadd.f32 %v7656, %v7891
      %v7893 = vpop.f32.mrb[0].mxu0
      %7894 = vmatprep.mubr.bf16.mxu0 %v7584
      %7895 = vmatmul.mubr.bf16.gmra.mrb[0].mxu0 %v7456
      %v7896 = vpop.f32.mrb[0].mxu0
      %v7897 = vadd.f32 %v7656, %v7896
      %v7898 = vpop.f32.mrb[0].mxu0
      %v7899 = vpop.f32.mrb[0].mxu0
      %v7900 = vadd.f32 %v7656, %v7899
      %v7901 = vpop.f32.mrb[0].mxu0
      %7902 = vmatprep.mubr.bf16.mxu0 %v7587
      %7903 = vmatmul.mubr.bf16.gmra.mrb[0].mxu0 %v7459
      %v7904 = vpop.f32.mrb[0].mxu0
      %v7905 = vadd.f32 %v7656, %v7904
      %v7906 = vpop.f32.mrb[0].mxu0
      %v7907 = vpop.f32.mrb[0].mxu0
      %v7908 = vadd.f32 %v7656, %v7907
      %v7909 = vpop.f32.mrb[0].mxu0
      %7910 = vmatprep.mubr.bf16.mxu0 %v7590
      %7911 = vmatmul.mubr.bf16.gmra.mrb[0].mxu0 %v7462
      %v7912 = vpop.f32.mrb[0].mxu0
      %v7913 = vadd.f32 %v7656, %v7912
      %v7914 = vpop.f32.mrb[0].mxu0
      %v7915 = vpop.f32.mrb[0].mxu0
      %v7916 = vadd.f32 %v7656, %v7915
      %v7917 = vpop.f32.mrb[0].mxu0
      %7918 = vmatprep.mubr.bf16.mxu0 %v7593
      %7919 = vmatmul.mubr.bf16.gmra.mrb[0].mxu0 %v7465
      %v7920 = vpop.f32.mrb[0].mxu0
      %v7921 = vadd.f32 %v7656, %v7920
      %v7922 = vpop.f32.mrb[0].mxu0
      %v7923 = vpop.f32.mrb[0].mxu0
      %v7924 = vadd.f32 %v7656, %v7923
      %v7925 = vpop.f32.mrb[0].mxu0
      %7926 = vmatprep.mubr.bf16.mxu0 %v7596
      %7927 = vmatmul.mubr.bf16.gmra.mrb[0].mxu0 %v7468
      %v7928 = vpop.f32.mrb[0].mxu0
      %v7929 = vadd.f32 %v7656, %v7928
      %v7930 = vpop.f32.mrb[0].mxu0
      %v7931 = vpop.f32.mrb[0].mxu0
      %v7932 = vadd.f32 %v7656, %v7931
      %v7933 = vpop.f32.mrb[0].mxu0
      %7934 = vmatprep.mubr.bf16.mxu0 %v7599
      %7935 = vmatmul.mubr.bf16.gmra.mrb[0].mxu0 %v7471
      %v7936 = vpop.f32.mrb[0].mxu0
      %v7937 = vadd.f32 %v7656, %v7936
      %v7938 = vpop.f32.mrb[0].mxu0
      %v7939 = vpop.f32.mrb[0].mxu0
      %v7940 = vadd.f32 %v7656, %v7939
      %v7941 = vpop.f32.mrb[0].mxu0
      %7942 = vmatprep.mubr.bf16.mxu0 %v7602
      %7943 = vmatmul.mubr.bf16.gmra.mrb[0].mxu0 %v7474
      %v7944 = vpop.f32.mrb[0].mxu0
      %v7945 = vadd.f32 %v7656, %v7944
      %v7946 = vpop.f32.mrb[0].mxu0
      %v7947 = vpop.f32.mrb[0].mxu0
      %v7948 = vadd.f32 %v7656, %v7947
      %v7949 = vpop.f32.mrb[0].mxu0
      %7950 = vmatprep.mubr.bf16.mxu0 %v7605
      %7951 = vmatmul.mubr.bf16.gmra.mrb[0].mxu0 %v7477
      %v7952 = vpop.f32.mrb[0].mxu0
      %v7953 = vadd.f32 %v7656, %v7952
      %v7954 = vpop.f32.mrb[0].mxu0
      %v7955 = vpop.f32.mrb[0].mxu0
      %v7956 = vadd.f32 %v7656, %v7955
      %v7957 = vpop.f32.mrb[0].mxu0
      %7958 = vmatprep.mubr.bf16.mxu0 %v7608
      %7959 = vmatmul.mubr.bf16.gmra.mrb[0].mxu0 %v7480
      %v7960 = vpop.f32.mrb[0].mxu0
      %v7961 = vadd.f32 %v7656, %v7960
      %v7962 = vpop.f32.mrb[0].mxu0
      %v7963 = vpop.f32.mrb[0].mxu0
      %v7964 = vadd.f32 %v7656, %v7963
      %v7965 = vpop.f32.mrb[0].mxu0
      %7966 = vmatprep.mubr.bf16.mxu0 %v7611
      %7967 = vmatmul.mubr.bf16.gmra.mrb[0].mxu0 %v7483
      %v7968 = vpop.f32.mrb[0].mxu0
      %v7969 = vadd.f32 %v7656, %v7968
      %v7970 = vpop.f32.mrb[0].mxu0
      %v7971 = vpop.f32.mrb[0].mxu0
      %v7972 = vadd.f32 %v7656, %v7971
      %v7973 = vpop.f32.mrb[0].mxu0
      %7974 = vdwg.mxu0
      %7975 = vmatprep.subr.bf16.mxu0 0
      %7976 = vmatpush1.bf16.msra.mxu0 %v7746
      %7977 = vmatprep.subr.bf16.mxu0 0
      %7978 = vmatpush1.bf16.msra.mxu0 %v7747
      %7979 = vmatprep.subr.bf16.mxu0 0
      %7980 = vmatpush1.bf16.msra.mxu0 0
      %7981 = vmatprep.subr.bf16.mxu0 0
      %7982 = vmatpush1.bf16.msra.mxu0 0
      %7983 = vmatprep.subr.bf16.mxu0 0
      %7984 = vmatpush1.bf16.msra.mxu0 0
      %7985 = vmatprep.subr.bf16.mxu0 0
      %7986 = vmatpush1.bf16.msra.mxu0 0
      %7987 = vmatprep.subr.bf16.mxu0 0
      %7988 = vmatpush1.bf16.msra.mxu0 0
      %7989 = vmatprep.subr.bf16.mxu0 0
      %7990 = vmatpush1.bf16.msra.mxu0 0
      %7991 = vmatprep.subr.bf16.mxu0 0
      %7992 = vmatpush1.bf16.msra.mxu0 0
      %7993 = vmatprep.subr.bf16.mxu0 0
      %7994 = vmatpush1.bf16.msra.mxu0 0
      %7995 = vmatprep.subr.bf16.mxu0 0
      %7996 = vmatpush1.bf16.msra.mxu0 0
      %7997 = vmatprep.subr.bf16.mxu0 0
      %7998 = vmatpush1.bf16.msra.mxu0 0
      %7999 = vmatprep.subr.bf16.mxu0 0
      %8000 = vmatpush1.bf16.msra.mxu0 0
      %8001 = vmatprep.subr.bf16.mxu0 0
      %8002 = vmatpush1.bf16.msra.mxu0 0
      %8003 = vmatprep.subr.bf16.mxu0 0
      %8004 = vmatpush1.bf16.msra.mxu0 0
      %8005 = vmatprep.subr.bf16.mxu0 0
      %8006 = vmatpush1.bf16.msra.mxu0 0
      %8007 = vmatprep.mubr.bf16.mxu0 0
      %8008 = vmatmul.mubr.bf16.gmra.mrb[0].mxu0 %v7767
      %v8009 = vpop.f32.mrb[0].mxu0
      %v8010 = vadd.f32 %v7849, %v8009
      %v8011 = vpop.f32.mrb[0].mxu0
      %v8012 = vpop.f32.mrb[0].mxu0
      %v8013 = vadd.f32 %v7852, %v8012
      %v8014 = vpop.f32.mrb[0].mxu0
      %8015 = vmatprep.mubr.bf16.mxu0 0
      %8016 = vmatmul.mubr.bf16.gmra.mrb[0].mxu0 %v7770
      %v8017 = vpop.f32.mrb[0].mxu0
      %v8018 = vadd.f32 %v7857, %v8017
      %v8019 = vpop.f32.mrb[0].mxu0
      %v8020 = vpop.f32.mrb[0].mxu0
      %v8021 = vadd.f32 %v7860, %v8020
      %v8022 = vpop.f32.mrb[0].mxu0
      %8023 = vmatprep.mubr.bf16.mxu0 0
      %8024 = vmatmul.mubr.bf16.gmra.mrb[0].mxu0 %v7773
      %v8025 = vpop.f32.mrb[0].mxu0
      %v8026 = vadd.f32 %v7865, %v8025
      %v8027 = vpop.f32.mrb[0].mxu0
      %v8028 = vpop.f32.mrb[0].mxu0
      %v8029 = vadd.f32 %v7868, %v8028
      %v8030 = vpop.f32.mrb[0].mxu0
      %8031 = vmatprep.mubr.bf16.mxu0 0
      %8032 = vmatmul.mubr.bf16.gmra.mrb[0].mxu0 %v7776
      %v8033 = vpop.f32.mrb[0].mxu0
      %v8034 = vadd.f32 %v7873, %v8033
      %v8035 = vpop.f32.mrb[0].mxu0
      %v8036 = vpop.f32.mrb[0].mxu0
      %v8037 = vadd.f32 %v7876, %v8036
      %v8038 = vpop.f32.mrb[0].mxu0
      %8039 = vmatprep.mubr.bf16.mxu0 0
      %8040 = vmatmul.mubr.bf16.gmra.mrb[0].mxu0 %v7779
      %v8041 = vpop.f32.mrb[0].mxu0
      %v8042 = vadd.f32 %v7881, %v8041
      %v8043 = vpop.f32.mrb[0].mxu0
      %v8044 = vpop.f32.mrb[0].mxu0
      %v8045 = vadd.f32 %v7884, %v8044
      %v8046 = vpop.f32.mrb[0].mxu0
      %8047 = vmatprep.mubr.bf16.mxu0 0
      %8048 = vmatmul.mubr.bf16.gmra.mrb[0].mxu0 %v7782
      %v8049 = vpop.f32.mrb[0].mxu0
      %v8050 = vadd.f32 %v7889, %v8049
      %v8051 = vpop.f32.mrb[0].mxu0
      %v8052 = vpop.f32.mrb[0].mxu0
      %v8053 = vadd.f32 %v7892, %v8052
      %v8054 = vpop.f32.mrb[0].mxu0
      %8055 = vmatprep.mubr.bf16.mxu0 0
      %8056 = vmatmul.mubr.bf16.gmra.mrb[0].mxu0 %v7785
      %v8057 = vpop.f32.mrb[0].mxu0
      %v8058 = vadd.f32 %v7897, %v8057
      %v8059 = vpop.f32.mrb[0].mxu0
      %v8060 = vpop.f32.mrb[0].mxu0
      %v8061 = vadd.f32 %v7900, %v8060
      %v8062 = vpop.f32.mrb[0].mxu0
      %8063 = vmatprep.mubr.bf16.mxu0 0
      %8064 = vmatmul.mubr.bf16.gmra.mrb[0].mxu0 %v7788
      %v8065 = vpop.f32.mrb[0].mxu0
      %v8066 = vadd.f32 %v7905, %v8065
      %v8067 = vpop.f32.mrb[0].mxu0
      %v8068 = vpop.f32.mrb[0].mxu0
      %v8069 = vadd.f32 %v7908, %v8068
      %v8070 = vpop.f32.mrb[0].mxu0
      %8071 = vmatprep.mubr.bf16.mxu0 0
      %8072 = vmatmul.mubr.bf16.gmra.mrb[0].mxu0 %v7791
      %v8073 = vpop.f32.mrb[0].mxu0
      %v8074 = vadd.f32 %v7913, %v8073
      %v8075 = vpop.f32.mrb[0].mxu0
      %v8076 = vpop.f32.mrb[0].mxu0
      %v8077 = vadd.f32 %v7916, %v8076
      %v8078 = vpop.f32.mrb[0].mxu0
      %8079 = vmatprep.mubr.bf16.mxu0 0
      %8080 = vmatmul.mubr.bf16.gmra.mrb[0].mxu0 %v7794
      %v8081 = vpop.f32.mrb[0].mxu0
      %v8082 = vadd.f32 %v7921, %v8081
      %v8083 = vpop.f32.mrb[0].mxu0
      %v8084 = vpop.f32.mrb[0].mxu0
      %v8085 = vadd.f32 %v7924, %v8084
      %v8086 = vpop.f32.mrb[0].mxu0
      %8087 = vmatprep.mubr.bf16.mxu0 0
      %8088 = vmatmul.mubr.bf16.gmra.mrb[0].mxu0 %v7797
      %v8089 = vpop.f32.mrb[0].mxu0
      %v8090 = vadd.f32 %v7929, %v8089
      %v8091 = vpop.f32.mrb[0].mxu0
      %v8092 = vpop.f32.mrb[0].mxu0
      %v8093 = vadd.f32 %v7932, %v8092
      %v8094 = vpop.f32.mrb[0].mxu0
      %8095 = vmatprep.mubr.bf16.mxu0 0
      %8096 = vmatmul.mubr.bf16.gmra.mrb[0].mxu0 %v7800
      %v8097 = vpop.f32.mrb[0].mxu0
      %v8098 = vadd.f32 %v7937, %v8097
      %v8099 = vpop.f32.mrb[0].mxu0
      %v8100 = vpop.f32.mrb[0].mxu0
      %v8101 = vadd.f32 %v7940, %v8100
      %v8102 = vpop.f32.mrb[0].mxu0
      %8103 = vmatprep.mubr.bf16.mxu0 0
      %8104 = vmatmul.mubr.bf16.gmra.mrb[0].mxu0 %v7803
      %v8105 = vpop.f32.mrb[0].mxu0
      %v8106 = vadd.f32 %v7945, %v8105
      %v8107 = vpop.f32.mrb[0].mxu0
      %v8108 = vpop.f32.mrb[0].mxu0
      %v8109 = vadd.f32 %v7948, %v8108
      %v8110 = vpop.f32.mrb[0].mxu0
      %8111 = vmatprep.mubr.bf16.mxu0 0
      %8112 = vmatmul.mubr.bf16.gmra.mrb[0].mxu0 %v7806
      %v8113 = vpop.f32.mrb[0].mxu0
      %v8114 = vadd.f32 %v7953, %v8113
      %v8115 = vpop.f32.mrb[0].mxu0
      %v8116 = vpop.f32.mrb[0].mxu0
      %v8117 = vadd.f32 %v7956, %v8116
      %v8118 = vpop.f32.mrb[0].mxu0
      %8119 = vmatprep.mubr.bf16.mxu0 0
      %8120 = vmatmul.mubr.bf16.gmra.mrb[0].mxu0 %v7809
      %v8121 = vpop.f32.mrb[0].mxu0
      %v8122 = vadd.f32 %v7961, %v8121
      %v8123 = vpop.f32.mrb[0].mxu0
      %v8124 = vpop.f32.mrb[0].mxu0
      %v8125 = vadd.f32 %v7964, %v8124
      %v8126 = vpop.f32.mrb[0].mxu0
      %8127 = vmatprep.mubr.bf16.mxu0 0
      %8128 = vmatmul.mubr.bf16.gmra.mrb[0].mxu0 %v7812
      %v8129 = vpop.f32.mrb[0].mxu0
      %v8130 = vadd.f32 %v7969, %v8129
      %v8131 = vpop.f32.mrb[0].mxu0
      %v8132 = vpop.f32.mrb[0].mxu0
      %v8133 = vadd.f32 %v7972, %v8132
      %v8134 = vpop.f32.mrb[0].mxu0
      %8135 = vdwg.mxu0
      %v8136 = vmax.f32 %v8010, 0.0
      %v8137 = vmax.f32 %v8013, 0.0
      %v8138 = vmax.f32 %v8018, 0.0
      %v8139 = vmax.f32 %v8021, 0.0
      %v8140 = vmax.f32 %v8026, 0.0
      %v8141 = vmax.f32 %v8029, 0.0
      %v8142 = vmax.f32 %v8034, 0.0
      %v8143 = vmax.f32 %v8037, 0.0
      %v8144 = vmax.f32 %v8042, 0.0
      %v8145 = vmax.f32 %v8045, 0.0
      %v8146 = vmax.f32 %v8050, 0.0
      %v8147 = vmax.f32 %v8053, 0.0
      %v8148 = vmax.f32 %v8058, 0.0
      %v8149 = vmax.f32 %v8061, 0.0
      %v8150 = vmax.f32 %v8066, 0.0
      %v8151 = vmax.f32 %v8069, 0.0
      %v8152 = vmax.f32 %v8074, 0.0
      %v8153 = vmax.f32 %v8077, 0.0
      %v8154 = vmax.f32 %v8082, 0.0
      %v8155 = vmax.f32 %v8085, 0.0
      %v8156 = vmax.f32 %v8090, 0.0
      %v8157 = vmax.f32 %v8093, 0.0
      %v8158 = vmax.f32 %v8098, 0.0
      %v8159 = vmax.f32 %v8101, 0.0
      %v8160 = vmax.f32 %v8106, 0.0
      %v8161 = vmax.f32 %v8109, 0.0
      %v8162 = vmax.f32 %v8114, 0.0
      %v8163 = vmax.f32 %v8117, 0.0
      %v8164 = vmax.f32 %v8122, 0.0
      %v8165 = vmax.f32 %v8125, 0.0
      %v8166 = vmax.f32 %v8130, 0.0
      %v8167 = vmax.f32 %v8133, 0.0
      %v8168 = vpack.c.bf16 %v8137, %v8136
      %v8169 = vpack.c.bf16 %v8139, %v8138
      %v8170 = vpack.c.bf16 %v8141, %v8140
      %v8171 = vpack.c.bf16 %v8143, %v8142
      %v8172 = vpack.c.bf16 %v8145, %v8144
      %v8173 = vpack.c.bf16 %v8147, %v8146
      %v8174 = vpack.c.bf16 %v8149, %v8148
      %v8175 = vpack.c.bf16 %v8151, %v8150
      %v8176 = vpack.c.bf16 %v8153, %v8152
      %v8177 = vpack.c.bf16 %v8155, %v8154
      %v8178 = vpack.c.bf16 %v8157, %v8156
      %v8179 = vpack.c.bf16 %v8159, %v8158
      %v8180 = vpack.c.bf16 %v8161, %v8160
      %v8181 = vpack.c.bf16 %v8163, %v8162
      %v8182 = vpack.c.bf16 %v8165, %v8164
      %v8183 = vpack.c.bf16 %v8167, %v8166
      %v8200 = vunpack.c.l.b16 %v8168
      %v8201 = vunpack.c.h.b16 %v8168
      %v8202 = vunpack.c.l.b16 %v8169
      %v8203 = vunpack.c.h.b16 %v8169
      %v8204 = vunpack.c.l.b16 %v8170
      %v8205 = vunpack.c.h.b16 %v8170
      %v8206 = vunpack.c.l.b16 %v8171
      %v8207 = vunpack.c.h.b16 %v8171
      %v8208 = vunpack.c.l.b16 %v8172
      %v8209 = vunpack.c.h.b16 %v8172
      %v8210 = vunpack.c.l.b16 %v8173
      %v8211 = vunpack.c.h.b16 %v8173
      %v8212 = vunpack.c.l.b16 %v8174
      %v8213 = vunpack.c.h.b16 %v8174
      %v8214 = vunpack.c.l.b16 %v8175
      %v8215 = vunpack.c.h.b16 %v8175
      %v8216 = vunpack.c.l.b16 %v8176
      %v8217 = vunpack.c.h.b16 %v8176
      %v8218 = vunpack.c.l.b16 %v8177
      %v8219 = vunpack.c.h.b16 %v8177
      %v8220 = vunpack.c.l.b16 %v8178
      %v8221 = vunpack.c.h.b16 %v8178
      %v8222 = vunpack.c.l.b16 %v8179
      %v8223 = vunpack.c.h.b16 %v8179
      %v8224 = vunpack.c.l.b16 %v8180
      %v8225 = vunpack.c.h.b16 %v8180
      %v8226 = vunpack.c.l.b16 %v8181
      %v8227 = vunpack.c.h.b16 %v8181
      %v8228 = vunpack.c.l.b16 %v8182
      %v8229 = vunpack.c.h.b16 %v8182
      %v8230 = vunpack.c.l.b16 %v8183
      %v8231 = vunpack.c.h.b16 %v8183
      %v8232 = vpack.c.b16 %v8200, %v8200
      %v8233 = vpack.c.b16 %v8201, %v8201
      %v8234 = vpack.c.b16 %v8202, %v8202
      %v8235 = vpack.c.b16 %v8203, %v8203
      %v8236 = vpack.c.b16 %v8204, %v8204
      %v8237 = vpack.c.b16 %v8205, %v8205
      %v8238 = vpack.c.b16 %v8206, %v8206
      %v8239 = vpack.c.b16 %v8207, %v8207
      %v8240 = vpack.c.b16 %v8208, %v8208
      %v8241 = vpack.c.b16 %v8209, %v8209
      %v8242 = vpack.c.b16 %v8210, %v8210
      %v8243 = vpack.c.b16 %v8211, %v8211
      %v8244 = vpack.c.b16 %v8212, %v8212
      %v8245 = vpack.c.b16 %v8213, %v8213
      %v8246 = vpack.c.b16 %v8214, %v8214
      %v8247 = vpack.c.b16 %v8215, %v8215
      %v8248 = vpack.c.b16 %v8216, %v8216
      %v8249 = vpack.c.b16 %v8217, %v8217
      %v8250 = vpack.c.b16 %v8218, %v8218
      %v8251 = vpack.c.b16 %v8219, %v8219
      %v8252 = vpack.c.b16 %v8220, %v8220
      %v8253 = vpack.c.b16 %v8221, %v8221
      %v8254 = vpack.c.b16 %v8222, %v8222
      %v8255 = vpack.c.b16 %v8223, %v8223
      %v8256 = vpack.c.b16 %v8224, %v8224
      %v8257 = vpack.c.b16 %v8225, %v8225
      %v8258 = vpack.c.b16 %v8226, %v8226
      %v8259 = vpack.c.b16 %v8227, %v8227
      %v8260 = vpack.c.b16 %v8228, %v8228
      %v8261 = vpack.c.b16 %v8229, %v8229
      %v8262 = vpack.c.b16 %v8230, %v8230
      %v8263 = vpack.c.b16 %v8231, %v8231
      %v8265 = vshrl.u32 %v8232, 16
      %v8267 = vrot.slane %v8265, 7
      %v8268 = vshll.u32 %v8232, 16
      %v8270 = vor.u32 %v8267, %v8268
      %v8271 = vrot.slane %v8267, 4
      %v8273 = vshrl.u32 %v8233, 16
      %v8275 = vrot.slane %v8273, 7
      %v8276 = vshll.u32 %v8233, 16
      %v8278 = vor.u32 %v8275, %v8276
      %v8279 = vsel %vm316, %v8271, %v8278
      %v8280 = vrot.slane %v8275, 4
      %v8282 = vshrl.u32 %v8234, 16
      %v8284 = vrot.slane %v8282, 7
      %v8285 = vshll.u32 %v8234, 16
      %v8287 = vor.u32 %v8284, %v8285
      %v8288 = vrot.slane %v8284, 4
      %v8290 = vshrl.u32 %v8235, 16
      %v8292 = vrot.slane %v8290, 7
      %v8293 = vshll.u32 %v8235, 16
      %v8295 = vor.u32 %v8292, %v8293
      %v8296 = vsel %vm316, %v8288, %v8295
      %v8297 = vrot.slane %v8292, 4
      %v8299 = vshrl.u32 %v8236, 16
      %v8301 = vrot.slane %v8299, 7
      %v8302 = vshll.u32 %v8236, 16
      %v8304 = vor.u32 %v8301, %v8302
      %v8305 = vrot.slane %v8301, 4
      %v8307 = vshrl.u32 %v8237, 16
      %v8309 = vrot.slane %v8307, 7
      %v8310 = vshll.u32 %v8237, 16
      %v8312 = vor.u32 %v8309, %v8310
      %v8313 = vsel %vm316, %v8305, %v8312
      %v8314 = vrot.slane %v8309, 4
      %v8316 = vshrl.u32 %v8238, 16
      %v8318 = vrot.slane %v8316, 7
      %v8319 = vshll.u32 %v8238, 16
      %v8321 = vor.u32 %v8318, %v8319
      %v8322 = vrot.slane %v8318, 4
      %v8324 = vshrl.u32 %v8239, 16
      %v8326 = vrot.slane %v8324, 7
      %v8327 = vshll.u32 %v8239, 16
      %v8329 = vor.u32 %v8326, %v8327
      %v8330 = vsel %vm316, %v8322, %v8329
      %v8331 = vrot.slane %v8326, 4
      %v8333 = vshrl.u32 %v8240, 16
      %v8335 = vrot.slane %v8333, 7
      %v8336 = vshll.u32 %v8240, 16
      %v8338 = vor.u32 %v8335, %v8336
      %v8339 = vrot.slane %v8335, 4
      %v8341 = vshrl.u32 %v8241, 16
      %v8343 = vrot.slane %v8341, 7
      %v8344 = vshll.u32 %v8241, 16
      %v8346 = vor.u32 %v8343, %v8344
      %v8347 = vsel %vm316, %v8339, %v8346
      %v8348 = vrot.slane %v8343, 4
      %v8350 = vshrl.u32 %v8242, 16
      %v8352 = vrot.slane %v8350, 7
      %v8353 = vshll.u32 %v8242, 16
      %v8355 = vor.u32 %v8352, %v8353
      %v8356 = vrot.slane %v8352, 4
      %v8358 = vshrl.u32 %v8243, 16
      %v8360 = vrot.slane %v8358, 7
      %v8361 = vshll.u32 %v8243, 16
      %v8363 = vor.u32 %v8360, %v8361
      %v8364 = vsel %vm316, %v8356, %v8363
      %v8365 = vrot.slane %v8360, 4
      %v8367 = vshrl.u32 %v8244, 16
      %v8369 = vrot.slane %v8367, 7
      %v8370 = vshll.u32 %v8244, 16
      %v8372 = vor.u32 %v8369, %v8370
      %v8373 = vrot.slane %v8369, 4
      %v8375 = vshrl.u32 %v8245, 16
      %v8377 = vrot.slane %v8375, 7
      %v8378 = vshll.u32 %v8245, 16
      %v8380 = vor.u32 %v8377, %v8378
      %v8381 = vsel %vm316, %v8373, %v8380
      %v8382 = vrot.slane %v8377, 4
      %v8384 = vshrl.u32 %v8246, 16
      %v8386 = vrot.slane %v8384, 7
      %v8387 = vshll.u32 %v8246, 16
      %v8389 = vor.u32 %v8386, %v8387
      %v8390 = vrot.slane %v8386, 4
      %v8392 = vshrl.u32 %v8247, 16
      %v8394 = vrot.slane %v8392, 7
      %v8395 = vshll.u32 %v8247, 16
      %v8397 = vor.u32 %v8394, %v8395
      %v8398 = vsel %vm316, %v8390, %v8397
      %v8399 = vrot.slane %v8394, 4
      %v8401 = vshrl.u32 %v8248, 16
      %v8403 = vrot.slane %v8401, 7
      %v8404 = vshll.u32 %v8248, 16
      %v8406 = vor.u32 %v8403, %v8404
      %v8407 = vrot.slane %v8403, 4
      %v8409 = vshrl.u32 %v8249, 16
      %v8411 = vrot.slane %v8409, 7
      %v8412 = vshll.u32 %v8249, 16
      %v8414 = vor.u32 %v8411, %v8412
      %v8415 = vsel %vm316, %v8407, %v8414
      %v8416 = vrot.slane %v8411, 4
      %v8418 = vshrl.u32 %v8250, 16
      %v8420 = vrot.slane %v8418, 7
      %v8421 = vshll.u32 %v8250, 16
      %v8423 = vor.u32 %v8420, %v8421
      %v8424 = vrot.slane %v8420, 4
      %v8426 = vshrl.u32 %v8251, 16
      %v8428 = vrot.slane %v8426, 7
      %v8429 = vshll.u32 %v8251, 16
      %v8431 = vor.u32 %v8428, %v8429
      %v8432 = vsel %vm316, %v8424, %v8431
      %v8433 = vrot.slane %v8428, 4
      %v8435 = vshrl.u32 %v8252, 16
      %v8437 = vrot.slane %v8435, 7
      %v8438 = vshll.u32 %v8252, 16
      %v8440 = vor.u32 %v8437, %v8438
      %v8441 = vrot.slane %v8437, 4
      %v8443 = vshrl.u32 %v8253, 16
      %v8445 = vrot.slane %v8443, 7
      %v8446 = vshll.u32 %v8253, 16
      %v8448 = vor.u32 %v8445, %v8446
      %v8449 = vsel %vm316, %v8441, %v8448
      %v8450 = vrot.slane %v8445, 4
      %v8452 = vshrl.u32 %v8254, 16
      %v8454 = vrot.slane %v8452, 7
      %v8455 = vshll.u32 %v8254, 16
      %v8457 = vor.u32 %v8454, %v8455
      %v8458 = vrot.slane %v8454, 4
      %v8460 = vshrl.u32 %v8255, 16
      %v8462 = vrot.slane %v8460, 7
      %v8463 = vshll.u32 %v8255, 16
      %v8465 = vor.u32 %v8462, %v8463
      %v8466 = vsel %vm316, %v8458, %v8465
      %v8467 = vrot.slane %v8462, 4
      %v8469 = vshrl.u32 %v8256, 16
      %v8471 = vrot.slane %v8469, 7
      %v8472 = vshll.u32 %v8256, 16
      %v8474 = vor.u32 %v8471, %v8472
      %v8475 = vrot.slane %v8471, 4
      %v8477 = vshrl.u32 %v8257, 16
      %v8479 = vrot.slane %v8477, 7
      %v8480 = vshll.u32 %v8257, 16
      %v8482 = vor.u32 %v8479, %v8480
      %v8483 = vsel %vm316, %v8475, %v8482
      %v8484 = vrot.slane %v8479, 4
      %v8486 = vshrl.u32 %v8258, 16
      %v8488 = vrot.slane %v8486, 7
      %v8489 = vshll.u32 %v8258, 16
      %v8491 = vor.u32 %v8488, %v8489
      %v8492 = vrot.slane %v8488, 4
      %v8494 = vshrl.u32 %v8259, 16
      %v8496 = vrot.slane %v8494, 7
      %v8497 = vshll.u32 %v8259, 16
      %v8499 = vor.u32 %v8496, %v8497
      %v8500 = vsel %vm316, %v8492, %v8499
      %v8501 = vrot.slane %v8496, 4
      %v8503 = vshrl.u32 %v8260, 16
      %v8505 = vrot.slane %v8503, 7
      %v8506 = vshll.u32 %v8260, 16
      %v8508 = vor.u32 %v8505, %v8506
      %v8509 = vrot.slane %v8505, 4
      %v8511 = vshrl.u32 %v8261, 16
      %v8513 = vrot.slane %v8511, 7
      %v8514 = vshll.u32 %v8261, 16
      %v8516 = vor.u32 %v8513, %v8514
      %v8517 = vsel %vm316, %v8509, %v8516
      %v8518 = vrot.slane %v8513, 4
      %v8520 = vshrl.u32 %v8262, 16
      %v8522 = vrot.slane %v8520, 7
      %v8523 = vshll.u32 %v8262, 16
      %v8525 = vor.u32 %v8522, %v8523
      %v8526 = vrot.slane %v8522, 4
      %v8528 = vshrl.u32 %v8263, 16
      %v8530 = vrot.slane %v8528, 7
      %v8531 = vshll.u32 %v8263, 16
      %v8533 = vor.u32 %v8530, %v8531
      %v8534 = vsel %vm316, %v8526, %v8533
      %v8535 = vrot.slane %v8530, 4
      %v8584 = vld [vmem:[%s637] sm:$0xf]
      %v8585 = vsel %vm2632, %v8270, %v8584
      %8586 = vst [vmem:[%s637] sm:$0xf] %v8585
      %8587 = vst.msk [vmem:[%s637 + $0x4] sm:$0xf] %vm172, %v8279
      %v8588 = vld [vmem:[%s637 + $0x8] sm:$0x1]
      %v8589 = vsel %vm2638, %v8280, %v8588
      %8590 = vst [vmem:[%s637 + $0x8] sm:$0x1] %v8589
      %v8591 = vld [vmem:[%s637 + $0xc] sm:$0xf]
      %v8592 = vsel %vm2632, %v8287, %v8591
      %8593 = vst [vmem:[%s637 + $0xc] sm:$0xf] %v8592
      %8594 = vst.msk [vmem:[%s637 + $0x10] sm:$0xf] %vm172, %v8296
      %v8595 = vld [vmem:[%s637 + $0x14] sm:$0x1]
      %v8596 = vsel %vm2638, %v8297, %v8595
      %8597 = vst [vmem:[%s637 + $0x14] sm:$0x1] %v8596
      %v8598 = vld [vmem:[%s637 + $0x18] sm:$0xf]
      %v8599 = vsel %vm2632, %v8304, %v8598
      %8600 = vst [vmem:[%s637 + $0x18] sm:$0xf] %v8599
      %8601 = vst.msk [vmem:[%s637 + $0x1c] sm:$0xf] %vm172, %v8313
      %v8602 = vld [vmem:[%s637 + $0x20] sm:$0x1]
      %v8603 = vsel %vm2638, %v8314, %v8602
      %8604 = vst [vmem:[%s637 + $0x20] sm:$0x1] %v8603
      %v8605 = vld [vmem:[%s637 + $0x24] sm:$0xf]
      %v8606 = vsel %vm2632, %v8321, %v8605
      %8607 = vst [vmem:[%s637 + $0x24] sm:$0xf] %v8606
      %8608 = vst.msk [vmem:[%s637 + $0x28] sm:$0xf] %vm172, %v8330
      %v8609 = vld [vmem:[%s637 + $0x2c] sm:$0x1]
      %v8610 = vsel %vm2638, %v8331, %v8609
      %8611 = vst [vmem:[%s637 + $0x2c] sm:$0x1] %v8610
      %v8612 = vld [vmem:[%s637 + $0x30] sm:$0xf]
      %v8613 = vsel %vm2632, %v8338, %v8612
      %8614 = vst [vmem:[%s637 + $0x30] sm:$0xf] %v8613
      %8615 = vst.msk [vmem:[%s637 + $0x34] sm:$0xf] %vm172, %v8347
      %v8616 = vld [vmem:[%s637 + $0x38] sm:$0x1]
      %v8617 = vsel %vm2638, %v8348, %v8616
      %8618 = vst [vmem:[%s637 + $0x38] sm:$0x1] %v8617
      %v8619 = vld [vmem:[%s637 + $0x3c] sm:$0xf]
      %v8620 = vsel %vm2632, %v8355, %v8619
      %8621 = vst [vmem:[%s637 + $0x3c] sm:$0xf] %v8620
      %8622 = vst.msk [vmem:[%s637 + $0x40] sm:$0xf] %vm172, %v8364
      %v8623 = vld [vmem:[%s637 + $0x44] sm:$0x1]
      %v8624 = vsel %vm2638, %v8365, %v8623
      %8625 = vst [vmem:[%s637 + $0x44] sm:$0x1] %v8624
      %v8626 = vld [vmem:[%s637 + $0x48] sm:$0xf]
      %v8627 = vsel %vm2632, %v8372, %v8626
      %8628 = vst [vmem:[%s637 + $0x48] sm:$0xf] %v8627
      %8629 = vst.msk [vmem:[%s637 + $0x4c] sm:$0xf] %vm172, %v8381
      %v8630 = vld [vmem:[%s637 + $0x50] sm:$0x1]
      %v8631 = vsel %vm2638, %v8382, %v8630
      %8632 = vst [vmem:[%s637 + $0x50] sm:$0x1] %v8631
      %v8633 = vld [vmem:[%s637 + $0x54] sm:$0xf]
      %v8634 = vsel %vm2632, %v8389, %v8633
      %8635 = vst [vmem:[%s637 + $0x54] sm:$0xf] %v8634
      %8636 = vst.msk [vmem:[%s637 + $0x58] sm:$0xf] %vm172, %v8398
      %v8637 = vld [vmem:[%s637 + $0x5c] sm:$0x1]
      %v8638 = vsel %vm2638, %v8399, %v8637
      %8639 = vst [vmem:[%s637 + $0x5c] sm:$0x1] %v8638
      %v8640 = vld [vmem:[%s637 + $0x60] sm:$0xf]
      %v8641 = vsel %vm2632, %v8406, %v8640
      %8642 = vst [vmem:[%s637 + $0x60] sm:$0xf] %v8641
      %8643 = vst.msk [vmem:[%s637 + $0x64] sm:$0xf] %vm172, %v8415
      %v8644 = vld [vmem:[%s637 + $0x68] sm:$0x1]
      %v8645 = vsel %vm2638, %v8416, %v8644
      %8646 = vst [vmem:[%s637 + $0x68] sm:$0x1] %v8645
      %v8647 = vld [vmem:[%s637 + $0x6c] sm:$0xf]
      %v8648 = vsel %vm2632, %v8423, %v8647
      %8649 = vst [vmem:[%s637 + $0x6c] sm:$0xf] %v8648
      %8650 = vst.msk [vmem:[%s637 + $0x70] sm:$0xf] %vm172, %v8432
      %v8651 = vld [vmem:[%s637 + $0x74] sm:$0x1]
      %v8652 = vsel %vm2638, %v8433, %v8651
      %8653 = vst [vmem:[%s637 + $0x74] sm:$0x1] %v8652
      %v8654 = vld [vmem:[%s637 + $0x78] sm:$0xf]
      %v8655 = vsel %vm2632, %v8440, %v8654
      %8656 = vst [vmem:[%s637 + $0x78] sm:$0xf] %v8655
      %8657 = vst.msk [vmem:[%s637 + $0x7c] sm:$0xf] %vm172, %v8449
      %v8658 = vld [vmem:[%s637 + $0x80] sm:$0x1]
      %v8659 = vsel %vm2638, %v8450, %v8658
      %8660 = vst [vmem:[%s637 + $0x80] sm:$0x1] %v8659
      %v8661 = vld [vmem:[%s637 + $0x84] sm:$0xf]
      %v8662 = vsel %vm2632, %v8457, %v8661
      %8663 = vst [vmem:[%s637 + $0x84] sm:$0xf] %v8662
      %8664 = vst.msk [vmem:[%s637 + $0x88] sm:$0xf] %vm172, %v8466
      %v8665 = vld [vmem:[%s637 + $0x8c] sm:$0x1]
      %v8666 = vsel %vm2638, %v8467, %v8665
      %8667 = vst [vmem:[%s637 + $0x8c] sm:$0x1] %v8666
      %v8668 = vld [vmem:[%s637 + $0x90] sm:$0xf]
      %v8669 = vsel %vm2632, %v8474, %v8668
      %8670 = vst [vmem:[%s637 + $0x90] sm:$0xf] %v8669
      %8671 = vst.msk [vmem:[%s637 + $0x94] sm:$0xf] %vm172, %v8483
      %v8672 = vld [vmem:[%s637 + $0x98] sm:$0x1]
      %v8673 = vsel %vm2638, %v8484, %v8672
      %8674 = vst [vmem:[%s637 + $0x98] sm:$0x1] %v8673
      %v8675 = vld [vmem:[%s637 + $0x9c] sm:$0xf]
      %v8676 = vsel %vm2632, %v8491, %v8675
      %8677 = vst [vmem:[%s637 + $0x9c] sm:$0xf] %v8676
      %8678 = vst.msk [vmem:[%s637 + $0xa0] sm:$0xf] %vm172, %v8500
      %v8679 = vld [vmem:[%s637 + $0xa4] sm:$0x1]
      %v8680 = vsel %vm2638, %v8501, %v8679
      %8681 = vst [vmem:[%s637 + $0xa4] sm:$0x1] %v8680
      %v8682 = vld [vmem:[%s637 + $0xa8] sm:$0xf]
      %v8683 = vsel %vm2632, %v8508, %v8682
      %8684 = vst [vmem:[%s637 + $0xa8] sm:$0xf] %v8683
      %8685 = vst.msk [vmem:[%s637 + $0xac] sm:$0xf] %vm172, %v8517
      %v8686 = vld [vmem:[%s637 + $0xb0] sm:$0x1]
      %v8687 = vsel %vm2638, %v8518, %v8686
      %8688 = vst [vmem:[%s637 + $0xb0] sm:$0x1] %v8687
      %v8689 = vld [vmem:[%s637 + $0xb4] sm:$0xf]
      %v8690 = vsel %vm2632, %v8525, %v8689
      %8691 = vst [vmem:[%s637 + $0xb4] sm:$0xf] %v8690
      %8692 = vst.msk [vmem:[%s637 + $0xb8] sm:$0xf] %vm172, %v8534
      %v8693 = vld [vmem:[%s637 + $0xbc] sm:$0x1]
      %v8694 = vsel %vm2638, %v8535, %v8693
      %8695 = vst [vmem:[%s637 + $0xbc] sm:$0x1] %v8694
      %v8696 = vld [vmem:[#allocation2] sm:$0xf]
      %v8697 = vld [vmem:[#allocation2 + $0x4] sm:$0xf]
      %v8698 = vld [vmem:[#allocation2 + $0x8] sm:$0x1]
      %v8699 = vld [vmem:[#allocation2 + $0xc] sm:$0xf]
      %v8700 = vld [vmem:[#allocation2 + $0x10] sm:$0xf]
      %v8701 = vld [vmem:[#allocation2 + $0x14] sm:$0x1]
      %v8702 = vld [vmem:[#allocation2 + $0x18] sm:$0xf]
      %v8703 = vld [vmem:[#allocation2 + $0x1c] sm:$0xf]
      %v8704 = vld [vmem:[#allocation2 + $0x20] sm:$0x1]
      %v8705 = vld [vmem:[#allocation2 + $0x24] sm:$0xf]
      %v8706 = vld [vmem:[#allocation2 + $0x28] sm:$0xf]
      %v8707 = vld [vmem:[#allocation2 + $0x2c] sm:$0x1]
      %v8708 = vld [vmem:[#allocation2 + $0x30] sm:$0xf]
      %v8709 = vld [vmem:[#allocation2 + $0x34] sm:$0xf]
      %v8710 = vld [vmem:[#allocation2 + $0x38] sm:$0x1]
      %v8711 = vld [vmem:[#allocation2 + $0x3c] sm:$0xf]
      %v8712 = vld [vmem:[#allocation2 + $0x40] sm:$0xf]
      %v8713 = vld [vmem:[#allocation2 + $0x44] sm:$0x1]
      %v8714 = vld [vmem:[#allocation2 + $0x48] sm:$0xf]
      %v8715 = vld [vmem:[#allocation2 + $0x4c] sm:$0xf]
      %v8716 = vld [vmem:[#allocation2 + $0x50] sm:$0x1]
      %v8717 = vld [vmem:[#allocation2 + $0x54] sm:$0xf]
      %v8718 = vld [vmem:[#allocation2 + $0x58] sm:$0xf]
      %v8719 = vld [vmem:[#allocation2 + $0x5c] sm:$0x1]
      %v8720 = vld [vmem:[#allocation2 + $0x60] sm:$0xf]
      %v8721 = vld [vmem:[#allocation2 + $0x64] sm:$0xf]
      %v8722 = vld [vmem:[#allocation2 + $0x68] sm:$0x1]
      %v8723 = vld [vmem:[#allocation2 + $0x6c] sm:$0xf]
      %v8724 = vld [vmem:[#allocation2 + $0x70] sm:$0xf]
      %v8725 = vld [vmem:[#allocation2 + $0x74] sm:$0x1]
      %v8726 = vld [vmem:[#allocation2 + $0x78] sm:$0xf]
      %v8727 = vld [vmem:[#allocation2 + $0x7c] sm:$0xf]
      %v8728 = vld [vmem:[#allocation2 + $0x80] sm:$0x1]
      %v8729 = vld [vmem:[#allocation2 + $0x84] sm:$0xf]
      %v8730 = vld [vmem:[#allocation2 + $0x88] sm:$0xf]
      %v8731 = vld [vmem:[#allocation2 + $0x8c] sm:$0x1]
      %v8732 = vld [vmem:[#allocation2 + $0x90] sm:$0xf]
      %v8733 = vld [vmem:[#allocation2 + $0x94] sm:$0xf]
      %v8734 = vld [vmem:[#allocation2 + $0x98] sm:$0x1]
      %v8735 = vld [vmem:[#allocation2 + $0x9c] sm:$0xf]
      %v8736 = vld [vmem:[#allocation2 + $0xa0] sm:$0xf]
      %v8737 = vld [vmem:[#allocation2 + $0xa4] sm:$0x1]
      %v8738 = vld [vmem:[#allocation2 + $0xa8] sm:$0xf]
      %v8739 = vld [vmem:[#allocation2 + $0xac] sm:$0xf]
      %v8740 = vld [vmem:[#allocation2 + $0xb0] sm:$0x1]
      %v8741 = vld [vmem:[#allocation2 + $0xb4] sm:$0xf]
      %v8742 = vld [vmem:[#allocation2 + $0xb8] sm:$0xf]
      %v8743 = vld [vmem:[#allocation2 + $0xbc] sm:$0x1]
      %v8744 = vld [vmem:[#allocation2 + $0xc0] sm:$0xf]
      %v8745 = vld [vmem:[#allocation2 + $0xc4] sm:$0xf]
      %v8746 = vld [vmem:[#allocation2 + $0xc8] sm:$0x1]
      %v8747 = vld [vmem:[#allocation2 + $0xcc] sm:$0xf]
      %v8748 = vld [vmem:[#allocation2 + $0xd0] sm:$0xf]
      %v8749 = vld [vmem:[#allocation2 + $0xd4] sm:$0x1]
      %v8782 = vunpack.c.l.b16 %v8696
      %v8783 = vunpack.c.l.b16 %v8697
      %v8784 = vunpack.c.l.b16 %v8699
      %v8785 = vunpack.c.l.b16 %v8700
      %v8786 = vunpack.c.l.b16 %v8702
      %v8787 = vunpack.c.l.b16 %v8703
      %v8788 = vunpack.c.l.b16 %v8705
      %v8789 = vunpack.c.l.b16 %v8706
      %v8790 = vunpack.c.l.b16 %v8708
      %v8791 = vunpack.c.l.b16 %v8709
      %v8792 = vunpack.c.l.b16 %v8711
      %v8793 = vunpack.c.l.b16 %v8712
      %v8794 = vunpack.c.l.b16 %v8714
      %v8795 = vunpack.c.l.b16 %v8715
      %v8796 = vunpack.c.l.b16 %v8717
      %v8797 = vunpack.c.l.b16 %v8718
      %v8798 = vunpack.c.l.b16 %v8720
      %v8799 = vunpack.c.l.b16 %v8721
      %v8800 = vunpack.c.l.b16 %v8723
      %v8801 = vunpack.c.l.b16 %v8724
      %v8802 = vunpack.c.l.b16 %v8726
      %v8803 = vunpack.c.l.b16 %v8727
      %v8804 = vunpack.c.l.b16 %v8729
      %v8805 = vunpack.c.l.b16 %v8730
      %v8806 = vunpack.c.l.b16 %v8732
      %v8807 = vunpack.c.l.b16 %v8733
      %v8808 = vunpack.c.l.b16 %v8735
      %v8809 = vunpack.c.l.b16 %v8736
      %v8810 = vunpack.c.l.b16 %v8738
      %v8811 = vunpack.c.l.b16 %v8739
      %v8812 = vunpack.c.l.b16 %v8741
      %v8813 = vunpack.c.l.b16 %v8742
      %v8814 = vpack.c.b16 %v8783, %v8782
      %v8815 = vpack.c.b16 %v8785, %v8784
      %v8816 = vpack.c.b16 %v8787, %v8786
      %v8817 = vpack.c.b16 %v8789, %v8788
      %v8818 = vpack.c.b16 %v8791, %v8790
      %v8819 = vpack.c.b16 %v8793, %v8792
      %v8820 = vpack.c.b16 %v8795, %v8794
      %v8821 = vpack.c.b16 %v8797, %v8796
      %v8822 = vpack.c.b16 %v8799, %v8798
      %v8823 = vpack.c.b16 %v8801, %v8800
      %v8824 = vpack.c.b16 %v8803, %v8802
      %v8825 = vpack.c.b16 %v8805, %v8804
      %v8826 = vpack.c.b16 %v8807, %v8806
      %v8827 = vpack.c.b16 %v8809, %v8808
      %v8828 = vpack.c.b16 %v8811, %v8810
      %v8829 = vpack.c.b16 %v8813, %v8812
      %v8846 = vunpack.c.l.b16 %v8698
      %v8847 = vunpack.c.l.b16 %v8701
      %v8848 = vunpack.c.l.b16 %v8704
      %v8849 = vunpack.c.l.b16 %v8707
      %v8850 = vunpack.c.l.b16 %v8710
      %v8851 = vunpack.c.l.b16 %v8713
      %v8852 = vunpack.c.l.b16 %v8716
      %v8853 = vunpack.c.l.b16 %v8719
      %v8854 = vunpack.c.l.b16 %v8722
      %v8855 = vunpack.c.l.b16 %v8725
      %v8856 = vunpack.c.l.b16 %v8728
      %v8857 = vunpack.c.l.b16 %v8731
      %v8858 = vunpack.c.l.b16 %v8734
      %v8859 = vunpack.c.l.b16 %v8737
      %v8860 = vunpack.c.l.b16 %v8740
      %v8861 = vunpack.c.l.b16 %v8743
      %v8862 = vpack.c.b16 %v8846, %v8846
      %v8863 = vpack.c.b16 %v8847, %v8847
      %v8864 = vpack.c.b16 %v8848, %v8848
      %v8865 = vpack.c.b16 %v8849, %v8849
      %v8866 = vpack.c.b16 %v8850, %v8850
      %v8867 = vpack.c.b16 %v8851, %v8851
      %v8868 = vpack.c.b16 %v8852, %v8852
      %v8869 = vpack.c.b16 %v8853, %v8853
      %v8870 = vpack.c.b16 %v8854, %v8854
      %v8871 = vpack.c.b16 %v8855, %v8855
      %v8872 = vpack.c.b16 %v8856, %v8856
      %v8873 = vpack.c.b16 %v8857, %v8857
      %v8874 = vpack.c.b16 %v8858, %v8858
      %v8875 = vpack.c.b16 %v8859, %v8859
      %v8876 = vpack.c.b16 %v8860, %v8860
      %v8877 = vpack.c.b16 %v8861, %v8861
      %v8879 = vshrl.u32 %v8814, 16
      %v8881 = vshll.u32 %v8814, 16
      %v8883 = vrot.slane %v8881, 1
      %v8884 = vor.u32 %v8879, %v8883
      %v8886 = vshll.u32 %v8862, 16
      %v8888 = vrot.slane %v8886, 1
      %v8889 = vsel %vm938, %v8884, %v8888
      %v8891 = vshrl.u32 %v8815, 16
      %v8893 = vshll.u32 %v8815, 16
      %v8895 = vrot.slane %v8893, 1
      %v8896 = vor.u32 %v8891, %v8895
      %v8898 = vshll.u32 %v8863, 16
      %v8900 = vrot.slane %v8898, 1
      %v8901 = vsel %vm938, %v8896, %v8900
      %v8903 = vshrl.u32 %v8816, 16
      %v8905 = vshll.u32 %v8816, 16
      %v8907 = vrot.slane %v8905, 1
      %v8908 = vor.u32 %v8903, %v8907
      %v8910 = vshll.u32 %v8864, 16
      %v8912 = vrot.slane %v8910, 1
      %v8913 = vsel %vm938, %v8908, %v8912
      %v8915 = vshrl.u32 %v8817, 16
      %v8917 = vshll.u32 %v8817, 16
      %v8919 = vrot.slane %v8917, 1
      %v8920 = vor.u32 %v8915, %v8919
      %v8922 = vshll.u32 %v8865, 16
      %v8924 = vrot.slane %v8922, 1
      %v8925 = vsel %vm938, %v8920, %v8924
      %v8927 = vshrl.u32 %v8818, 16
      %v8929 = vshll.u32 %v8818, 16
      %v8931 = vrot.slane %v8929, 1
      %v8932 = vor.u32 %v8927, %v8931
      %v8934 = vshll.u32 %v8866, 16
      %v8936 = vrot.slane %v8934, 1
      %v8937 = vsel %vm938, %v8932, %v8936
      %v8939 = vshrl.u32 %v8819, 16
      %v8941 = vshll.u32 %v8819, 16
      %v8943 = vrot.slane %v8941, 1
      %v8944 = vor.u32 %v8939, %v8943
      %v8946 = vshll.u32 %v8867, 16
      %v8948 = vrot.slane %v8946, 1
      %v8949 = vsel %vm938, %v8944, %v8948
      %v8951 = vshrl.u32 %v8820, 16
      %v8953 = vshll.u32 %v8820, 16
      %v8955 = vrot.slane %v8953, 1
      %v8956 = vor.u32 %v8951, %v8955
      %v8958 = vshll.u32 %v8868, 16
      %v8960 = vrot.slane %v8958, 1
      %v8961 = vsel %vm938, %v8956, %v8960
      %v8963 = vshrl.u32 %v8821, 16
      %v8965 = vshll.u32 %v8821, 16
      %v8967 = vrot.slane %v8965, 1
      %v8968 = vor.u32 %v8963, %v8967
      %v8970 = vshll.u32 %v8869, 16
      %v8972 = vrot.slane %v8970, 1
      %v8973 = vsel %vm938, %v8968, %v8972
      %v8975 = vshrl.u32 %v8822, 16
      %v8977 = vshll.u32 %v8822, 16
      %v8979 = vrot.slane %v8977, 1
      %v8980 = vor.u32 %v8975, %v8979
      %v8982 = vshll.u32 %v8870, 16
      %v8984 = vrot.slane %v8982, 1
      %v8985 = vsel %vm938, %v8980, %v8984
      %v8987 = vshrl.u32 %v8823, 16
      %v8989 = vshll.u32 %v8823, 16
      %v8991 = vrot.slane %v8989, 1
      %v8992 = vor.u32 %v8987, %v8991
      %v8994 = vshll.u32 %v8871, 16
      %v8996 = vrot.slane %v8994, 1
      %v8997 = vsel %vm938, %v8992, %v8996
      %v8999 = vshrl.u32 %v8824, 16
      %v9001 = vshll.u32 %v8824, 16
      %v9003 = vrot.slane %v9001, 1
      %v9004 = vor.u32 %v8999, %v9003
      %v9006 = vshll.u32 %v8872, 16
      %v9008 = vrot.slane %v9006, 1
      %v9009 = vsel %vm938, %v9004, %v9008
      %v9011 = vshrl.u32 %v8825, 16
      %v9013 = vshll.u32 %v8825, 16
      %v9015 = vrot.slane %v9013, 1
      %v9016 = vor.u32 %v9011, %v9015
      %v9018 = vshll.u32 %v8873, 16
      %v9020 = vrot.slane %v9018, 1
      %v9021 = vsel %vm938, %v9016, %v9020
      %v9023 = vshrl.u32 %v8826, 16
      %v9025 = vshll.u32 %v8826, 16
      %v9027 = vrot.slane %v9025, 1
      %v9028 = vor.u32 %v9023, %v9027
      %v9030 = vshll.u32 %v8874, 16
      %v9032 = vrot.slane %v9030, 1
      %v9033 = vsel %vm938, %v9028, %v9032
      %v9035 = vshrl.u32 %v8827, 16
      %v9037 = vshll.u32 %v8827, 16
      %v9039 = vrot.slane %v9037, 1
      %v9040 = vor.u32 %v9035, %v9039
      %v9042 = vshll.u32 %v8875, 16
      %v9044 = vrot.slane %v9042, 1
      %v9045 = vsel %vm938, %v9040, %v9044
      %v9047 = vshrl.u32 %v8828, 16
      %v9049 = vshll.u32 %v8828, 16
      %v9051 = vrot.slane %v9049, 1
      %v9052 = vor.u32 %v9047, %v9051
      %v9054 = vshll.u32 %v8876, 16
      %v9056 = vrot.slane %v9054, 1
      %v9057 = vsel %vm938, %v9052, %v9056
      %v9059 = vshrl.u32 %v8829, 16
      %v9061 = vshll.u32 %v8829, 16
      %v9063 = vrot.slane %v9061, 1
      %v9064 = vor.u32 %v9059, %v9063
      %v9066 = vshll.u32 %v8877, 16
      %v9068 = vrot.slane %v9066, 1
      %v9069 = vsel %vm938, %v9064, %v9068
      %9070 = vrot.lane.b32.xlu0 %v8889, 32
      %v9071 = vpop.permute.xlu0 %9070
      %9072 = vrot.lane.b32.xlu0 %v8901, 32
      %v9073 = vpop.permute.xlu0 %9072
      %9074 = vrot.lane.b32.xlu0 %v8913, 32
      %v9075 = vpop.permute.xlu0 %9074
      %9076 = vrot.lane.b32.xlu0 %v8925, 32
      %v9077 = vpop.permute.xlu0 %9076
      %9078 = vrot.lane.b32.xlu0 %v8937, 32
      %v9079 = vpop.permute.xlu0 %9078
      %9080 = vrot.lane.b32.xlu0 %v8949, 32
      %v9081 = vpop.permute.xlu0 %9080
      %9082 = vrot.lane.b32.xlu0 %v8961, 32
      %v9083 = vpop.permute.xlu0 %9082
      %9084 = vrot.lane.b32.xlu0 %v8973, 32
      %v9085 = vpop.permute.xlu0 %9084
      %9086 = vrot.lane.b32.xlu0 %v8985, 32
      %v9087 = vpop.permute.xlu0 %9086
      %9088 = vrot.lane.b32.xlu0 %v8997, 32
      %v9089 = vpop.permute.xlu0 %9088
      %9090 = vrot.lane.b32.xlu0 %v9009, 32
      %v9091 = vpop.permute.xlu0 %9090
      %9092 = vrot.lane.b32.xlu0 %v9021, 32
      %v9093 = vpop.permute.xlu0 %9092
      %9094 = vrot.lane.b32.xlu0 %v9033, 32
      %v9095 = vpop.permute.xlu0 %9094
      %9096 = vrot.lane.b32.xlu0 %v9045, 32
      %v9097 = vpop.permute.xlu0 %9096
      %9098 = vrot.lane.b32.xlu0 %v9057, 32
      %v9099 = vpop.permute.xlu0 %9098
      %9100 = vrot.lane.b32.xlu0 %v9069, 32
      %v9101 = vpop.permute.xlu0 %9100
      %v9102 = vrot.slane %v8814, 1
      %v9103 = vrot.slane %v8862, 1
      %v9104 = vsel %vm1163, %v9102, %v9103
      %v9105 = vrot.slane %v8815, 1
      %v9106 = vrot.slane %v8863, 1
      %v9107 = vsel %vm1163, %v9105, %v9106
      %v9108 = vrot.slane %v8816, 1
      %v9109 = vrot.slane %v8864, 1
      %v9110 = vsel %vm1163, %v9108, %v9109
      %v9111 = vrot.slane %v8817, 1
      %v9112 = vrot.slane %v8865, 1
      %v9113 = vsel %vm1163, %v9111, %v9112
      %v9114 = vrot.slane %v8818, 1
      %v9115 = vrot.slane %v8866, 1
      %v9116 = vsel %vm1163, %v9114, %v9115
      %v9117 = vrot.slane %v8819, 1
      %v9118 = vrot.slane %v8867, 1
      %v9119 = vsel %vm1163, %v9117, %v9118
      %v9120 = vrot.slane %v8820, 1
      %v9121 = vrot.slane %v8868, 1
      %v9122 = vsel %vm1163, %v9120, %v9121
      %v9123 = vrot.slane %v8821, 1
      %v9124 = vrot.slane %v8869, 1
      %v9125 = vsel %vm1163, %v9123, %v9124
      %v9126 = vrot.slane %v8822, 1
      %v9127 = vrot.slane %v8870, 1
      %v9128 = vsel %vm1163, %v9126, %v9127
      %v9129 = vrot.slane %v8823, 1
      %v9130 = vrot.slane %v8871, 1
      %v9131 = vsel %vm1163, %v9129, %v9130
      %v9132 = vrot.slane %v8824, 1
      %v9133 = vrot.slane %v8872, 1
      %v9134 = vsel %vm1163, %v9132, %v9133
      %v9135 = vrot.slane %v8825, 1
      %v9136 = vrot.slane %v8873, 1
      %v9137 = vsel %vm1163, %v9135, %v9136
      %v9138 = vrot.slane %v8826, 1
      %v9139 = vrot.slane %v8874, 1
      %v9140 = vsel %vm1163, %v9138, %v9139
      %v9141 = vrot.slane %v8827, 1
      %v9142 = vrot.slane %v8875, 1
      %v9143 = vsel %vm1163, %v9141, %v9142
      %v9144 = vrot.slane %v8828, 1
      %v9145 = vrot.slane %v8876, 1
      %v9146 = vsel %vm1163, %v9144, %v9145
      %v9147 = vrot.slane %v8829, 1
      %v9148 = vrot.slane %v8877, 1
      %v9149 = vsel %vm1163, %v9147, %v9148
      %9150 = vrot.lane.b32.xlu0 %v9104, 64
      %v9151 = vpop.permute.xlu0 %9150
      %9152 = vrot.lane.b32.xlu0 %v9107, 64
      %v9153 = vpop.permute.xlu0 %9152
      %9154 = vrot.lane.b32.xlu0 %v9110, 64
      %v9155 = vpop.permute.xlu0 %9154
      %9156 = vrot.lane.b32.xlu0 %v9113, 64
      %v9157 = vpop.permute.xlu0 %9156
      %9158 = vrot.lane.b32.xlu0 %v9116, 64
      %v9159 = vpop.permute.xlu0 %9158
      %9160 = vrot.lane.b32.xlu0 %v9119, 64
      %v9161 = vpop.permute.xlu0 %9160
      %9162 = vrot.lane.b32.xlu0 %v9122, 64
      %v9163 = vpop.permute.xlu0 %9162
      %9164 = vrot.lane.b32.xlu0 %v9125, 64
      %v9165 = vpop.permute.xlu0 %9164
      %9166 = vrot.lane.b32.xlu0 %v9128, 64
      %v9167 = vpop.permute.xlu0 %9166
      %9168 = vrot.lane.b32.xlu0 %v9131, 64
      %v9169 = vpop.permute.xlu0 %9168
      %9170 = vrot.lane.b32.xlu0 %v9134, 64
      %v9171 = vpop.permute.xlu0 %9170
      %9172 = vrot.lane.b32.xlu0 %v9137, 64
      %v9173 = vpop.permute.xlu0 %9172
      %9174 = vrot.lane.b32.xlu0 %v9140, 64
      %v9175 = vpop.permute.xlu0 %9174
      %9176 = vrot.lane.b32.xlu0 %v9143, 64
      %v9177 = vpop.permute.xlu0 %9176
      %9178 = vrot.lane.b32.xlu0 %v9146, 64
      %v9179 = vpop.permute.xlu0 %9178
      %9180 = vrot.lane.b32.xlu0 %v9149, 64
      %v9181 = vpop.permute.xlu0 %9180
      %v9184 = vunpack.c.l.b16 %v8744
      %v9185 = vunpack.c.l.b16 %v8745
      %v9186 = vpack.c.b16 %v9185, %v9184
      %9187 = vrot.lane.b32.xlu0 %v8815, 96
      %v9188 = vpop.permute.xlu0 %9187
      %9189 = vrot.lane.b32.xlu0 %v8816, 96
      %v9190 = vpop.permute.xlu0 %9189
      %9191 = vrot.lane.b32.xlu0 %v8817, 96
      %v9192 = vpop.permute.xlu0 %9191
      %9193 = vrot.lane.b32.xlu0 %v8818, 96
      %v9194 = vpop.permute.xlu0 %9193
      %9195 = vrot.lane.b32.xlu0 %v8819, 96
      %v9196 = vpop.permute.xlu0 %9195
      %9197 = vrot.lane.b32.xlu0 %v8820, 96
      %v9198 = vpop.permute.xlu0 %9197
      %9199 = vrot.lane.b32.xlu0 %v8821, 96
      %v9200 = vpop.permute.xlu0 %9199
      %9201 = vrot.lane.b32.xlu0 %v8822, 96
      %v9202 = vpop.permute.xlu0 %9201
      %9203 = vrot.lane.b32.xlu0 %v8823, 96
      %v9204 = vpop.permute.xlu0 %9203
      %9205 = vrot.lane.b32.xlu0 %v8824, 96
      %v9206 = vpop.permute.xlu0 %9205
      %9207 = vrot.lane.b32.xlu0 %v8825, 96
      %v9208 = vpop.permute.xlu0 %9207
      %9209 = vrot.lane.b32.xlu0 %v8826, 96
      %v9210 = vpop.permute.xlu0 %9209
      %9211 = vrot.lane.b32.xlu0 %v8827, 96
      %v9212 = vpop.permute.xlu0 %9211
      %9213 = vrot.lane.b32.xlu0 %v8828, 96
      %v9214 = vpop.permute.xlu0 %9213
      %9215 = vrot.lane.b32.xlu0 %v8829, 96
      %v9216 = vpop.permute.xlu0 %9215
      %9217 = vrot.lane.b32.xlu0 %v9186, 96
      %v9218 = vpop.permute.xlu0 %9217
      %v9220 = vunpack.c.l.b16 %v8746
      %v9221 = vpack.c.b16 %v9220, %v9220
      %v9223 = vshrl.u32 %v9186, 16
      %v9225 = vshll.u32 %v9186, 16
      %v9227 = vrot.slane %v9225, 1
      %v9228 = vor.u32 %v9223, %v9227
      %v9230 = vshll.u32 %v9221, 16
      %v9232 = vrot.slane %v9230, 1
      %v9233 = vsel %vm938, %v9228, %v9232
      %v9234 = vrot.slane %v9186, 1
      %v9235 = vrot.slane %v9221, 1
      %v9236 = vsel %vm1163, %v9234, %v9235
      %9237 = vrot.lane.b32.xlu0 %v9107, 32
      %v9238 = vpop.permute.xlu0 %9237
      %9239 = vrot.lane.b32.xlu0 %v9110, 32
      %v9240 = vpop.permute.xlu0 %9239
      %9241 = vrot.lane.b32.xlu0 %v9113, 32
      %v9242 = vpop.permute.xlu0 %9241
      %9243 = vrot.lane.b32.xlu0 %v9116, 32
      %v9244 = vpop.permute.xlu0 %9243
      %9245 = vrot.lane.b32.xlu0 %v9119, 32
      %v9246 = vpop.permute.xlu0 %9245
      %9247 = vrot.lane.b32.xlu0 %v9122, 32
      %v9248 = vpop.permute.xlu0 %9247
      %9249 = vrot.lane.b32.xlu0 %v9125, 32
      %v9250 = vpop.permute.xlu0 %9249
      %9251 = vrot.lane.b32.xlu0 %v9128, 32
      %v9252 = vpop.permute.xlu0 %9251
      %9253 = vrot.lane.b32.xlu0 %v9131, 32
      %v9254 = vpop.permute.xlu0 %9253
      %9255 = vrot.lane.b32.xlu0 %v9134, 32
      %v9256 = vpop.permute.xlu0 %9255
      %9257 = vrot.lane.b32.xlu0 %v9137, 32
      %v9258 = vpop.permute.xlu0 %9257
      %9259 = vrot.lane.b32.xlu0 %v9140, 32
      %v9260 = vpop.permute.xlu0 %9259
      %9261 = vrot.lane.b32.xlu0 %v9143, 32
      %v9262 = vpop.permute.xlu0 %9261
      %9263 = vrot.lane.b32.xlu0 %v9146, 32
      %v9264 = vpop.permute.xlu0 %9263
      %9265 = vrot.lane.b32.xlu0 %v9149, 32
      %v9266 = vpop.permute.xlu0 %9265
      %9267 = vrot.lane.b32.xlu0 %v9236, 32
      %v9268 = vpop.permute.xlu0 %9267
      %v9271 = vunpack.c.l.b16 %v8747
      %v9272 = vunpack.c.l.b16 %v8748
      %v9273 = vpack.c.b16 %v9272, %v9271
      %9274 = vrot.lane.b32.xlu0 %v8816, 64
      %v9275 = vpop.permute.xlu0 %9274
      %9276 = vrot.lane.b32.xlu0 %v8817, 64
      %v9277 = vpop.permute.xlu0 %9276
      %9278 = vrot.lane.b32.xlu0 %v8818, 64
      %v9279 = vpop.permute.xlu0 %9278
      %9280 = vrot.lane.b32.xlu0 %v8819, 64
      %v9281 = vpop.permute.xlu0 %9280
      %9282 = vrot.lane.b32.xlu0 %v8820, 64
      %v9283 = vpop.permute.xlu0 %9282
      %9284 = vrot.lane.b32.xlu0 %v8821, 64
      %v9285 = vpop.permute.xlu0 %9284
      %9286 = vrot.lane.b32.xlu0 %v8822, 64
      %v9287 = vpop.permute.xlu0 %9286
      %9288 = vrot.lane.b32.xlu0 %v8823, 64
      %v9289 = vpop.permute.xlu0 %9288
      %9290 = vrot.lane.b32.xlu0 %v8824, 64
      %v9291 = vpop.permute.xlu0 %9290
      %9292 = vrot.lane.b32.xlu0 %v8825, 64
      %v9293 = vpop.permute.xlu0 %9292
      %9294 = vrot.lane.b32.xlu0 %v8826, 64
      %v9295 = vpop.permute.xlu0 %9294
      %9296 = vrot.lane.b32.xlu0 %v8827, 64
      %v9297 = vpop.permute.xlu0 %9296
      %9298 = vrot.lane.b32.xlu0 %v8828, 64
      %v9299 = vpop.permute.xlu0 %9298
      %9300 = vrot.lane.b32.xlu0 %v8829, 64
      %v9301 = vpop.permute.xlu0 %9300
      %9302 = vrot.lane.b32.xlu0 %v9186, 64
      %v9303 = vpop.permute.xlu0 %9302
      %9304 = vrot.lane.b32.xlu0 %v9273, 64
      %v9305 = vpop.permute.xlu0 %9304
      %v9307 = vunpack.c.l.b16 %v8749
      %v9308 = vpack.c.b16 %v9307, %v9307
      %v9310 = vshrl.u32 %v9273, 16
      %v9312 = vshll.u32 %v9273, 16
      %v9314 = vrot.slane %v9312, 1
      %v9315 = vor.u32 %v9310, %v9314
      %v9317 = vshll.u32 %v9308, 16
      %v9319 = vrot.slane %v9317, 1
      %v9320 = vsel %vm938, %v9315, %v9319
      %9321 = vrot.lane.b32.xlu0 %v8913, 96
      %v9322 = vpop.permute.xlu0 %9321
      %9323 = vrot.lane.b32.xlu0 %v8925, 96
      %v9324 = vpop.permute.xlu0 %9323
      %9325 = vrot.lane.b32.xlu0 %v8937, 96
      %v9326 = vpop.permute.xlu0 %9325
      %9327 = vrot.lane.b32.xlu0 %v8949, 96
      %v9328 = vpop.permute.xlu0 %9327
      %9329 = vrot.lane.b32.xlu0 %v8961, 96
      %v9330 = vpop.permute.xlu0 %9329
      %9331 = vrot.lane.b32.xlu0 %v8973, 96
      %v9332 = vpop.permute.xlu0 %9331
      %9333 = vrot.lane.b32.xlu0 %v8985, 96
      %v9334 = vpop.permute.xlu0 %9333
      %9335 = vrot.lane.b32.xlu0 %v8997, 96
      %v9336 = vpop.permute.xlu0 %9335
      %9337 = vrot.lane.b32.xlu0 %v9009, 96
      %v9338 = vpop.permute.xlu0 %9337
      %9339 = vrot.lane.b32.xlu0 %v9021, 96
      %v9340 = vpop.permute.xlu0 %9339
      %9341 = vrot.lane.b32.xlu0 %v9033, 96
      %v9342 = vpop.permute.xlu0 %9341
      %9343 = vrot.lane.b32.xlu0 %v9045, 96
      %v9344 = vpop.permute.xlu0 %9343
      %9345 = vrot.lane.b32.xlu0 %v9057, 96
      %v9346 = vpop.permute.xlu0 %9345
      %9347 = vrot.lane.b32.xlu0 %v9069, 96
      %v9348 = vpop.permute.xlu0 %9347
      %9349 = vrot.lane.b32.xlu0 %v9233, 96
      %v9350 = vpop.permute.xlu0 %9349
      %9351 = vrot.lane.b32.xlu0 %v9320, 96
      %v9352 = vpop.permute.xlu0 %9351
      %v9353 = vrot.slane %v9273, 1
      %v9354 = vrot.slane %v9308, 1
      %v9355 = vsel %vm1163, %v9353, %v9354
      %v9357 = vsel %vm1418, %v8814, %v9071
      %v9359 = vsel %vm1418, %v8815, %v9073
      %v9361 = vsel %vm1418, %v8816, %v9075
      %v9363 = vsel %vm1418, %v8817, %v9077
      %v9365 = vsel %vm1418, %v8818, %v9079
      %v9367 = vsel %vm1418, %v8819, %v9081
      %v9369 = vsel %vm1418, %v8820, %v9083
      %v9371 = vsel %vm1418, %v8821, %v9085
      %v9373 = vsel %vm1418, %v8822, %v9087
      %v9375 = vsel %vm1418, %v8823, %v9089
      %v9377 = vsel %vm1418, %v8824, %v9091
      %v9379 = vsel %vm1418, %v8825, %v9093
      %v9381 = vsel %vm1418, %v8826, %v9095
      %v9383 = vsel %vm1418, %v8827, %v9097
      %v9385 = vsel %vm1418, %v8828, %v9099
      %v9387 = vsel %vm1418, %v8829, %v9101
      %v9389 = vsel %vm1451, %v9357, %v9151
      %v9391 = vsel %vm1451, %v9359, %v9153
      %v9393 = vsel %vm1451, %v9361, %v9155
      %v9395 = vsel %vm1451, %v9363, %v9157
      %v9397 = vsel %vm1451, %v9365, %v9159
      %v9399 = vsel %vm1451, %v9367, %v9161
      %v9401 = vsel %vm1451, %v9369, %v9163
      %v9403 = vsel %vm1451, %v9371, %v9165
      %v9405 = vsel %vm1451, %v9373, %v9167
      %v9407 = vsel %vm1451, %v9375, %v9169
      %v9409 = vsel %vm1451, %v9377, %v9171
      %v9411 = vsel %vm1451, %v9379, %v9173
      %v9413 = vsel %vm1451, %v9381, %v9175
      %v9415 = vsel %vm1451, %v9383, %v9177
      %v9417 = vsel %vm1451, %v9385, %v9179
      %v9419 = vsel %vm1451, %v9387, %v9181
      %v9421 = vsel %vm1484, %v9389, %v9188
      %v9424 = vsel %vm1484, %v9391, %v9190
      %v9427 = vsel %vm1484, %v9393, %v9192
      %v9430 = vsel %vm1484, %v9395, %v9194
      %v9433 = vsel %vm1484, %v9397, %v9196
      %v9436 = vsel %vm1484, %v9399, %v9198
      %v9439 = vsel %vm1484, %v9401, %v9200
      %v9442 = vsel %vm1484, %v9403, %v9202
      %v9445 = vsel %vm1484, %v9405, %v9204
      %v9448 = vsel %vm1484, %v9407, %v9206
      %v9451 = vsel %vm1484, %v9409, %v9208
      %v9454 = vsel %vm1484, %v9411, %v9210
      %v9457 = vsel %vm1484, %v9413, %v9212
      %v9460 = vsel %vm1484, %v9415, %v9214
      %v9463 = vsel %vm1484, %v9417, %v9216
      %v9466 = vsel %vm1484, %v9419, %v9218
      %v9470 = vsel %vm1418, %v8901, %v9238
      %v9473 = vsel %vm1418, %v8913, %v9240
      %v9476 = vsel %vm1418, %v8925, %v9242
      %v9479 = vsel %vm1418, %v8937, %v9244
      %v9482 = vsel %vm1418, %v8949, %v9246
      %v9485 = vsel %vm1418, %v8961, %v9248
      %v9488 = vsel %vm1418, %v8973, %v9250
      %v9491 = vsel %vm1418, %v8985, %v9252
      %v9494 = vsel %vm1418, %v8997, %v9254
      %v9497 = vsel %vm1418, %v9009, %v9256
      %v9500 = vsel %vm1418, %v9021, %v9258
      %v9503 = vsel %vm1418, %v9033, %v9260
      %v9506 = vsel %vm1418, %v9045, %v9262
      %v9509 = vsel %vm1418, %v9057, %v9264
      %v9512 = vsel %vm1418, %v9069, %v9266
      %v9515 = vsel %vm1418, %v9233, %v9268
      %v9517 = vsel %vm1451, %v9470, %v9275
      %v9519 = vsel %vm1451, %v9473, %v9277
      %v9521 = vsel %vm1451, %v9476, %v9279
      %v9523 = vsel %vm1451, %v9479, %v9281
      %v9525 = vsel %vm1451, %v9482, %v9283
      %v9527 = vsel %vm1451, %v9485, %v9285
      %v9529 = vsel %vm1451, %v9488, %v9287
      %v9531 = vsel %vm1451, %v9491, %v9289
      %v9533 = vsel %vm1451, %v9494, %v9291
      %v9535 = vsel %vm1451, %v9497, %v9293
      %v9537 = vsel %vm1451, %v9500, %v9295
      %v9539 = vsel %vm1451, %v9503, %v9297
      %v9541 = vsel %vm1451, %v9506, %v9299
      %v9543 = vsel %vm1451, %v9509, %v9301
      %v9545 = vsel %vm1451, %v9512, %v9303
      %v9547 = vsel %vm1451, %v9515, %v9305
      %v9549 = vsel %vm1484, %v9517, %v9322
      %v9552 = vsel %vm1484, %v9519, %v9324
      %v9555 = vsel %vm1484, %v9521, %v9326
      %v9558 = vsel %vm1484, %v9523, %v9328
      %v9561 = vsel %vm1484, %v9525, %v9330
      %v9564 = vsel %vm1484, %v9527, %v9332
      %v9567 = vsel %vm1484, %v9529, %v9334
      %v9570 = vsel %vm1484, %v9531, %v9336
      %v9573 = vsel %vm1484, %v9533, %v9338
      %v9576 = vsel %vm1484, %v9535, %v9340
      %v9579 = vsel %vm1484, %v9537, %v9342
      %v9582 = vsel %vm1484, %v9539, %v9344
      %v9585 = vsel %vm1484, %v9541, %v9346
      %v9588 = vsel %vm1484, %v9543, %v9348
      %v9591 = vsel %vm1484, %v9545, %v9350
      %v9594 = vsel %vm1484, %v9547, %v9352
      %s9596 = scalar_lea.vmem %s1, 576
      %v9597 = vld [vmem:[%s9596] sm:$0xf]
      %v9598 = vld [vmem:[%s9596 + $0x4] sm:$0xf]
      %v9599 = vld [vmem:[%s9596 + $0x8] sm:$0xf]
      %v9600 = vld [vmem:[%s9596 + $0xc] sm:$0xf]
      %v9601 = vld [vmem:[%s9596 + $0x10] sm:$0xf]
      %v9602 = vld [vmem:[%s9596 + $0x14] sm:$0xf]
      %v9603 = vld [vmem:[%s9596 + $0x18] sm:$0xf]
      %v9604 = vld [vmem:[%s9596 + $0x1c] sm:$0xf]
      %v9605 = vld [vmem:[%s9596 + $0x20] sm:$0xf]
      %v9606 = vld [vmem:[%s9596 + $0x24] sm:$0xf]
      %v9607 = vld [vmem:[%s9596 + $0x28] sm:$0xf]
      %v9608 = vld [vmem:[%s9596 + $0x2c] sm:$0xf]
      %v9609 = vld [vmem:[%s9596 + $0x30] sm:$0xf]
      %v9610 = vld [vmem:[%s9596 + $0x34] sm:$0xf]
      %v9611 = vld [vmem:[%s9596 + $0x38] sm:$0xf]
      %v9612 = vld [vmem:[%s9596 + $0x3c] sm:$0xf]
      %v9613 = vld [vmem:[%s9596 + $0x40] sm:$0xf]
      %v9614 = vld [vmem:[%s9596 + $0x44] sm:$0xf]
      %v9615 = vld [vmem:[%s9596 + $0x48] sm:$0xf]
      %v9616 = vld [vmem:[%s9596 + $0x4c] sm:$0xf]
      %v9617 = vld [vmem:[%s9596 + $0x50] sm:$0xf]
      %v9618 = vld [vmem:[%s9596 + $0x54] sm:$0xf]
      %v9619 = vld [vmem:[%s9596 + $0x58] sm:$0xf]
      %v9620 = vld [vmem:[%s9596 + $0x5c] sm:$0xf]
      %v9621 = vld [vmem:[%s9596 + $0x60] sm:$0xf]
      %v9622 = vld [vmem:[%s9596 + $0x64] sm:$0xf]
      %v9623 = vld [vmem:[%s9596 + $0x68] sm:$0xf]
      %v9624 = vld [vmem:[%s9596 + $0x6c] sm:$0xf]
      %v9625 = vld [vmem:[%s9596 + $0x70] sm:$0xf]
      %v9626 = vld [vmem:[%s9596 + $0x74] sm:$0xf]
      %v9627 = vld [vmem:[%s9596 + $0x78] sm:$0xf]
      %v9628 = vld [vmem:[%s9596 + $0x7c] sm:$0xf]
      %v9629 = vld [vmem:[%s9596 + $0x80] sm:$0xf]
      %v9630 = vld [vmem:[%s9596 + $0x84] sm:$0xf]
      %v9631 = vld [vmem:[%s9596 + $0x88] sm:$0xf]
      %v9632 = vld [vmem:[%s9596 + $0x8c] sm:$0xf]
      %s9633 = scalar_lea.vmem %s2, 4
      %v9634 = vld [vmem:[%s9633] sm:$0x1]
      %v9636 = vlaneseq
      %v9637 = vshrl.u32 %v9636, 7
      %v9638 = vsub.s32 0, %v9637
      %v9639 = vrot.slane %v9634, %v9638
      %v9677 = vunpack.c.l.b16 %v9597
      %v9678 = vunpack.c.l.b16 %v9598
      %v9679 = vunpack.c.l.b16 %v9599
      %v9680 = vunpack.c.l.b16 %v9600
      %v9681 = vunpack.c.l.b16 %v9601
      %v9682 = vunpack.c.l.b16 %v9602
      %v9683 = vunpack.c.l.b16 %v9603
      %v9684 = vunpack.c.l.b16 %v9604
      %v9685 = vunpack.c.l.b16 %v9605
      %v9686 = vunpack.c.l.b16 %v9606
      %v9687 = vunpack.c.l.b16 %v9607
      %v9688 = vunpack.c.l.b16 %v9608
      %v9689 = vunpack.c.l.b16 %v9609
      %v9690 = vunpack.c.l.b16 %v9610
      %v9691 = vunpack.c.l.b16 %v9611
      %v9692 = vunpack.c.l.b16 %v9612
      %v9693 = vunpack.c.l.b16 %v9613
      %v9694 = vunpack.c.l.b16 %v9614
      %v9695 = vunpack.c.l.b16 %v9615
      %v9696 = vunpack.c.l.b16 %v9616
      %v9697 = vunpack.c.l.b16 %v9617
      %v9698 = vunpack.c.l.b16 %v9618
      %v9699 = vunpack.c.l.b16 %v9619
      %v9700 = vunpack.c.l.b16 %v9620
      %v9701 = vunpack.c.l.b16 %v9621
      %v9702 = vunpack.c.l.b16 %v9622
      %v9703 = vunpack.c.l.b16 %v9623
      %v9704 = vunpack.c.l.b16 %v9624
      %v9705 = vunpack.c.l.b16 %v9625
      %v9706 = vunpack.c.l.b16 %v9626
      %v9707 = vunpack.c.l.b16 %v9627
      %v9708 = vunpack.c.l.b16 %v9628
      %v9709 = vunpack.c.l.b16 %v9629
      %v9710 = vunpack.c.l.b16 %v9630
      %v9711 = vunpack.c.l.b16 %v9631
      %v9712 = vunpack.c.l.b16 %v9632
      %v9713 = vpack.c.b16 %v9678, %v9677
      %v9714 = vpack.c.b16 %v9680, %v9679
      %v9715 = vpack.c.b16 %v9682, %v9681
      %v9716 = vpack.c.b16 %v9684, %v9683
      %v9717 = vpack.c.b16 %v9686, %v9685
      %v9718 = vpack.c.b16 %v9688, %v9687
      %v9719 = vpack.c.b16 %v9690, %v9689
      %v9720 = vpack.c.b16 %v9692, %v9691
      %v9721 = vpack.c.b16 %v9694, %v9693
      %v9722 = vpack.c.b16 %v9696, %v9695
      %v9723 = vpack.c.b16 %v9698, %v9697
      %v9724 = vpack.c.b16 %v9700, %v9699
      %v9725 = vpack.c.b16 %v9702, %v9701
      %v9726 = vpack.c.b16 %v9704, %v9703
      %v9727 = vpack.c.b16 %v9706, %v9705
      %v9728 = vpack.c.b16 %v9708, %v9707
      %v9729 = vpack.c.b16 %v9710, %v9709
      %v9730 = vpack.c.b16 %v9712, %v9711
      %v9750 = vsel %vm1418, %v9110, 0
      %v9753 = vsel %vm1418, %v9113, 0
      %v9756 = vsel %vm1418, %v9116, 0
      %v9759 = vsel %vm1418, %v9119, 0
      %v9762 = vsel %vm1418, %v9122, 0
      %v9765 = vsel %vm1418, %v9125, 0
      %v9768 = vsel %vm1418, %v9128, 0
      %v9771 = vsel %vm1418, %v9131, 0
      %v9774 = vsel %vm1418, %v9134, 0
      %v9777 = vsel %vm1418, %v9137, 0
      %v9780 = vsel %vm1418, %v9140, 0
      %v9783 = vsel %vm1418, %v9143, 0
      %v9786 = vsel %vm1418, %v9146, 0
      %v9789 = vsel %vm1418, %v9149, 0
      %v9792 = vsel %vm1418, %v9236, 0
      %v9795 = vsel %vm1418, %v9355, 0
      %9797 = vmatprep.subr.bf16.mxu0 0
      %9798 = vmatpush1.bf16.msra.mxu0 %v9713
      %9799 = vmatprep.subr.bf16.mxu0 0
      %9800 = vmatpush1.bf16.msra.mxu0 %v9714
      %9801 = vmatprep.subr.bf16.mxu0 0
      %9802 = vmatpush1.bf16.msra.mxu0 %v9715
      %9803 = vmatprep.subr.bf16.mxu0 0
      %9804 = vmatpush1.bf16.msra.mxu0 %v9716
      %9805 = vmatprep.subr.bf16.mxu0 0
      %9806 = vmatpush1.bf16.msra.mxu0 %v9717
      %9807 = vmatprep.subr.bf16.mxu0 0
      %9808 = vmatpush1.bf16.msra.mxu0 %v9718
      %9809 = vmatprep.subr.bf16.mxu0 0
      %9810 = vmatpush1.bf16.msra.mxu0 %v9719
      %9811 = vmatprep.subr.bf16.mxu0 0
      %9812 = vmatpush1.bf16.msra.mxu0 %v9720
      %9813 = vmatprep.subr.bf16.mxu0 0
      %9814 = vmatpush1.bf16.msra.mxu0 %v9721
      %9815 = vmatprep.subr.bf16.mxu0 0
      %9816 = vmatpush1.bf16.msra.mxu0 %v9722
      %9817 = vmatprep.subr.bf16.mxu0 0
      %9818 = vmatpush1.bf16.msra.mxu0 %v9723
      %9819 = vmatprep.subr.bf16.mxu0 0
      %9820 = vmatpush1.bf16.msra.mxu0 %v9724
      %9821 = vmatprep.subr.bf16.mxu0 0
      %9822 = vmatpush1.bf16.msra.mxu0 %v9725
      %9823 = vmatprep.subr.bf16.mxu0 0
      %9824 = vmatpush1.bf16.msra.mxu0 %v9726
      %9825 = vmatprep.subr.bf16.mxu0 0
      %9826 = vmatpush1.bf16.msra.mxu0 %v9727
      %9827 = vmatprep.subr.bf16.mxu0 0
      %9828 = vmatpush1.bf16.msra.mxu0 %v9728
      %9829 = vmatprep.mubr.bf16.mxu0 %v9549
      %9830 = vmatmul.mubr.bf16.gmra.mrb[0].mxu0 %v9421
      %v9831 = vpop.f32.mrb[0].mxu0
      %v9832 = vadd.f32 %v9639, %v9831
      %v9833 = vpop.f32.mrb[0].mxu0
      %v9834 = vpop.f32.mrb[0].mxu0
      %v9835 = vadd.f32 %v9639, %v9834
      %v9836 = vpop.f32.mrb[0].mxu0
      %9837 = vmatprep.mubr.bf16.mxu0 %v9552
      %9838 = vmatmul.mubr.bf16.gmra.mrb[0].mxu0 %v9424
      %v9839 = vpop.f32.mrb[0].mxu0
      %v9840 = vadd.f32 %v9639, %v9839
      %v9841 = vpop.f32.mrb[0].mxu0
      %v9842 = vpop.f32.mrb[0].mxu0
      %v9843 = vadd.f32 %v9639, %v9842
      %v9844 = vpop.f32.mrb[0].mxu0
      %9845 = vmatprep.mubr.bf16.mxu0 %v9555
      %9846 = vmatmul.mubr.bf16.gmra.mrb[0].mxu0 %v9427
      %v9847 = vpop.f32.mrb[0].mxu0
      %v9848 = vadd.f32 %v9639, %v9847
      %v9849 = vpop.f32.mrb[0].mxu0
      %v9850 = vpop.f32.mrb[0].mxu0
      %v9851 = vadd.f32 %v9639, %v9850
      %v9852 = vpop.f32.mrb[0].mxu0
      %9853 = vmatprep.mubr.bf16.mxu0 %v9558
      %9854 = vmatmul.mubr.bf16.gmra.mrb[0].mxu0 %v9430
      %v9855 = vpop.f32.mrb[0].mxu0
      %v9856 = vadd.f32 %v9639, %v9855
      %v9857 = vpop.f32.mrb[0].mxu0
      %v9858 = vpop.f32.mrb[0].mxu0
      %v9859 = vadd.f32 %v9639, %v9858
      %v9860 = vpop.f32.mrb[0].mxu0
      %9861 = vmatprep.mubr.bf16.mxu0 %v9561
      %9862 = vmatmul.mubr.bf16.gmra.mrb[0].mxu0 %v9433
      %v9863 = vpop.f32.mrb[0].mxu0
      %v9864 = vadd.f32 %v9639, %v9863
      %v9865 = vpop.f32.mrb[0].mxu0
      %v9866 = vpop.f32.mrb[0].mxu0
      %v9867 = vadd.f32 %v9639, %v9866
      %v9868 = vpop.f32.mrb[0].mxu0
      %9869 = vmatprep.mubr.bf16.mxu0 %v9564
      %9870 = vmatmul.mubr.bf16.gmra.mrb[0].mxu0 %v9436
      %v9871 = vpop.f32.mrb[0].mxu0
      %v9872 = vadd.f32 %v9639, %v9871
      %v9873 = vpop.f32.mrb[0].mxu0
      %v9874 = vpop.f32.mrb[0].mxu0
      %v9875 = vadd.f32 %v9639, %v9874
      %v9876 = vpop.f32.mrb[0].mxu0
      %9877 = vmatprep.mubr.bf16.mxu0 %v9567
      %9878 = vmatmul.mubr.bf16.gmra.mrb[0].mxu0 %v9439
      %v9879 = vpop.f32.mrb[0].mxu0
      %v9880 = vadd.f32 %v9639, %v9879
      %v9881 = vpop.f32.mrb[0].mxu0
      %v9882 = vpop.f32.mrb[0].mxu0
      %v9883 = vadd.f32 %v9639, %v9882
      %v9884 = vpop.f32.mrb[0].mxu0
      %9885 = vmatprep.mubr.bf16.mxu0 %v9570
      %9886 = vmatmul.mubr.bf16.gmra.mrb[0].mxu0 %v9442
      %v9887 = vpop.f32.mrb[0].mxu0
      %v9888 = vadd.f32 %v9639, %v9887
      %v9889 = vpop.f32.mrb[0].mxu0
      %v9890 = vpop.f32.mrb[0].mxu0
      %v9891 = vadd.f32 %v9639, %v9890
      %v9892 = vpop.f32.mrb[0].mxu0
      %9893 = vmatprep.mubr.bf16.mxu0 %v9573
      %9894 = vmatmul.mubr.bf16.gmra.mrb[0].mxu0 %v9445
      %v9895 = vpop.f32.mrb[0].mxu0
      %v9896 = vadd.f32 %v9639, %v9895
      %v9897 = vpop.f32.mrb[0].mxu0
      %v9898 = vpop.f32.mrb[0].mxu0
      %v9899 = vadd.f32 %v9639, %v9898
      %v9900 = vpop.f32.mrb[0].mxu0
      %9901 = vmatprep.mubr.bf16.mxu0 %v9576
      %9902 = vmatmul.mubr.bf16.gmra.mrb[0].mxu0 %v9448
      %v9903 = vpop.f32.mrb[0].mxu0
      %v9904 = vadd.f32 %v9639, %v9903
      %v9905 = vpop.f32.mrb[0].mxu0
      %v9906 = vpop.f32.mrb[0].mxu0
      %v9907 = vadd.f32 %v9639, %v9906
      %v9908 = vpop.f32.mrb[0].mxu0
      %9909 = vmatprep.mubr.bf16.mxu0 %v9579
      %9910 = vmatmul.mubr.bf16.gmra.mrb[0].mxu0 %v9451
      %v9911 = vpop.f32.mrb[0].mxu0
      %v9912 = vadd.f32 %v9639, %v9911
      %v9913 = vpop.f32.mrb[0].mxu0
      %v9914 = vpop.f32.mrb[0].mxu0
      %v9915 = vadd.f32 %v9639, %v9914
      %v9916 = vpop.f32.mrb[0].mxu0
      %9917 = vmatprep.mubr.bf16.mxu0 %v9582
      %9918 = vmatmul.mubr.bf16.gmra.mrb[0].mxu0 %v9454
      %v9919 = vpop.f32.mrb[0].mxu0
      %v9920 = vadd.f32 %v9639, %v9919
      %v9921 = vpop.f32.mrb[0].mxu0
      %v9922 = vpop.f32.mrb[0].mxu0
      %v9923 = vadd.f32 %v9639, %v9922
      %v9924 = vpop.f32.mrb[0].mxu0
      %9925 = vmatprep.mubr.bf16.mxu0 %v9585
      %9926 = vmatmul.mubr.bf16.gmra.mrb[0].mxu0 %v9457
      %v9927 = vpop.f32.mrb[0].mxu0
      %v9928 = vadd.f32 %v9639, %v9927
      %v9929 = vpop.f32.mrb[0].mxu0
      %v9930 = vpop.f32.mrb[0].mxu0
      %v9931 = vadd.f32 %v9639, %v9930
      %v9932 = vpop.f32.mrb[0].mxu0
      %9933 = vmatprep.mubr.bf16.mxu0 %v9588
      %9934 = vmatmul.mubr.bf16.gmra.mrb[0].mxu0 %v9460
      %v9935 = vpop.f32.mrb[0].mxu0
      %v9936 = vadd.f32 %v9639, %v9935
      %v9937 = vpop.f32.mrb[0].mxu0
      %v9938 = vpop.f32.mrb[0].mxu0
      %v9939 = vadd.f32 %v9639, %v9938
      %v9940 = vpop.f32.mrb[0].mxu0
      %9941 = vmatprep.mubr.bf16.mxu0 %v9591
      %9942 = vmatmul.mubr.bf16.gmra.mrb[0].mxu0 %v9463
      %v9943 = vpop.f32.mrb[0].mxu0
      %v9944 = vadd.f32 %v9639, %v9943
      %v9945 = vpop.f32.mrb[0].mxu0
      %v9946 = vpop.f32.mrb[0].mxu0
      %v9947 = vadd.f32 %v9639, %v9946
      %v9948 = vpop.f32.mrb[0].mxu0
      %9949 = vmatprep.mubr.bf16.mxu0 %v9594
      %9950 = vmatmul.mubr.bf16.gmra.mrb[0].mxu0 %v9466
      %v9951 = vpop.f32.mrb[0].mxu0
      %v9952 = vadd.f32 %v9639, %v9951
      %v9953 = vpop.f32.mrb[0].mxu0
      %v9954 = vpop.f32.mrb[0].mxu0
      %v9955 = vadd.f32 %v9639, %v9954
      %v9956 = vpop.f32.mrb[0].mxu0
      %9957 = vdwg.mxu0
      %9958 = vmatprep.subr.bf16.mxu0 0
      %9959 = vmatpush1.bf16.msra.mxu0 %v9729
      %9960 = vmatprep.subr.bf16.mxu0 0
      %9961 = vmatpush1.bf16.msra.mxu0 %v9730
      %9962 = vmatprep.subr.bf16.mxu0 0
      %9963 = vmatpush1.bf16.msra.mxu0 0
      %9964 = vmatprep.subr.bf16.mxu0 0
      %9965 = vmatpush1.bf16.msra.mxu0 0
      %9966 = vmatprep.subr.bf16.mxu0 0
      %9967 = vmatpush1.bf16.msra.mxu0 0
      %9968 = vmatprep.subr.bf16.mxu0 0
      %9969 = vmatpush1.bf16.msra.mxu0 0
      %9970 = vmatprep.subr.bf16.mxu0 0
      %9971 = vmatpush1.bf16.msra.mxu0 0
      %9972 = vmatprep.subr.bf16.mxu0 0
      %9973 = vmatpush1.bf16.msra.mxu0 0
      %9974 = vmatprep.subr.bf16.mxu0 0
      %9975 = vmatpush1.bf16.msra.mxu0 0
      %9976 = vmatprep.subr.bf16.mxu0 0
      %9977 = vmatpush1.bf16.msra.mxu0 0
      %9978 = vmatprep.subr.bf16.mxu0 0
      %9979 = vmatpush1.bf16.msra.mxu0 0
      %9980 = vmatprep.subr.bf16.mxu0 0
      %9981 = vmatpush1.bf16.msra.mxu0 0
      %9982 = vmatprep.subr.bf16.mxu0 0
      %9983 = vmatpush1.bf16.msra.mxu0 0
      %9984 = vmatprep.subr.bf16.mxu0 0
      %9985 = vmatpush1.bf16.msra.mxu0 0
      %9986 = vmatprep.subr.bf16.mxu0 0
      %9987 = vmatpush1.bf16.msra.mxu0 0
      %9988 = vmatprep.subr.bf16.mxu0 0
      %9989 = vmatpush1.bf16.msra.mxu0 0
      %9990 = vmatprep.mubr.bf16.mxu0 0
      %9991 = vmatmul.mubr.bf16.gmra.mrb[0].mxu0 %v9750
      %v9992 = vpop.f32.mrb[0].mxu0
      %v9993 = vadd.f32 %v9832, %v9992
      %v9994 = vpop.f32.mrb[0].mxu0
      %v9995 = vpop.f32.mrb[0].mxu0
      %v9996 = vadd.f32 %v9835, %v9995
      %v9997 = vpop.f32.mrb[0].mxu0
      %9998 = vmatprep.mubr.bf16.mxu0 0
      %9999 = vmatmul.mubr.bf16.gmra.mrb[0].mxu0 %v9753
      %v10000 = vpop.f32.mrb[0].mxu0
      %v10001 = vadd.f32 %v9840, %v10000
      %v10002 = vpop.f32.mrb[0].mxu0
      %v10003 = vpop.f32.mrb[0].mxu0
      %v10004 = vadd.f32 %v9843, %v10003
      %v10005 = vpop.f32.mrb[0].mxu0
      %10006 = vmatprep.mubr.bf16.mxu0 0
      %10007 = vmatmul.mubr.bf16.gmra.mrb[0].mxu0 %v9756
      %v10008 = vpop.f32.mrb[0].mxu0
      %v10009 = vadd.f32 %v9848, %v10008
      %v10010 = vpop.f32.mrb[0].mxu0
      %v10011 = vpop.f32.mrb[0].mxu0
      %v10012 = vadd.f32 %v9851, %v10011
      %v10013 = vpop.f32.mrb[0].mxu0
      %10014 = vmatprep.mubr.bf16.mxu0 0
      %10015 = vmatmul.mubr.bf16.gmra.mrb[0].mxu0 %v9759
      %v10016 = vpop.f32.mrb[0].mxu0
      %v10017 = vadd.f32 %v9856, %v10016
      %v10018 = vpop.f32.mrb[0].mxu0
      %v10019 = vpop.f32.mrb[0].mxu0
      %v10020 = vadd.f32 %v9859, %v10019
      %v10021 = vpop.f32.mrb[0].mxu0
      %10022 = vmatprep.mubr.bf16.mxu0 0
      %10023 = vmatmul.mubr.bf16.gmra.mrb[0].mxu0 %v9762
      %v10024 = vpop.f32.mrb[0].mxu0
      %v10025 = vadd.f32 %v9864, %v10024
      %v10026 = vpop.f32.mrb[0].mxu0
      %v10027 = vpop.f32.mrb[0].mxu0
      %v10028 = vadd.f32 %v9867, %v10027
      %v10029 = vpop.f32.mrb[0].mxu0
      %10030 = vmatprep.mubr.bf16.mxu0 0
      %10031 = vmatmul.mubr.bf16.gmra.mrb[0].mxu0 %v9765
      %v10032 = vpop.f32.mrb[0].mxu0
      %v10033 = vadd.f32 %v9872, %v10032
      %v10034 = vpop.f32.mrb[0].mxu0
      %v10035 = vpop.f32.mrb[0].mxu0
      %v10036 = vadd.f32 %v9875, %v10035
      %v10037 = vpop.f32.mrb[0].mxu0
      %10038 = vmatprep.mubr.bf16.mxu0 0
      %10039 = vmatmul.mubr.bf16.gmra.mrb[0].mxu0 %v9768
      %v10040 = vpop.f32.mrb[0].mxu0
      %v10041 = vadd.f32 %v9880, %v10040
      %v10042 = vpop.f32.mrb[0].mxu0
      %v10043 = vpop.f32.mrb[0].mxu0
      %v10044 = vadd.f32 %v9883, %v10043
      %v10045 = vpop.f32.mrb[0].mxu0
      %10046 = vmatprep.mubr.bf16.mxu0 0
      %10047 = vmatmul.mubr.bf16.gmra.mrb[0].mxu0 %v9771
      %v10048 = vpop.f32.mrb[0].mxu0
      %v10049 = vadd.f32 %v9888, %v10048
      %v10050 = vpop.f32.mrb[0].mxu0
      %v10051 = vpop.f32.mrb[0].mxu0
      %v10052 = vadd.f32 %v9891, %v10051
      %v10053 = vpop.f32.mrb[0].mxu0
      %10054 = vmatprep.mubr.bf16.mxu0 0
      %10055 = vmatmul.mubr.bf16.gmra.mrb[0].mxu0 %v9774
      %v10056 = vpop.f32.mrb[0].mxu0
      %v10057 = vadd.f32 %v9896, %v10056
      %v10058 = vpop.f32.mrb[0].mxu0
      %v10059 = vpop.f32.mrb[0].mxu0
      %v10060 = vadd.f32 %v9899, %v10059
      %v10061 = vpop.f32.mrb[0].mxu0
      %10062 = vmatprep.mubr.bf16.mxu0 0
      %10063 = vmatmul.mubr.bf16.gmra.mrb[0].mxu0 %v9777
      %v10064 = vpop.f32.mrb[0].mxu0
      %v10065 = vadd.f32 %v9904, %v10064
      %v10066 = vpop.f32.mrb[0].mxu0
      %v10067 = vpop.f32.mrb[0].mxu0
      %v10068 = vadd.f32 %v9907, %v10067
      %v10069 = vpop.f32.mrb[0].mxu0
      %10070 = vmatprep.mubr.bf16.mxu0 0
      %10071 = vmatmul.mubr.bf16.gmra.mrb[0].mxu0 %v9780
      %v10072 = vpop.f32.mrb[0].mxu0
      %v10073 = vadd.f32 %v9912, %v10072
      %v10074 = vpop.f32.mrb[0].mxu0
      %v10075 = vpop.f32.mrb[0].mxu0
      %v10076 = vadd.f32 %v9915, %v10075
      %v10077 = vpop.f32.mrb[0].mxu0
      %10078 = vmatprep.mubr.bf16.mxu0 0
      %10079 = vmatmul.mubr.bf16.gmra.mrb[0].mxu0 %v9783
      %v10080 = vpop.f32.mrb[0].mxu0
      %v10081 = vadd.f32 %v9920, %v10080
      %v10082 = vpop.f32.mrb[0].mxu0
      %v10083 = vpop.f32.mrb[0].mxu0
      %v10084 = vadd.f32 %v9923, %v10083
      %v10085 = vpop.f32.mrb[0].mxu0
      %10086 = vmatprep.mubr.bf16.mxu0 0
      %10087 = vmatmul.mubr.bf16.gmra.mrb[0].mxu0 %v9786
      %v10088 = vpop.f32.mrb[0].mxu0
      %v10089 = vadd.f32 %v9928, %v10088
      %v10090 = vpop.f32.mrb[0].mxu0
      %v10091 = vpop.f32.mrb[0].mxu0
      %v10092 = vadd.f32 %v9931, %v10091
      %v10093 = vpop.f32.mrb[0].mxu0
      %10094 = vmatprep.mubr.bf16.mxu0 0
      %10095 = vmatmul.mubr.bf16.gmra.mrb[0].mxu0 %v9789
      %v10096 = vpop.f32.mrb[0].mxu0
      %v10097 = vadd.f32 %v9936, %v10096
      %v10098 = vpop.f32.mrb[0].mxu0
      %v10099 = vpop.f32.mrb[0].mxu0
      %v10100 = vadd.f32 %v9939, %v10099
      %v10101 = vpop.f32.mrb[0].mxu0
      %10102 = vmatprep.mubr.bf16.mxu0 0
      %10103 = vmatmul.mubr.bf16.gmra.mrb[0].mxu0 %v9792
      %v10104 = vpop.f32.mrb[0].mxu0
      %v10105 = vadd.f32 %v9944, %v10104
      %v10106 = vpop.f32.mrb[0].mxu0
      %v10107 = vpop.f32.mrb[0].mxu0
      %v10108 = vadd.f32 %v9947, %v10107
      %v10109 = vpop.f32.mrb[0].mxu0
      %10110 = vmatprep.mubr.bf16.mxu0 0
      %10111 = vmatmul.mubr.bf16.gmra.mrb[0].mxu0 %v9795
      %v10112 = vpop.f32.mrb[0].mxu0
      %v10113 = vadd.f32 %v9952, %v10112
      %v10114 = vpop.f32.mrb[0].mxu0
      %v10115 = vpop.f32.mrb[0].mxu0
      %v10116 = vadd.f32 %v9955, %v10115
      %v10117 = vpop.f32.mrb[0].mxu0
      %10118 = vdwg.mxu0
      %v10119 = vmax.f32 %v9993, 0.0
      %v10120 = vmax.f32 %v9996, 0.0
      %v10121 = vmax.f32 %v10001, 0.0
      %v10122 = vmax.f32 %v10004, 0.0
      %v10123 = vmax.f32 %v10009, 0.0
      %v10124 = vmax.f32 %v10012, 0.0
      %v10125 = vmax.f32 %v10017, 0.0
      %v10126 = vmax.f32 %v10020, 0.0
      %v10127 = vmax.f32 %v10025, 0.0
      %v10128 = vmax.f32 %v10028, 0.0
      %v10129 = vmax.f32 %v10033, 0.0
      %v10130 = vmax.f32 %v10036, 0.0
      %v10131 = vmax.f32 %v10041, 0.0
      %v10132 = vmax.f32 %v10044, 0.0
      %v10133 = vmax.f32 %v10049, 0.0
      %v10134 = vmax.f32 %v10052, 0.0
      %v10135 = vmax.f32 %v10057, 0.0
      %v10136 = vmax.f32 %v10060, 0.0
      %v10137 = vmax.f32 %v10065, 0.0
      %v10138 = vmax.f32 %v10068, 0.0
      %v10139 = vmax.f32 %v10073, 0.0
      %v10140 = vmax.f32 %v10076, 0.0
      %v10141 = vmax.f32 %v10081, 0.0
      %v10142 = vmax.f32 %v10084, 0.0
      %v10143 = vmax.f32 %v10089, 0.0
      %v10144 = vmax.f32 %v10092, 0.0
      %v10145 = vmax.f32 %v10097, 0.0
      %v10146 = vmax.f32 %v10100, 0.0
      %v10147 = vmax.f32 %v10105, 0.0
      %v10148 = vmax.f32 %v10108, 0.0
      %v10149 = vmax.f32 %v10113, 0.0
      %v10150 = vmax.f32 %v10116, 0.0
      %10151 = vst.msk [vmem:[%s170] sm:$0xff] %vm1418, %v10119
      %10152 = vst.msk [vmem:[%s170 + $0x8] sm:$0xff] %vm1418, %v10120
      %10153 = vst.msk [vmem:[%s170 + $0x10] sm:$0xff] %vm1418, %v10121
      %10154 = vst.msk [vmem:[%s170 + $0x18] sm:$0xff] %vm1418, %v10122
      %10155 = vst.msk [vmem:[%s170 + $0x20] sm:$0xff] %vm1418, %v10123
      %10156 = vst.msk [vmem:[%s170 + $0x28] sm:$0xff] %vm1418, %v10124
      %10157 = vst.msk [vmem:[%s170 + $0x30] sm:$0xff] %vm1418, %v10125
      %10158 = vst.msk [vmem:[%s170 + $0x38] sm:$0xff] %vm1418, %v10126
      %10159 = vst.msk [vmem:[%s170 + $0x40] sm:$0xff] %vm1418, %v10127
      %10160 = vst.msk [vmem:[%s170 + $0x48] sm:$0xff] %vm1418, %v10128
      %10161 = vst.msk [vmem:[%s170 + $0x50] sm:$0xff] %vm1418, %v10129
      %10162 = vst.msk [vmem:[%s170 + $0x58] sm:$0xff] %vm1418, %v10130
      %10163 = vst.msk [vmem:[%s170 + $0x60] sm:$0xff] %vm1418, %v10131
      %10164 = vst.msk [vmem:[%s170 + $0x68] sm:$0xff] %vm1418, %v10132
      %10165 = vst.msk [vmem:[%s170 + $0x70] sm:$0xff] %vm1418, %v10133
      %10166 = vst.msk [vmem:[%s170 + $0x78] sm:$0xff] %vm1418, %v10134
      %10167 = vst.msk [vmem:[%s170 + $0x80] sm:$0xff] %vm1418, %v10135
      %10168 = vst.msk [vmem:[%s170 + $0x88] sm:$0xff] %vm1418, %v10136
      %10169 = vst.msk [vmem:[%s170 + $0x90] sm:$0xff] %vm1418, %v10137
      %10170 = vst.msk [vmem:[%s170 + $0x98] sm:$0xff] %vm1418, %v10138
      %10171 = vst.msk [vmem:[%s170 + $0xa0] sm:$0xff] %vm1418, %v10139
      %10172 = vst.msk [vmem:[%s170 + $0xa8] sm:$0xff] %vm1418, %v10140
      %10173 = vst.msk [vmem:[%s170 + $0xb0] sm:$0xff] %vm1418, %v10141
      %10174 = vst.msk [vmem:[%s170 + $0xb8] sm:$0xff] %vm1418, %v10142
      %10175 = vst.msk [vmem:[%s170 + $0xc0] sm:$0xff] %vm1418, %v10143
      %10176 = vst.msk [vmem:[%s170 + $0xc8] sm:$0xff] %vm1418, %v10144
      %10177 = vst.msk [vmem:[%s170 + $0xd0] sm:$0xff] %vm1418, %v10145
      %10178 = vst.msk [vmem:[%s170 + $0xd8] sm:$0xff] %vm1418, %v10146
      %10179 = vst.msk [vmem:[%s170 + $0xe0] sm:$0xff] %vm1418, %v10147
      %10180 = vst.msk [vmem:[%s170 + $0xe8] sm:$0xff] %vm1418, %v10148
      %10181 = vst.msk [vmem:[%s170 + $0xf0] sm:$0xff] %vm1418, %v10149
      %10182 = vst.msk [vmem:[%s170 + $0xf8] sm:$0xff] %vm1418, %v10150
      %p10183 = scmp.lt.s32.totalorder %s14, 1
      %s10184 = scalar_select %p10183, %s14, 1
      %s10185 = smul.addr %s10184, 32
      %s10186 = smul.addr %s10185, 8
      %s10187 = scalar_lea.vmem %s3, %s10186
      // Predicated region
      $region33: #{fcn_forward.1} parent=31 // pred_check
        %p10188 = pneg %p100
      $region34: #{fcn_forward.1} parent=31 // pred_check_branch
        %10190 = sbr.rel (%p10188) target = $region36
      $region35: #{fcn_forward.1} parent=31 // pred_region
        _
      $region36: #{fcn_forward.1} parent=31 // pred_fallthru
        _
    $region32: #{fcn_forward.1} parent=5 // pred_fallthru
      _
    %p10191 = scmp.le.s32.totalorder 2, %s9
    // Predicated region
    $region37: #{fcn_forward.1} parent=5 // pred_check
      %p10192 = pneg %p10191
    $region38: #{fcn_forward.1} parent=5 // pred_check_branch
      %10194 = sbr.rel (%p10192) target = $region40
    $region39: #{fcn_forward.1} parent=5 // pred_region
      %s10195 = ssub.s32 %s9, 2
      // Predicated region
      $region41: #{fcn_forward.1} parent=39 // pred_check
        %p10196 = pneg %p106
      $region42: #{fcn_forward.1} parent=39 // pred_check_branch
        %10198 = sbr.rel (%p10196) target = $region44
      $region43: #{fcn_forward.1} parent=39 // pred_region
        %p10199 = scmp.lt.s32.totalorder %s15, 1
        %s10200 = scalar_select %p10199, %s15, 1
        %s10201 = smul.addr %s10200, 32
        %s10202 = smul.addr %s10201, 8
        %s10203 = scalar_lea.vmem %s3, %s10202
      $region44: #{fcn_forward.1} parent=39 // pred_fallthru
        _
    $region40: #{fcn_forward.1} parent=5 // pred_fallthru
      _
  $region6: #{fcn_forward.1} parent=0 // loop_footer
    %s13 = sadd.s32 1, %s9
  $region7: #{fcn_forward.1} parent=0 // loop_footer_branch
    %8 = sbr.rel target = $region3
  $region8: #{fcn_forward.1} parent=0 // loop_exit
    _

</llo_original>
